<compile_context>
chip_gen: v7x
topology: tpu7x:2x2x1
jax: 0.10.0
libtpu: 0.0.40
codegen_flags: <defaults>
</compile_context>

<pallas_src>
import math

import jax
import jax.numpy as jnp
from jax.experimental import pallas as pl
from jax.experimental.pallas import tpu as pltpu

CLAMP = 2.0          # affine_clamping
LN_EPS = 1e-5        # nn.LayerNorm default eps


# --------------------------------------------------------------------------
# In-kernel 'same'-padded conv as a single im2col matmul (bf16 in, f32 acc).
#   x_bf : (H, W, Cin)  bf16 value
#   w_ref: (k*k*Cin, Cout) bf16 ref   (pre-flattened in the wrapper)
#   b_ref: (1, Cout) f32 ref
# --------------------------------------------------------------------------
def _conv_same(x_bf, w_ref, b_ref, ksize, H, W):
    Cin = x_bf.shape[-1]
    Cout = w_ref.shape[-1]
    if ksize == 1:
        lhs = x_bf.reshape(H * W, Cin)
    else:
        zr = jnp.zeros((1, W, Cin), x_bf.dtype)
        zc = jnp.zeros((H + 2, 1, Cin), x_bf.dtype)
        xp = jnp.concatenate([zr, x_bf, zr], axis=0)       # zero halo rows only
        xp = jnp.concatenate([zc, xp, zc], axis=1)         # zero halo cols only
        lhs = jnp.concatenate(
            [xp[dy:dy + H, dx:dx + W, :] for dy in range(3) for dx in range(3)],
            axis=-1).reshape(H * W, 9 * Cin)               # im2col: (H*W, 9*Cin)
    y = jnp.dot(lhs, w_ref[...], preferred_element_type=jnp.float32)
    return (y + b_ref[...]).reshape(H, W, Cout)


# --------------------------------------------------------------------------
# Fused per-scale kernel: LayerNorm -> flow steps -> output reductions.
# One grid step == one sample; z stays resident as VMEM values throughout.
# --------------------------------------------------------------------------
def _make_scale_kernel(H, W, C, ksizes):
    C2 = C // 2
    C1 = C - C2
    T = len(ksizes)

    def kernel(*refs):
        x_ref, lnw_ref, lnb_ref = refs[:3]
        step_refs = refs[3:3 + 6 * T]
        stat_ref, amap_ref = refs[3 + 6 * T], refs[4 + 6 * T]

        # ---- LayerNorm over the whole (H, W, C) sample, elementwise affine ----
        x = x_ref[0]                                           # (H, W, C) f32
        mu = jnp.mean(x, keepdims=True)
        var = jnp.mean((x - mu) ** 2, keepdims=True)
        z = (x - mu) * jax.lax.rsqrt(var + LN_EPS) * lnw_ref[...] + lnb_ref[...]

        # ---- unrolled FrEIA AllInOneBlock steps (permute_soft=False) ----------
        jac = jnp.float32(0.0)
        for t, ks in enumerate(ksizes):
            w1, b1, w2, b2, ps, gp = step_refs[6 * t:6 * t + 6]
            x1 = z[:, :, :C1]
            x2 = z[:, :, C1:]
            # subnet: conv -> ReLU -> conv  (bf16 MXU matmuls, f32 accumulation)
            h = _conv_same(x1.astype(jnp.bfloat16), w1, b1, ks, H, W)
            h = jnp.maximum(h, 0.0)
            a = _conv_same(h.astype(jnp.bfloat16), w2, b2, ks, H, W) * 0.1
            # affine coupling (f32 elementwise path)
            s = CLAMP * jnp.tanh(a[:, :, :C2])
            x2n = x2 * jnp.exp(s) + a[:, :, C2:]
            jac = jac + jnp.sum(s)
            v = jnp.concatenate([x1, x2n], axis=-1)            # (H, W, C)
            # global affine + hard permutation folded into one matrix:
            #   (v*scale + go) @ P  ==  v @ (diag(scale) @ P) + go[perm]
            z = (jnp.dot(v.reshape(H * W, C), ps[...],
                         preferred_element_type=jnp.float32)
                 + gp[...]).reshape(H, W, C)

        # ---- output reductions (z never written to HBM) ------------------------
        z2 = z * z
        stat = 0.5 * jnp.sum(z2) - jac                         # 0.5*sum(z^2) - data jac
        stat_ref[...] = jnp.full((1, 1, 128), stat, dtype=jnp.float32)
        amap_ref[...] = (-jnp.exp(-0.5 * jnp.mean(z2, axis=-1)))[None]

    return kernel


def fastflow_scale(feat, ln_w, ln_b, steps):
    """Fused LayerNorm -> flow chain -> reductions for one scale.

    feat: (N, H, W, C) f32.  Returns (stat (N,), amap (N, H, W))."""
    N, H, W, C = feat.shape
    ksizes = tuple(int(s['ksize']) for s in steps)
    kernel = _make_scale_kernel(H, W, C, ksizes)

    step_arrays = []
    in_specs = [
        pl.BlockSpec((1, H, W, C), lambda n: (n, 0, 0, 0)),      # per-sample block
        pl.BlockSpec((H, W, C), lambda n: (0, 0, 0)),            # ln weight (resident)
        pl.BlockSpec((H, W, C), lambda n: (0, 0, 0)),            # ln bias (resident)
    ]
    for s in steps:
        for name in ('w1', 'b1', 'w2', 'b2', 'pscale', 'go_p'):
            arr = s[name]
            step_arrays.append(arr)
            in_specs.append(
                pl.BlockSpec(arr.shape, lambda n, nd=arr.ndim: (0,) * nd))

    stat, amap = pl.pallas_call(
        kernel,
        grid=(N,),
        out_shape=(jax.ShapeDtypeStruct((N, 1, 128), jnp.float32),   # lane-dense stat
                   jax.ShapeDtypeStruct((N, H, W), jnp.float32)),    # lane-dense amap
        in_specs=in_specs,
        out_specs=(pl.BlockSpec((1, 1, 128), lambda n: (n, 0, 0)),
                   pl.BlockSpec((1, H, W), lambda n: (n, 0, 0))),
        compiler_params=pltpu.CompilerParams(
            dimension_semantics=("parallel",),          # shard batch across TCs
            vmem_limit_bytes=32 * 1024 * 1024),
    )(feat, ln_w, ln_b, *step_arrays)
    return stat[:, 0, 0], amap


# --------------------------------------------------------------------------
# Plain-JAX glue: synthetic backbone, parameter init, end-to-end forward.
# --------------------------------------------------------------------------
def synthetic_backbone(x_nchw, proj_list, scales):
    # TODO(synk): stands in for the frozen pretrained timm resnet18 backbone.
    feats = []
    N, Cin, S, _ = x_nchw.shape
    for proj, s in zip(proj_list, scales):
        h = S // s
        pooled = x_nchw.reshape(N, Cin, h, s, h, s).mean(axis=(3, 5))   # (N,Cin,h,h)
        feats.append(jnp.einsum('nchw,cd->nhwd', pooled, proj))         # NHWC
    return feats


def init_params(key, channels, scales, input_size, flow_steps,
                conv3x3_only=False, hidden_ratio=1.0):
    params = []
    # FrEIA SOFTPLUS global-affine init (global_affine_init=1.0, beta=0.5, *0.1)
    gscale_init = 2.0 * math.log(math.exp(0.5 * 10.0 * 1.0) - 1.0)
    for C, s in zip(channels, scales):
        H = W = input_size // s
        C2 = C // 2
        C1 = C - C2
        Hid = int(C1 * hidden_ratio)
        ln_w = jnp.ones((H, W, C), jnp.float32)     # nn.LayerNorm default init
        ln_b = jnp.zeros((H, W, C), jnp.float32)
        steps = []
        jac_const = jnp.float32(0.0)
        for st in range(flow_steps):
            ksize = 1 if (st % 2 == 1 and not conv3x3_only) else 3
            key, k1, k2, k3, k4, k5 = jax.random.split(key, 6)
            w1 = jax.random.normal(k1, (ksize, ksize, C1, Hid), jnp.float32)
            w1 = (w1 / math.sqrt(C1 * ksize * ksize)).reshape(ksize * ksize * C1, Hid)
            b1 = jax.random.normal(k2, (1, Hid), jnp.float32) * 0.01
            w2 = jax.random.normal(k3, (ksize, ksize, Hid, 2 * C2), jnp.float32)
            w2 = (w2 / math.sqrt(Hid * ksize * ksize)).reshape(ksize * ksize * Hid, 2 * C2)
            b2 = jax.random.normal(k4, (1, 2 * C2), jnp.float32) * 0.01
            gs = jnp.full((C,), gscale_init, jnp.float32)
            go = jnp.zeros((C,), jnp.float32)
            # hoisted global-affine math: scale = 0.1 * softplus(gs, beta=0.5)
            scale = 0.2 * jnp.log1p(jnp.exp(0.5 * gs))
            jac_const = jac_const + float(H * W) * jnp.sum(jnp.log(scale))
            idx = jax.random.permutation(k5, C)
            # F.conv2d with hard-perm weight w[i, idx[i]]=1 -> y[..., i]=v[..., idx[i]];
            # as a right-matmul that is P = eye[idx].T; fold scale/offset through it.
            P = jnp.eye(C, dtype=jnp.float32)[idx].T
            pscale = scale[:, None] * P
            go_p = go[idx][None, :]
            steps.append(dict(ksize=ksize,
                              w1=w1.astype(jnp.bfloat16), b1=b1,
                              w2=w2.astype(jnp.bfloat16), b2=b2,
                              pscale=pscale, go_p=go_p))
        params.append(dict(ln_w=ln_w, ln_b=ln_b, steps=steps, jac_const=jac_const))
    return params


def fastflow_forward(x_nchw, proj_list, params, scales, input_size):
    feats = synthetic_backbone(x_nchw, proj_list, scales)
    loss = 0.0
    amaps = []
    for feat, p in zip(feats, params):
        stat, amap_small = fastflow_scale(feat, p['ln_w'], p['ln_b'], p['steps'])
        # per-sample loss term = 0.5*sum(z^2) - (data jac + constant scale jac)
        loss = loss + jnp.mean(stat) - p['jac_const']
        N = feat.shape[0]
        # F.interpolate(..., mode='bilinear', align_corners=False) equivalent
        amaps.append(jax.image.resize(
            amap_small, (N, input_size, input_size), method='bilinear'))
    anomaly_map = jnp.mean(jnp.stack(amaps, axis=0), axis=0)[:, None, :, :]  # NCHW
    return {'loss': loss, 'anomaly_map': anomaly_map}


if __name__ == "__main__":
    key = jax.random.PRNGKey(0)
    N, S = 2, 32                    # batch, input_size
    channels = [8, 16]              # synthetic multi-scale feature channels
    scales = [4, 8]                 # feature reductions
    flow_steps = 4                  # alternates 3x3 / 1x1 (conv3x3_only=False)

    key, kx, kb, kp = jax.random.split(key, 4)
    x = jax.random.normal(kx, (N, 3, S, S), jnp.float32)        # NCHW like torch
    proj_list = [
        jax.random.normal(jax.random.fold_in(kb, i), (3, c), jnp.float32)
        / math.sqrt(3.0)
        for i, c in enumerate(channels)
    ]
    params = init_params(kp, channels, scales, S, flow_steps,
                         conv3x3_only=False, hidden_ratio=1.0)

    fwd = jax.jit(lambda inp: fastflow_forward(inp, proj_list, params, scales, S))
    out = fwd(x)
    out = jax.tree_util.tree_map(jax.block_until_ready, out)

    assert bool(jnp.isfinite(out['loss']))
    assert out['anomaly_map'].shape == (N, 1, S, S)
    assert bool(jnp.all(jnp.isfinite(out['anomaly_map'])))
    print("KERNEL_OK")
</pallas_src>

<mosaic_0001>
module attributes {stable_mosaic.version = 11 : i64} {
  func.func @kernel(%arg0: i32, %arg1: memref<1x8x8x8xf32, #tpu.memory_space<vmem>>, %arg2: memref<8x8x8xf32, #tpu.memory_space<vmem>>, %arg3: memref<8x8x8xf32, #tpu.memory_space<vmem>>, %arg4: memref<36x4xbf16, #tpu.memory_space<vmem>>, %arg5: memref<1x4xf32, #tpu.memory_space<vmem>>, %arg6: memref<36x8xbf16, #tpu.memory_space<vmem>>, %arg7: memref<1x8xf32, #tpu.memory_space<vmem>>, %arg8: memref<8x8xf32, #tpu.memory_space<vmem>>, %arg9: memref<1x8xf32, #tpu.memory_space<vmem>>, %arg10: memref<4x4xbf16, #tpu.memory_space<vmem>>, %arg11: memref<1x4xf32, #tpu.memory_space<vmem>>, %arg12: memref<4x8xbf16, #tpu.memory_space<vmem>>, %arg13: memref<1x8xf32, #tpu.memory_space<vmem>>, %arg14: memref<8x8xf32, #tpu.memory_space<vmem>>, %arg15: memref<1x8xf32, #tpu.memory_space<vmem>>, %arg16: memref<36x4xbf16, #tpu.memory_space<vmem>>, %arg17: memref<1x4xf32, #tpu.memory_space<vmem>>, %arg18: memref<36x8xbf16, #tpu.memory_space<vmem>>, %arg19: memref<1x8xf32, #tpu.memory_space<vmem>>, %arg20: memref<8x8xf32, #tpu.memory_space<vmem>>, %arg21: memref<1x8xf32, #tpu.memory_space<vmem>>, %arg22: memref<4x4xbf16, #tpu.memory_space<vmem>>, %arg23: memref<1x4xf32, #tpu.memory_space<vmem>>, %arg24: memref<4x8xbf16, #tpu.memory_space<vmem>>, %arg25: memref<1x8xf32, #tpu.memory_space<vmem>>, %arg26: memref<8x8xf32, #tpu.memory_space<vmem>>, %arg27: memref<1x8xf32, #tpu.memory_space<vmem>>, %arg28: memref<1x1x128xf32, #tpu.memory_space<vmem>>, %arg29: memref<1x8x8xf32, #tpu.memory_space<vmem>>) attributes {dimension_semantics = [#tpu.dimension_semantics<parallel>], iteration_bounds = array<i64: 2>, scalar_prefetch = 0 : i64, scratch_operands = 0 : i64, tpu.core_type = #tpu.core_type<tc>, window_params = [{transform_indices = @transform_0, window_bounds = array<i64: 1, 8, 8, 8>}, {pipeline_mode = #tpu.pipeline_mode<synchronous>, transform_indices = @transform_1, window_bounds = array<i64: 8, 8, 8>}, {pipeline_mode = #tpu.pipeline_mode<synchronous>, transform_indices = @transform_2, window_bounds = array<i64: 8, 8, 8>}, {pipeline_mode = #tpu.pipeline_mode<synchronous>, transform_indices = @transform_3, window_bounds = array<i64: 36, 4>}, {pipeline_mode = #tpu.pipeline_mode<synchronous>, transform_indices = @transform_4, window_bounds = array<i64: 1, 4>}, {pipeline_mode = #tpu.pipeline_mode<synchronous>, transform_indices = @transform_5, window_bounds = array<i64: 36, 8>}, {pipeline_mode = #tpu.pipeline_mode<synchronous>, transform_indices = @transform_6, window_bounds = array<i64: 1, 8>}, {pipeline_mode = #tpu.pipeline_mode<synchronous>, transform_indices = @transform_7, window_bounds = array<i64: 8, 8>}, {pipeline_mode = #tpu.pipeline_mode<synchronous>, transform_indices = @transform_8, window_bounds = array<i64: 1, 8>}, {pipeline_mode = #tpu.pipeline_mode<synchronous>, transform_indices = @transform_9, window_bounds = array<i64: 4, 4>}, {pipeline_mode = #tpu.pipeline_mode<synchronous>, transform_indices = @transform_10, window_bounds = array<i64: 1, 4>}, {pipeline_mode = #tpu.pipeline_mode<synchronous>, transform_indices = @transform_11, window_bounds = array<i64: 4, 8>}, {pipeline_mode = #tpu.pipeline_mode<synchronous>, transform_indices = @transform_12, window_bounds = array<i64: 1, 8>}, {pipeline_mode = #tpu.pipeline_mode<synchronous>, transform_indices = @transform_13, window_bounds = array<i64: 8, 8>}, {pipeline_mode = #tpu.pipeline_mode<synchronous>, transform_indices = @transform_14, window_bounds = array<i64: 1, 8>}, {pipeline_mode = #tpu.pipeline_mode<synchronous>, transform_indices = @transform_15, window_bounds = array<i64: 36, 4>}, {pipeline_mode = #tpu.pipeline_mode<synchronous>, transform_indices = @transform_16, window_bounds = array<i64: 1, 4>}, {pipeline_mode = #tpu.pipeline_mode<synchronous>, transform_indices = @transform_17, window_bounds = array<i64: 36, 8>}, {pipeline_mode = #tpu.pipeline_mode<synchronous>, transform_indices = @transform_18, window_bounds = array<i64: 1, 8>}, {pipeline_mode = #tpu.pipeline_mode<synchronous>, transform_indices = @transform_19, window_bounds = array<i64: 8, 8>}, {pipeline_mode = #tpu.pipeline_mode<synchronous>, transform_indices = @transform_20, window_bounds = array<i64: 1, 8>}, {pipeline_mode = #tpu.pipeline_mode<synchronous>, transform_indices = @transform_21, window_bounds = array<i64: 4, 4>}, {pipeline_mode = #tpu.pipeline_mode<synchronous>, transform_indices = @transform_22, window_bounds = array<i64: 1, 4>}, {pipeline_mode = #tpu.pipeline_mode<synchronous>, transform_indices = @transform_23, window_bounds = array<i64: 4, 8>}, {pipeline_mode = #tpu.pipeline_mode<synchronous>, transform_indices = @transform_24, window_bounds = array<i64: 1, 8>}, {pipeline_mode = #tpu.pipeline_mode<synchronous>, transform_indices = @transform_25, window_bounds = array<i64: 8, 8>}, {pipeline_mode = #tpu.pipeline_mode<synchronous>, transform_indices = @transform_26, window_bounds = array<i64: 1, 8>}, {transform_indices = @transform_27, window_bounds = array<i64: 1, 1, 128>}, {transform_indices = @transform_28, window_bounds = array<i64: 1, 8, 8>}]} {
    %c0 = arith.constant 0 : index
    %c0_0 = arith.constant 0 : index
    %c0_1 = arith.constant 0 : index
    %c0_2 = arith.constant 0 : index
    %0 = vector.load %arg1[%c0, %c0_0, %c0_1, %c0_2] : memref<1x8x8x8xf32, #tpu.memory_space<vmem>>, vector<1x8x8x8xf32>
    %1 = vector.shape_cast %0 : vector<1x8x8x8xf32> to vector<8x8x8xf32>
    %2 = vector.shape_cast %1 : vector<8x8x8xf32> to vector<1x8x8x8xf32>
    %cst = arith.constant dense<0.000000e+00> : vector<1xf32>
    %3 = vector.multi_reduction <add>, %2, %cst [1, 2, 3] : vector<1x8x8x8xf32> to vector<1xf32>
    %4 = vector.shape_cast %3 : vector<1xf32> to vector<1x1x1x1xf32>
    %5 = vector.extract %4[0, 0, 0, 0] : f32 from vector<1x1x1x1xf32>
    %6 = vector.broadcast %5 : f32 to vector<1x1x1xf32>
    %cst_3 = arith.constant 5.120000e+02 : f32
    %7 = vector.broadcast %cst_3 : f32 to vector<1x1x1xf32>
    %8 = arith.divf %6, %7 : vector<1x1x1xf32>
    %9 = vector.broadcast %8 : vector<1x1x1xf32> to vector<8x8x8xf32>
    %10 = arith.subf %1, %9 : vector<8x8x8xf32>
    %11 = arith.mulf %10, %10 : vector<8x8x8xf32>
    %12 = vector.shape_cast %11 : vector<8x8x8xf32> to vector<1x8x8x8xf32>
    %cst_4 = arith.constant dense<0.000000e+00> : vector<1xf32>
    %13 = vector.multi_reduction <add>, %12, %cst_4 [1, 2, 3] : vector<1x8x8x8xf32> to vector<1xf32>
    %14 = vector.shape_cast %13 : vector<1xf32> to vector<1x1x1x1xf32>
    %15 = vector.extract %14[0, 0, 0, 0] : f32 from vector<1x1x1x1xf32>
    %16 = vector.broadcast %15 : f32 to vector<1x1x1xf32>
    %cst_5 = arith.constant 5.120000e+02 : f32
    %17 = vector.broadcast %cst_5 : f32 to vector<1x1x1xf32>
    %18 = arith.divf %16, %17 : vector<1x1x1xf32>
    %19 = vector.broadcast %8 : vector<1x1x1xf32> to vector<8x8x8xf32>
    %20 = arith.subf %1, %19 : vector<8x8x8xf32>
    %cst_6 = arith.constant 9.99999974E-6 : f32
    %21 = vector.broadcast %cst_6 : f32 to vector<1x1x1xf32>
    %22 = arith.addf %18, %21 : vector<1x1x1xf32>
    %23 = math.rsqrt %22 : vector<1x1x1xf32>
    %24 = vector.broadcast %23 : vector<1x1x1xf32> to vector<8x8x8xf32>
    %25 = arith.mulf %20, %24 : vector<8x8x8xf32>
    %c0_7 = arith.constant 0 : index
    %c0_8 = arith.constant 0 : index
    %c0_9 = arith.constant 0 : index
    %26 = vector.load %arg2[%c0_7, %c0_8, %c0_9] : memref<8x8x8xf32, #tpu.memory_space<vmem>>, vector<8x8x8xf32>
    %27 = arith.mulf %25, %26 : vector<8x8x8xf32>
    %c0_10 = arith.constant 0 : index
    %c0_11 = arith.constant 0 : index
    %c0_12 = arith.constant 0 : index
    %28 = vector.load %arg3[%c0_10, %c0_11, %c0_12] : memref<8x8x8xf32, #tpu.memory_space<vmem>>, vector<8x8x8xf32>
    %29 = arith.addf %27, %28 : vector<8x8x8xf32>
    %30 = vector.extract_strided_slice %29 {offsets = [0, 0, 0], sizes = [8, 8, 4], strides = [1, 1, 1]} : vector<8x8x8xf32> to vector<8x8x4xf32>
    %31 = vector.extract_strided_slice %29 {offsets = [0, 0, 4], sizes = [8, 8, 4], strides = [1, 1, 1]} : vector<8x8x8xf32> to vector<8x8x4xf32>
    %32 = arith.truncf %30 : vector<8x8x4xf32> to vector<8x8x4xbf16>
    %cst_13 = arith.constant 0.000000e+00 : bf16
    %33 = vector.broadcast %cst_13 : bf16 to vector<1x8x4xbf16>
    %cst_14 = arith.constant 0.000000e+00 : bf16
    %34 = vector.broadcast %cst_14 : bf16 to vector<10x1x4xbf16>
    %35 = tpu.concatenate %33, %32, %33 in 0 : vector<1x8x4xbf16>, vector<8x8x4xbf16>, vector<1x8x4xbf16> -> vector<10x8x4xbf16>
    %36 = tpu.concatenate %34, %35, %34 in 1 : vector<10x1x4xbf16>, vector<10x8x4xbf16>, vector<10x1x4xbf16> -> vector<10x10x4xbf16>
    %37 = vector.extract_strided_slice %36 {offsets = [0, 0, 0], sizes = [8, 8, 4], strides = [1, 1, 1]} : vector<10x10x4xbf16> to vector<8x8x4xbf16>
    %38 = vector.extract_strided_slice %36 {offsets = [0, 1, 0], sizes = [8, 8, 4], strides = [1, 1, 1]} : vector<10x10x4xbf16> to vector<8x8x4xbf16>
    %39 = vector.extract_strided_slice %36 {offsets = [0, 2, 0], sizes = [8, 8, 4], strides = [1, 1, 1]} : vector<10x10x4xbf16> to vector<8x8x4xbf16>
    %40 = vector.extract_strided_slice %36 {offsets = [1, 0, 0], sizes = [8, 8, 4], strides = [1, 1, 1]} : vector<10x10x4xbf16> to vector<8x8x4xbf16>
    %41 = vector.extract_strided_slice %36 {offsets = [1, 1, 0], sizes = [8, 8, 4], strides = [1, 1, 1]} : vector<10x10x4xbf16> to vector<8x8x4xbf16>
    %42 = vector.extract_strided_slice %36 {offsets = [1, 2, 0], sizes = [8, 8, 4], strides = [1, 1, 1]} : vector<10x10x4xbf16> to vector<8x8x4xbf16>
    %43 = vector.extract_strided_slice %36 {offsets = [2, 0, 0], sizes = [8, 8, 4], strides = [1, 1, 1]} : vector<10x10x4xbf16> to vector<8x8x4xbf16>
    %44 = vector.extract_strided_slice %36 {offsets = [2, 1, 0], sizes = [8, 8, 4], strides = [1, 1, 1]} : vector<10x10x4xbf16> to vector<8x8x4xbf16>
    %45 = vector.extract_strided_slice %36 {offsets = [2, 2, 0], sizes = [8, 8, 4], strides = [1, 1, 1]} : vector<10x10x4xbf16> to vector<8x8x4xbf16>
    %46 = tpu.concatenate %37, %38, %39, %40, %41, %42, %43, %44, %45 in 2 : vector<8x8x4xbf16>, vector<8x8x4xbf16>, vector<8x8x4xbf16>, vector<8x8x4xbf16>, vector<8x8x4xbf16>, vector<8x8x4xbf16>, vector<8x8x4xbf16>, vector<8x8x4xbf16>, vector<8x8x4xbf16> -> vector<8x8x36xbf16>
    %47 = vector.shape_cast %46 : vector<8x8x36xbf16> to vector<64x36xbf16>
    %c0_15 = arith.constant 0 : index
    %c0_16 = arith.constant 0 : index
    %48 = vector.load %arg4[%c0_15, %c0_16] : memref<36x4xbf16, #tpu.memory_space<vmem>>, vector<36x4xbf16>
    %cst_17 = arith.constant dense<0.000000e+00> : vector<64x4xf32>
    %49 = tpu.matmul %47, %48, %cst_17 {dimension_numbers = #tpu.dot_dimension_numbers<[1], [0], [0], [1], [0, 0, 1, 1], [], []>} : vector<64x36xbf16>, vector<36x4xbf16>, vector<64x4xf32> -> vector<64x4xf32>
    %c0_18 = arith.constant 0 : index
    %c0_19 = arith.constant 0 : index
    %50 = vector.load %arg5[%c0_18, %c0_19] : memref<1x4xf32, #tpu.memory_space<vmem>>, vector<1x4xf32>
    %51 = vector.broadcast %50 : vector<1x4xf32> to vector<64x4xf32>
    %52 = arith.addf %49, %51 : vector<64x4xf32>
    %53 = vector.shape_cast %52 : vector<64x4xf32> to vector<8x8x4xf32>
    %cst_20 = arith.constant 0.000000e+00 : f32
    %54 = vector.broadcast %cst_20 : f32 to vector<8x8x4xf32>
    %55 = arith.maximumf %53, %54 : vector<8x8x4xf32>
    %56 = arith.truncf %55 : vector<8x8x4xf32> to vector<8x8x4xbf16>
    %cst_21 = arith.constant 0.000000e+00 : bf16
    %57 = vector.broadcast %cst_21 : bf16 to vector<1x8x4xbf16>
    %cst_22 = arith.constant 0.000000e+00 : bf16
    %58 = vector.broadcast %cst_22 : bf16 to vector<10x1x4xbf16>
    %59 = tpu.concatenate %57, %56, %57 in 0 : vector<1x8x4xbf16>, vector<8x8x4xbf16>, vector<1x8x4xbf16> -> vector<10x8x4xbf16>
    %60 = tpu.concatenate %58, %59, %58 in 1 : vector<10x1x4xbf16>, vector<10x8x4xbf16>, vector<10x1x4xbf16> -> vector<10x10x4xbf16>
    %61 = vector.extract_strided_slice %60 {offsets = [0, 0, 0], sizes = [8, 8, 4], strides = [1, 1, 1]} : vector<10x10x4xbf16> to vector<8x8x4xbf16>
    %62 = vector.extract_strided_slice %60 {offsets = [0, 1, 0], sizes = [8, 8, 4], strides = [1, 1, 1]} : vector<10x10x4xbf16> to vector<8x8x4xbf16>
    %63 = vector.extract_strided_slice %60 {offsets = [0, 2, 0], sizes = [8, 8, 4], strides = [1, 1, 1]} : vector<10x10x4xbf16> to vector<8x8x4xbf16>
    %64 = vector.extract_strided_slice %60 {offsets = [1, 0, 0], sizes = [8, 8, 4], strides = [1, 1, 1]} : vector<10x10x4xbf16> to vector<8x8x4xbf16>
    %65 = vector.extract_strided_slice %60 {offsets = [1, 1, 0], sizes = [8, 8, 4], strides = [1, 1, 1]} : vector<10x10x4xbf16> to vector<8x8x4xbf16>
    %66 = vector.extract_strided_slice %60 {offsets = [1, 2, 0], sizes = [8, 8, 4], strides = [1, 1, 1]} : vector<10x10x4xbf16> to vector<8x8x4xbf16>
    %67 = vector.extract_strided_slice %60 {offsets = [2, 0, 0], sizes = [8, 8, 4], strides = [1, 1, 1]} : vector<10x10x4xbf16> to vector<8x8x4xbf16>
    %68 = vector.extract_strided_slice %60 {offsets = [2, 1, 0], sizes = [8, 8, 4], strides = [1, 1, 1]} : vector<10x10x4xbf16> to vector<8x8x4xbf16>
    %69 = vector.extract_strided_slice %60 {offsets = [2, 2, 0], sizes = [8, 8, 4], strides = [1, 1, 1]} : vector<10x10x4xbf16> to vector<8x8x4xbf16>
    %70 = tpu.concatenate %61, %62, %63, %64, %65, %66, %67, %68, %69 in 2 : vector<8x8x4xbf16>, vector<8x8x4xbf16>, vector<8x8x4xbf16>, vector<8x8x4xbf16>, vector<8x8x4xbf16>, vector<8x8x4xbf16>, vector<8x8x4xbf16>, vector<8x8x4xbf16>, vector<8x8x4xbf16> -> vector<8x8x36xbf16>
    %71 = vector.shape_cast %70 : vector<8x8x36xbf16> to vector<64x36xbf16>
    %c0_23 = arith.constant 0 : index
    %c0_24 = arith.constant 0 : index
    %72 = vector.load %arg6[%c0_23, %c0_24] : memref<36x8xbf16, #tpu.memory_space<vmem>>, vector<36x8xbf16>
    %cst_25 = arith.constant dense<0.000000e+00> : vector<64x8xf32>
    %73 = tpu.matmul %71, %72, %cst_25 {dimension_numbers = #tpu.dot_dimension_numbers<[1], [0], [0], [1], [0, 0, 1, 1], [], []>} : vector<64x36xbf16>, vector<36x8xbf16>, vector<64x8xf32> -> vector<64x8xf32>
    %c0_26 = arith.constant 0 : index
    %c0_27 = arith.constant 0 : index
    %74 = vector.load %arg7[%c0_26, %c0_27] : memref<1x8xf32, #tpu.memory_space<vmem>>, vector<1x8xf32>
    %75 = vector.broadcast %74 : vector<1x8xf32> to vector<64x8xf32>
    %76 = arith.addf %73, %75 : vector<64x8xf32>
    %77 = vector.shape_cast %76 : vector<64x8xf32> to vector<8x8x8xf32>
    %cst_28 = arith.constant 1.000000e-01 : f32
    %78 = vector.broadcast %cst_28 : f32 to vector<8x8x8xf32>
    %79 = arith.mulf %77, %78 : vector<8x8x8xf32>
    %80 = vector.extract_strided_slice %79 {offsets = [0, 0, 0], sizes = [8, 8, 4], strides = [1, 1, 1]} : vector<8x8x8xf32> to vector<8x8x4xf32>
    %81 = math.tanh %80 : vector<8x8x4xf32>
    %cst_29 = arith.constant 2.000000e+00 : f32
    %82 = vector.broadcast %cst_29 : f32 to vector<8x8x4xf32>
    %83 = arith.mulf %82, %81 : vector<8x8x4xf32>
    %84 = math.exp %83 : vector<8x8x4xf32>
    %85 = arith.mulf %31, %84 : vector<8x8x4xf32>
    %86 = vector.extract_strided_slice %79 {offsets = [0, 0, 4], sizes = [8, 8, 4], strides = [1, 1, 1]} : vector<8x8x8xf32> to vector<8x8x4xf32>
    %87 = arith.addf %85, %86 : vector<8x8x4xf32>
    %88 = vector.shape_cast %83 : vector<8x8x4xf32> to vector<1x8x8x4xf32>
    %cst_30 = arith.constant dense<0.000000e+00> : vector<1xf32>
    %89 = vector.multi_reduction <add>, %88, %cst_30 [1, 2, 3] : vector<1x8x8x4xf32> to vector<1xf32>
    %90 = vector.shape_cast %89 : vector<1xf32> to vector<1x1x1x1xf32>
    %91 = vector.extract %90[0, 0, 0, 0] : f32 from vector<1x1x1x1xf32>
    %cst_31 = arith.constant 0.000000e+00 : f32
    %92 = arith.addf %cst_31, %91 : f32
    %93 = tpu.concatenate %30, %87 in 2 : vector<8x8x4xf32>, vector<8x8x4xf32> -> vector<8x8x8xf32>
    %94 = vector.shape_cast %93 : vector<8x8x8xf32> to vector<64x8xf32>
    %c0_32 = arith.constant 0 : index
    %c0_33 = arith.constant 0 : index
    %95 = vector.load %arg8[%c0_32, %c0_33] : memref<8x8xf32, #tpu.memory_space<vmem>>, vector<8x8xf32>
    %cst_34 = arith.constant dense<0.000000e+00> : vector<64x8xf32>
    %96 = tpu.matmul %94, %95, %cst_34 {dimension_numbers = #tpu.dot_dimension_numbers<[1], [0], [0], [1], [0, 0, 1, 1], [], []>} : vector<64x8xf32>, vector<8x8xf32>, vector<64x8xf32> -> vector<64x8xf32>
    %c0_35 = arith.constant 0 : index
    %c0_36 = arith.constant 0 : index
    %97 = vector.load %arg9[%c0_35, %c0_36] : memref<1x8xf32, #tpu.memory_space<vmem>>, vector<1x8xf32>
    %98 = vector.broadcast %97 : vector<1x8xf32> to vector<64x8xf32>
    %99 = arith.addf %96, %98 : vector<64x8xf32>
    %100 = vector.shape_cast %99 : vector<64x8xf32> to vector<8x8x8xf32>
    %101 = vector.extract_strided_slice %100 {offsets = [0, 0, 0], sizes = [8, 8, 4], strides = [1, 1, 1]} : vector<8x8x8xf32> to vector<8x8x4xf32>
    %102 = vector.extract_strided_slice %100 {offsets = [0, 0, 4], sizes = [8, 8, 4], strides = [1, 1, 1]} : vector<8x8x8xf32> to vector<8x8x4xf32>
    %103 = arith.truncf %101 : vector<8x8x4xf32> to vector<8x8x4xbf16>
    %104 = vector.shape_cast %103 : vector<8x8x4xbf16> to vector<64x4xbf16>
    %c0_37 = arith.constant 0 : index
    %c0_38 = arith.constant 0 : index
    %105 = vector.load %arg10[%c0_37, %c0_38] : memref<4x4xbf16, #tpu.memory_space<vmem>>, vector<4x4xbf16>
    %cst_39 = arith.constant dense<0.000000e+00> : vector<64x4xf32>
    %106 = tpu.matmul %104, %105, %cst_39 {dimension_numbers = #tpu.dot_dimension_numbers<[1], [0], [0], [1], [0, 0, 1, 1], [], []>} : vector<64x4xbf16>, vector<4x4xbf16>, vector<64x4xf32> -> vector<64x4xf32>
    %c0_40 = arith.constant 0 : index
    %c0_41 = arith.constant 0 : index
    %107 = vector.load %arg11[%c0_40, %c0_41] : memref<1x4xf32, #tpu.memory_space<vmem>>, vector<1x4xf32>
    %108 = vector.broadcast %107 : vector<1x4xf32> to vector<64x4xf32>
    %109 = arith.addf %106, %108 : vector<64x4xf32>
    %110 = vector.shape_cast %109 : vector<64x4xf32> to vector<8x8x4xf32>
    %cst_42 = arith.constant 0.000000e+00 : f32
    %111 = vector.broadcast %cst_42 : f32 to vector<8x8x4xf32>
    %112 = arith.maximumf %110, %111 : vector<8x8x4xf32>
    %113 = arith.truncf %112 : vector<8x8x4xf32> to vector<8x8x4xbf16>
    %114 = vector.shape_cast %113 : vector<8x8x4xbf16> to vector<64x4xbf16>
    %c0_43 = arith.constant 0 : index
    %c0_44 = arith.constant 0 : index
    %115 = vector.load %arg12[%c0_43, %c0_44] : memref<4x8xbf16, #tpu.memory_space<vmem>>, vector<4x8xbf16>
    %cst_45 = arith.constant dense<0.000000e+00> : vector<64x8xf32>
    %116 = tpu.matmul %114, %115, %cst_45 {dimension_numbers = #tpu.dot_dimension_numbers<[1], [0], [0], [1], [0, 0, 1, 1], [], []>} : vector<64x4xbf16>, vector<4x8xbf16>, vector<64x8xf32> -> vector<64x8xf32>
    %c0_46 = arith.constant 0 : index
    %c0_47 = arith.constant 0 : index
    %117 = vector.load %arg13[%c0_46, %c0_47] : memref<1x8xf32, #tpu.memory_space<vmem>>, vector<1x8xf32>
    %118 = vector.broadcast %117 : vector<1x8xf32> to vector<64x8xf32>
    %119 = arith.addf %116, %118 : vector<64x8xf32>
    %120 = vector.shape_cast %119 : vector<64x8xf32> to vector<8x8x8xf32>
    %cst_48 = arith.constant 1.000000e-01 : f32
    %121 = vector.broadcast %cst_48 : f32 to vector<8x8x8xf32>
    %122 = arith.mulf %120, %121 : vector<8x8x8xf32>
    %123 = vector.extract_strided_slice %122 {offsets = [0, 0, 0], sizes = [8, 8, 4], strides = [1, 1, 1]} : vector<8x8x8xf32> to vector<8x8x4xf32>
    %124 = math.tanh %123 : vector<8x8x4xf32>
    %cst_49 = arith.constant 2.000000e+00 : f32
    %125 = vector.broadcast %cst_49 : f32 to vector<8x8x4xf32>
    %126 = arith.mulf %125, %124 : vector<8x8x4xf32>
    %127 = math.exp %126 : vector<8x8x4xf32>
    %128 = arith.mulf %102, %127 : vector<8x8x4xf32>
    %129 = vector.extract_strided_slice %122 {offsets = [0, 0, 4], sizes = [8, 8, 4], strides = [1, 1, 1]} : vector<8x8x8xf32> to vector<8x8x4xf32>
    %130 = arith.addf %128, %129 : vector<8x8x4xf32>
    %131 = vector.shape_cast %126 : vector<8x8x4xf32> to vector<1x8x8x4xf32>
    %cst_50 = arith.constant dense<0.000000e+00> : vector<1xf32>
    %132 = vector.multi_reduction <add>, %131, %cst_50 [1, 2, 3] : vector<1x8x8x4xf32> to vector<1xf32>
    %133 = vector.shape_cast %132 : vector<1xf32> to vector<1x1x1x1xf32>
    %134 = vector.extract %133[0, 0, 0, 0] : f32 from vector<1x1x1x1xf32>
    %135 = arith.addf %92, %134 : f32
    %136 = tpu.concatenate %101, %130 in 2 : vector<8x8x4xf32>, vector<8x8x4xf32> -> vector<8x8x8xf32>
    %137 = vector.shape_cast %136 : vector<8x8x8xf32> to vector<64x8xf32>
    %c0_51 = arith.constant 0 : index
    %c0_52 = arith.constant 0 : index
    %138 = vector.load %arg14[%c0_51, %c0_52] : memref<8x8xf32, #tpu.memory_space<vmem>>, vector<8x8xf32>
    %cst_53 = arith.constant dense<0.000000e+00> : vector<64x8xf32>
    %139 = tpu.matmul %137, %138, %cst_53 {dimension_numbers = #tpu.dot_dimension_numbers<[1], [0], [0], [1], [0, 0, 1, 1], [], []>} : vector<64x8xf32>, vector<8x8xf32>, vector<64x8xf32> -> vector<64x8xf32>
    %c0_54 = arith.constant 0 : index
    %c0_55 = arith.constant 0 : index
    %140 = vector.load %arg15[%c0_54, %c0_55] : memref<1x8xf32, #tpu.memory_space<vmem>>, vector<1x8xf32>
    %141 = vector.broadcast %140 : vector<1x8xf32> to vector<64x8xf32>
    %142 = arith.addf %139, %141 : vector<64x8xf32>
    %143 = vector.shape_cast %142 : vector<64x8xf32> to vector<8x8x8xf32>
    %144 = vector.extract_strided_slice %143 {offsets = [0, 0, 0], sizes = [8, 8, 4], strides = [1, 1, 1]} : vector<8x8x8xf32> to vector<8x8x4xf32>
    %145 = vector.extract_strided_slice %143 {offsets = [0, 0, 4], sizes = [8, 8, 4], strides = [1, 1, 1]} : vector<8x8x8xf32> to vector<8x8x4xf32>
    %146 = arith.truncf %144 : vector<8x8x4xf32> to vector<8x8x4xbf16>
    %cst_56 = arith.constant 0.000000e+00 : bf16
    %147 = vector.broadcast %cst_56 : bf16 to vector<1x8x4xbf16>
    %cst_57 = arith.constant 0.000000e+00 : bf16
    %148 = vector.broadcast %cst_57 : bf16 to vector<10x1x4xbf16>
    %149 = tpu.concatenate %147, %146, %147 in 0 : vector<1x8x4xbf16>, vector<8x8x4xbf16>, vector<1x8x4xbf16> -> vector<10x8x4xbf16>
    %150 = tpu.concatenate %148, %149, %148 in 1 : vector<10x1x4xbf16>, vector<10x8x4xbf16>, vector<10x1x4xbf16> -> vector<10x10x4xbf16>
    %151 = vector.extract_strided_slice %150 {offsets = [0, 0, 0], sizes = [8, 8, 4], strides = [1, 1, 1]} : vector<10x10x4xbf16> to vector<8x8x4xbf16>
    %152 = vector.extract_strided_slice %150 {offsets = [0, 1, 0], sizes = [8, 8, 4], strides = [1, 1, 1]} : vector<10x10x4xbf16> to vector<8x8x4xbf16>
    %153 = vector.extract_strided_slice %150 {offsets = [0, 2, 0], sizes = [8, 8, 4], strides = [1, 1, 1]} : vector<10x10x4xbf16> to vector<8x8x4xbf16>
    %154 = vector.extract_strided_slice %150 {offsets = [1, 0, 0], sizes = [8, 8, 4], strides = [1, 1, 1]} : vector<10x10x4xbf16> to vector<8x8x4xbf16>
    %155 = vector.extract_strided_slice %150 {offsets = [1, 1, 0], sizes = [8, 8, 4], strides = [1, 1, 1]} : vector<10x10x4xbf16> to vector<8x8x4xbf16>
    %156 = vector.extract_strided_slice %150 {offsets = [1, 2, 0], sizes = [8, 8, 4], strides = [1, 1, 1]} : vector<10x10x4xbf16> to vector<8x8x4xbf16>
    %157 = vector.extract_strided_slice %150 {offsets = [2, 0, 0], sizes = [8, 8, 4], strides = [1, 1, 1]} : vector<10x10x4xbf16> to vector<8x8x4xbf16>
    %158 = vector.extract_strided_slice %150 {offsets = [2, 1, 0], sizes = [8, 8, 4], strides = [1, 1, 1]} : vector<10x10x4xbf16> to vector<8x8x4xbf16>
    %159 = vector.extract_strided_slice %150 {offsets = [2, 2, 0], sizes = [8, 8, 4], strides = [1, 1, 1]} : vector<10x10x4xbf16> to vector<8x8x4xbf16>
    %160 = tpu.concatenate %151, %152, %153, %154, %155, %156, %157, %158, %159 in 2 : vector<8x8x4xbf16>, vector<8x8x4xbf16>, vector<8x8x4xbf16>, vector<8x8x4xbf16>, vector<8x8x4xbf16>, vector<8x8x4xbf16>, vector<8x8x4xbf16>, vector<8x8x4xbf16>, vector<8x8x4xbf16> -> vector<8x8x36xbf16>
    %161 = vector.shape_cast %160 : vector<8x8x36xbf16> to vector<64x36xbf16>
    %c0_58 = arith.constant 0 : index
    %c0_59 = arith.constant 0 : index
    %162 = vector.load %arg16[%c0_58, %c0_59] : memref<36x4xbf16, #tpu.memory_space<vmem>>, vector<36x4xbf16>
    %cst_60 = arith.constant dense<0.000000e+00> : vector<64x4xf32>
    %163 = tpu.matmul %161, %162, %cst_60 {dimension_numbers = #tpu.dot_dimension_numbers<[1], [0], [0], [1], [0, 0, 1, 1], [], []>} : vector<64x36xbf16>, vector<36x4xbf16>, vector<64x4xf32> -> vector<64x4xf32>
    %c0_61 = arith.constant 0 : index
    %c0_62 = arith.constant 0 : index
    %164 = vector.load %arg17[%c0_61, %c0_62] : memref<1x4xf32, #tpu.memory_space<vmem>>, vector<1x4xf32>
    %165 = vector.broadcast %164 : vector<1x4xf32> to vector<64x4xf32>
    %166 = arith.addf %163, %165 : vector<64x4xf32>
    %167 = vector.shape_cast %166 : vector<64x4xf32> to vector<8x8x4xf32>
    %cst_63 = arith.constant 0.000000e+00 : f32
    %168 = vector.broadcast %cst_63 : f32 to vector<8x8x4xf32>
    %169 = arith.maximumf %167, %168 : vector<8x8x4xf32>
    %170 = arith.truncf %169 : vector<8x8x4xf32> to vector<8x8x4xbf16>
    %cst_64 = arith.constant 0.000000e+00 : bf16
    %171 = vector.broadcast %cst_64 : bf16 to vector<1x8x4xbf16>
    %cst_65 = arith.constant 0.000000e+00 : bf16
    %172 = vector.broadcast %cst_65 : bf16 to vector<10x1x4xbf16>
    %173 = tpu.concatenate %171, %170, %171 in 0 : vector<1x8x4xbf16>, vector<8x8x4xbf16>, vector<1x8x4xbf16> -> vector<10x8x4xbf16>
    %174 = tpu.concatenate %172, %173, %172 in 1 : vector<10x1x4xbf16>, vector<10x8x4xbf16>, vector<10x1x4xbf16> -> vector<10x10x4xbf16>
    %175 = vector.extract_strided_slice %174 {offsets = [0, 0, 0], sizes = [8, 8, 4], strides = [1, 1, 1]} : vector<10x10x4xbf16> to vector<8x8x4xbf16>
    %176 = vector.extract_strided_slice %174 {offsets = [0, 1, 0], sizes = [8, 8, 4], strides = [1, 1, 1]} : vector<10x10x4xbf16> to vector<8x8x4xbf16>
    %177 = vector.extract_strided_slice %174 {offsets = [0, 2, 0], sizes = [8, 8, 4], strides = [1, 1, 1]} : vector<10x10x4xbf16> to vector<8x8x4xbf16>
    %178 = vector.extract_strided_slice %174 {offsets = [1, 0, 0], sizes = [8, 8, 4], strides = [1, 1, 1]} : vector<10x10x4xbf16> to vector<8x8x4xbf16>
    %179 = vector.extract_strided_slice %174 {offsets = [1, 1, 0], sizes = [8, 8, 4], strides = [1, 1, 1]} : vector<10x10x4xbf16> to vector<8x8x4xbf16>
    %180 = vector.extract_strided_slice %174 {offsets = [1, 2, 0], sizes = [8, 8, 4], strides = [1, 1, 1]} : vector<10x10x4xbf16> to vector<8x8x4xbf16>
    %181 = vector.extract_strided_slice %174 {offsets = [2, 0, 0], sizes = [8, 8, 4], strides = [1, 1, 1]} : vector<10x10x4xbf16> to vector<8x8x4xbf16>
    %182 = vector.extract_strided_slice %174 {offsets = [2, 1, 0], sizes = [8, 8, 4], strides = [1, 1, 1]} : vector<10x10x4xbf16> to vector<8x8x4xbf16>
    %183 = vector.extract_strided_slice %174 {offsets = [2, 2, 0], sizes = [8, 8, 4], strides = [1, 1, 1]} : vector<10x10x4xbf16> to vector<8x8x4xbf16>
    %184 = tpu.concatenate %175, %176, %177, %178, %179, %180, %181, %182, %183 in 2 : vector<8x8x4xbf16>, vector<8x8x4xbf16>, vector<8x8x4xbf16>, vector<8x8x4xbf16>, vector<8x8x4xbf16>, vector<8x8x4xbf16>, vector<8x8x4xbf16>, vector<8x8x4xbf16>, vector<8x8x4xbf16> -> vector<8x8x36xbf16>
    %185 = vector.shape_cast %184 : vector<8x8x36xbf16> to vector<64x36xbf16>
    %c0_66 = arith.constant 0 : index
    %c0_67 = arith.constant 0 : index
    %186 = vector.load %arg18[%c0_66, %c0_67] : memref<36x8xbf16, #tpu.memory_space<vmem>>, vector<36x8xbf16>
    %cst_68 = arith.constant dense<0.000000e+00> : vector<64x8xf32>
    %187 = tpu.matmul %185, %186, %cst_68 {dimension_numbers = #tpu.dot_dimension_numbers<[1], [0], [0], [1], [0, 0, 1, 1], [], []>} : vector<64x36xbf16>, vector<36x8xbf16>, vector<64x8xf32> -> vector<64x8xf32>
    %c0_69 = arith.constant 0 : index
    %c0_70 = arith.constant 0 : index
    %188 = vector.load %arg19[%c0_69, %c0_70] : memref<1x8xf32, #tpu.memory_space<vmem>>, vector<1x8xf32>
    %189 = vector.broadcast %188 : vector<1x8xf32> to vector<64x8xf32>
    %190 = arith.addf %187, %189 : vector<64x8xf32>
    %191 = vector.shape_cast %190 : vector<64x8xf32> to vector<8x8x8xf32>
    %cst_71 = arith.constant 1.000000e-01 : f32
    %192 = vector.broadcast %cst_71 : f32 to vector<8x8x8xf32>
    %193 = arith.mulf %191, %192 : vector<8x8x8xf32>
    %194 = vector.extract_strided_slice %193 {offsets = [0, 0, 0], sizes = [8, 8, 4], strides = [1, 1, 1]} : vector<8x8x8xf32> to vector<8x8x4xf32>
    %195 = math.tanh %194 : vector<8x8x4xf32>
    %cst_72 = arith.constant 2.000000e+00 : f32
    %196 = vector.broadcast %cst_72 : f32 to vector<8x8x4xf32>
    %197 = arith.mulf %196, %195 : vector<8x8x4xf32>
    %198 = math.exp %197 : vector<8x8x4xf32>
    %199 = arith.mulf %145, %198 : vector<8x8x4xf32>
    %200 = vector.extract_strided_slice %193 {offsets = [0, 0, 4], sizes = [8, 8, 4], strides = [1, 1, 1]} : vector<8x8x8xf32> to vector<8x8x4xf32>
    %201 = arith.addf %199, %200 : vector<8x8x4xf32>
    %202 = vector.shape_cast %197 : vector<8x8x4xf32> to vector<1x8x8x4xf32>
    %cst_73 = arith.constant dense<0.000000e+00> : vector<1xf32>
    %203 = vector.multi_reduction <add>, %202, %cst_73 [1, 2, 3] : vector<1x8x8x4xf32> to vector<1xf32>
    %204 = vector.shape_cast %203 : vector<1xf32> to vector<1x1x1x1xf32>
    %205 = vector.extract %204[0, 0, 0, 0] : f32 from vector<1x1x1x1xf32>
    %206 = arith.addf %135, %205 : f32
    %207 = tpu.concatenate %144, %201 in 2 : vector<8x8x4xf32>, vector<8x8x4xf32> -> vector<8x8x8xf32>
    %208 = vector.shape_cast %207 : vector<8x8x8xf32> to vector<64x8xf32>
    %c0_74 = arith.constant 0 : index
    %c0_75 = arith.constant 0 : index
    %209 = vector.load %arg20[%c0_74, %c0_75] : memref<8x8xf32, #tpu.memory_space<vmem>>, vector<8x8xf32>
    %cst_76 = arith.constant dense<0.000000e+00> : vector<64x8xf32>
    %210 = tpu.matmul %208, %209, %cst_76 {dimension_numbers = #tpu.dot_dimension_numbers<[1], [0], [0], [1], [0, 0, 1, 1], [], []>} : vector<64x8xf32>, vector<8x8xf32>, vector<64x8xf32> -> vector<64x8xf32>
    %c0_77 = arith.constant 0 : index
    %c0_78 = arith.constant 0 : index
    %211 = vector.load %arg21[%c0_77, %c0_78] : memref<1x8xf32, #tpu.memory_space<vmem>>, vector<1x8xf32>
    %212 = vector.broadcast %211 : vector<1x8xf32> to vector<64x8xf32>
    %213 = arith.addf %210, %212 : vector<64x8xf32>
    %214 = vector.shape_cast %213 : vector<64x8xf32> to vector<8x8x8xf32>
    %215 = vector.extract_strided_slice %214 {offsets = [0, 0, 0], sizes = [8, 8, 4], strides = [1, 1, 1]} : vector<8x8x8xf32> to vector<8x8x4xf32>
    %216 = vector.extract_strided_slice %214 {offsets = [0, 0, 4], sizes = [8, 8, 4], strides = [1, 1, 1]} : vector<8x8x8xf32> to vector<8x8x4xf32>
    %217 = arith.truncf %215 : vector<8x8x4xf32> to vector<8x8x4xbf16>
    %218 = vector.shape_cast %217 : vector<8x8x4xbf16> to vector<64x4xbf16>
    %c0_79 = arith.constant 0 : index
    %c0_80 = arith.constant 0 : index
    %219 = vector.load %arg22[%c0_79, %c0_80] : memref<4x4xbf16, #tpu.memory_space<vmem>>, vector<4x4xbf16>
    %cst_81 = arith.constant dense<0.000000e+00> : vector<64x4xf32>
    %220 = tpu.matmul %218, %219, %cst_81 {dimension_numbers = #tpu.dot_dimension_numbers<[1], [0], [0], [1], [0, 0, 1, 1], [], []>} : vector<64x4xbf16>, vector<4x4xbf16>, vector<64x4xf32> -> vector<64x4xf32>
    %c0_82 = arith.constant 0 : index
    %c0_83 = arith.constant 0 : index
    %221 = vector.load %arg23[%c0_82, %c0_83] : memref<1x4xf32, #tpu.memory_space<vmem>>, vector<1x4xf32>
    %222 = vector.broadcast %221 : vector<1x4xf32> to vector<64x4xf32>
    %223 = arith.addf %220, %222 : vector<64x4xf32>
    %224 = vector.shape_cast %223 : vector<64x4xf32> to vector<8x8x4xf32>
    %cst_84 = arith.constant 0.000000e+00 : f32
    %225 = vector.broadcast %cst_84 : f32 to vector<8x8x4xf32>
    %226 = arith.maximumf %224, %225 : vector<8x8x4xf32>
    %227 = arith.truncf %226 : vector<8x8x4xf32> to vector<8x8x4xbf16>
    %228 = vector.shape_cast %227 : vector<8x8x4xbf16> to vector<64x4xbf16>
    %c0_85 = arith.constant 0 : index
    %c0_86 = arith.constant 0 : index
    %229 = vector.load %arg24[%c0_85, %c0_86] : memref<4x8xbf16, #tpu.memory_space<vmem>>, vector<4x8xbf16>
    %cst_87 = arith.constant dense<0.000000e+00> : vector<64x8xf32>
    %230 = tpu.matmul %228, %229, %cst_87 {dimension_numbers = #tpu.dot_dimension_numbers<[1], [0], [0], [1], [0, 0, 1, 1], [], []>} : vector<64x4xbf16>, vector<4x8xbf16>, vector<64x8xf32> -> vector<64x8xf32>
    %c0_88 = arith.constant 0 : index
    %c0_89 = arith.constant 0 : index
    %231 = vector.load %arg25[%c0_88, %c0_89] : memref<1x8xf32, #tpu.memory_space<vmem>>, vector<1x8xf32>
    %232 = vector.broadcast %231 : vector<1x8xf32> to vector<64x8xf32>
    %233 = arith.addf %230, %232 : vector<64x8xf32>
    %234 = vector.shape_cast %233 : vector<64x8xf32> to vector<8x8x8xf32>
    %cst_90 = arith.constant 1.000000e-01 : f32
    %235 = vector.broadcast %cst_90 : f32 to vector<8x8x8xf32>
    %236 = arith.mulf %234, %235 : vector<8x8x8xf32>
    %237 = vector.extract_strided_slice %236 {offsets = [0, 0, 0], sizes = [8, 8, 4], strides = [1, 1, 1]} : vector<8x8x8xf32> to vector<8x8x4xf32>
    %238 = math.tanh %237 : vector<8x8x4xf32>
    %cst_91 = arith.constant 2.000000e+00 : f32
    %239 = vector.broadcast %cst_91 : f32 to vector<8x8x4xf32>
    %240 = arith.mulf %239, %238 : vector<8x8x4xf32>
    %241 = math.exp %240 : vector<8x8x4xf32>
    %242 = arith.mulf %216, %241 : vector<8x8x4xf32>
    %243 = vector.extract_strided_slice %236 {offsets = [0, 0, 4], sizes = [8, 8, 4], strides = [1, 1, 1]} : vector<8x8x8xf32> to vector<8x8x4xf32>
    %244 = arith.addf %242, %243 : vector<8x8x4xf32>
    %245 = vector.shape_cast %240 : vector<8x8x4xf32> to vector<1x8x8x4xf32>
    %cst_92 = arith.constant dense<0.000000e+00> : vector<1xf32>
    %246 = vector.multi_reduction <add>, %245, %cst_92 [1, 2, 3] : vector<1x8x8x4xf32> to vector<1xf32>
    %247 = vector.shape_cast %246 : vector<1xf32> to vector<1x1x1x1xf32>
    %248 = vector.extract %247[0, 0, 0, 0] : f32 from vector<1x1x1x1xf32>
    %249 = arith.addf %206, %248 : f32
    %250 = tpu.concatenate %215, %244 in 2 : vector<8x8x4xf32>, vector<8x8x4xf32> -> vector<8x8x8xf32>
    %251 = vector.shape_cast %250 : vector<8x8x8xf32> to vector<64x8xf32>
    %c0_93 = arith.constant 0 : index
    %c0_94 = arith.constant 0 : index
    %252 = vector.load %arg26[%c0_93, %c0_94] : memref<8x8xf32, #tpu.memory_space<vmem>>, vector<8x8xf32>
    %cst_95 = arith.constant dense<0.000000e+00> : vector<64x8xf32>
    %253 = tpu.matmul %251, %252, %cst_95 {dimension_numbers = #tpu.dot_dimension_numbers<[1], [0], [0], [1], [0, 0, 1, 1], [], []>} : vector<64x8xf32>, vector<8x8xf32>, vector<64x8xf32> -> vector<64x8xf32>
    %c0_96 = arith.constant 0 : index
    %c0_97 = arith.constant 0 : index
    %254 = vector.load %arg27[%c0_96, %c0_97] : memref<1x8xf32, #tpu.memory_space<vmem>>, vector<1x8xf32>
    %255 = vector.broadcast %254 : vector<1x8xf32> to vector<64x8xf32>
    %256 = arith.addf %253, %255 : vector<64x8xf32>
    %257 = vector.shape_cast %256 : vector<64x8xf32> to vector<8x8x8xf32>
    %258 = arith.mulf %257, %257 : vector<8x8x8xf32>
    %259 = vector.shape_cast %258 : vector<8x8x8xf32> to vector<1x8x8x8xf32>
    %cst_98 = arith.constant dense<0.000000e+00> : vector<1xf32>
    %260 = vector.multi_reduction <add>, %259, %cst_98 [1, 2, 3] : vector<1x8x8x8xf32> to vector<1xf32>
    %261 = vector.shape_cast %260 : vector<1xf32> to vector<1x1x1x1xf32>
    %262 = vector.extract %261[0, 0, 0, 0] : f32 from vector<1x1x1x1xf32>
    %cst_99 = arith.constant 5.000000e-01 : f32
    %263 = arith.mulf %cst_99, %262 : f32
    %264 = arith.subf %263, %249 : f32
    %265 = vector.broadcast %264 : f32 to vector<1x1x128xf32>
    %c0_100 = arith.constant 0 : index
    %c0_101 = arith.constant 0 : index
    %c0_102 = arith.constant 0 : index
    %266 = vector.load %arg28[%c0_100, %c0_101, %c0_102] : memref<1x1x128xf32, #tpu.memory_space<vmem>>, vector<1x1x128xf32>
    tpu.vector_store %arg28[%c0_100, %c0_101, %c0_102], %265 {strides = array<i32>} : memref<1x1x128xf32, #tpu.memory_space<vmem>>, vector<1x1x128xf32>,
    %cst_103 = arith.constant dense<0.000000e+00> : vector<8x8xf32>
    %267 = vector.multi_reduction <add>, %258, %cst_103 [2] : vector<8x8x8xf32> to vector<8x8xf32>
    %cst_104 = arith.constant 8.000000e+00 : f32
    %268 = vector.broadcast %cst_104 : f32 to vector<8x8xf32>
    %269 = arith.divf %267, %268 : vector<8x8xf32>
    %cst_105 = arith.constant -5.000000e-01 : f32
    %270 = vector.broadcast %cst_105 : f32 to vector<8x8xf32>
    %271 = arith.mulf %270, %269 : vector<8x8xf32>
    %272 = math.exp %271 : vector<8x8xf32>
    %cst_106 = arith.constant 0.000000e+00 : f32
    %273 = vector.broadcast %cst_106 : f32 to vector<8x8xf32>
    %274 = arith.subf %273, %272 : vector<8x8xf32>
    %275 = vector.shape_cast %274 : vector<8x8xf32> to vector<1x8x8xf32>
    %c0_107 = arith.constant 0 : index
    %c0_108 = arith.constant 0 : index
    %c0_109 = arith.constant 0 : index
    %276 = vector.load %arg29[%c0_107, %c0_108, %c0_109] : memref<1x8x8xf32, #tpu.memory_space<vmem>>, vector<1x8x8xf32>
    tpu.vector_store %arg29[%c0_107, %c0_108, %c0_109], %275 {strides = array<i32>} : memref<1x8x8xf32, #tpu.memory_space<vmem>>, vector<1x8x8xf32>,
    return
  }
  func.func @transform_0(%arg0: i32) -> (i32, i32, i32, i32) {
    %c0_i32 = arith.constant 0 : i32
    %c0_i32_0 = arith.constant 0 : i32
    %c0_i32_1 = arith.constant 0 : i32
    %c0_i32_2 = arith.constant 0 : i32
    return %arg0, %c0_i32, %c0_i32_0, %c0_i32_1 : i32, i32, i32, i32
  }
  func.func @transform_1(%arg0: i32) -> (i32, i32, i32) {
    %c0_i32 = arith.constant 0 : i32
    %c0_i32_0 = arith.constant 0 : i32
    %c0_i32_1 = arith.constant 0 : i32
    %c0_i32_2 = arith.constant 0 : i32
    return %c0_i32, %c0_i32_0, %c0_i32_1 : i32, i32, i32
  }
  func.func @transform_2(%arg0: i32) -> (i32, i32, i32) {
    %c0_i32 = arith.constant 0 : i32
    %c0_i32_0 = arith.constant 0 : i32
    %c0_i32_1 = arith.constant 0 : i32
    %c0_i32_2 = arith.constant 0 : i32
    return %c0_i32, %c0_i32_0, %c0_i32_1 : i32, i32, i32
  }
  func.func @transform_3(%arg0: i32) -> (i32, i32) {
    %c0_i32 = arith.constant 0 : i32
    %c0_i32_0 = arith.constant 0 : i32
    %c0_i32_1 = arith.constant 0 : i32
    return %c0_i32, %c0_i32_0 : i32, i32
  }
  func.func @transform_4(%arg0: i32) -> (i32, i32) {
    %c0_i32 = arith.constant 0 : i32
    %c0_i32_0 = arith.constant 0 : i32
    %c0_i32_1 = arith.constant 0 : i32
    return %c0_i32, %c0_i32_0 : i32, i32
  }
  func.func @transform_5(%arg0: i32) -> (i32, i32) {
    %c0_i32 = arith.constant 0 : i32
    %c0_i32_0 = arith.constant 0 : i32
    %c0_i32_1 = arith.constant 0 : i32
    return %c0_i32, %c0_i32_0 : i32, i32
  }
  func.func @transform_6(%arg0: i32) -> (i32, i32) {
    %c0_i32 = arith.constant 0 : i32
    %c0_i32_0 = arith.constant 0 : i32
    %c0_i32_1 = arith.constant 0 : i32
    return %c0_i32, %c0_i32_0 : i32, i32
  }
  func.func @transform_7(%arg0: i32) -> (i32, i32) {
    %c0_i32 = arith.constant 0 : i32
    %c0_i32_0 = arith.constant 0 : i32
    %c0_i32_1 = arith.constant 0 : i32
    return %c0_i32, %c0_i32_0 : i32, i32
  }
  func.func @transform_8(%arg0: i32) -> (i32, i32) {
    %c0_i32 = arith.constant 0 : i32
    %c0_i32_0 = arith.constant 0 : i32
    %c0_i32_1 = arith.constant 0 : i32
    return %c0_i32, %c0_i32_0 : i32, i32
  }
  func.func @transform_9(%arg0: i32) -> (i32, i32) {
    %c0_i32 = arith.constant 0 : i32
    %c0_i32_0 = arith.constant 0 : i32
    %c0_i32_1 = arith.constant 0 : i32
    return %c0_i32, %c0_i32_0 : i32, i32
  }
  func.func @transform_10(%arg0: i32) -> (i32, i32) {
    %c0_i32 = arith.constant 0 : i32
    %c0_i32_0 = arith.constant 0 : i32
    %c0_i32_1 = arith.constant 0 : i32
    return %c0_i32, %c0_i32_0 : i32, i32
  }
  func.func @transform_11(%arg0: i32) -> (i32, i32) {
    %c0_i32 = arith.constant 0 : i32
    %c0_i32_0 = arith.constant 0 : i32
    %c0_i32_1 = arith.constant 0 : i32
    return %c0_i32, %c0_i32_0 : i32, i32
  }
  func.func @transform_12(%arg0: i32) -> (i32, i32) {
    %c0_i32 = arith.constant 0 : i32
    %c0_i32_0 = arith.constant 0 : i32
    %c0_i32_1 = arith.constant 0 : i32
    return %c0_i32, %c0_i32_0 : i32, i32
  }
  func.func @transform_13(%arg0: i32) -> (i32, i32) {
    %c0_i32 = arith.constant 0 : i32
    %c0_i32_0 = arith.constant 0 : i32
    %c0_i32_1 = arith.constant 0 : i32
    return %c0_i32, %c0_i32_0 : i32, i32
  }
  func.func @transform_14(%arg0: i32) -> (i32, i32) {
    %c0_i32 = arith.constant 0 : i32
    %c0_i32_0 = arith.constant 0 : i32
    %c0_i32_1 = arith.constant 0 : i32
    return %c0_i32, %c0_i32_0 : i32, i32
  }
  func.func @transform_15(%arg0: i32) -> (i32, i32) {
    %c0_i32 = arith.constant 0 : i32
    %c0_i32_0 = arith.constant 0 : i32
    %c0_i32_1 = arith.constant 0 : i32
    return %c0_i32, %c0_i32_0 : i32, i32
  }
  func.func @transform_16(%arg0: i32) -> (i32, i32) {
    %c0_i32 = arith.constant 0 : i32
    %c0_i32_0 = arith.constant 0 : i32
    %c0_i32_1 = arith.constant 0 : i32
    return %c0_i32, %c0_i32_0 : i32, i32
  }
  func.func @transform_17(%arg0: i32) -> (i32, i32) {
    %c0_i32 = arith.constant 0 : i32
    %c0_i32_0 = arith.constant 0 : i32
    %c0_i32_1 = arith.constant 0 : i32
    return %c0_i32, %c0_i32_0 : i32, i32
  }
  func.func @transform_18(%arg0: i32) -> (i32, i32) {
    %c0_i32 = arith.constant 0 : i32
    %c0_i32_0 = arith.constant 0 : i32
    %c0_i32_1 = arith.constant 0 : i32
    return %c0_i32, %c0_i32_0 : i32, i32
  }
  func.func @transform_19(%arg0: i32) -> (i32, i32) {
    %c0_i32 = arith.constant 0 : i32
    %c0_i32_0 = arith.constant 0 : i32
    %c0_i32_1 = arith.constant 0 : i32
    return %c0_i32, %c0_i32_0 : i32, i32
  }
  func.func @transform_20(%arg0: i32) -> (i32, i32) {
    %c0_i32 = arith.constant 0 : i32
    %c0_i32_0 = arith.constant 0 : i32
    %c0_i32_1 = arith.constant 0 : i32
    return %c0_i32, %c0_i32_0 : i32, i32
  }
  func.func @transform_21(%arg0: i32) -> (i32, i32) {
    %c0_i32 = arith.constant 0 : i32
    %c0_i32_0 = arith.constant 0 : i32
    %c0_i32_1 = arith.constant 0 : i32
    return %c0_i32, %c0_i32_0 : i32, i32
  }
  func.func @transform_22(%arg0: i32) -> (i32, i32) {
    %c0_i32 = arith.constant 0 : i32
    %c0_i32_0 = arith.constant 0 : i32
    %c0_i32_1 = arith.constant 0 : i32
    return %c0_i32, %c0_i32_0 : i32, i32
  }
  func.func @transform_23(%arg0: i32) -> (i32, i32) {
    %c0_i32 = arith.constant 0 : i32
    %c0_i32_0 = arith.constant 0 : i32
    %c0_i32_1 = arith.constant 0 : i32
    return %c0_i32, %c0_i32_0 : i32, i32
  }
  func.func @transform_24(%arg0: i32) -> (i32, i32) {
    %c0_i32 = arith.constant 0 : i32
    %c0_i32_0 = arith.constant 0 : i32
    %c0_i32_1 = arith.constant 0 : i32
    return %c0_i32, %c0_i32_0 : i32, i32
  }
  func.func @transform_25(%arg0: i32) -> (i32, i32) {
    %c0_i32 = arith.constant 0 : i32
    %c0_i32_0 = arith.constant 0 : i32
    %c0_i32_1 = arith.constant 0 : i32
    return %c0_i32, %c0_i32_0 : i32, i32
  }
  func.func @transform_26(%arg0: i32) -> (i32, i32) {
    %c0_i32 = arith.constant 0 : i32
    %c0_i32_0 = arith.constant 0 : i32
    %c0_i32_1 = arith.constant 0 : i32
    return %c0_i32, %c0_i32_0 : i32, i32
  }
  func.func @transform_27(%arg0: i32) -> (i32, i32, i32) {
    %c0_i32 = arith.constant 0 : i32
    %c0_i32_0 = arith.constant 0 : i32
    %c0_i32_1 = arith.constant 0 : i32
    return %arg0, %c0_i32, %c0_i32_0 : i32, i32, i32
  }
  func.func @transform_28(%arg0: i32) -> (i32, i32, i32) {
    %c0_i32 = arith.constant 0 : i32
    %c0_i32_0 = arith.constant 0 : i32
    %c0_i32_1 = arith.constant 0 : i32
    return %arg0, %c0_i32, %c0_i32_0 : i32, i32, i32
  }
}

module attributes {stable_mosaic.version = 11 : i64} {
  func.func @kernel(%arg0: i32, %arg1: memref<1x4x4x16xf32, #tpu.memory_space<vmem>>, %arg2: memref<4x4x16xf32, #tpu.memory_space<vmem>>, %arg3: memref<4x4x16xf32, #tpu.memory_space<vmem>>, %arg4: memref<72x8xbf16, #tpu.memory_space<vmem>>, %arg5: memref<1x8xf32, #tpu.memory_space<vmem>>, %arg6: memref<72x16xbf16, #tpu.memory_space<vmem>>, %arg7: memref<1x16xf32, #tpu.memory_space<vmem>>, %arg8: memref<16x16xf32, #tpu.memory_space<vmem>>, %arg9: memref<1x16xf32, #tpu.memory_space<vmem>>, %arg10: memref<8x8xbf16, #tpu.memory_space<vmem>>, %arg11: memref<1x8xf32, #tpu.memory_space<vmem>>, %arg12: memref<8x16xbf16, #tpu.memory_space<vmem>>, %arg13: memref<1x16xf32, #tpu.memory_space<vmem>>, %arg14: memref<16x16xf32, #tpu.memory_space<vmem>>, %arg15: memref<1x16xf32, #tpu.memory_space<vmem>>, %arg16: memref<72x8xbf16, #tpu.memory_space<vmem>>, %arg17: memref<1x8xf32, #tpu.memory_space<vmem>>, %arg18: memref<72x16xbf16, #tpu.memory_space<vmem>>, %arg19: memref<1x16xf32, #tpu.memory_space<vmem>>, %arg20: memref<16x16xf32, #tpu.memory_space<vmem>>, %arg21: memref<1x16xf32, #tpu.memory_space<vmem>>, %arg22: memref<8x8xbf16, #tpu.memory_space<vmem>>, %arg23: memref<1x8xf32, #tpu.memory_space<vmem>>, %arg24: memref<8x16xbf16, #tpu.memory_space<vmem>>, %arg25: memref<1x16xf32, #tpu.memory_space<vmem>>, %arg26: memref<16x16xf32, #tpu.memory_space<vmem>>, %arg27: memref<1x16xf32, #tpu.memory_space<vmem>>, %arg28: memref<1x1x128xf32, #tpu.memory_space<vmem>>, %arg29: memref<1x4x4xf32, #tpu.memory_space<vmem>>) attributes {dimension_semantics = [#tpu.dimension_semantics<parallel>], iteration_bounds = array<i64: 2>, scalar_prefetch = 0 : i64, scratch_operands = 0 : i64, tpu.core_type = #tpu.core_type<tc>, window_params = [{transform_indices = @transform_0, window_bounds = array<i64: 1, 4, 4, 16>}, {pipeline_mode = #tpu.pipeline_mode<synchronous>, transform_indices = @transform_1, window_bounds = array<i64: 4, 4, 16>}, {pipeline_mode = #tpu.pipeline_mode<synchronous>, transform_indices = @transform_2, window_bounds = array<i64: 4, 4, 16>}, {pipeline_mode = #tpu.pipeline_mode<synchronous>, transform_indices = @transform_3, window_bounds = array<i64: 72, 8>}, {pipeline_mode = #tpu.pipeline_mode<synchronous>, transform_indices = @transform_4, window_bounds = array<i64: 1, 8>}, {pipeline_mode = #tpu.pipeline_mode<synchronous>, transform_indices = @transform_5, window_bounds = array<i64: 72, 16>}, {pipeline_mode = #tpu.pipeline_mode<synchronous>, transform_indices = @transform_6, window_bounds = array<i64: 1, 16>}, {pipeline_mode = #tpu.pipeline_mode<synchronous>, transform_indices = @transform_7, window_bounds = array<i64: 16, 16>}, {pipeline_mode = #tpu.pipeline_mode<synchronous>, transform_indices = @transform_8, window_bounds = array<i64: 1, 16>}, {pipeline_mode = #tpu.pipeline_mode<synchronous>, transform_indices = @transform_9, window_bounds = array<i64: 8, 8>}, {pipeline_mode = #tpu.pipeline_mode<synchronous>, transform_indices = @transform_10, window_bounds = array<i64: 1, 8>}, {pipeline_mode = #tpu.pipeline_mode<synchronous>, transform_indices = @transform_11, window_bounds = array<i64: 8, 16>}, {pipeline_mode = #tpu.pipeline_mode<synchronous>, transform_indices = @transform_12, window_bounds = array<i64: 1, 16>}, {pipeline_mode = #tpu.pipeline_mode<synchronous>, transform_indices = @transform_13, window_bounds = array<i64: 16, 16>}, {pipeline_mode = #tpu.pipeline_mode<synchronous>, transform_indices = @transform_14, window_bounds = array<i64: 1, 16>}, {pipeline_mode = #tpu.pipeline_mode<synchronous>, transform_indices = @transform_15, window_bounds = array<i64: 72, 8>}, {pipeline_mode = #tpu.pipeline_mode<synchronous>, transform_indices = @transform_16, window_bounds = array<i64: 1, 8>}, {pipeline_mode = #tpu.pipeline_mode<synchronous>, transform_indices = @transform_17, window_bounds = array<i64: 72, 16>}, {pipeline_mode = #tpu.pipeline_mode<synchronous>, transform_indices = @transform_18, window_bounds = array<i64: 1, 16>}, {pipeline_mode = #tpu.pipeline_mode<synchronous>, transform_indices = @transform_19, window_bounds = array<i64: 16, 16>}, {pipeline_mode = #tpu.pipeline_mode<synchronous>, transform_indices = @transform_20, window_bounds = array<i64: 1, 16>}, {pipeline_mode = #tpu.pipeline_mode<synchronous>, transform_indices = @transform_21, window_bounds = array<i64: 8, 8>}, {pipeline_mode = #tpu.pipeline_mode<synchronous>, transform_indices = @transform_22, window_bounds = array<i64: 1, 8>}, {pipeline_mode = #tpu.pipeline_mode<synchronous>, transform_indices = @transform_23, window_bounds = array<i64: 8, 16>}, {pipeline_mode = #tpu.pipeline_mode<synchronous>, transform_indices = @transform_24, window_bounds = array<i64: 1, 16>}, {pipeline_mode = #tpu.pipeline_mode<synchronous>, transform_indices = @transform_25, window_bounds = array<i64: 16, 16>}, {pipeline_mode = #tpu.pipeline_mode<synchronous>, transform_indices = @transform_26, window_bounds = array<i64: 1, 16>}, {transform_indices = @transform_27, window_bounds = array<i64: 1, 1, 128>}, {transform_indices = @transform_28, window_bounds = array<i64: 1, 4, 4>}]} {
    %c0 = arith.constant 0 : index
    %c0_0 = arith.constant 0 : index
    %c0_1 = arith.constant 0 : index
    %c0_2 = arith.constant 0 : index
    %0 = vector.load %arg1[%c0, %c0_0, %c0_1, %c0_2] : memref<1x4x4x16xf32, #tpu.memory_space<vmem>>, vector<1x4x4x16xf32>
    %1 = vector.shape_cast %0 : vector<1x4x4x16xf32> to vector<4x4x16xf32>
    %2 = vector.shape_cast %1 : vector<4x4x16xf32> to vector<1x4x4x16xf32>
    %cst = arith.constant dense<0.000000e+00> : vector<1xf32>
    %3 = vector.multi_reduction <add>, %2, %cst [1, 2, 3] : vector<1x4x4x16xf32> to vector<1xf32>
    %4 = vector.shape_cast %3 : vector<1xf32> to vector<1x1x1x1xf32>
    %5 = vector.extract %4[0, 0, 0, 0] : f32 from vector<1x1x1x1xf32>
    %6 = vector.broadcast %5 : f32 to vector<1x1x1xf32>
    %cst_3 = arith.constant 2.560000e+02 : f32
    %7 = vector.broadcast %cst_3 : f32 to vector<1x1x1xf32>
    %8 = arith.divf %6, %7 : vector<1x1x1xf32>
    %9 = vector.broadcast %8 : vector<1x1x1xf32> to vector<4x4x16xf32>
    %10 = arith.subf %1, %9 : vector<4x4x16xf32>
    %11 = arith.mulf %10, %10 : vector<4x4x16xf32>
    %12 = vector.shape_cast %11 : vector<4x4x16xf32> to vector<1x4x4x16xf32>
    %cst_4 = arith.constant dense<0.000000e+00> : vector<1xf32>
    %13 = vector.multi_reduction <add>, %12, %cst_4 [1, 2, 3] : vector<1x4x4x16xf32> to vector<1xf32>
    %14 = vector.shape_cast %13 : vector<1xf32> to vector<1x1x1x1xf32>
    %15 = vector.extract %14[0, 0, 0, 0] : f32 from vector<1x1x1x1xf32>
    %16 = vector.broadcast %15 : f32 to vector<1x1x1xf32>
    %cst_5 = arith.constant 2.560000e+02 : f32
    %17 = vector.broadcast %cst_5 : f32 to vector<1x1x1xf32>
    %18 = arith.divf %16, %17 : vector<1x1x1xf32>
    %19 = vector.broadcast %8 : vector<1x1x1xf32> to vector<4x4x16xf32>
    %20 = arith.subf %1, %19 : vector<4x4x16xf32>
    %cst_6 = arith.constant 9.99999974E-6 : f32
    %21 = vector.broadcast %cst_6 : f32 to vector<1x1x1xf32>
    %22 = arith.addf %18, %21 : vector<1x1x1xf32>
    %23 = math.rsqrt %22 : vector<1x1x1xf32>
    %24 = vector.broadcast %23 : vector<1x1x1xf32> to vector<4x4x16xf32>
    %25 = arith.mulf %20, %24 : vector<4x4x16xf32>
    %c0_7 = arith.constant 0 : index
    %c0_8 = arith.constant 0 : index
    %c0_9 = arith.constant 0 : index
    %26 = vector.load %arg2[%c0_7, %c0_8, %c0_9] : memref<4x4x16xf32, #tpu.memory_space<vmem>>, vector<4x4x16xf32>
    %27 = arith.mulf %25, %26 : vector<4x4x16xf32>
    %c0_10 = arith.constant 0 : index
    %c0_11 = arith.constant 0 : index
    %c0_12 = arith.constant 0 : index
    %28 = vector.load %arg3[%c0_10, %c0_11, %c0_12] : memref<4x4x16xf32, #tpu.memory_space<vmem>>, vector<4x4x16xf32>
    %29 = arith.addf %27, %28 : vector<4x4x16xf32>
    %30 = vector.extract_strided_slice %29 {offsets = [0, 0, 0], sizes = [4, 4, 8], strides = [1, 1, 1]} : vector<4x4x16xf32> to vector<4x4x8xf32>
    %31 = vector.extract_strided_slice %29 {offsets = [0, 0, 8], sizes = [4, 4, 8], strides = [1, 1, 1]} : vector<4x4x16xf32> to vector<4x4x8xf32>
    %32 = arith.truncf %30 : vector<4x4x8xf32> to vector<4x4x8xbf16>
    %cst_13 = arith.constant 0.000000e+00 : bf16
    %33 = vector.broadcast %cst_13 : bf16 to vector<1x4x8xbf16>
    %cst_14 = arith.constant 0.000000e+00 : bf16
    %34 = vector.broadcast %cst_14 : bf16 to vector<6x1x8xbf16>
    %35 = tpu.concatenate %33, %32, %33 in 0 : vector<1x4x8xbf16>, vector<4x4x8xbf16>, vector<1x4x8xbf16> -> vector<6x4x8xbf16>
    %36 = tpu.concatenate %34, %35, %34 in 1 : vector<6x1x8xbf16>, vector<6x4x8xbf16>, vector<6x1x8xbf16> -> vector<6x6x8xbf16>
    %37 = vector.extract_strided_slice %36 {offsets = [0, 0, 0], sizes = [4, 4, 8], strides = [1, 1, 1]} : vector<6x6x8xbf16> to vector<4x4x8xbf16>
    %38 = vector.extract_strided_slice %36 {offsets = [0, 1, 0], sizes = [4, 4, 8], strides = [1, 1, 1]} : vector<6x6x8xbf16> to vector<4x4x8xbf16>
    %39 = vector.extract_strided_slice %36 {offsets = [0, 2, 0], sizes = [4, 4, 8], strides = [1, 1, 1]} : vector<6x6x8xbf16> to vector<4x4x8xbf16>
    %40 = vector.extract_strided_slice %36 {offsets = [1, 0, 0], sizes = [4, 4, 8], strides = [1, 1, 1]} : vector<6x6x8xbf16> to vector<4x4x8xbf16>
    %41 = vector.extract_strided_slice %36 {offsets = [1, 1, 0], sizes = [4, 4, 8], strides = [1, 1, 1]} : vector<6x6x8xbf16> to vector<4x4x8xbf16>
    %42 = vector.extract_strided_slice %36 {offsets = [1, 2, 0], sizes = [4, 4, 8], strides = [1, 1, 1]} : vector<6x6x8xbf16> to vector<4x4x8xbf16>
    %43 = vector.extract_strided_slice %36 {offsets = [2, 0, 0], sizes = [4, 4, 8], strides = [1, 1, 1]} : vector<6x6x8xbf16> to vector<4x4x8xbf16>
    %44 = vector.extract_strided_slice %36 {offsets = [2, 1, 0], sizes = [4, 4, 8], strides = [1, 1, 1]} : vector<6x6x8xbf16> to vector<4x4x8xbf16>
    %45 = vector.extract_strided_slice %36 {offsets = [2, 2, 0], sizes = [4, 4, 8], strides = [1, 1, 1]} : vector<6x6x8xbf16> to vector<4x4x8xbf16>
    %46 = tpu.concatenate %37, %38, %39, %40, %41, %42, %43, %44, %45 in 2 : vector<4x4x8xbf16>, vector<4x4x8xbf16>, vector<4x4x8xbf16>, vector<4x4x8xbf16>, vector<4x4x8xbf16>, vector<4x4x8xbf16>, vector<4x4x8xbf16>, vector<4x4x8xbf16>, vector<4x4x8xbf16> -> vector<4x4x72xbf16>
    %47 = vector.shape_cast %46 : vector<4x4x72xbf16> to vector<16x72xbf16>
    %c0_15 = arith.constant 0 : index
    %c0_16 = arith.constant 0 : index
    %48 = vector.load %arg4[%c0_15, %c0_16] : memref<72x8xbf16, #tpu.memory_space<vmem>>, vector<72x8xbf16>
    %cst_17 = arith.constant dense<0.000000e+00> : vector<16x8xf32>
    %49 = tpu.matmul %47, %48, %cst_17 {dimension_numbers = #tpu.dot_dimension_numbers<[1], [0], [0], [1], [0, 0, 1, 1], [], []>} : vector<16x72xbf16>, vector<72x8xbf16>, vector<16x8xf32> -> vector<16x8xf32>
    %c0_18 = arith.constant 0 : index
    %c0_19 = arith.constant 0 : index
    %50 = vector.load %arg5[%c0_18, %c0_19] : memref<1x8xf32, #tpu.memory_space<vmem>>, vector<1x8xf32>
    %51 = vector.broadcast %50 : vector<1x8xf32> to vector<16x8xf32>
    %52 = arith.addf %49, %51 : vector<16x8xf32>
    %53 = vector.shape_cast %52 : vector<16x8xf32> to vector<4x4x8xf32>
    %cst_20 = arith.constant 0.000000e+00 : f32
    %54 = vector.broadcast %cst_20 : f32 to vector<4x4x8xf32>
    %55 = arith.maximumf %53, %54 : vector<4x4x8xf32>
    %56 = arith.truncf %55 : vector<4x4x8xf32> to vector<4x4x8xbf16>
    %cst_21 = arith.constant 0.000000e+00 : bf16
    %57 = vector.broadcast %cst_21 : bf16 to vector<1x4x8xbf16>
    %cst_22 = arith.constant 0.000000e+00 : bf16
    %58 = vector.broadcast %cst_22 : bf16 to vector<6x1x8xbf16>
    %59 = tpu.concatenate %57, %56, %57 in 0 : vector<1x4x8xbf16>, vector<4x4x8xbf16>, vector<1x4x8xbf16> -> vector<6x4x8xbf16>
    %60 = tpu.concatenate %58, %59, %58 in 1 : vector<6x1x8xbf16>, vector<6x4x8xbf16>, vector<6x1x8xbf16> -> vector<6x6x8xbf16>
    %61 = vector.extract_strided_slice %60 {offsets = [0, 0, 0], sizes = [4, 4, 8], strides = [1, 1, 1]} : vector<6x6x8xbf16> to vector<4x4x8xbf16>
    %62 = vector.extract_strided_slice %60 {offsets = [0, 1, 0], sizes = [4, 4, 8], strides = [1, 1, 1]} : vector<6x6x8xbf16> to vector<4x4x8xbf16>
    %63 = vector.extract_strided_slice %60 {offsets = [0, 2, 0], sizes = [4, 4, 8], strides = [1, 1, 1]} : vector<6x6x8xbf16> to vector<4x4x8xbf16>
    %64 = vector.extract_strided_slice %60 {offsets = [1, 0, 0], sizes = [4, 4, 8], strides = [1, 1, 1]} : vector<6x6x8xbf16> to vector<4x4x8xbf16>
    %65 = vector.extract_strided_slice %60 {offsets = [1, 1, 0], sizes = [4, 4, 8], strides = [1, 1, 1]} : vector<6x6x8xbf16> to vector<4x4x8xbf16>
    %66 = vector.extract_strided_slice %60 {offsets = [1, 2, 0], sizes = [4, 4, 8], strides = [1, 1, 1]} : vector<6x6x8xbf16> to vector<4x4x8xbf16>
    %67 = vector.extract_strided_slice %60 {offsets = [2, 0, 0], sizes = [4, 4, 8], strides = [1, 1, 1]} : vector<6x6x8xbf16> to vector<4x4x8xbf16>
    %68 = vector.extract_strided_slice %60 {offsets = [2, 1, 0], sizes = [4, 4, 8], strides = [1, 1, 1]} : vector<6x6x8xbf16> to vector<4x4x8xbf16>
    %69 = vector.extract_strided_slice %60 {offsets = [2, 2, 0], sizes = [4, 4, 8], strides = [1, 1, 1]} : vector<6x6x8xbf16> to vector<4x4x8xbf16>
    %70 = tpu.concatenate %61, %62, %63, %64, %65, %66, %67, %68, %69 in 2 : vector<4x4x8xbf16>, vector<4x4x8xbf16>, vector<4x4x8xbf16>, vector<4x4x8xbf16>, vector<4x4x8xbf16>, vector<4x4x8xbf16>, vector<4x4x8xbf16>, vector<4x4x8xbf16>, vector<4x4x8xbf16> -> vector<4x4x72xbf16>
    %71 = vector.shape_cast %70 : vector<4x4x72xbf16> to vector<16x72xbf16>
    %c0_23 = arith.constant 0 : index
    %c0_24 = arith.constant 0 : index
    %72 = vector.load %arg6[%c0_23, %c0_24] : memref<72x16xbf16, #tpu.memory_space<vmem>>, vector<72x16xbf16>
    %cst_25 = arith.constant dense<0.000000e+00> : vector<16x16xf32>
    %73 = tpu.matmul %71, %72, %cst_25 {dimension_numbers = #tpu.dot_dimension_numbers<[1], [0], [0], [1], [0, 0, 1, 1], [], []>} : vector<16x72xbf16>, vector<72x16xbf16>, vector<16x16xf32> -> vector<16x16xf32>
    %c0_26 = arith.constant 0 : index
    %c0_27 = arith.constant 0 : index
    %74 = vector.load %arg7[%c0_26, %c0_27] : memref<1x16xf32, #tpu.memory_space<vmem>>, vector<1x16xf32>
    %75 = vector.broadcast %74 : vector<1x16xf32> to vector<16x16xf32>
    %76 = arith.addf %73, %75 : vector<16x16xf32>
    %77 = vector.shape_cast %76 : vector<16x16xf32> to vector<4x4x16xf32>
    %cst_28 = arith.constant 1.000000e-01 : f32
    %78 = vector.broadcast %cst_28 : f32 to vector<4x4x16xf32>
    %79 = arith.mulf %77, %78 : vector<4x4x16xf32>
    %80 = vector.extract_strided_slice %79 {offsets = [0, 0, 0], sizes = [4, 4, 8], strides = [1, 1, 1]} : vector<4x4x16xf32> to vector<4x4x8xf32>
    %81 = math.tanh %80 : vector<4x4x8xf32>
    %cst_29 = arith.constant 2.000000e+00 : f32
    %82 = vector.broadcast %cst_29 : f32 to vector<4x4x8xf32>
    %83 = arith.mulf %82, %81 : vector<4x4x8xf32>
    %84 = math.exp %83 : vector<4x4x8xf32>
    %85 = arith.mulf %31, %84 : vector<4x4x8xf32>
    %86 = vector.extract_strided_slice %79 {offsets = [0, 0, 8], sizes = [4, 4, 8], strides = [1, 1, 1]} : vector<4x4x16xf32> to vector<4x4x8xf32>
    %87 = arith.addf %85, %86 : vector<4x4x8xf32>
    %88 = vector.shape_cast %83 : vector<4x4x8xf32> to vector<1x4x4x8xf32>
    %cst_30 = arith.constant dense<0.000000e+00> : vector<1xf32>
    %89 = vector.multi_reduction <add>, %88, %cst_30 [1, 2, 3] : vector<1x4x4x8xf32> to vector<1xf32>
    %90 = vector.shape_cast %89 : vector<1xf32> to vector<1x1x1x1xf32>
    %91 = vector.extract %90[0, 0, 0, 0] : f32 from vector<1x1x1x1xf32>
    %cst_31 = arith.constant 0.000000e+00 : f32
    %92 = arith.addf %cst_31, %91 : f32
    %93 = tpu.concatenate %30, %87 in 2 : vector<4x4x8xf32>, vector<4x4x8xf32> -> vector<4x4x16xf32>
    %94 = vector.shape_cast %93 : vector<4x4x16xf32> to vector<16x16xf32>
    %c0_32 = arith.constant 0 : index
    %c0_33 = arith.constant 0 : index
    %95 = vector.load %arg8[%c0_32, %c0_33] : memref<16x16xf32, #tpu.memory_space<vmem>>, vector<16x16xf32>
    %cst_34 = arith.constant dense<0.000000e+00> : vector<16x16xf32>
    %96 = tpu.matmul %94, %95, %cst_34 {dimension_numbers = #tpu.dot_dimension_numbers<[1], [0], [0], [1], [0, 0, 1, 1], [], []>} : vector<16x16xf32>, vector<16x16xf32>, vector<16x16xf32> -> vector<16x16xf32>
    %c0_35 = arith.constant 0 : index
    %c0_36 = arith.constant 0 : index
    %97 = vector.load %arg9[%c0_35, %c0_36] : memref<1x16xf32, #tpu.memory_space<vmem>>, vector<1x16xf32>
    %98 = vector.broadcast %97 : vector<1x16xf32> to vector<16x16xf32>
    %99 = arith.addf %96, %98 : vector<16x16xf32>
    %100 = vector.shape_cast %99 : vector<16x16xf32> to vector<4x4x16xf32>
    %101 = vector.extract_strided_slice %100 {offsets = [0, 0, 0], sizes = [4, 4, 8], strides = [1, 1, 1]} : vector<4x4x16xf32> to vector<4x4x8xf32>
    %102 = vector.extract_strided_slice %100 {offsets = [0, 0, 8], sizes = [4, 4, 8], strides = [1, 1, 1]} : vector<4x4x16xf32> to vector<4x4x8xf32>
    %103 = arith.truncf %101 : vector<4x4x8xf32> to vector<4x4x8xbf16>
    %104 = vector.shape_cast %103 : vector<4x4x8xbf16> to vector<16x8xbf16>
    %c0_37 = arith.constant 0 : index
    %c0_38 = arith.constant 0 : index
    %105 = vector.load %arg10[%c0_37, %c0_38] : memref<8x8xbf16, #tpu.memory_space<vmem>>, vector<8x8xbf16>
    %cst_39 = arith.constant dense<0.000000e+00> : vector<16x8xf32>
    %106 = tpu.matmul %104, %105, %cst_39 {dimension_numbers = #tpu.dot_dimension_numbers<[1], [0], [0], [1], [0, 0, 1, 1], [], []>} : vector<16x8xbf16>, vector<8x8xbf16>, vector<16x8xf32> -> vector<16x8xf32>
    %c0_40 = arith.constant 0 : index
    %c0_41 = arith.constant 0 : index
    %107 = vector.load %arg11[%c0_40, %c0_41] : memref<1x8xf32, #tpu.memory_space<vmem>>, vector<1x8xf32>
    %108 = vector.broadcast %107 : vector<1x8xf32> to vector<16x8xf32>
    %109 = arith.addf %106, %108 : vector<16x8xf32>
    %110 = vector.shape_cast %109 : vector<16x8xf32> to vector<4x4x8xf32>
    %cst_42 = arith.constant 0.000000e+00 : f32
    %111 = vector.broadcast %cst_42 : f32 to vector<4x4x8xf32>
    %112 = arith.maximumf %110, %111 : vector<4x4x8xf32>
    %113 = arith.truncf %112 : vector<4x4x8xf32> to vector<4x4x8xbf16>
    %114 = vector.shape_cast %113 : vector<4x4x8xbf16> to vector<16x8xbf16>
    %c0_43 = arith.constant 0 : index
    %c0_44 = arith.constant 0 : index
    %115 = vector.load %arg12[%c0_43, %c0_44] : memref<8x16xbf16, #tpu.memory_space<vmem>>, vector<8x16xbf16>
    %cst_45 = arith.constant dense<0.000000e+00> : vector<16x16xf32>
    %116 = tpu.matmul %114, %115, %cst_45 {dimension_numbers = #tpu.dot_dimension_numbers<[1], [0], [0], [1], [0, 0, 1, 1], [], []>} : vector<16x8xbf16>, vector<8x16xbf16>, vector<16x16xf32> -> vector<16x16xf32>
    %c0_46 = arith.constant 0 : index
    %c0_47 = arith.constant 0 : index
    %117 = vector.load %arg13[%c0_46, %c0_47] : memref<1x16xf32, #tpu.memory_space<vmem>>, vector<1x16xf32>
    %118 = vector.broadcast %117 : vector<1x16xf32> to vector<16x16xf32>
    %119 = arith.addf %116, %118 : vector<16x16xf32>
    %120 = vector.shape_cast %119 : vector<16x16xf32> to vector<4x4x16xf32>
    %cst_48 = arith.constant 1.000000e-01 : f32
    %121 = vector.broadcast %cst_48 : f32 to vector<4x4x16xf32>
    %122 = arith.mulf %120, %121 : vector<4x4x16xf32>
    %123 = vector.extract_strided_slice %122 {offsets = [0, 0, 0], sizes = [4, 4, 8], strides = [1, 1, 1]} : vector<4x4x16xf32> to vector<4x4x8xf32>
    %124 = math.tanh %123 : vector<4x4x8xf32>
    %cst_49 = arith.constant 2.000000e+00 : f32
    %125 = vector.broadcast %cst_49 : f32 to vector<4x4x8xf32>
    %126 = arith.mulf %125, %124 : vector<4x4x8xf32>
    %127 = math.exp %126 : vector<4x4x8xf32>
    %128 = arith.mulf %102, %127 : vector<4x4x8xf32>
    %129 = vector.extract_strided_slice %122 {offsets = [0, 0, 8], sizes = [4, 4, 8], strides = [1, 1, 1]} : vector<4x4x16xf32> to vector<4x4x8xf32>
    %130 = arith.addf %128, %129 : vector<4x4x8xf32>
    %131 = vector.shape_cast %126 : vector<4x4x8xf32> to vector<1x4x4x8xf32>
    %cst_50 = arith.constant dense<0.000000e+00> : vector<1xf32>
    %132 = vector.multi_reduction <add>, %131, %cst_50 [1, 2, 3] : vector<1x4x4x8xf32> to vector<1xf32>
    %133 = vector.shape_cast %132 : vector<1xf32> to vector<1x1x1x1xf32>
    %134 = vector.extract %133[0, 0, 0, 0] : f32 from vector<1x1x1x1xf32>
    %135 = arith.addf %92, %134 : f32
    %136 = tpu.concatenate %101, %130 in 2 : vector<4x4x8xf32>, vector<4x4x8xf32> -> vector<4x4x16xf32>
    %137 = vector.shape_cast %136 : vector<4x4x16xf32> to vector<16x16xf32>
    %c0_51 = arith.constant 0 : index
    %c0_52 = arith.constant 0 : index
    %138 = vector.load %arg14[%c0_51, %c0_52] : memref<16x16xf32, #tpu.memory_space<vmem>>, vector<16x16xf32>
    %cst_53 = arith.constant dense<0.000000e+00> : vector<16x16xf32>
    %139 = tpu.matmul %137, %138, %cst_53 {dimension_numbers = #tpu.dot_dimension_numbers<[1], [0], [0], [1], [0, 0, 1, 1], [], []>} : vector<16x16xf32>, vector<16x16xf32>, vector<16x16xf32> -> vector<16x16xf32>
    %c0_54 = arith.constant 0 : index
    %c0_55 = arith.constant 0 : index
    %140 = vector.load %arg15[%c0_54, %c0_55] : memref<1x16xf32, #tpu.memory_space<vmem>>, vector<1x16xf32>
    %141 = vector.broadcast %140 : vector<1x16xf32> to vector<16x16xf32>
    %142 = arith.addf %139, %141 : vector<16x16xf32>
    %143 = vector.shape_cast %142 : vector<16x16xf32> to vector<4x4x16xf32>
    %144 = vector.extract_strided_slice %143 {offsets = [0, 0, 0], sizes = [4, 4, 8], strides = [1, 1, 1]} : vector<4x4x16xf32> to vector<4x4x8xf32>
    %145 = vector.extract_strided_slice %143 {offsets = [0, 0, 8], sizes = [4, 4, 8], strides = [1, 1, 1]} : vector<4x4x16xf32> to vector<4x4x8xf32>
    %146 = arith.truncf %144 : vector<4x4x8xf32> to vector<4x4x8xbf16>
    %cst_56 = arith.constant 0.000000e+00 : bf16
    %147 = vector.broadcast %cst_56 : bf16 to vector<1x4x8xbf16>
    %cst_57 = arith.constant 0.000000e+00 : bf16
    %148 = vector.broadcast %cst_57 : bf16 to vector<6x1x8xbf16>
    %149 = tpu.concatenate %147, %146, %147 in 0 : vector<1x4x8xbf16>, vector<4x4x8xbf16>, vector<1x4x8xbf16> -> vector<6x4x8xbf16>
    %150 = tpu.concatenate %148, %149, %148 in 1 : vector<6x1x8xbf16>, vector<6x4x8xbf16>, vector<6x1x8xbf16> -> vector<6x6x8xbf16>
    %151 = vector.extract_strided_slice %150 {offsets = [0, 0, 0], sizes = [4, 4, 8], strides = [1, 1, 1]} : vector<6x6x8xbf16> to vector<4x4x8xbf16>
    %152 = vector.extract_strided_slice %150 {offsets = [0, 1, 0], sizes = [4, 4, 8], strides = [1, 1, 1]} : vector<6x6x8xbf16> to vector<4x4x8xbf16>
    %153 = vector.extract_strided_slice %150 {offsets = [0, 2, 0], sizes = [4, 4, 8], strides = [1, 1, 1]} : vector<6x6x8xbf16> to vector<4x4x8xbf16>
    %154 = vector.extract_strided_slice %150 {offsets = [1, 0, 0], sizes = [4, 4, 8], strides = [1, 1, 1]} : vector<6x6x8xbf16> to vector<4x4x8xbf16>
    %155 = vector.extract_strided_slice %150 {offsets = [1, 1, 0], sizes = [4, 4, 8], strides = [1, 1, 1]} : vector<6x6x8xbf16> to vector<4x4x8xbf16>
    %156 = vector.extract_strided_slice %150 {offsets = [1, 2, 0], sizes = [4, 4, 8], strides = [1, 1, 1]} : vector<6x6x8xbf16> to vector<4x4x8xbf16>
    %157 = vector.extract_strided_slice %150 {offsets = [2, 0, 0], sizes = [4, 4, 8], strides = [1, 1, 1]} : vector<6x6x8xbf16> to vector<4x4x8xbf16>
    %158 = vector.extract_strided_slice %150 {offsets = [2, 1, 0], sizes = [4, 4, 8], strides = [1, 1, 1]} : vector<6x6x8xbf16> to vector<4x4x8xbf16>
    %159 = vector.extract_strided_slice %150 {offsets = [2, 2, 0], sizes = [4, 4, 8], strides = [1, 1, 1]} : vector<6x6x8xbf16> to vector<4x4x8xbf16>
    %160 = tpu.concatenate %151, %152, %153, %154, %155, %156, %157, %158, %159 in 2 : vector<4x4x8xbf16>, vector<4x4x8xbf16>, vector<4x4x8xbf16>, vector<4x4x8xbf16>, vector<4x4x8xbf16>, vector<4x4x8xbf16>, vector<4x4x8xbf16>, vector<4x4x8xbf16>, vector<4x4x8xbf16> -> vector<4x4x72xbf16>
    %161 = vector.shape_cast %160 : vector<4x4x72xbf16> to vector<16x72xbf16>
    %c0_58 = arith.constant 0 : index
    %c0_59 = arith.constant 0 : index
    %162 = vector.load %arg16[%c0_58, %c0_59] : memref<72x8xbf16, #tpu.memory_space<vmem>>, vector<72x8xbf16>
    %cst_60 = arith.constant dense<0.000000e+00> : vector<16x8xf32>
    %163 = tpu.matmul %161, %162, %cst_60 {dimension_numbers = #tpu.dot_dimension_numbers<[1], [0], [0], [1], [0, 0, 1, 1], [], []>} : vector<16x72xbf16>, vector<72x8xbf16>, vector<16x8xf32> -> vector<16x8xf32>
    %c0_61 = arith.constant 0 : index
    %c0_62 = arith.constant 0 : index
    %164 = vector.load %arg17[%c0_61, %c0_62] : memref<1x8xf32, #tpu.memory_space<vmem>>, vector<1x8xf32>
    %165 = vector.broadcast %164 : vector<1x8xf32> to vector<16x8xf32>
    %166 = arith.addf %163, %165 : vector<16x8xf32>
    %167 = vector.shape_cast %166 : vector<16x8xf32> to vector<4x4x8xf32>
    %cst_63 = arith.constant 0.000000e+00 : f32
    %168 = vector.broadcast %cst_63 : f32 to vector<4x4x8xf32>
    %169 = arith.maximumf %167, %168 : vector<4x4x8xf32>
    %170 = arith.truncf %169 : vector<4x4x8xf32> to vector<4x4x8xbf16>
    %cst_64 = arith.constant 0.000000e+00 : bf16
    %171 = vector.broadcast %cst_64 : bf16 to vector<1x4x8xbf16>
    %cst_65 = arith.constant 0.000000e+00 : bf16
    %172 = vector.broadcast %cst_65 : bf16 to vector<6x1x8xbf16>
    %173 = tpu.concatenate %171, %170, %171 in 0 : vector<1x4x8xbf16>, vector<4x4x8xbf16>, vector<1x4x8xbf16> -> vector<6x4x8xbf16>
    %174 = tpu.concatenate %172, %173, %172 in 1 : vector<6x1x8xbf16>, vector<6x4x8xbf16>, vector<6x1x8xbf16> -> vector<6x6x8xbf16>
    %175 = vector.extract_strided_slice %174 {offsets = [0, 0, 0], sizes = [4, 4, 8], strides = [1, 1, 1]} : vector<6x6x8xbf16> to vector<4x4x8xbf16>
    %176 = vector.extract_strided_slice %174 {offsets = [0, 1, 0], sizes = [4, 4, 8], strides = [1, 1, 1]} : vector<6x6x8xbf16> to vector<4x4x8xbf16>
    %177 = vector.extract_strided_slice %174 {offsets = [0, 2, 0], sizes = [4, 4, 8], strides = [1, 1, 1]} : vector<6x6x8xbf16> to vector<4x4x8xbf16>
    %178 = vector.extract_strided_slice %174 {offsets = [1, 0, 0], sizes = [4, 4, 8], strides = [1, 1, 1]} : vector<6x6x8xbf16> to vector<4x4x8xbf16>
    %179 = vector.extract_strided_slice %174 {offsets = [1, 1, 0], sizes = [4, 4, 8], strides = [1, 1, 1]} : vector<6x6x8xbf16> to vector<4x4x8xbf16>
    %180 = vector.extract_strided_slice %174 {offsets = [1, 2, 0], sizes = [4, 4, 8], strides = [1, 1, 1]} : vector<6x6x8xbf16> to vector<4x4x8xbf16>
    %181 = vector.extract_strided_slice %174 {offsets = [2, 0, 0], sizes = [4, 4, 8], strides = [1, 1, 1]} : vector<6x6x8xbf16> to vector<4x4x8xbf16>
    %182 = vector.extract_strided_slice %174 {offsets = [2, 1, 0], sizes = [4, 4, 8], strides = [1, 1, 1]} : vector<6x6x8xbf16> to vector<4x4x8xbf16>
    %183 = vector.extract_strided_slice %174 {offsets = [2, 2, 0], sizes = [4, 4, 8], strides = [1, 1, 1]} : vector<6x6x8xbf16> to vector<4x4x8xbf16>
    %184 = tpu.concatenate %175, %176, %177, %178, %179, %180, %181, %182, %183 in 2 : vector<4x4x8xbf16>, vector<4x4x8xbf16>, vector<4x4x8xbf16>, vector<4x4x8xbf16>, vector<4x4x8xbf16>, vector<4x4x8xbf16>, vector<4x4x8xbf16>, vector<4x4x8xbf16>, vector<4x4x8xbf16> -> vector<4x4x72xbf16>
    %185 = vector.shape_cast %184 : vector<4x4x72xbf16> to vector<16x72xbf16>
    %c0_66 = arith.constant 0 : index
    %c0_67 = arith.constant 0 : index
    %186 = vector.load %arg18[%c0_66, %c0_67] : memref<72x16xbf16, #tpu.memory_space<vmem>>, vector<72x16xbf16>
    %cst_68 = arith.constant dense<0.000000e+00> : vector<16x16xf32>
    %187 = tpu.matmul %185, %186, %cst_68 {dimension_numbers = #tpu.dot_dimension_numbers<[1], [0], [0], [1], [0, 0, 1, 1], [], []>} : vector<16x72xbf16>, vector<72x16xbf16>, vector<16x16xf32> -> vector<16x16xf32>
    %c0_69 = arith.constant 0 : index
    %c0_70 = arith.constant 0 : index
    %188 = vector.load %arg19[%c0_69, %c0_70] : memref<1x16xf32, #tpu.memory_space<vmem>>, vector<1x16xf32>
    %189 = vector.broadcast %188 : vector<1x16xf32> to vector<16x16xf32>
    %190 = arith.addf %187, %189 : vector<16x16xf32>
    %191 = vector.shape_cast %190 : vector<16x16xf32> to vector<4x4x16xf32>
    %cst_71 = arith.constant 1.000000e-01 : f32
    %192 = vector.broadcast %cst_71 : f32 to vector<4x4x16xf32>
    %193 = arith.mulf %191, %192 : vector<4x4x16xf32>
    %194 = vector.extract_strided_slice %193 {offsets = [0, 0, 0], sizes = [4, 4, 8], strides = [1, 1, 1]} : vector<4x4x16xf32> to vector<4x4x8xf32>
    %195 = math.tanh %194 : vector<4x4x8xf32>
    %cst_72 = arith.constant 2.000000e+00 : f32
    %196 = vector.broadcast %cst_72 : f32 to vector<4x4x8xf32>
    %197 = arith.mulf %196, %195 : vector<4x4x8xf32>
    %198 = math.exp %197 : vector<4x4x8xf32>
    %199 = arith.mulf %145, %198 : vector<4x4x8xf32>
    %200 = vector.extract_strided_slice %193 {offsets = [0, 0, 8], sizes = [4, 4, 8], strides = [1, 1, 1]} : vector<4x4x16xf32> to vector<4x4x8xf32>
    %201 = arith.addf %199, %200 : vector<4x4x8xf32>
    %202 = vector.shape_cast %197 : vector<4x4x8xf32> to vector<1x4x4x8xf32>
    %cst_73 = arith.constant dense<0.000000e+00> : vector<1xf32>
    %203 = vector.multi_reduction <add>, %202, %cst_73 [1, 2, 3] : vector<1x4x4x8xf32> to vector<1xf32>
    %204 = vector.shape_cast %203 : vector<1xf32> to vector<1x1x1x1xf32>
    %205 = vector.extract %204[0, 0, 0, 0] : f32 from vector<1x1x1x1xf32>
    %206 = arith.addf %135, %205 : f32
    %207 = tpu.concatenate %144, %201 in 2 : vector<4x4x8xf32>, vector<4x4x8xf32> -> vector<4x4x16xf32>
    %208 = vector.shape_cast %207 : vector<4x4x16xf32> to vector<16x16xf32>
    %c0_74 = arith.constant 0 : index
    %c0_75 = arith.constant 0 : index
    %209 = vector.load %arg20[%c0_74, %c0_75] : memref<16x16xf32, #tpu.memory_space<vmem>>, vector<16x16xf32>
    %cst_76 = arith.constant dense<0.000000e+00> : vector<16x16xf32>
    %210 = tpu.matmul %208, %209, %cst_76 {dimension_numbers = #tpu.dot_dimension_numbers<[1], [0], [0], [1], [0, 0, 1, 1], [], []>} : vector<16x16xf32>, vector<16x16xf32>, vector<16x16xf32> -> vector<16x16xf32>
    %c0_77 = arith.constant 0 : index
    %c0_78 = arith.constant 0 : index
    %211 = vector.load %arg21[%c0_77, %c0_78] : memref<1x16xf32, #tpu.memory_space<vmem>>, vector<1x16xf32>
    %212 = vector.broadcast %211 : vector<1x16xf32> to vector<16x16xf32>
    %213 = arith.addf %210, %212 : vector<16x16xf32>
    %214 = vector.shape_cast %213 : vector<16x16xf32> to vector<4x4x16xf32>
    %215 = vector.extract_strided_slice %214 {offsets = [0, 0, 0], sizes = [4, 4, 8], strides = [1, 1, 1]} : vector<4x4x16xf32> to vector<4x4x8xf32>
    %216 = vector.extract_strided_slice %214 {offsets = [0, 0, 8], sizes = [4, 4, 8], strides = [1, 1, 1]} : vector<4x4x16xf32> to vector<4x4x8xf32>
    %217 = arith.truncf %215 : vector<4x4x8xf32> to vector<4x4x8xbf16>
    %218 = vector.shape_cast %217 : vector<4x4x8xbf16> to vector<16x8xbf16>
    %c0_79 = arith.constant 0 : index
    %c0_80 = arith.constant 0 : index
    %219 = vector.load %arg22[%c0_79, %c0_80] : memref<8x8xbf16, #tpu.memory_space<vmem>>, vector<8x8xbf16>
    %cst_81 = arith.constant dense<0.000000e+00> : vector<16x8xf32>
    %220 = tpu.matmul %218, %219, %cst_81 {dimension_numbers = #tpu.dot_dimension_numbers<[1], [0], [0], [1], [0, 0, 1, 1], [], []>} : vector<16x8xbf16>, vector<8x8xbf16>, vector<16x8xf32> -> vector<16x8xf32>
    %c0_82 = arith.constant 0 : index
    %c0_83 = arith.constant 0 : index
    %221 = vector.load %arg23[%c0_82, %c0_83] : memref<1x8xf32, #tpu.memory_space<vmem>>, vector<1x8xf32>
    %222 = vector.broadcast %221 : vector<1x8xf32> to vector<16x8xf32>
    %223 = arith.addf %220, %222 : vector<16x8xf32>
    %224 = vector.shape_cast %223 : vector<16x8xf32> to vector<4x4x8xf32>
    %cst_84 = arith.constant 0.000000e+00 : f32
    %225 = vector.broadcast %cst_84 : f32 to vector<4x4x8xf32>
    %226 = arith.maximumf %224, %225 : vector<4x4x8xf32>
    %227 = arith.truncf %226 : vector<4x4x8xf32> to vector<4x4x8xbf16>
    %228 = vector.shape_cast %227 : vector<4x4x8xbf16> to vector<16x8xbf16>
    %c0_85 = arith.constant 0 : index
    %c0_86 = arith.constant 0 : index
    %229 = vector.load %arg24[%c0_85, %c0_86] : memref<8x16xbf16, #tpu.memory_space<vmem>>, vector<8x16xbf16>
    %cst_87 = arith.constant dense<0.000000e+00> : vector<16x16xf32>
    %230 = tpu.matmul %228, %229, %cst_87 {dimension_numbers = #tpu.dot_dimension_numbers<[1], [0], [0], [1], [0, 0, 1, 1], [], []>} : vector<16x8xbf16>, vector<8x16xbf16>, vector<16x16xf32> -> vector<16x16xf32>
    %c0_88 = arith.constant 0 : index
    %c0_89 = arith.constant 0 : index
    %231 = vector.load %arg25[%c0_88, %c0_89] : memref<1x16xf32, #tpu.memory_space<vmem>>, vector<1x16xf32>
    %232 = vector.broadcast %231 : vector<1x16xf32> to vector<16x16xf32>
    %233 = arith.addf %230, %232 : vector<16x16xf32>
    %234 = vector.shape_cast %233 : vector<16x16xf32> to vector<4x4x16xf32>
    %cst_90 = arith.constant 1.000000e-01 : f32
    %235 = vector.broadcast %cst_90 : f32 to vector<4x4x16xf32>
    %236 = arith.mulf %234, %235 : vector<4x4x16xf32>
    %237 = vector.extract_strided_slice %236 {offsets = [0, 0, 0], sizes = [4, 4, 8], strides = [1, 1, 1]} : vector<4x4x16xf32> to vector<4x4x8xf32>
    %238 = math.tanh %237 : vector<4x4x8xf32>
    %cst_91 = arith.constant 2.000000e+00 : f32
    %239 = vector.broadcast %cst_91 : f32 to vector<4x4x8xf32>
    %240 = arith.mulf %239, %238 : vector<4x4x8xf32>
    %241 = math.exp %240 : vector<4x4x8xf32>
    %242 = arith.mulf %216, %241 : vector<4x4x8xf32>
    %243 = vector.extract_strided_slice %236 {offsets = [0, 0, 8], sizes = [4, 4, 8], strides = [1, 1, 1]} : vector<4x4x16xf32> to vector<4x4x8xf32>
    %244 = arith.addf %242, %243 : vector<4x4x8xf32>
    %245 = vector.shape_cast %240 : vector<4x4x8xf32> to vector<1x4x4x8xf32>
    %cst_92 = arith.constant dense<0.000000e+00> : vector<1xf32>
    %246 = vector.multi_reduction <add>, %245, %cst_92 [1, 2, 3] : vector<1x4x4x8xf32> to vector<1xf32>
    %247 = vector.shape_cast %246 : vector<1xf32> to vector<1x1x1x1xf32>
    %248 = vector.extract %247[0, 0, 0, 0] : f32 from vector<1x1x1x1xf32>
    %249 = arith.addf %206, %248 : f32
    %250 = tpu.concatenate %215, %244 in 2 : vector<4x4x8xf32>, vector<4x4x8xf32> -> vector<4x4x16xf32>
    %251 = vector.shape_cast %250 : vector<4x4x16xf32> to vector<16x16xf32>
    %c0_93 = arith.constant 0 : index
    %c0_94 = arith.constant 0 : index
    %252 = vector.load %arg26[%c0_93, %c0_94] : memref<16x16xf32, #tpu.memory_space<vmem>>, vector<16x16xf32>
    %cst_95 = arith.constant dense<0.000000e+00> : vector<16x16xf32>
    %253 = tpu.matmul %251, %252, %cst_95 {dimension_numbers = #tpu.dot_dimension_numbers<[1], [0], [0], [1], [0, 0, 1, 1], [], []>} : vector<16x16xf32>, vector<16x16xf32>, vector<16x16xf32> -> vector<16x16xf32>
    %c0_96 = arith.constant 0 : index
    %c0_97 = arith.constant 0 : index
    %254 = vector.load %arg27[%c0_96, %c0_97] : memref<1x16xf32, #tpu.memory_space<vmem>>, vector<1x16xf32>
    %255 = vector.broadcast %254 : vector<1x16xf32> to vector<16x16xf32>
    %256 = arith.addf %253, %255 : vector<16x16xf32>
    %257 = vector.shape_cast %256 : vector<16x16xf32> to vector<4x4x16xf32>
    %258 = arith.mulf %257, %257 : vector<4x4x16xf32>
    %259 = vector.shape_cast %258 : vector<4x4x16xf32> to vector<1x4x4x16xf32>
    %cst_98 = arith.constant dense<0.000000e+00> : vector<1xf32>
    %260 = vector.multi_reduction <add>, %259, %cst_98 [1, 2, 3] : vector<1x4x4x16xf32> to vector<1xf32>
    %261 = vector.shape_cast %260 : vector<1xf32> to vector<1x1x1x1xf32>
    %262 = vector.extract %261[0, 0, 0, 0] : f32 from vector<1x1x1x1xf32>
    %cst_99 = arith.constant 5.000000e-01 : f32
    %263 = arith.mulf %cst_99, %262 : f32
    %264 = arith.subf %263, %249 : f32
    %265 = vector.broadcast %264 : f32 to vector<1x1x128xf32>
    %c0_100 = arith.constant 0 : index
    %c0_101 = arith.constant 0 : index
    %c0_102 = arith.constant 0 : index
    %266 = vector.load %arg28[%c0_100, %c0_101, %c0_102] : memref<1x1x128xf32, #tpu.memory_space<vmem>>, vector<1x1x128xf32>
    tpu.vector_store %arg28[%c0_100, %c0_101, %c0_102], %265 {strides = array<i32>} : memref<1x1x128xf32, #tpu.memory_space<vmem>>, vector<1x1x128xf32>,
    %cst_103 = arith.constant dense<0.000000e+00> : vector<4x4xf32>
    %267 = vector.multi_reduction <add>, %258, %cst_103 [2] : vector<4x4x16xf32> to vector<4x4xf32>
    %cst_104 = arith.constant 1.600000e+01 : f32
    %268 = vector.broadcast %cst_104 : f32 to vector<4x4xf32>
    %269 = arith.divf %267, %268 : vector<4x4xf32>
    %cst_105 = arith.constant -5.000000e-01 : f32
    %270 = vector.broadcast %cst_105 : f32 to vector<4x4xf32>
    %271 = arith.mulf %270, %269 : vector<4x4xf32>
    %272 = math.exp %271 : vector<4x4xf32>
    %cst_106 = arith.constant 0.000000e+00 : f32
    %273 = vector.broadcast %cst_106 : f32 to vector<4x4xf32>
    %274 = arith.subf %273, %272 : vector<4x4xf32>
    %275 = vector.shape_cast %274 : vector<4x4xf32> to vector<1x4x4xf32>
    %c0_107 = arith.constant 0 : index
    %c0_108 = arith.constant 0 : index
    %c0_109 = arith.constant 0 : index
    %276 = vector.load %arg29[%c0_107, %c0_108, %c0_109] : memref<1x4x4xf32, #tpu.memory_space<vmem>>, vector<1x4x4xf32>
    tpu.vector_store %arg29[%c0_107, %c0_108, %c0_109], %275 {strides = array<i32>} : memref<1x4x4xf32, #tpu.memory_space<vmem>>, vector<1x4x4xf32>,
    return
  }
  func.func @transform_0(%arg0: i32) -> (i32, i32, i32, i32) {
    %c0_i32 = arith.constant 0 : i32
    %c0_i32_0 = arith.constant 0 : i32
    %c0_i32_1 = arith.constant 0 : i32
    %c0_i32_2 = arith.constant 0 : i32
    return %arg0, %c0_i32, %c0_i32_0, %c0_i32_1 : i32, i32, i32, i32
  }
  func.func @transform_1(%arg0: i32) -> (i32, i32, i32) {
    %c0_i32 = arith.constant 0 : i32
    %c0_i32_0 = arith.constant 0 : i32
    %c0_i32_1 = arith.constant 0 : i32
    %c0_i32_2 = arith.constant 0 : i32
    return %c0_i32, %c0_i32_0, %c0_i32_1 : i32, i32, i32
  }
  func.func @transform_2(%arg0: i32) -> (i32, i32, i32) {
    %c0_i32 = arith.constant 0 : i32
    %c0_i32_0 = arith.constant 0 : i32
    %c0_i32_1 = arith.constant 0 : i32
    %c0_i32_2 = arith.constant 0 : i32
    return %c0_i32, %c0_i32_0, %c0_i32_1 : i32, i32, i32
  }
  func.func @transform_3(%arg0: i32) -> (i32, i32) {
    %c0_i32 = arith.constant 0 : i32
    %c0_i32_0 = arith.constant 0 : i32
    %c0_i32_1 = arith.constant 0 : i32
    return %c0_i32, %c0_i32_0 : i32, i32
  }
  func.func @transform_4(%arg0: i32) -> (i32, i32) {
    %c0_i32 = arith.constant 0 : i32
    %c0_i32_0 = arith.constant 0 : i32
    %c0_i32_1 = arith.constant 0 : i32
    return %c0_i32, %c0_i32_0 : i32, i32
  }
  func.func @transform_5(%arg0: i32) -> (i32, i32) {
    %c0_i32 = arith.constant 0 : i32
    %c0_i32_0 = arith.constant 0 : i32
    %c0_i32_1 = arith.constant 0 : i32
    return %c0_i32, %c0_i32_0 : i32, i32
  }
  func.func @transform_6(%arg0: i32) -> (i32, i32) {
    %c0_i32 = arith.constant 0 : i32
    %c0_i32_0 = arith.constant 0 : i32
    %c0_i32_1 = arith.constant 0 : i32
    return %c0_i32, %c0_i32_0 : i32, i32
  }
  func.func @transform_7(%arg0: i32) -> (i32, i32) {
    %c0_i32 = arith.constant 0 : i32
    %c0_i32_0 = arith.constant 0 : i32
    %c0_i32_1 = arith.constant 0 : i32
    return %c0_i32, %c0_i32_0 : i32, i32
  }
  func.func @transform_8(%arg0: i32) -> (i32, i32) {
    %c0_i32 = arith.constant 0 : i32
    %c0_i32_0 = arith.constant 0 : i32
    %c0_i32_1 = arith.constant 0 : i32
    return %c0_i32, %c0_i32_0 : i32, i32
  }
  func.func @transform_9(%arg0: i32) -> (i32, i32) {
    %c0_i32 = arith.constant 0 : i32
    %c0_i32_0 = arith.constant 0 : i32
    %c0_i32_1 = arith.constant 0 : i32
    return %c0_i32, %c0_i32_0 : i32, i32
  }
  func.func @transform_10(%arg0: i32) -> (i32, i32) {
    %c0_i32 = arith.constant 0 : i32
    %c0_i32_0 = arith.constant 0 : i32
    %c0_i32_1 = arith.constant 0 : i32
    return %c0_i32, %c0_i32_0 : i32, i32
  }
  func.func @transform_11(%arg0: i32) -> (i32, i32) {
    %c0_i32 = arith.constant 0 : i32
    %c0_i32_0 = arith.constant 0 : i32
    %c0_i32_1 = arith.constant 0 : i32
    return %c0_i32, %c0_i32_0 : i32, i32
  }
  func.func @transform_12(%arg0: i32) -> (i32, i32) {
    %c0_i32 = arith.constant 0 : i32
    %c0_i32_0 = arith.constant 0 : i32
    %c0_i32_1 = arith.constant 0 : i32
    return %c0_i32, %c0_i32_0 : i32, i32
  }
  func.func @transform_13(%arg0: i32) -> (i32, i32) {
    %c0_i32 = arith.constant 0 : i32
    %c0_i32_0 = arith.constant 0 : i32
    %c0_i32_1 = arith.constant 0 : i32
    return %c0_i32, %c0_i32_0 : i32, i32
  }
  func.func @transform_14(%arg0: i32) -> (i32, i32) {
    %c0_i32 = arith.constant 0 : i32
    %c0_i32_0 = arith.constant 0 : i32
    %c0_i32_1 = arith.constant 0 : i32
    return %c0_i32, %c0_i32_0 : i32, i32
  }
  func.func @transform_15(%arg0: i32) -> (i32, i32) {
    %c0_i32 = arith.constant 0 : i32
    %c0_i32_0 = arith.constant 0 : i32
    %c0_i32_1 = arith.constant 0 : i32
    return %c0_i32, %c0_i32_0 : i32, i32
  }
  func.func @transform_16(%arg0: i32) -> (i32, i32) {
    %c0_i32 = arith.constant 0 : i32
    %c0_i32_0 = arith.constant 0 : i32
    %c0_i32_1 = arith.constant 0 : i32
    return %c0_i32, %c0_i32_0 : i32, i32
  }
  func.func @transform_17(%arg0: i32) -> (i32, i32) {
    %c0_i32 = arith.constant 0 : i32
    %c0_i32_0 = arith.constant 0 : i32
    %c0_i32_1 = arith.constant 0 : i32
    return %c0_i32, %c0_i32_0 : i32, i32
  }
  func.func @transform_18(%arg0: i32) -> (i32, i32) {
    %c0_i32 = arith.constant 0 : i32
    %c0_i32_0 = arith.constant 0 : i32
    %c0_i32_1 = arith.constant 0 : i32
    return %c0_i32, %c0_i32_0 : i32, i32
  }
  func.func @transform_19(%arg0: i32) -> (i32, i32) {
    %c0_i32 = arith.constant 0 : i32
    %c0_i32_0 = arith.constant 0 : i32
    %c0_i32_1 = arith.constant 0 : i32
    return %c0_i32, %c0_i32_0 : i32, i32
  }
  func.func @transform_20(%arg0: i32) -> (i32, i32) {
    %c0_i32 = arith.constant 0 : i32
    %c0_i32_0 = arith.constant 0 : i32
    %c0_i32_1 = arith.constant 0 : i32
    return %c0_i32, %c0_i32_0 : i32, i32
  }
  func.func @transform_21(%arg0: i32) -> (i32, i32) {
    %c0_i32 = arith.constant 0 : i32
    %c0_i32_0 = arith.constant 0 : i32
    %c0_i32_1 = arith.constant 0 : i32
    return %c0_i32, %c0_i32_0 : i32, i32
  }
  func.func @transform_22(%arg0: i32) -> (i32, i32) {
    %c0_i32 = arith.constant 0 : i32
    %c0_i32_0 = arith.constant 0 : i32
    %c0_i32_1 = arith.constant 0 : i32
    return %c0_i32, %c0_i32_0 : i32, i32
  }
  func.func @transform_23(%arg0: i32) -> (i32, i32) {
    %c0_i32 = arith.constant 0 : i32
    %c0_i32_0 = arith.constant 0 : i32
    %c0_i32_1 = arith.constant 0 : i32
    return %c0_i32, %c0_i32_0 : i32, i32
  }
  func.func @transform_24(%arg0: i32) -> (i32, i32) {
    %c0_i32 = arith.constant 0 : i32
    %c0_i32_0 = arith.constant 0 : i32
    %c0_i32_1 = arith.constant 0 : i32
    return %c0_i32, %c0_i32_0 : i32, i32
  }
  func.func @transform_25(%arg0: i32) -> (i32, i32) {
    %c0_i32 = arith.constant 0 : i32
    %c0_i32_0 = arith.constant 0 : i32
    %c0_i32_1 = arith.constant 0 : i32
    return %c0_i32, %c0_i32_0 : i32, i32
  }
  func.func @transform_26(%arg0: i32) -> (i32, i32) {
    %c0_i32 = arith.constant 0 : i32
    %c0_i32_0 = arith.constant 0 : i32
    %c0_i32_1 = arith.constant 0 : i32
    return %c0_i32, %c0_i32_0 : i32, i32
  }
  func.func @transform_27(%arg0: i32) -> (i32, i32, i32) {
    %c0_i32 = arith.constant 0 : i32
    %c0_i32_0 = arith.constant 0 : i32
    %c0_i32_1 = arith.constant 0 : i32
    return %arg0, %c0_i32, %c0_i32_0 : i32, i32, i32
  }
  func.func @transform_28(%arg0: i32) -> (i32, i32, i32) {
    %c0_i32 = arith.constant 0 : i32
    %c0_i32_0 = arith.constant 0 : i32
    %c0_i32_1 = arith.constant 0 : i32
    return %arg0, %c0_i32, %c0_i32_0 : i32, i32, i32
  }
}

</mosaic_0001>

<llo_original>
// kernel: _lambda_.2
$region0: #{_lambda_.2}
  #allocation0 [shape = 'u32[]', space=smem, size = 0x4, offset = 0x4, fixed_abs, tag = 'smem constant byte address 0x4 - core index']
  #allocation1 [shape = 'u32[144,128]{1,0:T(1,128)}', space=vmem, size = 0x12000, scoped, tag = 'internal scratch']
  %s0 = inlined_call_operand.vmem [shape: f32[2,8,8,8], index: 0, kind: input, shape index: {}]
  %s1 = inlined_call_operand.vmem [shape: f32[8,8,8], index: 1, kind: input, shape index: {}]
  %s2 = inlined_call_operand.vmem [shape: f32[8,8,8], index: 2, kind: input, shape index: {}]
  %s3 = inlined_call_operand.vmem [shape: bf16[36,4], index: 3, kind: input, shape index: {}]
  %s4 = inlined_call_operand.vmem [shape: f32[1,4], index: 4, kind: input, shape index: {}]
  %s5 = inlined_call_operand.vmem [shape: bf16[36,8], index: 5, kind: input, shape index: {}]
  %s6 = inlined_call_operand.vmem [shape: f32[1,8], index: 6, kind: input, shape index: {}]
  %s7 = inlined_call_operand.vmem [shape: f32[8,8], index: 7, kind: input, shape index: {}]
  %s8 = inlined_call_operand.vmem [shape: f32[1,8], index: 8, kind: input, shape index: {}, may-alias: {8,14,20,26}]
  %s9 = inlined_call_operand.vmem [shape: bf16[4,4], index: 9, kind: input, shape index: {}]
  %s10 = inlined_call_operand.vmem [shape: f32[1,4], index: 10, kind: input, shape index: {}]
  %s11 = inlined_call_operand.vmem [shape: bf16[4,8], index: 11, kind: input, shape index: {}]
  %s12 = inlined_call_operand.vmem [shape: f32[1,8], index: 12, kind: input, shape index: {}]
  %s13 = inlined_call_operand.vmem [shape: f32[8,8], index: 13, kind: input, shape index: {}]
  %s14 = inlined_call_operand.vmem [shape: f32[1,8], index: 14, kind: input, shape index: {}, may-alias: {8,14,20,26}]
  %s15 = inlined_call_operand.vmem [shape: bf16[36,4], index: 15, kind: input, shape index: {}]
  %s16 = inlined_call_operand.vmem [shape: f32[1,4], index: 16, kind: input, shape index: {}]
  %s17 = inlined_call_operand.vmem [shape: bf16[36,8], index: 17, kind: input, shape index: {}]
  %s18 = inlined_call_operand.vmem [shape: f32[1,8], index: 18, kind: input, shape index: {}]
  %s19 = inlined_call_operand.vmem [shape: f32[8,8], index: 19, kind: input, shape index: {}]
  %s20 = inlined_call_operand.vmem [shape: f32[1,8], index: 20, kind: input, shape index: {}, may-alias: {8,14,20,26}]
  %s21 = inlined_call_operand.vmem [shape: bf16[4,4], index: 21, kind: input, shape index: {}]
  %s22 = inlined_call_operand.vmem [shape: f32[1,4], index: 22, kind: input, shape index: {}]
  %s23 = inlined_call_operand.vmem [shape: bf16[4,8], index: 23, kind: input, shape index: {}]
  %s24 = inlined_call_operand.vmem [shape: f32[1,8], index: 24, kind: input, shape index: {}]
  %s25 = inlined_call_operand.vmem [shape: f32[8,8], index: 25, kind: input, shape index: {}]
  %s26 = inlined_call_operand.vmem [shape: f32[1,8], index: 26, kind: input, shape index: {}, may-alias: {8,14,20,26}]
  %s27 = inlined_call_operand.vmem [shape: f32[2,1,128], index: 27, kind: output, shape index: {0}]
  %s28 = inlined_call_operand.vmem [shape: f32[2,8,8], index: 28, kind: output, shape index: {1}]
  %29 = xla_tuple %s27, %s28
  %s30 = sld [smem:[#allocation0]]
  $region149: #{_lambda_.2} parent=0
    _
  %s32 = ssub.s32 1, %s30
  %s33 = scalar_select 0, %s32, %s30
  loop: start=0, step=1, limit=4
  $region2: #{_lambda_.2} parent=0 // loop_pre_header
    _
  $region3: #{_lambda_.2} parent=0 // loop_header
    %s35 = sphi 0, %s39
    %p36 = scmp.ge.s32.totalorder %s35, 4
    %s45 = sphi 0, %s47
    %s48 = sphi 0, %s45
    %s49 = sphi 0, %s48
    %s65 = sphi 0, %s49
    %s69 = sphi 0, %s69
    %s71 = sphi 0, %s69
    %s72 = sphi 0, %s71
    %s86 = sphi 0, %s72
    %s90 = sphi 0, %s90
    %s92 = sphi 0, %s90
    %s93 = sphi 0, %s92
    %s107 = sphi 0, %s93
    %s111 = sphi 0, %s111
    %s113 = sphi 0, %s111
    %s114 = sphi 0, %s113
    %s128 = sphi 0, %s114
    %s132 = sphi 0, %s132
    %s134 = sphi 0, %s132
    %s135 = sphi 0, %s134
    %s149 = sphi 0, %s135
    %s153 = sphi 0, %s153
    %s155 = sphi 0, %s153
    %s156 = sphi 0, %s155
    %s170 = sphi 0, %s156
    %s174 = sphi 0, %s174
    %s176 = sphi 0, %s174
    %s177 = sphi 0, %s176
    %s191 = sphi 0, %s177
    %s195 = sphi 0, %s195
    %s197 = sphi 0, %s195
    %s198 = sphi 0, %s197
    %s212 = sphi 0, %s198
    %s216 = sphi 0, %s216
    %s218 = sphi 0, %s216
    %s219 = sphi 0, %s218
    %s233 = sphi 0, %s219
    %s237 = sphi 0, %s237
    %s239 = sphi 0, %s237
    %s240 = sphi 0, %s239
    %s254 = sphi 0, %s240
    %s258 = sphi 0, %s258
    %s260 = sphi 0, %s258
    %s261 = sphi 0, %s260
    %s275 = sphi 0, %s261
    %s279 = sphi 0, %s279
    %s281 = sphi 0, %s279
    %s282 = sphi 0, %s281
    %s296 = sphi 0, %s282
    %s300 = sphi 0, %s300
    %s302 = sphi 0, %s300
    %s303 = sphi 0, %s302
    %s317 = sphi 0, %s303
    %s321 = sphi 0, %s321
    %s323 = sphi 0, %s321
    %s324 = sphi 0, %s323
    %s338 = sphi 0, %s324
    %s342 = sphi 0, %s342
    %s344 = sphi 0, %s342
    %s345 = sphi 0, %s344
    %s359 = sphi 0, %s345
    %s363 = sphi 0, %s363
    %s365 = sphi 0, %s363
    %s366 = sphi 0, %s365
    %s380 = sphi 0, %s366
    %s384 = sphi 0, %s384
    %s386 = sphi 0, %s384
    %s387 = sphi 0, %s386
    %s401 = sphi 0, %s387
    %s405 = sphi 0, %s405
    %s407 = sphi 0, %s405
    %s408 = sphi 0, %s407
    %s422 = sphi 0, %s408
    %s426 = sphi 0, %s426
    %s428 = sphi 0, %s426
    %s429 = sphi 0, %s428
    %s443 = sphi 0, %s429
    %s447 = sphi 0, %s447
    %s449 = sphi 0, %s447
    %s450 = sphi 0, %s449
    %s464 = sphi 0, %s450
    %s468 = sphi 0, %s468
    %s470 = sphi 0, %s468
    %s471 = sphi 0, %s470
    %s485 = sphi 0, %s471
    %s489 = sphi 0, %s489
    %s491 = sphi 0, %s489
    %s492 = sphi 0, %s491
    %s506 = sphi 0, %s492
    %s510 = sphi 0, %s510
    %s512 = sphi 0, %s510
    %s513 = sphi 0, %s512
    %s527 = sphi 0, %s513
    %s531 = sphi 0, %s531
    %s533 = sphi 0, %s531
    %s534 = sphi 0, %s533
    %s548 = sphi 0, %s534
    %s552 = sphi 0, %s552
    %s554 = sphi 0, %s552
    %s555 = sphi 0, %s554
    %s569 = sphi 0, %s555
    %s573 = sphi 0, %s573
    %s575 = sphi 0, %s573
    %s576 = sphi 0, %s575
    %s590 = sphi 0, %s576
    %s594 = sphi 0, %s594
    %s596 = sphi 0, %s594
    %s597 = sphi 0, %s596
    %s611 = sphi 0, %s597
    %s617 = sphi 0, %s619
    %s620 = sphi 0, %s617
    %s621 = sphi 0, %s620
    %s637 = sphi 0, %s621
    %s643 = sphi 0, %s645
    %s646 = sphi 0, %s643
    %s647 = sphi 0, %s646
    %s663 = sphi 0, %s647
  $region4: #{_lambda_.2} parent=0 // loop_header_branch
    %38 = sbr.rel (%p36) target = $region8
  $region5: #{_lambda_.2} parent=0 // loop_body
    %s40 = ssub.s32 %s35, 1
    %s41 = ssub.s32 %s35, 2
    %s42 = sadd.s32 %s35, 1
    %s43 = ssub.s32 %s35, %s42
    %p44 = scmp.eq.s32.totalorder %s43, 0
    %s46 = sadd.s32 %s45, 1
    %s47 = scalar_select %p44, %s45, %s46
    %p50 = pneg %p44
    %p51 = scmp.eq.s32.totalorder %s35, 1
    %p52 = por %p50, %p51
    %p53 = scmp.ne.s32.totalorder %s45, %s48
    %p54 = scmp.eq.s32.totalorder %s35, 0
    %p55 = por %p53, %p54
    %p56 = scmp.ne.s32.totalorder %s45, %s48
    %p57 = scmp.eq.s32.totalorder %s40, 1
    %p58 = por %p56, %p57
    %p59 = scmp.ne.s32.totalorder %s48, %s49
    %p60 = scmp.eq.s32.totalorder %s40, 0
    %p61 = por %p59, %p60
    %p62 = scmp.ne.s32.totalorder %s48, %s49
    %p63 = scmp.eq.s32.totalorder %s41, 1
    %p64 = por %p62, %p63
    %p66 = scmp.ne.s32.totalorder %s49, %s65
    %p67 = scmp.eq.s32.totalorder %s41, 0
    %p68 = por %p66, %p67
    %s70 = sadd.s32 %s69, 1
    %p73 = scmp.eq.s32.totalorder %s35, 1
    %p74 = scmp.ne.s32.totalorder %s69, %s71
    %p75 = scmp.eq.s32.totalorder %s35, 0
    %p76 = por %p74, %p75
    %p77 = scmp.ne.s32.totalorder %s69, %s71
    %p78 = scmp.eq.s32.totalorder %s40, 1
    %p79 = por %p77, %p78
    %p80 = scmp.ne.s32.totalorder %s71, %s72
    %p81 = scmp.eq.s32.totalorder %s40, 0
    %p82 = por %p80, %p81
    %p83 = scmp.ne.s32.totalorder %s71, %s72
    %p84 = scmp.eq.s32.totalorder %s41, 1
    %p85 = por %p83, %p84
    %p87 = scmp.ne.s32.totalorder %s72, %s86
    %p88 = scmp.eq.s32.totalorder %s41, 0
    %p89 = por %p87, %p88
    %s91 = sadd.s32 %s90, 1
    %p94 = scmp.eq.s32.totalorder %s35, 1
    %p95 = scmp.ne.s32.totalorder %s90, %s92
    %p96 = scmp.eq.s32.totalorder %s35, 0
    %p97 = por %p95, %p96
    %p98 = scmp.ne.s32.totalorder %s90, %s92
    %p99 = scmp.eq.s32.totalorder %s40, 1
    %p100 = por %p98, %p99
    %p101 = scmp.ne.s32.totalorder %s92, %s93
    %p102 = scmp.eq.s32.totalorder %s40, 0
    %p103 = por %p101, %p102
    %p104 = scmp.ne.s32.totalorder %s92, %s93
    %p105 = scmp.eq.s32.totalorder %s41, 1
    %p106 = por %p104, %p105
    %p108 = scmp.ne.s32.totalorder %s93, %s107
    %p109 = scmp.eq.s32.totalorder %s41, 0
    %p110 = por %p108, %p109
    %s112 = sadd.s32 %s111, 1
    %p115 = scmp.eq.s32.totalorder %s35, 1
    %p116 = scmp.ne.s32.totalorder %s111, %s113
    %p117 = scmp.eq.s32.totalorder %s35, 0
    %p118 = por %p116, %p117
    %p119 = scmp.ne.s32.totalorder %s111, %s113
    %p120 = scmp.eq.s32.totalorder %s40, 1
    %p121 = por %p119, %p120
    %p122 = scmp.ne.s32.totalorder %s113, %s114
    %p123 = scmp.eq.s32.totalorder %s40, 0
    %p124 = por %p122, %p123
    %p125 = scmp.ne.s32.totalorder %s113, %s114
    %p126 = scmp.eq.s32.totalorder %s41, 1
    %p127 = por %p125, %p126
    %p129 = scmp.ne.s32.totalorder %s114, %s128
    %p130 = scmp.eq.s32.totalorder %s41, 0
    %p131 = por %p129, %p130
    %s133 = sadd.s32 %s132, 1
    %p136 = scmp.eq.s32.totalorder %s35, 1
    %p137 = scmp.ne.s32.totalorder %s132, %s134
    %p138 = scmp.eq.s32.totalorder %s35, 0
    %p139 = por %p137, %p138
    %p140 = scmp.ne.s32.totalorder %s132, %s134
    %p141 = scmp.eq.s32.totalorder %s40, 1
    %p142 = por %p140, %p141
    %p143 = scmp.ne.s32.totalorder %s134, %s135
    %p144 = scmp.eq.s32.totalorder %s40, 0
    %p145 = por %p143, %p144
    %p146 = scmp.ne.s32.totalorder %s134, %s135
    %p147 = scmp.eq.s32.totalorder %s41, 1
    %p148 = por %p146, %p147
    %p150 = scmp.ne.s32.totalorder %s135, %s149
    %p151 = scmp.eq.s32.totalorder %s41, 0
    %p152 = por %p150, %p151
    %s154 = sadd.s32 %s153, 1
    %p157 = scmp.eq.s32.totalorder %s35, 1
    %p158 = scmp.ne.s32.totalorder %s153, %s155
    %p159 = scmp.eq.s32.totalorder %s35, 0
    %p160 = por %p158, %p159
    %p161 = scmp.ne.s32.totalorder %s153, %s155
    %p162 = scmp.eq.s32.totalorder %s40, 1
    %p163 = por %p161, %p162
    %p164 = scmp.ne.s32.totalorder %s155, %s156
    %p165 = scmp.eq.s32.totalorder %s40, 0
    %p166 = por %p164, %p165
    %p167 = scmp.ne.s32.totalorder %s155, %s156
    %p168 = scmp.eq.s32.totalorder %s41, 1
    %p169 = por %p167, %p168
    %p171 = scmp.ne.s32.totalorder %s156, %s170
    %p172 = scmp.eq.s32.totalorder %s41, 0
    %p173 = por %p171, %p172
    %s175 = sadd.s32 %s174, 1
    %p178 = scmp.eq.s32.totalorder %s35, 1
    %p179 = scmp.ne.s32.totalorder %s174, %s176
    %p180 = scmp.eq.s32.totalorder %s35, 0
    %p181 = por %p179, %p180
    %p182 = scmp.ne.s32.totalorder %s174, %s176
    %p183 = scmp.eq.s32.totalorder %s40, 1
    %p184 = por %p182, %p183
    %p185 = scmp.ne.s32.totalorder %s176, %s177
    %p186 = scmp.eq.s32.totalorder %s40, 0
    %p187 = por %p185, %p186
    %p188 = scmp.ne.s32.totalorder %s176, %s177
    %p189 = scmp.eq.s32.totalorder %s41, 1
    %p190 = por %p188, %p189
    %p192 = scmp.ne.s32.totalorder %s177, %s191
    %p193 = scmp.eq.s32.totalorder %s41, 0
    %p194 = por %p192, %p193
    %s196 = sadd.s32 %s195, 1
    %p199 = scmp.eq.s32.totalorder %s35, 1
    %p200 = scmp.ne.s32.totalorder %s195, %s197
    %p201 = scmp.eq.s32.totalorder %s35, 0
    %p202 = por %p200, %p201
    %p203 = scmp.ne.s32.totalorder %s195, %s197
    %p204 = scmp.eq.s32.totalorder %s40, 1
    %p205 = por %p203, %p204
    %p206 = scmp.ne.s32.totalorder %s197, %s198
    %p207 = scmp.eq.s32.totalorder %s40, 0
    %p208 = por %p206, %p207
    %p209 = scmp.ne.s32.totalorder %s197, %s198
    %p210 = scmp.eq.s32.totalorder %s41, 1
    %p211 = por %p209, %p210
    %p213 = scmp.ne.s32.totalorder %s198, %s212
    %p214 = scmp.eq.s32.totalorder %s41, 0
    %p215 = por %p213, %p214
    %s217 = sadd.s32 %s216, 1
    %p220 = scmp.eq.s32.totalorder %s35, 1
    %p221 = scmp.ne.s32.totalorder %s216, %s218
    %p222 = scmp.eq.s32.totalorder %s35, 0
    %p223 = por %p221, %p222
    %p224 = scmp.ne.s32.totalorder %s216, %s218
    %p225 = scmp.eq.s32.totalorder %s40, 1
    %p226 = por %p224, %p225
    %p227 = scmp.ne.s32.totalorder %s218, %s219
    %p228 = scmp.eq.s32.totalorder %s40, 0
    %p229 = por %p227, %p228
    %p230 = scmp.ne.s32.totalorder %s218, %s219
    %p231 = scmp.eq.s32.totalorder %s41, 1
    %p232 = por %p230, %p231
    %p234 = scmp.ne.s32.totalorder %s219, %s233
    %p235 = scmp.eq.s32.totalorder %s41, 0
    %p236 = por %p234, %p235
    %s238 = sadd.s32 %s237, 1
    %p241 = scmp.eq.s32.totalorder %s35, 1
    %p242 = scmp.ne.s32.totalorder %s237, %s239
    %p243 = scmp.eq.s32.totalorder %s35, 0
    %p244 = por %p242, %p243
    %p245 = scmp.ne.s32.totalorder %s237, %s239
    %p246 = scmp.eq.s32.totalorder %s40, 1
    %p247 = por %p245, %p246
    %p248 = scmp.ne.s32.totalorder %s239, %s240
    %p249 = scmp.eq.s32.totalorder %s40, 0
    %p250 = por %p248, %p249
    %p251 = scmp.ne.s32.totalorder %s239, %s240
    %p252 = scmp.eq.s32.totalorder %s41, 1
    %p253 = por %p251, %p252
    %p255 = scmp.ne.s32.totalorder %s240, %s254
    %p256 = scmp.eq.s32.totalorder %s41, 0
    %p257 = por %p255, %p256
    %s259 = sadd.s32 %s258, 1
    %p262 = scmp.eq.s32.totalorder %s35, 1
    %p263 = scmp.ne.s32.totalorder %s258, %s260
    %p264 = scmp.eq.s32.totalorder %s35, 0
    %p265 = por %p263, %p264
    %p266 = scmp.ne.s32.totalorder %s258, %s260
    %p267 = scmp.eq.s32.totalorder %s40, 1
    %p268 = por %p266, %p267
    %p269 = scmp.ne.s32.totalorder %s260, %s261
    %p270 = scmp.eq.s32.totalorder %s40, 0
    %p271 = por %p269, %p270
    %p272 = scmp.ne.s32.totalorder %s260, %s261
    %p273 = scmp.eq.s32.totalorder %s41, 1
    %p274 = por %p272, %p273
    %p276 = scmp.ne.s32.totalorder %s261, %s275
    %p277 = scmp.eq.s32.totalorder %s41, 0
    %p278 = por %p276, %p277
    %s280 = sadd.s32 %s279, 1
    %p283 = scmp.eq.s32.totalorder %s35, 1
    %p284 = scmp.ne.s32.totalorder %s279, %s281
    %p285 = scmp.eq.s32.totalorder %s35, 0
    %p286 = por %p284, %p285
    %p287 = scmp.ne.s32.totalorder %s279, %s281
    %p288 = scmp.eq.s32.totalorder %s40, 1
    %p289 = por %p287, %p288
    %p290 = scmp.ne.s32.totalorder %s281, %s282
    %p291 = scmp.eq.s32.totalorder %s40, 0
    %p292 = por %p290, %p291
    %p293 = scmp.ne.s32.totalorder %s281, %s282
    %p294 = scmp.eq.s32.totalorder %s41, 1
    %p295 = por %p293, %p294
    %p297 = scmp.ne.s32.totalorder %s282, %s296
    %p298 = scmp.eq.s32.totalorder %s41, 0
    %p299 = por %p297, %p298
    %s301 = sadd.s32 %s300, 1
    %p304 = scmp.eq.s32.totalorder %s35, 1
    %p305 = scmp.ne.s32.totalorder %s300, %s302
    %p306 = scmp.eq.s32.totalorder %s35, 0
    %p307 = por %p305, %p306
    %p308 = scmp.ne.s32.totalorder %s300, %s302
    %p309 = scmp.eq.s32.totalorder %s40, 1
    %p310 = por %p308, %p309
    %p311 = scmp.ne.s32.totalorder %s302, %s303
    %p312 = scmp.eq.s32.totalorder %s40, 0
    %p313 = por %p311, %p312
    %p314 = scmp.ne.s32.totalorder %s302, %s303
    %p315 = scmp.eq.s32.totalorder %s41, 1
    %p316 = por %p314, %p315
    %p318 = scmp.ne.s32.totalorder %s303, %s317
    %p319 = scmp.eq.s32.totalorder %s41, 0
    %p320 = por %p318, %p319
    %s322 = sadd.s32 %s321, 1
    %p325 = scmp.eq.s32.totalorder %s35, 1
    %p326 = scmp.ne.s32.totalorder %s321, %s323
    %p327 = scmp.eq.s32.totalorder %s35, 0
    %p328 = por %p326, %p327
    %p329 = scmp.ne.s32.totalorder %s321, %s323
    %p330 = scmp.eq.s32.totalorder %s40, 1
    %p331 = por %p329, %p330
    %p332 = scmp.ne.s32.totalorder %s323, %s324
    %p333 = scmp.eq.s32.totalorder %s40, 0
    %p334 = por %p332, %p333
    %p335 = scmp.ne.s32.totalorder %s323, %s324
    %p336 = scmp.eq.s32.totalorder %s41, 1
    %p337 = por %p335, %p336
    %p339 = scmp.ne.s32.totalorder %s324, %s338
    %p340 = scmp.eq.s32.totalorder %s41, 0
    %p341 = por %p339, %p340
    %s343 = sadd.s32 %s342, 1
    %p346 = scmp.eq.s32.totalorder %s35, 1
    %p347 = scmp.ne.s32.totalorder %s342, %s344
    %p348 = scmp.eq.s32.totalorder %s35, 0
    %p349 = por %p347, %p348
    %p350 = scmp.ne.s32.totalorder %s342, %s344
    %p351 = scmp.eq.s32.totalorder %s40, 1
    %p352 = por %p350, %p351
    %p353 = scmp.ne.s32.totalorder %s344, %s345
    %p354 = scmp.eq.s32.totalorder %s40, 0
    %p355 = por %p353, %p354
    %p356 = scmp.ne.s32.totalorder %s344, %s345
    %p357 = scmp.eq.s32.totalorder %s41, 1
    %p358 = por %p356, %p357
    %p360 = scmp.ne.s32.totalorder %s345, %s359
    %p361 = scmp.eq.s32.totalorder %s41, 0
    %p362 = por %p360, %p361
    %s364 = sadd.s32 %s363, 1
    %p367 = scmp.eq.s32.totalorder %s35, 1
    %p368 = scmp.ne.s32.totalorder %s363, %s365
    %p369 = scmp.eq.s32.totalorder %s35, 0
    %p370 = por %p368, %p369
    %p371 = scmp.ne.s32.totalorder %s363, %s365
    %p372 = scmp.eq.s32.totalorder %s40, 1
    %p373 = por %p371, %p372
    %p374 = scmp.ne.s32.totalorder %s365, %s366
    %p375 = scmp.eq.s32.totalorder %s40, 0
    %p376 = por %p374, %p375
    %p377 = scmp.ne.s32.totalorder %s365, %s366
    %p378 = scmp.eq.s32.totalorder %s41, 1
    %p379 = por %p377, %p378
    %p381 = scmp.ne.s32.totalorder %s366, %s380
    %p382 = scmp.eq.s32.totalorder %s41, 0
    %p383 = por %p381, %p382
    %s385 = sadd.s32 %s384, 1
    %p388 = scmp.eq.s32.totalorder %s35, 1
    %p389 = scmp.ne.s32.totalorder %s384, %s386
    %p390 = scmp.eq.s32.totalorder %s35, 0
    %p391 = por %p389, %p390
    %p392 = scmp.ne.s32.totalorder %s384, %s386
    %p393 = scmp.eq.s32.totalorder %s40, 1
    %p394 = por %p392, %p393
    %p395 = scmp.ne.s32.totalorder %s386, %s387
    %p396 = scmp.eq.s32.totalorder %s40, 0
    %p397 = por %p395, %p396
    %p398 = scmp.ne.s32.totalorder %s386, %s387
    %p399 = scmp.eq.s32.totalorder %s41, 1
    %p400 = por %p398, %p399
    %p402 = scmp.ne.s32.totalorder %s387, %s401
    %p403 = scmp.eq.s32.totalorder %s41, 0
    %p404 = por %p402, %p403
    %s406 = sadd.s32 %s405, 1
    %p409 = scmp.eq.s32.totalorder %s35, 1
    %p410 = scmp.ne.s32.totalorder %s405, %s407
    %p411 = scmp.eq.s32.totalorder %s35, 0
    %p412 = por %p410, %p411
    %p413 = scmp.ne.s32.totalorder %s405, %s407
    %p414 = scmp.eq.s32.totalorder %s40, 1
    %p415 = por %p413, %p414
    %p416 = scmp.ne.s32.totalorder %s407, %s408
    %p417 = scmp.eq.s32.totalorder %s40, 0
    %p418 = por %p416, %p417
    %p419 = scmp.ne.s32.totalorder %s407, %s408
    %p420 = scmp.eq.s32.totalorder %s41, 1
    %p421 = por %p419, %p420
    %p423 = scmp.ne.s32.totalorder %s408, %s422
    %p424 = scmp.eq.s32.totalorder %s41, 0
    %p425 = por %p423, %p424
    %s427 = sadd.s32 %s426, 1
    %p430 = scmp.eq.s32.totalorder %s35, 1
    %p431 = scmp.ne.s32.totalorder %s426, %s428
    %p432 = scmp.eq.s32.totalorder %s35, 0
    %p433 = por %p431, %p432
    %p434 = scmp.ne.s32.totalorder %s426, %s428
    %p435 = scmp.eq.s32.totalorder %s40, 1
    %p436 = por %p434, %p435
    %p437 = scmp.ne.s32.totalorder %s428, %s429
    %p438 = scmp.eq.s32.totalorder %s40, 0
    %p439 = por %p437, %p438
    %p440 = scmp.ne.s32.totalorder %s428, %s429
    %p441 = scmp.eq.s32.totalorder %s41, 1
    %p442 = por %p440, %p441
    %p444 = scmp.ne.s32.totalorder %s429, %s443
    %p445 = scmp.eq.s32.totalorder %s41, 0
    %p446 = por %p444, %p445
    %s448 = sadd.s32 %s447, 1
    %p451 = scmp.eq.s32.totalorder %s35, 1
    %p452 = scmp.ne.s32.totalorder %s447, %s449
    %p453 = scmp.eq.s32.totalorder %s35, 0
    %p454 = por %p452, %p453
    %p455 = scmp.ne.s32.totalorder %s447, %s449
    %p456 = scmp.eq.s32.totalorder %s40, 1
    %p457 = por %p455, %p456
    %p458 = scmp.ne.s32.totalorder %s449, %s450
    %p459 = scmp.eq.s32.totalorder %s40, 0
    %p460 = por %p458, %p459
    %p461 = scmp.ne.s32.totalorder %s449, %s450
    %p462 = scmp.eq.s32.totalorder %s41, 1
    %p463 = por %p461, %p462
    %p465 = scmp.ne.s32.totalorder %s450, %s464
    %p466 = scmp.eq.s32.totalorder %s41, 0
    %p467 = por %p465, %p466
    %s469 = sadd.s32 %s468, 1
    %p472 = scmp.eq.s32.totalorder %s35, 1
    %p473 = scmp.ne.s32.totalorder %s468, %s470
    %p474 = scmp.eq.s32.totalorder %s35, 0
    %p475 = por %p473, %p474
    %p476 = scmp.ne.s32.totalorder %s468, %s470
    %p477 = scmp.eq.s32.totalorder %s40, 1
    %p478 = por %p476, %p477
    %p479 = scmp.ne.s32.totalorder %s470, %s471
    %p480 = scmp.eq.s32.totalorder %s40, 0
    %p481 = por %p479, %p480
    %p482 = scmp.ne.s32.totalorder %s470, %s471
    %p483 = scmp.eq.s32.totalorder %s41, 1
    %p484 = por %p482, %p483
    %p486 = scmp.ne.s32.totalorder %s471, %s485
    %p487 = scmp.eq.s32.totalorder %s41, 0
    %p488 = por %p486, %p487
    %s490 = sadd.s32 %s489, 1
    %p493 = scmp.eq.s32.totalorder %s35, 1
    %p494 = scmp.ne.s32.totalorder %s489, %s491
    %p495 = scmp.eq.s32.totalorder %s35, 0
    %p496 = por %p494, %p495
    %p497 = scmp.ne.s32.totalorder %s489, %s491
    %p498 = scmp.eq.s32.totalorder %s40, 1
    %p499 = por %p497, %p498
    %p500 = scmp.ne.s32.totalorder %s491, %s492
    %p501 = scmp.eq.s32.totalorder %s40, 0
    %p502 = por %p500, %p501
    %p503 = scmp.ne.s32.totalorder %s491, %s492
    %p504 = scmp.eq.s32.totalorder %s41, 1
    %p505 = por %p503, %p504
    %p507 = scmp.ne.s32.totalorder %s492, %s506
    %p508 = scmp.eq.s32.totalorder %s41, 0
    %p509 = por %p507, %p508
    %s511 = sadd.s32 %s510, 1
    %p514 = scmp.eq.s32.totalorder %s35, 1
    %p515 = scmp.ne.s32.totalorder %s510, %s512
    %p516 = scmp.eq.s32.totalorder %s35, 0
    %p517 = por %p515, %p516
    %p518 = scmp.ne.s32.totalorder %s510, %s512
    %p519 = scmp.eq.s32.totalorder %s40, 1
    %p520 = por %p518, %p519
    %p521 = scmp.ne.s32.totalorder %s512, %s513
    %p522 = scmp.eq.s32.totalorder %s40, 0
    %p523 = por %p521, %p522
    %p524 = scmp.ne.s32.totalorder %s512, %s513
    %p525 = scmp.eq.s32.totalorder %s41, 1
    %p526 = por %p524, %p525
    %p528 = scmp.ne.s32.totalorder %s513, %s527
    %p529 = scmp.eq.s32.totalorder %s41, 0
    %p530 = por %p528, %p529
    %s532 = sadd.s32 %s531, 1
    %p535 = scmp.eq.s32.totalorder %s35, 1
    %p536 = scmp.ne.s32.totalorder %s531, %s533
    %p537 = scmp.eq.s32.totalorder %s35, 0
    %p538 = por %p536, %p537
    %p539 = scmp.ne.s32.totalorder %s531, %s533
    %p540 = scmp.eq.s32.totalorder %s40, 1
    %p541 = por %p539, %p540
    %p542 = scmp.ne.s32.totalorder %s533, %s534
    %p543 = scmp.eq.s32.totalorder %s40, 0
    %p544 = por %p542, %p543
    %p545 = scmp.ne.s32.totalorder %s533, %s534
    %p546 = scmp.eq.s32.totalorder %s41, 1
    %p547 = por %p545, %p546
    %p549 = scmp.ne.s32.totalorder %s534, %s548
    %p550 = scmp.eq.s32.totalorder %s41, 0
    %p551 = por %p549, %p550
    %s553 = sadd.s32 %s552, 1
    %p556 = scmp.eq.s32.totalorder %s35, 1
    %p557 = scmp.ne.s32.totalorder %s552, %s554
    %p558 = scmp.eq.s32.totalorder %s35, 0
    %p559 = por %p557, %p558
    %p560 = scmp.ne.s32.totalorder %s552, %s554
    %p561 = scmp.eq.s32.totalorder %s40, 1
    %p562 = por %p560, %p561
    %p563 = scmp.ne.s32.totalorder %s554, %s555
    %p564 = scmp.eq.s32.totalorder %s40, 0
    %p565 = por %p563, %p564
    %p566 = scmp.ne.s32.totalorder %s554, %s555
    %p567 = scmp.eq.s32.totalorder %s41, 1
    %p568 = por %p566, %p567
    %p570 = scmp.ne.s32.totalorder %s555, %s569
    %p571 = scmp.eq.s32.totalorder %s41, 0
    %p572 = por %p570, %p571
    %s574 = sadd.s32 %s573, 1
    %p577 = scmp.eq.s32.totalorder %s35, 1
    %p578 = scmp.ne.s32.totalorder %s573, %s575
    %p579 = scmp.eq.s32.totalorder %s35, 0
    %p580 = por %p578, %p579
    %p581 = scmp.ne.s32.totalorder %s573, %s575
    %p582 = scmp.eq.s32.totalorder %s40, 1
    %p583 = por %p581, %p582
    %p584 = scmp.ne.s32.totalorder %s575, %s576
    %p585 = scmp.eq.s32.totalorder %s40, 0
    %p586 = por %p584, %p585
    %p587 = scmp.ne.s32.totalorder %s575, %s576
    %p588 = scmp.eq.s32.totalorder %s41, 1
    %p589 = por %p587, %p588
    %p591 = scmp.ne.s32.totalorder %s576, %s590
    %p592 = scmp.eq.s32.totalorder %s41, 0
    %p593 = por %p591, %p592
    %s595 = sadd.s32 %s594, 1
    %p598 = scmp.eq.s32.totalorder %s35, 1
    %p599 = scmp.ne.s32.totalorder %s594, %s596
    %p600 = scmp.eq.s32.totalorder %s35, 0
    %p601 = por %p599, %p600
    %p602 = scmp.ne.s32.totalorder %s594, %s596
    %p603 = scmp.eq.s32.totalorder %s40, 1
    %p604 = por %p602, %p603
    %p605 = scmp.ne.s32.totalorder %s596, %s597
    %p606 = scmp.eq.s32.totalorder %s40, 0
    %p607 = por %p605, %p606
    %p608 = scmp.ne.s32.totalorder %s596, %s597
    %p609 = scmp.eq.s32.totalorder %s41, 1
    %p610 = por %p608, %p609
    %p612 = scmp.ne.s32.totalorder %s597, %s611
    %p613 = scmp.eq.s32.totalorder %s41, 0
    %p614 = por %p612, %p613
    %s615 = ssub.s32 %s35, %s42
    %p616 = scmp.eq.s32.totalorder %s615, 0
    %s618 = sadd.s32 %s617, 1
    %s619 = scalar_select %p616, %s617, %s618
    %p622 = pneg %p616
    %p623 = scmp.eq.s32.totalorder %s35, 1
    %p624 = por %p622, %p623
    %p625 = scmp.ne.s32.totalorder %s617, %s620
    %p626 = scmp.eq.s32.totalorder %s35, 0
    %p627 = por %p625, %p626
    %p628 = scmp.ne.s32.totalorder %s617, %s620
    %p629 = scmp.eq.s32.totalorder %s40, 1
    %p630 = por %p628, %p629
    %p631 = scmp.ne.s32.totalorder %s620, %s621
    %p632 = scmp.eq.s32.totalorder %s40, 0
    %p633 = por %p631, %p632
    %p634 = scmp.ne.s32.totalorder %s620, %s621
    %p635 = scmp.eq.s32.totalorder %s41, 1
    %p636 = por %p634, %p635
    %p638 = scmp.ne.s32.totalorder %s621, %s637
    %p639 = scmp.eq.s32.totalorder %s41, 0
    %p640 = por %p638, %p639
    %s641 = ssub.s32 %s35, %s42
    %p642 = scmp.eq.s32.totalorder %s641, 0
    %s644 = sadd.s32 %s643, 1
    %s645 = scalar_select %p642, %s643, %s644
    %p648 = pneg %p642
    %p649 = scmp.eq.s32.totalorder %s35, 1
    %p650 = por %p648, %p649
    %p651 = scmp.ne.s32.totalorder %s643, %s646
    %p652 = scmp.eq.s32.totalorder %s35, 0
    %p653 = por %p651, %p652
    %p654 = scmp.ne.s32.totalorder %s643, %s646
    %p655 = scmp.eq.s32.totalorder %s40, 1
    %p656 = por %p654, %p655
    %p657 = scmp.ne.s32.totalorder %s646, %s647
    %p658 = scmp.eq.s32.totalorder %s40, 0
    %p659 = por %p657, %p658
    %p660 = scmp.ne.s32.totalorder %s646, %s647
    %p661 = scmp.eq.s32.totalorder %s41, 1
    %p662 = por %p660, %p661
    %p664 = scmp.ne.s32.totalorder %s647, %s663
    %p665 = scmp.eq.s32.totalorder %s41, 0
    %p666 = por %p664, %p665
    %p667 = scmp.le.s32.totalorder 1, %s35
    %p668 = scmp.lt.s32.totalorder %s35, 3
    %p669 = pnand %p667, %p668
    %p670 = pneg %p669
    // Predicated region
    $region9: #{_lambda_.2} parent=5 // pred_check
      _
    $region10: #{_lambda_.2} parent=5 // pred_check_branch
      %672 = sbr.rel (%p669) target = $region12
    $region11: #{_lambda_.2} parent=5 // pred_region
      %s673 = ssub.s32 %s35, 1
      // Predicated region
      $region13: #{_lambda_.2} parent=11 // pred_check
        %p674 = pneg %p82
      $region14: #{_lambda_.2} parent=11 // pred_check_branch
        %676 = sbr.rel (%p674) target = $region16
      $region15: #{_lambda_.2} parent=11 // pred_region
        _
      $region16: #{_lambda_.2} parent=11 // pred_fallthru
        _
      // Predicated region
      $region17: #{_lambda_.2} parent=11 // pred_check
        %p677 = pneg %p103
      $region18: #{_lambda_.2} parent=11 // pred_check_branch
        %679 = sbr.rel (%p677) target = $region20
      $region19: #{_lambda_.2} parent=11 // pred_region
        _
      $region20: #{_lambda_.2} parent=11 // pred_fallthru
        _
      // Predicated region
      $region21: #{_lambda_.2} parent=11 // pred_check
        %p680 = pneg %p124
      $region22: #{_lambda_.2} parent=11 // pred_check_branch
        %682 = sbr.rel (%p680) target = $region24
      $region23: #{_lambda_.2} parent=11 // pred_region
        _
      $region24: #{_lambda_.2} parent=11 // pred_fallthru
        _
      // Predicated region
      $region25: #{_lambda_.2} parent=11 // pred_check
        %p683 = pneg %p145
      $region26: #{_lambda_.2} parent=11 // pred_check_branch
        %685 = sbr.rel (%p683) target = $region28
      $region27: #{_lambda_.2} parent=11 // pred_region
        _
      $region28: #{_lambda_.2} parent=11 // pred_fallthru
        _
      // Predicated region
      $region29: #{_lambda_.2} parent=11 // pred_check
        %p686 = pneg %p166
      $region30: #{_lambda_.2} parent=11 // pred_check_branch
        %688 = sbr.rel (%p686) target = $region32
      $region31: #{_lambda_.2} parent=11 // pred_region
        _
      $region32: #{_lambda_.2} parent=11 // pred_fallthru
        _
      // Predicated region
      $region33: #{_lambda_.2} parent=11 // pred_check
        %p689 = pneg %p187
      $region34: #{_lambda_.2} parent=11 // pred_check_branch
        %691 = sbr.rel (%p689) target = $region36
      $region35: #{_lambda_.2} parent=11 // pred_region
        _
      $region36: #{_lambda_.2} parent=11 // pred_fallthru
        _
      // Predicated region
      $region37: #{_lambda_.2} parent=11 // pred_check
        %p692 = pneg %p208
      $region38: #{_lambda_.2} parent=11 // pred_check_branch
        %694 = sbr.rel (%p692) target = $region40
      $region39: #{_lambda_.2} parent=11 // pred_region
        _
      $region40: #{_lambda_.2} parent=11 // pred_fallthru
        _
      // Predicated region
      $region41: #{_lambda_.2} parent=11 // pred_check
        %p695 = pneg %p229
      $region42: #{_lambda_.2} parent=11 // pred_check_branch
        %697 = sbr.rel (%p695) target = $region44
      $region43: #{_lambda_.2} parent=11 // pred_region
        _
      $region44: #{_lambda_.2} parent=11 // pred_fallthru
        _
      // Predicated region
      $region45: #{_lambda_.2} parent=11 // pred_check
        %p698 = pneg %p250
      $region46: #{_lambda_.2} parent=11 // pred_check_branch
        %700 = sbr.rel (%p698) target = $region48
      $region47: #{_lambda_.2} parent=11 // pred_region
        _
      $region48: #{_lambda_.2} parent=11 // pred_fallthru
        _
      // Predicated region
      $region49: #{_lambda_.2} parent=11 // pred_check
        %p701 = pneg %p271
      $region50: #{_lambda_.2} parent=11 // pred_check_branch
        %703 = sbr.rel (%p701) target = $region52
      $region51: #{_lambda_.2} parent=11 // pred_region
        _
      $region52: #{_lambda_.2} parent=11 // pred_fallthru
        _
      // Predicated region
      $region53: #{_lambda_.2} parent=11 // pred_check
        %p704 = pneg %p292
      $region54: #{_lambda_.2} parent=11 // pred_check_branch
        %706 = sbr.rel (%p704) target = $region56
      $region55: #{_lambda_.2} parent=11 // pred_region
        _
      $region56: #{_lambda_.2} parent=11 // pred_fallthru
        _
      // Predicated region
      $region57: #{_lambda_.2} parent=11 // pred_check
        %p707 = pneg %p313
      $region58: #{_lambda_.2} parent=11 // pred_check_branch
        %709 = sbr.rel (%p707) target = $region60
      $region59: #{_lambda_.2} parent=11 // pred_region
        _
      $region60: #{_lambda_.2} parent=11 // pred_fallthru
        _
      // Predicated region
      $region61: #{_lambda_.2} parent=11 // pred_check
        %p710 = pneg %p334
      $region62: #{_lambda_.2} parent=11 // pred_check_branch
        %712 = sbr.rel (%p710) target = $region64
      $region63: #{_lambda_.2} parent=11 // pred_region
        _
      $region64: #{_lambda_.2} parent=11 // pred_fallthru
        _
      // Predicated region
      $region65: #{_lambda_.2} parent=11 // pred_check
        %p713 = pneg %p355
      $region66: #{_lambda_.2} parent=11 // pred_check_branch
        %715 = sbr.rel (%p713) target = $region68
      $region67: #{_lambda_.2} parent=11 // pred_region
        _
      $region68: #{_lambda_.2} parent=11 // pred_fallthru
        _
      // Predicated region
      $region69: #{_lambda_.2} parent=11 // pred_check
        %p716 = pneg %p376
      $region70: #{_lambda_.2} parent=11 // pred_check_branch
        %718 = sbr.rel (%p716) target = $region72
      $region71: #{_lambda_.2} parent=11 // pred_region
        _
      $region72: #{_lambda_.2} parent=11 // pred_fallthru
        _
      // Predicated region
      $region73: #{_lambda_.2} parent=11 // pred_check
        %p719 = pneg %p397
      $region74: #{_lambda_.2} parent=11 // pred_check_branch
        %721 = sbr.rel (%p719) target = $region76
      $region75: #{_lambda_.2} parent=11 // pred_region
        _
      $region76: #{_lambda_.2} parent=11 // pred_fallthru
        _
      // Predicated region
      $region77: #{_lambda_.2} parent=11 // pred_check
        %p722 = pneg %p418
      $region78: #{_lambda_.2} parent=11 // pred_check_branch
        %724 = sbr.rel (%p722) target = $region80
      $region79: #{_lambda_.2} parent=11 // pred_region
        _
      $region80: #{_lambda_.2} parent=11 // pred_fallthru
        _
      // Predicated region
      $region81: #{_lambda_.2} parent=11 // pred_check
        %p725 = pneg %p439
      $region82: #{_lambda_.2} parent=11 // pred_check_branch
        %727 = sbr.rel (%p725) target = $region84
      $region83: #{_lambda_.2} parent=11 // pred_region
        _
      $region84: #{_lambda_.2} parent=11 // pred_fallthru
        _
      // Predicated region
      $region85: #{_lambda_.2} parent=11 // pred_check
        %p728 = pneg %p460
      $region86: #{_lambda_.2} parent=11 // pred_check_branch
        %730 = sbr.rel (%p728) target = $region88
      $region87: #{_lambda_.2} parent=11 // pred_region
        _
      $region88: #{_lambda_.2} parent=11 // pred_fallthru
        _
      // Predicated region
      $region89: #{_lambda_.2} parent=11 // pred_check
        %p731 = pneg %p481
      $region90: #{_lambda_.2} parent=11 // pred_check_branch
        %733 = sbr.rel (%p731) target = $region92
      $region91: #{_lambda_.2} parent=11 // pred_region
        _
      $region92: #{_lambda_.2} parent=11 // pred_fallthru
        _
      // Predicated region
      $region93: #{_lambda_.2} parent=11 // pred_check
        %p734 = pneg %p502
      $region94: #{_lambda_.2} parent=11 // pred_check_branch
        %736 = sbr.rel (%p734) target = $region96
      $region95: #{_lambda_.2} parent=11 // pred_region
        _
      $region96: #{_lambda_.2} parent=11 // pred_fallthru
        _
      // Predicated region
      $region97: #{_lambda_.2} parent=11 // pred_check
        %p737 = pneg %p523
      $region98: #{_lambda_.2} parent=11 // pred_check_branch
        %739 = sbr.rel (%p737) target = $region100
      $region99: #{_lambda_.2} parent=11 // pred_region
        _
      $region100: #{_lambda_.2} parent=11 // pred_fallthru
        _
      // Predicated region
      $region101: #{_lambda_.2} parent=11 // pred_check
        %p740 = pneg %p544
      $region102: #{_lambda_.2} parent=11 // pred_check_branch
        %742 = sbr.rel (%p740) target = $region104
      $region103: #{_lambda_.2} parent=11 // pred_region
        _
      $region104: #{_lambda_.2} parent=11 // pred_fallthru
        _
      // Predicated region
      $region105: #{_lambda_.2} parent=11 // pred_check
        %p743 = pneg %p565
      $region106: #{_lambda_.2} parent=11 // pred_check_branch
        %745 = sbr.rel (%p743) target = $region108
      $region107: #{_lambda_.2} parent=11 // pred_region
        _
      $region108: #{_lambda_.2} parent=11 // pred_fallthru
        _
      // Predicated region
      $region109: #{_lambda_.2} parent=11 // pred_check
        %p746 = pneg %p586
      $region110: #{_lambda_.2} parent=11 // pred_check_branch
        %748 = sbr.rel (%p746) target = $region112
      $region111: #{_lambda_.2} parent=11 // pred_region
        _
      $region112: #{_lambda_.2} parent=11 // pred_fallthru
        _
      // Predicated region
      $region113: #{_lambda_.2} parent=11 // pred_check
        %p749 = pneg %p607
      $region114: #{_lambda_.2} parent=11 // pred_check_branch
        %751 = sbr.rel (%p749) target = $region116
      $region115: #{_lambda_.2} parent=11 // pred_region
        _
      $region116: #{_lambda_.2} parent=11 // pred_fallthru
        _
    $region12: #{_lambda_.2} parent=5 // pred_fallthru
      _
    %p752 = scmp.lt.s32.totalorder %s35, 2
    // Predicated region
    $region117: #{_lambda_.2} parent=5 // pred_check
      %p753 = pneg %p752
    $region118: #{_lambda_.2} parent=5 // pred_check_branch
      %755 = sbr.rel (%p753) target = $region120
    $region119: #{_lambda_.2} parent=5 // pred_region
      // Predicated region
      $region121: #{_lambda_.2} parent=119 // pred_check
        %p756 = pneg %p55
      $region122: #{_lambda_.2} parent=119 // pred_check_branch
        %758 = sbr.rel (%p756) target = $region124
      $region123: #{_lambda_.2} parent=119 // pred_region
        %p759 = scmp.lt.s32.totalorder %s35, 1
        %s760 = scalar_select %p759, %s35, 1
        %s761 = smul.addr %s760, 8
        %s762 = smul.addr %s761, 8
        %s763 = scalar_lea.vmem %s0, %s762
      $region124: #{_lambda_.2} parent=119 // pred_fallthru
        _
    $region120: #{_lambda_.2} parent=5 // pred_fallthru
      _
    %p764 = scmp.le.s32.totalorder 1, %s35
    %p765 = scmp.lt.s32.totalorder %s35, 3
    %p766 = pnand %p764, %p765
    %p767 = pneg %p766
    // Predicated region
    $region125: #{_lambda_.2} parent=5 // pred_check
      _
    $region126: #{_lambda_.2} parent=5 // pred_check_branch
      %769 = sbr.rel (%p766) target = $region128
    $region127: #{_lambda_.2} parent=5 // pred_region
      %s770 = ssub.s32 %s35, 1
      %p771 = scmp.lt.s32.totalorder %s40, 1
      %s772 = scalar_select %p771, %s40, 1
      %s773 = smul.addr %s772, 8
      %s774 = smul.addr %s773, 8
      %s775 = scalar_lea.vmem %s0, %s774
      %p776 = pneg %p61
      %p777 = pneg %p58
      %p778 = pneg %p82
      %p779 = pneg %p79
      %p780 = pneg %p103
      %p781 = pneg %p100
      %p782 = pneg %p124
      %p783 = pneg %p121
      %p784 = pneg %p145
      %p785 = pneg %p142
      %p786 = pneg %p166
      %p787 = pneg %p163
      %p788 = pneg %p187
      %p789 = pneg %p184
      %p790 = pneg %p208
      %p791 = pneg %p205
      %p792 = pneg %p229
      %p793 = pneg %p226
      %p794 = pneg %p250
      %p795 = pneg %p247
      %p796 = pneg %p271
      %p797 = pneg %p268
      %p798 = pneg %p292
      %p799 = pneg %p289
      %p800 = pneg %p313
      %p801 = pneg %p310
      %p802 = pneg %p334
      %p803 = pneg %p331
      %p804 = pneg %p355
      %p805 = pneg %p352
      %p806 = pneg %p376
      %p807 = pneg %p373
      %p808 = pneg %p397
      %p809 = pneg %p394
      %p810 = pneg %p418
      %p811 = pneg %p415
      %p812 = pneg %p439
      %p813 = pneg %p436
      %p814 = pneg %p460
      %p815 = pneg %p457
      %p816 = pneg %p481
      %p817 = pneg %p478
      %p818 = pneg %p502
      %p819 = pneg %p499
      %p820 = pneg %p523
      %p821 = pneg %p520
      %p822 = pneg %p544
      %p823 = pneg %p541
      %p824 = pneg %p565
      %p825 = pneg %p562
      %p826 = pneg %p586
      %p827 = pneg %p583
      %p828 = pneg %p607
      %p829 = pneg %p604
      %p830 = pneg %p633
      %p831 = pneg %p630
      %p832 = scmp.lt.s32.totalorder %s40, 1
      %s833 = scalar_select %p832, %s40, 1
      %s834 = scalar_lea.vmem %s27, %s833
      %p835 = pneg %p659
      %p836 = pneg %p656
      %p837 = scmp.lt.s32.totalorder %s40, 1
      %s838 = scalar_select %p837, %s40, 1
      %s839 = smul.addr %s838, 8
      %s840 = scalar_lea.vmem %s28, %s839
      %p841 = scmp.lt.s32.totalorder %s40, 1
      %s842 = scalar_select %p841, %s40, 1
      %s843 = smul.addr %s842, 8
      %s844 = smul.addr %s843, 8
      %s845 = scalar_lea.vmem %s0, %s844
      %p846 = scmp.lt.s32.totalorder %s40, 1
      %s847 = scalar_select %p846, %s40, 1
      %s848 = scalar_lea.vmem %s27, %s847
      %p849 = scmp.lt.s32.totalorder %s40, 1
      %s850 = scalar_select %p849, %s40, 1
      %s851 = smul.addr %s850, 8
      %s852 = scalar_lea.vmem %s28, %s851
      %v854 = vld [vmem:[%s845] sm:$0xff]
      %v855 = vld [vmem:[%s845 + $0x8] sm:$0xff]
      %v856 = vld [vmem:[%s845 + $0x10] sm:$0xff]
      %v857 = vld [vmem:[%s845 + $0x18] sm:$0xff]
      %v858 = vld [vmem:[%s845 + $0x20] sm:$0xff]
      %v859 = vld [vmem:[%s845 + $0x28] sm:$0xff]
      %v860 = vld [vmem:[%s845 + $0x30] sm:$0xff]
      %v861 = vld [vmem:[%s845 + $0x38] sm:$0xff]
      %vm862 = vcmask 64512
      %v863 = vsel %vm862, %v854, 0.0
      %v864 = vsel %vm862, %v855, 0.0
      %v865 = vadd.f32 %v863, %v864
      %v866 = vsel %vm862, %v856, 0.0
      %v867 = vadd.f32 %v865, %v866
      %v868 = vsel %vm862, %v857, 0.0
      %v869 = vadd.f32 %v867, %v868
      %v870 = vsel %vm862, %v858, 0.0
      %v871 = vadd.f32 %v869, %v870
      %v872 = vsel %vm862, %v859, 0.0
      %v873 = vadd.f32 %v871, %v872
      %v874 = vsel %vm862, %v860, 0.0
      %v875 = vadd.f32 %v873, %v874
      %v876 = vsel %vm862, %v861, 0.0
      %v877 = vadd.f32 %v875, %v876
      %878 = vadd.xlane.f32.xlu0 %v877
      %v879 = vpop.xlane.xlu0 %878
      %v880 = vrot.slane %v879, 4
      %v881 = vadd.f32 %v879, %v880
      %v882 = vrot.slane %v881, 2
      %v883 = vadd.f32 %v881, %v882
      %v884 = vrot.slane %v883, 1
      %v885 = vadd.f32 %v883, %v884
      %s886 = vtos %v885
      %v887 = vstv %s886
      %v888 = vrcp.pop 512.0
      %v889 = vmul.f32 %v887, %v888
      %v890 = vsub.f32 %v854, %v889
      %v891 = vsub.f32 %v855, %v889
      %v892 = vsub.f32 %v856, %v889
      %v893 = vsub.f32 %v857, %v889
      %v894 = vsub.f32 %v858, %v889
      %v895 = vsub.f32 %v859, %v889
      %v896 = vsub.f32 %v860, %v889
      %v897 = vsub.f32 %v861, %v889
      %v898 = vmul.f32 %v890, %v890
      %v899 = vmul.f32 %v891, %v891
      %v900 = vmul.f32 %v892, %v892
      %v901 = vmul.f32 %v893, %v893
      %v902 = vmul.f32 %v894, %v894
      %v903 = vmul.f32 %v895, %v895
      %v904 = vmul.f32 %v896, %v896
      %v905 = vmul.f32 %v897, %v897
      %v906 = vsel %vm862, %v898, 0.0
      %v907 = vsel %vm862, %v899, 0.0
      %v908 = vadd.f32 %v906, %v907
      %v909 = vsel %vm862, %v900, 0.0
      %v910 = vadd.f32 %v908, %v909
      %v911 = vsel %vm862, %v901, 0.0
      %v912 = vadd.f32 %v910, %v911
      %v913 = vsel %vm862, %v902, 0.0
      %v914 = vadd.f32 %v912, %v913
      %v915 = vsel %vm862, %v903, 0.0
      %v916 = vadd.f32 %v914, %v915
      %v917 = vsel %vm862, %v904, 0.0
      %v918 = vadd.f32 %v916, %v917
      %v919 = vsel %vm862, %v905, 0.0
      %v920 = vadd.f32 %v918, %v919
      %921 = vadd.xlane.f32.xlu0 %v920
      %v922 = vpop.xlane.xlu0 %921
      %v923 = vrot.slane %v922, 4
      %v924 = vadd.f32 %v922, %v923
      %v925 = vrot.slane %v924, 2
      %v926 = vadd.f32 %v924, %v925
      %v927 = vrot.slane %v926, 1
      %v928 = vadd.f32 %v926, %v927
      %s929 = vtos %v928
      %v930 = vstv %s929
      %v931 = vmul.f32 %v930, %v888
      %v932 = vadd.f32 %v931, 1e-05
      %v933 = vrsqrt.pop %v932
      %v934 = vmul.f32 %v890, %v933
      %v935 = vmul.f32 %v891, %v933
      %v936 = vmul.f32 %v892, %v933
      %v937 = vmul.f32 %v893, %v933
      %v938 = vmul.f32 %v894, %v933
      %v939 = vmul.f32 %v895, %v933
      %v940 = vmul.f32 %v896, %v933
      %v941 = vmul.f32 %v897, %v933
      %v942 = vld [vmem:[%s1] sm:$0xff]
      %v943 = vld [vmem:[%s1 + $0x8] sm:$0xff]
      %v944 = vld [vmem:[%s1 + $0x10] sm:$0xff]
      %v945 = vld [vmem:[%s1 + $0x18] sm:$0xff]
      %v946 = vld [vmem:[%s1 + $0x20] sm:$0xff]
      %v947 = vld [vmem:[%s1 + $0x28] sm:$0xff]
      %v948 = vld [vmem:[%s1 + $0x30] sm:$0xff]
      %v949 = vld [vmem:[%s1 + $0x38] sm:$0xff]
      %v950 = vmul.f32 %v934, %v942
      %v951 = vmul.f32 %v935, %v943
      %v952 = vmul.f32 %v936, %v944
      %v953 = vmul.f32 %v937, %v945
      %v954 = vmul.f32 %v938, %v946
      %v955 = vmul.f32 %v939, %v947
      %v956 = vmul.f32 %v940, %v948
      %v957 = vmul.f32 %v941, %v949
      %v958 = vld [vmem:[%s2] sm:$0xff]
      %v959 = vld [vmem:[%s2 + $0x8] sm:$0xff]
      %v960 = vld [vmem:[%s2 + $0x10] sm:$0xff]
      %v961 = vld [vmem:[%s2 + $0x18] sm:$0xff]
      %v962 = vld [vmem:[%s2 + $0x20] sm:$0xff]
      %v963 = vld [vmem:[%s2 + $0x28] sm:$0xff]
      %v964 = vld [vmem:[%s2 + $0x30] sm:$0xff]
      %v965 = vld [vmem:[%s2 + $0x38] sm:$0xff]
      %v966 = vadd.f32 %v950, %v958
      %v967 = vadd.f32 %v951, %v959
      %v968 = vadd.f32 %v952, %v960
      %v969 = vadd.f32 %v953, %v961
      %v970 = vadd.f32 %v954, %v962
      %v971 = vadd.f32 %v955, %v963
      %v972 = vadd.f32 %v956, %v964
      %v973 = vadd.f32 %v957, %v965
      %v974 = vpack.c.bf16 %v966, %v966
      %v975 = vpack.c.bf16 %v967, %v967
      %v976 = vpack.c.bf16 %v968, %v968
      %v977 = vpack.c.bf16 %v969, %v969
      %v978 = vpack.c.bf16 %v970, %v970
      %v979 = vpack.c.bf16 %v971, %v971
      %v980 = vpack.c.bf16 %v972, %v972
      %v981 = vpack.c.bf16 %v973, %v973
      %v983 = vshrl.u32 0, 16
      %v985 = vrot.slane %v983, 7
      %v986 = vshll.u32 0, 16
      %v988 = vor.u32 %v985, %v986
      %v990 = vshrl.u32 %v974, 16
      %v992 = vrot.slane %v990, 7
      %v993 = vshll.u32 %v974, 16
      %v995 = vor.u32 %v992, %v993
      %v997 = vshrl.u32 %v975, 16
      %v999 = vrot.slane %v997, 7
      %v1000 = vshll.u32 %v975, 16
      %v1002 = vor.u32 %v999, %v1000
      %v1004 = vshrl.u32 %v976, 16
      %v1006 = vrot.slane %v1004, 7
      %v1007 = vshll.u32 %v976, 16
      %v1009 = vor.u32 %v1006, %v1007
      %v1011 = vshrl.u32 %v977, 16
      %v1013 = vrot.slane %v1011, 7
      %v1014 = vshll.u32 %v977, 16
      %v1016 = vor.u32 %v1013, %v1014
      %v1018 = vshrl.u32 %v978, 16
      %v1020 = vrot.slane %v1018, 7
      %v1021 = vshll.u32 %v978, 16
      %v1023 = vor.u32 %v1020, %v1021
      %v1025 = vshrl.u32 %v979, 16
      %v1027 = vrot.slane %v1025, 7
      %v1028 = vshll.u32 %v979, 16
      %v1030 = vor.u32 %v1027, %v1028
      %v1032 = vshrl.u32 %v980, 16
      %v1034 = vrot.slane %v1032, 7
      %v1035 = vshll.u32 %v980, 16
      %v1037 = vor.u32 %v1034, %v1035
      %v1039 = vshrl.u32 %v981, 16
      %v1041 = vrot.slane %v1039, 7
      %v1042 = vshll.u32 %v981, 16
      %v1044 = vor.u32 %v1041, %v1042
      %vm1054 = vcmask 1040384
      %vm1055 = vsmask.f32 256
      %vm1056 = vmand %vm1054, %vm1055
      %v1057 = vsel %vm1056, 0, %v988
      %v1058 = vsel %vm1056, 0, %v995
      %v1059 = vsel %vm1056, 0, %v1002
      %v1060 = vsel %vm1056, 0, %v1009
      %v1061 = vsel %vm1056, 0, %v1016
      %v1062 = vsel %vm1056, 0, %v1023
      %v1063 = vsel %vm1056, 0, %v1030
      %v1064 = vsel %vm1056, 0, %v1037
      %v1065 = vsel %vm1056, 0, %v1044
      %vm1066 = vcmask 1044480
      %vm1067 = vsmask.f32 4352
      %vm1068 = vmand %vm1066, %vm1067
      %v1069 = vsel %vm1068, %v1057, 0
      %v1070 = vsel %vm1068, %v1058, 0
      %v1071 = vsel %vm1068, %v1059, 0
      %v1072 = vsel %vm1068, %v1060, 0
      %v1073 = vsel %vm1068, %v1061, 0
      %v1074 = vsel %vm1068, %v1062, 0
      %v1075 = vsel %vm1068, %v1063, 0
      %v1076 = vsel %vm1068, %v1064, 0
      %v1077 = vsel %vm1068, %v1065, 0
      %v1079 = vshrl.u32 %v1069, 16
      %v1081 = vshll.u32 %v1069, 16
      %v1083 = vrot.slane %v1081, 1
      %v1084 = vor.u32 %v1079, %v1083
      %v1086 = vshrl.u32 %v1070, 16
      %v1088 = vshll.u32 %v1070, 16
      %v1090 = vrot.slane %v1088, 1
      %v1091 = vor.u32 %v1086, %v1090
      %v1093 = vshrl.u32 %v1071, 16
      %v1095 = vshll.u32 %v1071, 16
      %v1097 = vrot.slane %v1095, 1
      %v1098 = vor.u32 %v1093, %v1097
      %v1100 = vshrl.u32 %v1072, 16
      %v1102 = vshll.u32 %v1072, 16
      %v1104 = vrot.slane %v1102, 1
      %v1105 = vor.u32 %v1100, %v1104
      %v1107 = vshrl.u32 %v1073, 16
      %v1109 = vshll.u32 %v1073, 16
      %v1111 = vrot.slane %v1109, 1
      %v1112 = vor.u32 %v1107, %v1111
      %v1114 = vshrl.u32 %v1074, 16
      %v1116 = vshll.u32 %v1074, 16
      %v1118 = vrot.slane %v1116, 1
      %v1119 = vor.u32 %v1114, %v1118
      %v1121 = vshrl.u32 %v1075, 16
      %v1123 = vshll.u32 %v1075, 16
      %v1125 = vrot.slane %v1123, 1
      %v1126 = vor.u32 %v1121, %v1125
      %v1128 = vshrl.u32 %v1076, 16
      %v1130 = vshll.u32 %v1076, 16
      %v1132 = vrot.slane %v1130, 1
      %v1133 = vor.u32 %v1128, %v1132
      %1134 = vrot.lane.b32.xlu0 %v1084, 4
      %v1135 = vpop.permute.xlu0 %1134
      %1136 = vrot.lane.b32.xlu0 %v1091, 4
      %v1137 = vpop.permute.xlu0 %1136
      %1138 = vrot.lane.b32.xlu0 %v1098, 4
      %v1139 = vpop.permute.xlu0 %1138
      %1140 = vrot.lane.b32.xlu0 %v1105, 4
      %v1141 = vpop.permute.xlu0 %1140
      %1142 = vrot.lane.b32.xlu0 %v1112, 4
      %v1143 = vpop.permute.xlu0 %1142
      %1144 = vrot.lane.b32.xlu0 %v1119, 4
      %v1145 = vpop.permute.xlu0 %1144
      %1146 = vrot.lane.b32.xlu0 %v1126, 4
      %v1147 = vpop.permute.xlu0 %1146
      %1148 = vrot.lane.b32.xlu0 %v1133, 4
      %v1149 = vpop.permute.xlu0 %1148
      %v1158 = vrot.slane %v1069, 1
      %v1159 = vrot.slane %v1070, 1
      %v1160 = vrot.slane %v1071, 1
      %v1161 = vrot.slane %v1072, 1
      %v1162 = vrot.slane %v1073, 1
      %v1163 = vrot.slane %v1074, 1
      %v1164 = vrot.slane %v1075, 1
      %v1165 = vrot.slane %v1076, 1
      %1166 = vrot.lane.b32.xlu0 %v1158, 8
      %v1167 = vpop.permute.xlu0 %1166
      %1168 = vrot.lane.b32.xlu0 %v1159, 8
      %v1169 = vpop.permute.xlu0 %1168
      %1170 = vrot.lane.b32.xlu0 %v1160, 8
      %v1171 = vpop.permute.xlu0 %1170
      %1172 = vrot.lane.b32.xlu0 %v1161, 8
      %v1173 = vpop.permute.xlu0 %1172
      %1174 = vrot.lane.b32.xlu0 %v1162, 8
      %v1175 = vpop.permute.xlu0 %1174
      %1176 = vrot.lane.b32.xlu0 %v1163, 8
      %v1177 = vpop.permute.xlu0 %1176
      %1178 = vrot.lane.b32.xlu0 %v1164, 8
      %v1179 = vpop.permute.xlu0 %1178
      %1180 = vrot.lane.b32.xlu0 %v1165, 8
      %v1181 = vpop.permute.xlu0 %1180
      %1183 = vrot.lane.b32.xlu0 %v1070, 12
      %v1184 = vpop.permute.xlu0 %1183
      %1185 = vrot.lane.b32.xlu0 %v1071, 12
      %v1186 = vpop.permute.xlu0 %1185
      %1187 = vrot.lane.b32.xlu0 %v1072, 12
      %v1188 = vpop.permute.xlu0 %1187
      %1189 = vrot.lane.b32.xlu0 %v1073, 12
      %v1190 = vpop.permute.xlu0 %1189
      %1191 = vrot.lane.b32.xlu0 %v1074, 12
      %v1192 = vpop.permute.xlu0 %1191
      %1193 = vrot.lane.b32.xlu0 %v1075, 12
      %v1194 = vpop.permute.xlu0 %1193
      %1195 = vrot.lane.b32.xlu0 %v1076, 12
      %v1196 = vpop.permute.xlu0 %1195
      %1197 = vrot.lane.b32.xlu0 %v1077, 12
      %v1198 = vpop.permute.xlu0 %1197
      %v1200 = vshrl.u32 %v1077, 16
      %v1202 = vshll.u32 %v1077, 16
      %v1204 = vrot.slane %v1202, 1
      %v1205 = vor.u32 %v1200, %v1204
      %1206 = vrot.lane.b32.xlu0 %v1091, 16
      %v1207 = vpop.permute.xlu0 %1206
      %1208 = vrot.lane.b32.xlu0 %v1098, 16
      %v1209 = vpop.permute.xlu0 %1208
      %1210 = vrot.lane.b32.xlu0 %v1105, 16
      %v1211 = vpop.permute.xlu0 %1210
      %1212 = vrot.lane.b32.xlu0 %v1112, 16
      %v1213 = vpop.permute.xlu0 %1212
      %1214 = vrot.lane.b32.xlu0 %v1119, 16
      %v1215 = vpop.permute.xlu0 %1214
      %1216 = vrot.lane.b32.xlu0 %v1126, 16
      %v1217 = vpop.permute.xlu0 %1216
      %1218 = vrot.lane.b32.xlu0 %v1133, 16
      %v1219 = vpop.permute.xlu0 %1218
      %1220 = vrot.lane.b32.xlu0 %v1205, 16
      %v1221 = vpop.permute.xlu0 %1220
      %v1222 = vrot.slane %v1077, 1
      %1223 = vrot.lane.b32.xlu0 %v1159, 20
      %v1224 = vpop.permute.xlu0 %1223
      %1225 = vrot.lane.b32.xlu0 %v1160, 20
      %v1226 = vpop.permute.xlu0 %1225
      %1227 = vrot.lane.b32.xlu0 %v1161, 20
      %v1228 = vpop.permute.xlu0 %1227
      %1229 = vrot.lane.b32.xlu0 %v1162, 20
      %v1230 = vpop.permute.xlu0 %1229
      %1231 = vrot.lane.b32.xlu0 %v1163, 20
      %v1232 = vpop.permute.xlu0 %1231
      %1233 = vrot.lane.b32.xlu0 %v1164, 20
      %v1234 = vpop.permute.xlu0 %1233
      %1235 = vrot.lane.b32.xlu0 %v1165, 20
      %v1236 = vpop.permute.xlu0 %1235
      %1237 = vrot.lane.b32.xlu0 %v1222, 20
      %v1238 = vpop.permute.xlu0 %1237
      %1239 = vrot.lane.b32.xlu0 %v1071, 24
      %v1240 = vpop.permute.xlu0 %1239
      %1241 = vrot.lane.b32.xlu0 %v1072, 24
      %v1242 = vpop.permute.xlu0 %1241
      %1243 = vrot.lane.b32.xlu0 %v1073, 24
      %v1244 = vpop.permute.xlu0 %1243
      %1245 = vrot.lane.b32.xlu0 %v1074, 24
      %v1246 = vpop.permute.xlu0 %1245
      %1247 = vrot.lane.b32.xlu0 %v1075, 24
      %v1248 = vpop.permute.xlu0 %1247
      %1249 = vrot.lane.b32.xlu0 %v1076, 24
      %v1250 = vpop.permute.xlu0 %1249
      %1251 = vrot.lane.b32.xlu0 %v1077, 24
      %v1252 = vpop.permute.xlu0 %1251
      %1253 = vrot.lane.b32.xlu0 %v1069, 24
      %v1254 = vpop.permute.xlu0 %1253
      %1255 = vrot.lane.b32.xlu0 %v1098, 28
      %v1256 = vpop.permute.xlu0 %1255
      %1257 = vrot.lane.b32.xlu0 %v1105, 28
      %v1258 = vpop.permute.xlu0 %1257
      %1259 = vrot.lane.b32.xlu0 %v1112, 28
      %v1260 = vpop.permute.xlu0 %1259
      %1261 = vrot.lane.b32.xlu0 %v1119, 28
      %v1262 = vpop.permute.xlu0 %1261
      %1263 = vrot.lane.b32.xlu0 %v1126, 28
      %v1264 = vpop.permute.xlu0 %1263
      %1265 = vrot.lane.b32.xlu0 %v1133, 28
      %v1266 = vpop.permute.xlu0 %1265
      %1267 = vrot.lane.b32.xlu0 %v1205, 28
      %v1268 = vpop.permute.xlu0 %1267
      %1269 = vrot.lane.b32.xlu0 %v1084, 28
      %v1270 = vpop.permute.xlu0 %1269
      %1271 = vrot.lane.b32.xlu0 %v1160, 32
      %v1272 = vpop.permute.xlu0 %1271
      %1273 = vrot.lane.b32.xlu0 %v1161, 32
      %v1274 = vpop.permute.xlu0 %1273
      %1275 = vrot.lane.b32.xlu0 %v1162, 32
      %v1276 = vpop.permute.xlu0 %1275
      %1277 = vrot.lane.b32.xlu0 %v1163, 32
      %v1278 = vpop.permute.xlu0 %1277
      %1279 = vrot.lane.b32.xlu0 %v1164, 32
      %v1280 = vpop.permute.xlu0 %1279
      %1281 = vrot.lane.b32.xlu0 %v1165, 32
      %v1282 = vpop.permute.xlu0 %1281
      %1283 = vrot.lane.b32.xlu0 %v1222, 32
      %v1284 = vpop.permute.xlu0 %1283
      %1285 = vrot.lane.b32.xlu0 %v1158, 32
      %v1286 = vpop.permute.xlu0 %1285
      %vm1287 = vcmask 31744
      %v1289 = vsel %vm1287, %v1069, %v1135
      %v1291 = vsel %vm1287, %v1070, %v1137
      %v1293 = vsel %vm1287, %v1071, %v1139
      %v1295 = vsel %vm1287, %v1072, %v1141
      %v1297 = vsel %vm1287, %v1073, %v1143
      %v1299 = vsel %vm1287, %v1074, %v1145
      %v1301 = vsel %vm1287, %v1075, %v1147
      %v1303 = vsel %vm1287, %v1076, %v1149
      %v1305 = vsel %vm862, %v1289, %v1167
      %v1307 = vsel %vm862, %v1291, %v1169
      %v1309 = vsel %vm862, %v1293, %v1171
      %v1311 = vsel %vm862, %v1295, %v1173
      %v1313 = vsel %vm862, %v1297, %v1175
      %v1315 = vsel %vm862, %v1299, %v1177
      %v1317 = vsel %vm862, %v1301, %v1179
      %v1319 = vsel %vm862, %v1303, %v1181
      %vm1320 = vcmask 97280
      %v1322 = vsel %vm1320, %v1305, %v1184
      %v1324 = vsel %vm1320, %v1307, %v1186
      %v1326 = vsel %vm1320, %v1309, %v1188
      %v1328 = vsel %vm1320, %v1311, %v1190
      %v1330 = vsel %vm1320, %v1313, %v1192
      %v1332 = vsel %vm1320, %v1315, %v1194
      %v1334 = vsel %vm1320, %v1317, %v1196
      %v1336 = vsel %vm1320, %v1319, %v1198
      %vm1337 = vcmask 130048
      %v1339 = vsel %vm1337, %v1322, %v1207
      %v1341 = vsel %vm1337, %v1324, %v1209
      %v1343 = vsel %vm1337, %v1326, %v1211
      %v1345 = vsel %vm1337, %v1328, %v1213
      %v1347 = vsel %vm1337, %v1330, %v1215
      %v1349 = vsel %vm1337, %v1332, %v1217
      %v1351 = vsel %vm1337, %v1334, %v1219
      %v1353 = vsel %vm1337, %v1336, %v1221
      %vm1354 = vcmask 162816
      %v1356 = vsel %vm1354, %v1339, %v1224
      %v1358 = vsel %vm1354, %v1341, %v1226
      %v1360 = vsel %vm1354, %v1343, %v1228
      %v1362 = vsel %vm1354, %v1345, %v1230
      %v1364 = vsel %vm1354, %v1347, %v1232
      %v1366 = vsel %vm1354, %v1349, %v1234
      %v1368 = vsel %vm1354, %v1351, %v1236
      %v1370 = vsel %vm1354, %v1353, %v1238
      %vm1371 = vcmask 195584
      %v1373 = vsel %vm1371, %v1356, %v1240
      %v1375 = vsel %vm1371, %v1358, %v1242
      %v1377 = vsel %vm1371, %v1360, %v1244
      %v1379 = vsel %vm1371, %v1362, %v1246
      %v1381 = vsel %vm1371, %v1364, %v1248
      %v1383 = vsel %vm1371, %v1366, %v1250
      %v1385 = vsel %vm1371, %v1368, %v1252
      %v1387 = vsel %vm1371, %v1370, %v1254
      %vm1388 = vcmask 228352
      %v1390 = vsel %vm1388, %v1373, %v1256
      %v1392 = vsel %vm1388, %v1375, %v1258
      %v1394 = vsel %vm1388, %v1377, %v1260
      %v1396 = vsel %vm1388, %v1379, %v1262
      %v1398 = vsel %vm1388, %v1381, %v1264
      %v1400 = vsel %vm1388, %v1383, %v1266
      %v1402 = vsel %vm1388, %v1385, %v1268
      %v1404 = vsel %vm1388, %v1387, %v1270
      %vm1405 = vcmask 261120
      %v1407 = vsel %vm1405, %v1390, %v1272
      %v1409 = vsel %vm1405, %v1392, %v1274
      %v1411 = vsel %vm1405, %v1394, %v1276
      %v1413 = vsel %vm1405, %v1396, %v1278
      %v1415 = vsel %vm1405, %v1398, %v1280
      %v1417 = vsel %vm1405, %v1400, %v1282
      %v1419 = vsel %vm1405, %v1402, %v1284
      %v1421 = vsel %vm1405, %v1404, %v1286
      %v1422 = vld [vmem:[%s3] sm:$0xf]
      %v1423 = vld [vmem:[%s3 + $0x4] sm:$0xf]
      %v1424 = vld [vmem:[%s3 + $0x8] sm:$0xf]
      %v1425 = vld [vmem:[%s3 + $0xc] sm:$0xf]
      %v1426 = vld [vmem:[%s3 + $0x10] sm:$0x3]
      %v1427 = vld [vmem:[%s4] sm:$0x1]
      %v1429 = vlaneseq
      %v1430 = vshrl.u32 %v1429, 7
      %v1431 = vsub.s32 0, %v1430
      %v1432 = vrot.slane %v1427, %v1431
      %v1442 = vunpack.c.l.b16 %v1407
      %v1443 = vunpack.c.l.b16 %v1409
      %v1444 = vunpack.c.l.b16 %v1411
      %v1445 = vunpack.c.l.b16 %v1413
      %v1446 = vunpack.c.l.b16 %v1415
      %v1447 = vunpack.c.l.b16 %v1417
      %v1448 = vunpack.c.l.b16 %v1419
      %v1449 = vunpack.c.l.b16 %v1421
      %v1450 = vpack.c.b16 %v1443, %v1442
      %v1451 = vpack.c.b16 %v1445, %v1444
      %v1452 = vpack.c.b16 %v1447, %v1446
      %v1453 = vpack.c.b16 %v1449, %v1448
      %v1459 = vunpack.c.l.b16 %v1422
      %v1460 = vunpack.c.l.b16 %v1423
      %v1461 = vunpack.c.l.b16 %v1424
      %v1462 = vunpack.c.l.b16 %v1425
      %v1463 = vunpack.c.l.b16 %v1426
      %v1464 = vpack.c.b16 %v1460, %v1459
      %v1465 = vpack.c.b16 %v1462, %v1461
      %v1466 = vpack.c.b16 %v1463, %v1463
      %vm1469 = vcmask 293888
      %v1471 = vsel %vm1469, %v1450, 0
      %v1474 = vsel %vm1469, %v1451, 0
      %v1477 = vsel %vm1469, %v1452, 0
      %v1480 = vsel %vm1469, %v1453, 0
      %vm1482 = vcmask 1041408
      %v1484 = vsel %vm1482, %v1466, 0
      %1486 = vmatprep.subr.bf16.mxu0 0
      %1487 = vmatpush1.bf16.msra.mxu0 %v1464
      %1488 = vmatprep.subr.bf16.mxu0 0
      %1489 = vmatpush1.bf16.msra.mxu0 %v1465
      %1490 = vmatprep.subr.bf16.mxu0 0
      %1491 = vmatpush1.bf16.msra.mxu0 %v1484
      %1492 = vmatprep.subr.bf16.mxu0 0
      %1493 = vmatpush1.bf16.msra.mxu0 0
      %1494 = vmatprep.subr.bf16.mxu0 0
      %1495 = vmatpush1.bf16.msra.mxu0 0
      %1496 = vmatprep.subr.bf16.mxu0 0
      %1497 = vmatpush1.bf16.msra.mxu0 0
      %1498 = vmatprep.subr.bf16.mxu0 0
      %1499 = vmatpush1.bf16.msra.mxu0 0
      %1500 = vmatprep.subr.bf16.mxu0 0
      %1501 = vmatpush1.bf16.msra.mxu0 0
      %1502 = vmatprep.subr.bf16.mxu0 0
      %1503 = vmatpush1.bf16.msra.mxu0 0
      %1504 = vmatprep.subr.bf16.mxu0 0
      %1505 = vmatpush1.bf16.msra.mxu0 0
      %1506 = vmatprep.subr.bf16.mxu0 0
      %1507 = vmatpush1.bf16.msra.mxu0 0
      %1508 = vmatprep.subr.bf16.mxu0 0
      %1509 = vmatpush1.bf16.msra.mxu0 0
      %1510 = vmatprep.subr.bf16.mxu0 0
      %1511 = vmatpush1.bf16.msra.mxu0 0
      %1512 = vmatprep.subr.bf16.mxu0 0
      %1513 = vmatpush1.bf16.msra.mxu0 0
      %1514 = vmatprep.subr.bf16.mxu0 0
      %1515 = vmatpush1.bf16.msra.mxu0 0
      %1516 = vmatprep.subr.bf16.mxu0 0
      %1517 = vmatpush1.bf16.msra.mxu0 0
      %1518 = vmatprep.mubr.bf16.mxu0 0
      %1519 = vmatmul.mubr.bf16.gmra.mrb[0].mxu0 %v1471
      %v1520 = vpop.f32.mrb[0].mxu0
      %v1521 = vadd.f32 %v1432, %v1520
      %v1522 = vpop.f32.mrb[0].mxu0
      %v1523 = vpop.f32.mrb[0].mxu0
      %v1524 = vadd.f32 %v1432, %v1523
      %v1525 = vpop.f32.mrb[0].mxu0
      %1526 = vmatprep.mubr.bf16.mxu0 0
      %1527 = vmatmul.mubr.bf16.gmra.mrb[0].mxu0 %v1474
      %v1528 = vpop.f32.mrb[0].mxu0
      %v1529 = vadd.f32 %v1432, %v1528
      %v1530 = vpop.f32.mrb[0].mxu0
      %v1531 = vpop.f32.mrb[0].mxu0
      %v1532 = vadd.f32 %v1432, %v1531
      %v1533 = vpop.f32.mrb[0].mxu0
      %1534 = vmatprep.mubr.bf16.mxu0 0
      %1535 = vmatmul.mubr.bf16.gmra.mrb[0].mxu0 %v1477
      %v1536 = vpop.f32.mrb[0].mxu0
      %v1537 = vadd.f32 %v1432, %v1536
      %v1538 = vpop.f32.mrb[0].mxu0
      %v1539 = vpop.f32.mrb[0].mxu0
      %v1540 = vadd.f32 %v1432, %v1539
      %v1541 = vpop.f32.mrb[0].mxu0
      %1542 = vmatprep.mubr.bf16.mxu0 0
      %1543 = vmatmul.mubr.bf16.gmra.mrb[0].mxu0 %v1480
      %v1544 = vpop.f32.mrb[0].mxu0
      %v1545 = vadd.f32 %v1432, %v1544
      %v1546 = vpop.f32.mrb[0].mxu0
      %v1547 = vpop.f32.mrb[0].mxu0
      %v1548 = vadd.f32 %v1432, %v1547
      %v1549 = vpop.f32.mrb[0].mxu0
      %1550 = vdwg.mxu0
      %v1551 = vmax.f32 %v1521, 0.0
      %v1552 = vmax.f32 %v1524, 0.0
      %v1553 = vmax.f32 %v1529, 0.0
      %v1554 = vmax.f32 %v1532, 0.0
      %v1555 = vmax.f32 %v1537, 0.0
      %v1556 = vmax.f32 %v1540, 0.0
      %v1557 = vmax.f32 %v1545, 0.0
      %v1558 = vmax.f32 %v1548, 0.0
      %v1559 = vpack.c.bf16 %v1551, %v1551
      %v1560 = vpack.c.bf16 %v1552, %v1552
      %v1561 = vpack.c.bf16 %v1553, %v1553
      %v1562 = vpack.c.bf16 %v1554, %v1554
      %v1563 = vpack.c.bf16 %v1555, %v1555
      %v1564 = vpack.c.bf16 %v1556, %v1556
      %v1565 = vpack.c.bf16 %v1557, %v1557
      %v1566 = vpack.c.bf16 %v1558, %v1558
      %v1568 = vshrl.u32 %v1559, 16
      %v1570 = vrot.slane %v1568, 7
      %v1571 = vshll.u32 %v1559, 16
      %v1573 = vor.u32 %v1570, %v1571
      %v1575 = vshrl.u32 %v1560, 16
      %v1577 = vrot.slane %v1575, 7
      %v1578 = vshll.u32 %v1560, 16
      %v1580 = vor.u32 %v1577, %v1578
      %v1582 = vshrl.u32 %v1561, 16
      %v1584 = vrot.slane %v1582, 7
      %v1585 = vshll.u32 %v1561, 16
      %v1587 = vor.u32 %v1584, %v1585
      %v1589 = vshrl.u32 %v1562, 16
      %v1591 = vrot.slane %v1589, 7
      %v1592 = vshll.u32 %v1562, 16
      %v1594 = vor.u32 %v1591, %v1592
      %v1596 = vshrl.u32 %v1563, 16
      %v1598 = vrot.slane %v1596, 7
      %v1599 = vshll.u32 %v1563, 16
      %v1601 = vor.u32 %v1598, %v1599
      %v1603 = vshrl.u32 %v1564, 16
      %v1605 = vrot.slane %v1603, 7
      %v1606 = vshll.u32 %v1564, 16
      %v1608 = vor.u32 %v1605, %v1606
      %v1610 = vshrl.u32 %v1565, 16
      %v1612 = vrot.slane %v1610, 7
      %v1613 = vshll.u32 %v1565, 16
      %v1615 = vor.u32 %v1612, %v1613
      %v1617 = vshrl.u32 %v1566, 16
      %v1619 = vrot.slane %v1617, 7
      %v1620 = vshll.u32 %v1566, 16
      %v1622 = vor.u32 %v1619, %v1620
      %v1631 = vsel %vm1056, 0, %v1573
      %v1632 = vsel %vm1056, 0, %v1580
      %v1633 = vsel %vm1056, 0, %v1587
      %v1634 = vsel %vm1056, 0, %v1594
      %v1635 = vsel %vm1056, 0, %v1601
      %v1636 = vsel %vm1056, 0, %v1608
      %v1637 = vsel %vm1056, 0, %v1615
      %v1638 = vsel %vm1056, 0, %v1622
      %v1639 = vsel %vm1068, %v1631, 0
      %v1640 = vsel %vm1068, %v1632, 0
      %v1641 = vsel %vm1068, %v1633, 0
      %v1642 = vsel %vm1068, %v1634, 0
      %v1643 = vsel %vm1068, %v1635, 0
      %v1644 = vsel %vm1068, %v1636, 0
      %v1645 = vsel %vm1068, %v1637, 0
      %v1646 = vsel %vm1068, %v1638, 0
      %v1648 = vshrl.u32 %v1639, 16
      %v1650 = vshll.u32 %v1639, 16
      %v1652 = vrot.slane %v1650, 1
      %v1653 = vor.u32 %v1648, %v1652
      %v1655 = vshrl.u32 %v1640, 16
      %v1657 = vshll.u32 %v1640, 16
      %v1659 = vrot.slane %v1657, 1
      %v1660 = vor.u32 %v1655, %v1659
      %v1662 = vshrl.u32 %v1641, 16
      %v1664 = vshll.u32 %v1641, 16
      %v1666 = vrot.slane %v1664, 1
      %v1667 = vor.u32 %v1662, %v1666
      %v1669 = vshrl.u32 %v1642, 16
      %v1671 = vshll.u32 %v1642, 16
      %v1673 = vrot.slane %v1671, 1
      %v1674 = vor.u32 %v1669, %v1673
      %v1676 = vshrl.u32 %v1643, 16
      %v1678 = vshll.u32 %v1643, 16
      %v1680 = vrot.slane %v1678, 1
      %v1681 = vor.u32 %v1676, %v1680
      %v1683 = vshrl.u32 %v1644, 16
      %v1685 = vshll.u32 %v1644, 16
      %v1687 = vrot.slane %v1685, 1
      %v1688 = vor.u32 %v1683, %v1687
      %v1690 = vshrl.u32 %v1645, 16
      %v1692 = vshll.u32 %v1645, 16
      %v1694 = vrot.slane %v1692, 1
      %v1695 = vor.u32 %v1690, %v1694
      %1696 = vrot.lane.b32.xlu0 %v1653, 4
      %v1697 = vpop.permute.xlu0 %1696
      %1698 = vrot.lane.b32.xlu0 %v1660, 4
      %v1699 = vpop.permute.xlu0 %1698
      %1700 = vrot.lane.b32.xlu0 %v1667, 4
      %v1701 = vpop.permute.xlu0 %1700
      %1702 = vrot.lane.b32.xlu0 %v1674, 4
      %v1703 = vpop.permute.xlu0 %1702
      %1704 = vrot.lane.b32.xlu0 %v1681, 4
      %v1705 = vpop.permute.xlu0 %1704
      %1706 = vrot.lane.b32.xlu0 %v1688, 4
      %v1707 = vpop.permute.xlu0 %1706
      %1708 = vrot.lane.b32.xlu0 %v1695, 4
      %v1709 = vpop.permute.xlu0 %1708
      %v1717 = vrot.slane %v1639, 1
      %v1718 = vrot.slane %v1640, 1
      %v1719 = vrot.slane %v1641, 1
      %v1720 = vrot.slane %v1642, 1
      %v1721 = vrot.slane %v1643, 1
      %v1722 = vrot.slane %v1644, 1
      %v1723 = vrot.slane %v1645, 1
      %1724 = vrot.lane.b32.xlu0 %v1717, 8
      %v1725 = vpop.permute.xlu0 %1724
      %1726 = vrot.lane.b32.xlu0 %v1718, 8
      %v1727 = vpop.permute.xlu0 %1726
      %1728 = vrot.lane.b32.xlu0 %v1719, 8
      %v1729 = vpop.permute.xlu0 %1728
      %1730 = vrot.lane.b32.xlu0 %v1720, 8
      %v1731 = vpop.permute.xlu0 %1730
      %1732 = vrot.lane.b32.xlu0 %v1721, 8
      %v1733 = vpop.permute.xlu0 %1732
      %1734 = vrot.lane.b32.xlu0 %v1722, 8
      %v1735 = vpop.permute.xlu0 %1734
      %1736 = vrot.lane.b32.xlu0 %v1723, 8
      %v1737 = vpop.permute.xlu0 %1736
      %1739 = vrot.lane.b32.xlu0 %v1639, 12
      %v1740 = vpop.permute.xlu0 %1739
      %1741 = vrot.lane.b32.xlu0 %v1640, 12
      %v1742 = vpop.permute.xlu0 %1741
      %1743 = vrot.lane.b32.xlu0 %v1641, 12
      %v1744 = vpop.permute.xlu0 %1743
      %1745 = vrot.lane.b32.xlu0 %v1642, 12
      %v1746 = vpop.permute.xlu0 %1745
      %1747 = vrot.lane.b32.xlu0 %v1643, 12
      %v1748 = vpop.permute.xlu0 %1747
      %1749 = vrot.lane.b32.xlu0 %v1644, 12
      %v1750 = vpop.permute.xlu0 %1749
      %1751 = vrot.lane.b32.xlu0 %v1645, 12
      %v1752 = vpop.permute.xlu0 %1751
      %1753 = vrot.lane.b32.xlu0 %v1646, 12
      %v1754 = vpop.permute.xlu0 %1753
      %v1756 = vshrl.u32 %v1646, 16
      %v1758 = vshll.u32 %v1646, 16
      %v1760 = vrot.slane %v1758, 1
      %v1761 = vor.u32 %v1756, %v1760
      %1762 = vrot.lane.b32.xlu0 %v1653, 16
      %v1763 = vpop.permute.xlu0 %1762
      %1764 = vrot.lane.b32.xlu0 %v1660, 16
      %v1765 = vpop.permute.xlu0 %1764
      %1766 = vrot.lane.b32.xlu0 %v1667, 16
      %v1767 = vpop.permute.xlu0 %1766
      %1768 = vrot.lane.b32.xlu0 %v1674, 16
      %v1769 = vpop.permute.xlu0 %1768
      %1770 = vrot.lane.b32.xlu0 %v1681, 16
      %v1771 = vpop.permute.xlu0 %1770
      %1772 = vrot.lane.b32.xlu0 %v1688, 16
      %v1773 = vpop.permute.xlu0 %1772
      %1774 = vrot.lane.b32.xlu0 %v1695, 16
      %v1775 = vpop.permute.xlu0 %1774
      %1776 = vrot.lane.b32.xlu0 %v1761, 16
      %v1777 = vpop.permute.xlu0 %1776
      %v1778 = vrot.slane %v1646, 1
      %1779 = vrot.lane.b32.xlu0 %v1717, 20
      %v1780 = vpop.permute.xlu0 %1779
      %1781 = vrot.lane.b32.xlu0 %v1718, 20
      %v1782 = vpop.permute.xlu0 %1781
      %1783 = vrot.lane.b32.xlu0 %v1719, 20
      %v1784 = vpop.permute.xlu0 %1783
      %1785 = vrot.lane.b32.xlu0 %v1720, 20
      %v1786 = vpop.permute.xlu0 %1785
      %1787 = vrot.lane.b32.xlu0 %v1721, 20
      %v1788 = vpop.permute.xlu0 %1787
      %1789 = vrot.lane.b32.xlu0 %v1722, 20
      %v1790 = vpop.permute.xlu0 %1789
      %1791 = vrot.lane.b32.xlu0 %v1723, 20
      %v1792 = vpop.permute.xlu0 %1791
      %1793 = vrot.lane.b32.xlu0 %v1778, 20
      %v1794 = vpop.permute.xlu0 %1793
      %1795 = vrot.lane.b32.xlu0 %v1640, 24
      %v1796 = vpop.permute.xlu0 %1795
      %1797 = vrot.lane.b32.xlu0 %v1641, 24
      %v1798 = vpop.permute.xlu0 %1797
      %1799 = vrot.lane.b32.xlu0 %v1642, 24
      %v1800 = vpop.permute.xlu0 %1799
      %1801 = vrot.lane.b32.xlu0 %v1643, 24
      %v1802 = vpop.permute.xlu0 %1801
      %1803 = vrot.lane.b32.xlu0 %v1644, 24
      %v1804 = vpop.permute.xlu0 %1803
      %1805 = vrot.lane.b32.xlu0 %v1645, 24
      %v1806 = vpop.permute.xlu0 %1805
      %1807 = vrot.lane.b32.xlu0 %v1646, 24
      %v1808 = vpop.permute.xlu0 %1807
      %1809 = vrot.lane.b32.xlu0 %v1660, 28
      %v1810 = vpop.permute.xlu0 %1809
      %1811 = vrot.lane.b32.xlu0 %v1667, 28
      %v1812 = vpop.permute.xlu0 %1811
      %1813 = vrot.lane.b32.xlu0 %v1674, 28
      %v1814 = vpop.permute.xlu0 %1813
      %1815 = vrot.lane.b32.xlu0 %v1681, 28
      %v1816 = vpop.permute.xlu0 %1815
      %1817 = vrot.lane.b32.xlu0 %v1688, 28
      %v1818 = vpop.permute.xlu0 %1817
      %1819 = vrot.lane.b32.xlu0 %v1695, 28
      %v1820 = vpop.permute.xlu0 %1819
      %1821 = vrot.lane.b32.xlu0 %v1761, 28
      %v1822 = vpop.permute.xlu0 %1821
      %1823 = vrot.lane.b32.xlu0 %v1718, 32
      %v1824 = vpop.permute.xlu0 %1823
      %1825 = vrot.lane.b32.xlu0 %v1719, 32
      %v1826 = vpop.permute.xlu0 %1825
      %1827 = vrot.lane.b32.xlu0 %v1720, 32
      %v1828 = vpop.permute.xlu0 %1827
      %1829 = vrot.lane.b32.xlu0 %v1721, 32
      %v1830 = vpop.permute.xlu0 %1829
      %1831 = vrot.lane.b32.xlu0 %v1722, 32
      %v1832 = vpop.permute.xlu0 %1831
      %1833 = vrot.lane.b32.xlu0 %v1723, 32
      %v1834 = vpop.permute.xlu0 %1833
      %1835 = vrot.lane.b32.xlu0 %v1778, 32
      %v1836 = vpop.permute.xlu0 %1835
      %v1838 = vsel %vm1287, %v1639, %v1697
      %v1840 = vsel %vm1287, %v1640, %v1699
      %v1842 = vsel %vm1287, %v1641, %v1701
      %v1844 = vsel %vm1287, %v1642, %v1703
      %v1846 = vsel %vm1287, %v1643, %v1705
      %v1848 = vsel %vm1287, %v1644, %v1707
      %v1850 = vsel %vm1287, %v1645, %v1709
      %v1852 = vsel %vm862, %v1838, %v1725
      %v1854 = vsel %vm862, %v1840, %v1727
      %v1856 = vsel %vm862, %v1842, %v1729
      %v1858 = vsel %vm862, %v1844, %v1731
      %v1860 = vsel %vm862, %v1846, %v1733
      %v1862 = vsel %vm862, %v1848, %v1735
      %v1864 = vsel %vm862, %v1850, %v1737
      %v1866 = vsel %vm1320, %v1305, %v1740
      %v1868 = vsel %vm1320, %v1852, %v1742
      %v1870 = vsel %vm1320, %v1854, %v1744
      %v1872 = vsel %vm1320, %v1856, %v1746
      %v1874 = vsel %vm1320, %v1858, %v1748
      %v1876 = vsel %vm1320, %v1860, %v1750
      %v1878 = vsel %vm1320, %v1862, %v1752
      %v1880 = vsel %vm1320, %v1864, %v1754
      %v1882 = vsel %vm1337, %v1866, %v1763
      %v1884 = vsel %vm1337, %v1868, %v1765
      %v1886 = vsel %vm1337, %v1870, %v1767
      %v1888 = vsel %vm1337, %v1872, %v1769
      %v1890 = vsel %vm1337, %v1874, %v1771
      %v1892 = vsel %vm1337, %v1876, %v1773
      %v1894 = vsel %vm1337, %v1878, %v1775
      %v1896 = vsel %vm1337, %v1880, %v1777
      %v1898 = vsel %vm1354, %v1882, %v1780
      %v1900 = vsel %vm1354, %v1884, %v1782
      %v1902 = vsel %vm1354, %v1886, %v1784
      %v1904 = vsel %vm1354, %v1888, %v1786
      %v1906 = vsel %vm1354, %v1890, %v1788
      %v1908 = vsel %vm1354, %v1892, %v1790
      %v1910 = vsel %vm1354, %v1894, %v1792
      %v1912 = vsel %vm1354, %v1896, %v1794
      %v1914 = vsel %vm1371, %v1898, %v1796
      %v1916 = vsel %vm1371, %v1900, %v1798
      %v1918 = vsel %vm1371, %v1902, %v1800
      %v1920 = vsel %vm1371, %v1904, %v1802
      %v1922 = vsel %vm1371, %v1906, %v1804
      %v1924 = vsel %vm1371, %v1908, %v1806
      %v1926 = vsel %vm1371, %v1910, %v1808
      %v1927 = vsel %vm1371, %v1912, %v1254
      %v1929 = vsel %vm1388, %v1914, %v1810
      %v1931 = vsel %vm1388, %v1916, %v1812
      %v1933 = vsel %vm1388, %v1918, %v1814
      %v1935 = vsel %vm1388, %v1920, %v1816
      %v1937 = vsel %vm1388, %v1922, %v1818
      %v1939 = vsel %vm1388, %v1924, %v1820
      %v1941 = vsel %vm1388, %v1926, %v1822
      %v1942 = vsel %vm1388, %v1927, %v1270
      %v1944 = vsel %vm1405, %v1929, %v1824
      %v1946 = vsel %vm1405, %v1931, %v1826
      %v1948 = vsel %vm1405, %v1933, %v1828
      %v1950 = vsel %vm1405, %v1935, %v1830
      %v1952 = vsel %vm1405, %v1937, %v1832
      %v1954 = vsel %vm1405, %v1939, %v1834
      %v1956 = vsel %vm1405, %v1941, %v1836
      %v1957 = vsel %vm1405, %v1942, %v1286
      %v1958 = vld [vmem:[%s5] sm:$0xf]
      %v1959 = vld [vmem:[%s5 + $0x4] sm:$0xf]
      %v1960 = vld [vmem:[%s5 + $0x8] sm:$0xf]
      %v1961 = vld [vmem:[%s5 + $0xc] sm:$0xf]
      %v1962 = vld [vmem:[%s5 + $0x10] sm:$0x3]
      %v1963 = vld [vmem:[%s6] sm:$0x1]
      %v1965 = vlaneseq
      %v1966 = vshrl.u32 %v1965, 7
      %v1967 = vsub.s32 0, %v1966
      %v1968 = vrot.slane %v1963, %v1967
      %v1978 = vunpack.c.l.b16 %v1944
      %v1979 = vunpack.c.l.b16 %v1946
      %v1980 = vunpack.c.l.b16 %v1948
      %v1981 = vunpack.c.l.b16 %v1950
      %v1982 = vunpack.c.l.b16 %v1952
      %v1983 = vunpack.c.l.b16 %v1954
      %v1984 = vunpack.c.l.b16 %v1956
      %v1985 = vunpack.c.l.b16 %v1957
      %v1986 = vpack.c.b16 %v1979, %v1978
      %v1987 = vpack.c.b16 %v1981, %v1980
      %v1988 = vpack.c.b16 %v1983, %v1982
      %v1989 = vpack.c.b16 %v1985, %v1984
      %v1995 = vunpack.c.l.b16 %v1958
      %v1996 = vunpack.c.l.b16 %v1959
      %v1997 = vunpack.c.l.b16 %v1960
      %v1998 = vunpack.c.l.b16 %v1961
      %v1999 = vunpack.c.l.b16 %v1962
      %v2000 = vpack.c.b16 %v1996, %v1995
      %v2001 = vpack.c.b16 %v1998, %v1997
      %v2002 = vpack.c.b16 %v1999, %v1999
      %v2006 = vsel %vm1469, %v1986, 0
      %v2009 = vsel %vm1469, %v1987, 0
      %v2012 = vsel %vm1469, %v1988, 0
      %v2015 = vsel %vm1469, %v1989, 0
      %v2018 = vsel %vm1482, %v2002, 0
      %2020 = vmatprep.subr.bf16.mxu0 0
      %2021 = vmatpush1.bf16.msra.mxu0 %v2000
      %2022 = vmatprep.subr.bf16.mxu0 0
      %2023 = vmatpush1.bf16.msra.mxu0 %v2001
      %2024 = vmatprep.subr.bf16.mxu0 0
      %2025 = vmatpush1.bf16.msra.mxu0 %v2018
      %2026 = vmatprep.subr.bf16.mxu0 0
      %2027 = vmatpush1.bf16.msra.mxu0 0
      %2028 = vmatprep.subr.bf16.mxu0 0
      %2029 = vmatpush1.bf16.msra.mxu0 0
      %2030 = vmatprep.subr.bf16.mxu0 0
      %2031 = vmatpush1.bf16.msra.mxu0 0
      %2032 = vmatprep.subr.bf16.mxu0 0
      %2033 = vmatpush1.bf16.msra.mxu0 0
      %2034 = vmatprep.subr.bf16.mxu0 0
      %2035 = vmatpush1.bf16.msra.mxu0 0
      %2036 = vmatprep.subr.bf16.mxu0 0
      %2037 = vmatpush1.bf16.msra.mxu0 0
      %2038 = vmatprep.subr.bf16.mxu0 0
      %2039 = vmatpush1.bf16.msra.mxu0 0
      %2040 = vmatprep.subr.bf16.mxu0 0
      %2041 = vmatpush1.bf16.msra.mxu0 0
      %2042 = vmatprep.subr.bf16.mxu0 0
      %2043 = vmatpush1.bf16.msra.mxu0 0
      %2044 = vmatprep.subr.bf16.mxu0 0
      %2045 = vmatpush1.bf16.msra.mxu0 0
      %2046 = vmatprep.subr.bf16.mxu0 0
      %2047 = vmatpush1.bf16.msra.mxu0 0
      %2048 = vmatprep.subr.bf16.mxu0 0
      %2049 = vmatpush1.bf16.msra.mxu0 0
      %2050 = vmatprep.subr.bf16.mxu0 0
      %2051 = vmatpush1.bf16.msra.mxu0 0
      %2052 = vmatprep.mubr.bf16.mxu0 0
      %2053 = vmatmul.mubr.bf16.gmra.mrb[0].mxu0 %v2006
      %v2054 = vpop.f32.mrb[0].mxu0
      %v2055 = vadd.f32 %v1968, %v2054
      %v2056 = vpop.f32.mrb[0].mxu0
      %v2057 = vpop.f32.mrb[0].mxu0
      %v2058 = vadd.f32 %v1968, %v2057
      %v2059 = vpop.f32.mrb[0].mxu0
      %2060 = vmatprep.mubr.bf16.mxu0 0
      %2061 = vmatmul.mubr.bf16.gmra.mrb[0].mxu0 %v2009
      %v2062 = vpop.f32.mrb[0].mxu0
      %v2063 = vadd.f32 %v1968, %v2062
      %v2064 = vpop.f32.mrb[0].mxu0
      %v2065 = vpop.f32.mrb[0].mxu0
      %v2066 = vadd.f32 %v1968, %v2065
      %v2067 = vpop.f32.mrb[0].mxu0
      %2068 = vmatprep.mubr.bf16.mxu0 0
      %2069 = vmatmul.mubr.bf16.gmra.mrb[0].mxu0 %v2012
      %v2070 = vpop.f32.mrb[0].mxu0
      %v2071 = vadd.f32 %v1968, %v2070
      %v2072 = vpop.f32.mrb[0].mxu0
      %v2073 = vpop.f32.mrb[0].mxu0
      %v2074 = vadd.f32 %v1968, %v2073
      %v2075 = vpop.f32.mrb[0].mxu0
      %2076 = vmatprep.mubr.bf16.mxu0 0
      %2077 = vmatmul.mubr.bf16.gmra.mrb[0].mxu0 %v2015
      %v2078 = vpop.f32.mrb[0].mxu0
      %v2079 = vadd.f32 %v1968, %v2078
      %v2080 = vpop.f32.mrb[0].mxu0
      %v2081 = vpop.f32.mrb[0].mxu0
      %v2082 = vadd.f32 %v1968, %v2081
      %v2083 = vpop.f32.mrb[0].mxu0
      %2084 = vdwg.mxu0
      %v2085 = vmul.f32 %v2055, 0.1
      %v2086 = vmul.f32 %v2058, 0.1
      %v2087 = vmul.f32 %v2063, 0.1
      %v2088 = vmul.f32 %v2066, 0.1
      %v2089 = vmul.f32 %v2071, 0.1
      %v2090 = vmul.f32 %v2074, 0.1
      %v2091 = vmul.f32 %v2079, 0.1
      %v2092 = vmul.f32 %v2082, 0.1
      %v2093 = vtanh.pop %v2085
      %v2094 = vtanh.pop %v2086
      %v2095 = vtanh.pop %v2087
      %v2096 = vtanh.pop %v2088
      %v2097 = vtanh.pop %v2089
      %v2098 = vtanh.pop %v2090
      %v2099 = vtanh.pop %v2091
      %v2100 = vtanh.pop %v2092
      %v2101 = vmul.f32 %v2093, 2.0
      %v2102 = vmul.f32 %v2094, 2.0
      %v2103 = vmul.f32 %v2095, 2.0
      %v2104 = vmul.f32 %v2096, 2.0
      %v2105 = vmul.f32 %v2097, 2.0
      %v2106 = vmul.f32 %v2098, 2.0
      %v2107 = vmul.f32 %v2099, 2.0
      %v2108 = vmul.f32 %v2100, 2.0
      %v2109 = vmul.f32 %v2101, 1.442695
      %v2110 = vpow.pop %v2109
      %v2111 = vmul.f32 %v2102, 1.442695
      %v2112 = vpow.pop %v2111
      %v2113 = vmul.f32 %v2103, 1.442695
      %v2114 = vpow.pop %v2113
      %v2115 = vmul.f32 %v2104, 1.442695
      %v2116 = vpow.pop %v2115
      %v2117 = vmul.f32 %v2105, 1.442695
      %v2118 = vpow.pop %v2117
      %v2119 = vmul.f32 %v2106, 1.442695
      %v2120 = vpow.pop %v2119
      %v2121 = vmul.f32 %v2107, 1.442695
      %v2122 = vpow.pop %v2121
      %v2123 = vmul.f32 %v2108, 1.442695
      %v2124 = vpow.pop %v2123
      %2133 = vrot.lane.b32.xlu0 %v2110, 4
      %v2134 = vpop.permute.xlu0 %2133
      %2135 = vrot.lane.b32.xlu0 %v2112, 4
      %v2136 = vpop.permute.xlu0 %2135
      %2137 = vrot.lane.b32.xlu0 %v2114, 4
      %v2138 = vpop.permute.xlu0 %2137
      %2139 = vrot.lane.b32.xlu0 %v2116, 4
      %v2140 = vpop.permute.xlu0 %2139
      %2141 = vrot.lane.b32.xlu0 %v2118, 4
      %v2142 = vpop.permute.xlu0 %2141
      %2143 = vrot.lane.b32.xlu0 %v2120, 4
      %v2144 = vpop.permute.xlu0 %2143
      %2145 = vrot.lane.b32.xlu0 %v2122, 4
      %v2146 = vpop.permute.xlu0 %2145
      %2147 = vrot.lane.b32.xlu0 %v2124, 4
      %v2148 = vpop.permute.xlu0 %2147
      %v2157 = vmul.f32 %v966, %v2134
      %v2158 = vmul.f32 %v967, %v2136
      %v2159 = vmul.f32 %v968, %v2138
      %v2160 = vmul.f32 %v969, %v2140
      %v2161 = vmul.f32 %v970, %v2142
      %v2162 = vmul.f32 %v971, %v2144
      %v2163 = vmul.f32 %v972, %v2146
      %v2164 = vmul.f32 %v973, %v2148
      %v2165 = vadd.f32 %v2157, %v2085
      %v2166 = vadd.f32 %v2158, %v2086
      %v2167 = vadd.f32 %v2159, %v2087
      %v2168 = vadd.f32 %v2160, %v2088
      %v2169 = vadd.f32 %v2161, %v2089
      %v2170 = vadd.f32 %v2162, %v2090
      %v2171 = vadd.f32 %v2163, %v2091
      %v2172 = vadd.f32 %v2164, %v2092
      %v2173 = vsel %vm1287, %v2101, 0.0
      %v2174 = vsel %vm1287, %v2102, 0.0
      %v2175 = vadd.f32 %v2173, %v2174
      %v2176 = vsel %vm1287, %v2103, 0.0
      %v2177 = vadd.f32 %v2175, %v2176
      %v2178 = vsel %vm1287, %v2104, 0.0
      %v2179 = vadd.f32 %v2177, %v2178
      %v2180 = vsel %vm1287, %v2105, 0.0
      %v2181 = vadd.f32 %v2179, %v2180
      %v2182 = vsel %vm1287, %v2106, 0.0
      %v2183 = vadd.f32 %v2181, %v2182
      %v2184 = vsel %vm1287, %v2107, 0.0
      %v2185 = vadd.f32 %v2183, %v2184
      %v2186 = vsel %vm1287, %v2108, 0.0
      %v2187 = vadd.f32 %v2185, %v2186
      %2188 = vadd.xlane.f32.xlu0 %v2187
      %v2189 = vpop.xlane.xlu0 %2188
      %v2190 = vrot.slane %v2189, 4
      %v2191 = vadd.f32 %v2189, %v2190
      %v2192 = vrot.slane %v2191, 2
      %v2193 = vadd.f32 %v2191, %v2192
      %v2194 = vrot.slane %v2193, 1
      %v2195 = vadd.f32 %v2193, %v2194
      %s2196 = vtos %v2195
      %s2197 = sadd.f32 %s2196, 0.0
      %v2198 = vsel %vm1287, %v966, %v2165
      %v2199 = vsel %vm1287, %v967, %v2166
      %v2200 = vsel %vm1287, %v968, %v2167
      %v2201 = vsel %vm1287, %v969, %v2168
      %v2202 = vsel %vm1287, %v970, %v2169
      %v2203 = vsel %vm1287, %v971, %v2170
      %v2204 = vsel %vm1287, %v972, %v2171
      %v2205 = vsel %vm1287, %v973, %v2172
      %v2206 = vld [vmem:[%s7] sm:$0xff]
      %v2207 = vld [vmem:[%s8] sm:$0x1]
      %v2209 = vlaneseq
      %v2210 = vshrl.u32 %v2209, 7
      %v2211 = vsub.s32 0, %v2210
      %v2212 = vrot.slane %v2207, %v2211
      %v2215 = vsel %vm862, %v2198, 0
      %v2218 = vsel %vm862, %v2199, 0
      %v2221 = vsel %vm862, %v2200, 0
      %v2224 = vsel %vm862, %v2201, 0
      %v2227 = vsel %vm862, %v2202, 0
      %v2230 = vsel %vm862, %v2203, 0
      %v2233 = vsel %vm862, %v2204, 0
      %v2236 = vsel %vm862, %v2205, 0
      %2238 = vmatprep.subr.mxu0 0.0
      %2239 = vmatpush1.msra.mxu0 %v2206
      %2240 = vmatprep.subr.mxu0 0.0
      %2241 = vmatpush1.msra.mxu0 0.0
      %2242 = vmatprep.subr.mxu0 0.0
      %2243 = vmatpush1.msra.mxu0 0.0
      %2244 = vmatprep.subr.mxu0 0.0
      %2245 = vmatpush1.msra.mxu0 0.0
      %2246 = vmatprep.subr.mxu0 0.0
      %2247 = vmatpush1.msra.mxu0 0.0
      %2248 = vmatprep.subr.mxu0 0.0
      %2249 = vmatpush1.msra.mxu0 0.0
      %2250 = vmatprep.subr.mxu0 0.0
      %2251 = vmatpush1.msra.mxu0 0.0
      %2252 = vmatprep.subr.mxu0 0.0
      %2253 = vmatpush1.msra.mxu0 0.0
      %2254 = vmatprep.subr.mxu0 0.0
      %2255 = vmatpush1.msra.mxu0 0.0
      %2256 = vmatprep.subr.mxu0 0.0
      %2257 = vmatpush1.msra.mxu0 0.0
      %2258 = vmatprep.subr.mxu0 0.0
      %2259 = vmatpush1.msra.mxu0 0.0
      %2260 = vmatprep.subr.mxu0 0.0
      %2261 = vmatpush1.msra.mxu0 0.0
      %2262 = vmatprep.subr.mxu0 0.0
      %2263 = vmatpush1.msra.mxu0 0.0
      %2264 = vmatprep.subr.mxu0 0.0
      %2265 = vmatpush1.msra.mxu0 0.0
      %2266 = vmatprep.subr.mxu0 0.0
      %2267 = vmatpush1.msra.mxu0 0.0
      %2268 = vmatprep.subr.mxu0 0.0
      %2269 = vmatpush1.msra.mxu0 0.0
      %2270 = vmatprep.subr.mxu0 0.0
      %2271 = vmatpush1.msra.mxu0 0.0
      %2272 = vmatprep.subr.mxu0 0.0
      %2273 = vmatpush1.msra.mxu0 0.0
      %2274 = vmatprep.subr.mxu0 0.0
      %2275 = vmatpush1.msra.mxu0 0.0
      %2276 = vmatprep.subr.mxu0 0.0
      %2277 = vmatpush1.msra.mxu0 0.0
      %2278 = vmatprep.subr.mxu0 0.0
      %2279 = vmatpush1.msra.mxu0 0.0
      %2280 = vmatprep.subr.mxu0 0.0
      %2281 = vmatpush1.msra.mxu0 0.0
      %2282 = vmatprep.subr.mxu0 0.0
      %2283 = vmatpush1.msra.mxu0 0.0
      %2284 = vmatprep.subr.mxu0 0.0
      %2285 = vmatpush1.msra.mxu0 0.0
      %2286 = vmatprep.subr.mxu0 0.0
      %2287 = vmatpush1.msra.mxu0 0.0
      %2288 = vmatprep.subr.mxu0 0.0
      %2289 = vmatpush1.msra.mxu0 0.0
      %2290 = vmatprep.subr.mxu0 0.0
      %2291 = vmatpush1.msra.mxu0 0.0
      %2292 = vmatprep.subr.mxu0 0.0
      %2293 = vmatpush1.msra.mxu0 0.0
      %2294 = vmatprep.subr.mxu0 0.0
      %2295 = vmatpush1.msra.mxu0 0.0
      %2296 = vmatprep.subr.mxu0 0.0
      %2297 = vmatpush1.msra.mxu0 0.0
      %2298 = vmatprep.subr.mxu0 0.0
      %2299 = vmatpush1.msra.mxu0 0.0
      %2300 = vmatprep.subr.mxu0 0.0
      %2301 = vmatpush1.msra.mxu0 0.0
      %2302 = vmatprep.mubr.f32.mxu0 0.0
      %2303 = vmatmul.mubr.f32.gmra.mrb[0].mxu0 %v2215
      %v2304 = vpop.f32.mrb[0].mxu0
      %v2305 = vadd.f32 %v2212, %v2304
      %v2306 = vpop.f32.mrb[0].mxu0
      %2307 = vmatprep.mubr.f32.mxu0 0.0
      %2308 = vmatmul.mubr.f32.gmra.mrb[0].mxu0 %v2218
      %v2309 = vpop.f32.mrb[0].mxu0
      %v2310 = vadd.f32 %v2212, %v2309
      %v2311 = vpop.f32.mrb[0].mxu0
      %2312 = vmatprep.mubr.f32.mxu0 0.0
      %2313 = vmatmul.mubr.f32.gmra.mrb[0].mxu0 %v2221
      %v2314 = vpop.f32.mrb[0].mxu0
      %v2315 = vadd.f32 %v2212, %v2314
      %v2316 = vpop.f32.mrb[0].mxu0
      %2317 = vmatprep.mubr.f32.mxu0 0.0
      %2318 = vmatmul.mubr.f32.gmra.mrb[0].mxu0 %v2224
      %v2319 = vpop.f32.mrb[0].mxu0
      %v2320 = vadd.f32 %v2212, %v2319
      %v2321 = vpop.f32.mrb[0].mxu0
      %2322 = vmatprep.mubr.f32.mxu0 0.0
      %2323 = vmatmul.mubr.f32.gmra.mrb[0].mxu0 %v2227
      %v2324 = vpop.f32.mrb[0].mxu0
      %v2325 = vadd.f32 %v2212, %v2324
      %v2326 = vpop.f32.mrb[0].mxu0
      %2327 = vmatprep.mubr.f32.mxu0 0.0
      %2328 = vmatmul.mubr.f32.gmra.mrb[0].mxu0 %v2230
      %v2329 = vpop.f32.mrb[0].mxu0
      %v2330 = vadd.f32 %v2212, %v2329
      %v2331 = vpop.f32.mrb[0].mxu0
      %2332 = vmatprep.mubr.f32.mxu0 0.0
      %2333 = vmatmul.mubr.f32.gmra.mrb[0].mxu0 %v2233
      %v2334 = vpop.f32.mrb[0].mxu0
      %v2335 = vadd.f32 %v2212, %v2334
      %v2336 = vpop.f32.mrb[0].mxu0
      %2337 = vmatprep.mubr.f32.mxu0 0.0
      %2338 = vmatmul.mubr.f32.gmra.mrb[0].mxu0 %v2236
      %v2339 = vpop.f32.mrb[0].mxu0
      %v2340 = vadd.f32 %v2212, %v2339
      %v2341 = vpop.f32.mrb[0].mxu0
      %2342 = vdwg.mxu0
      %v2343 = vpack.c.bf16 %v2305, %v2305
      %v2344 = vpack.c.bf16 %v2310, %v2310
      %v2345 = vpack.c.bf16 %v2315, %v2315
      %v2346 = vpack.c.bf16 %v2320, %v2320
      %v2347 = vpack.c.bf16 %v2325, %v2325
      %v2348 = vpack.c.bf16 %v2330, %v2330
      %v2349 = vpack.c.bf16 %v2335, %v2335
      %v2350 = vpack.c.bf16 %v2340, %v2340
      %v2351 = vld [vmem:[%s9] sm:$0x3]
      %v2352 = vld [vmem:[%s10] sm:$0x1]
      %v2354 = vlaneseq
      %v2355 = vshrl.u32 %v2354, 7
      %v2356 = vsub.s32 0, %v2355
      %v2357 = vrot.slane %v2352, %v2356
      %v2367 = vunpack.c.l.b16 %v2343
      %v2368 = vunpack.c.l.b16 %v2344
      %v2369 = vunpack.c.l.b16 %v2345
      %v2370 = vunpack.c.l.b16 %v2346
      %v2371 = vunpack.c.l.b16 %v2347
      %v2372 = vunpack.c.l.b16 %v2348
      %v2373 = vunpack.c.l.b16 %v2349
      %v2374 = vunpack.c.l.b16 %v2350
      %v2375 = vpack.c.b16 %v2368, %v2367
      %v2376 = vpack.c.b16 %v2370, %v2369
      %v2377 = vpack.c.b16 %v2372, %v2371
      %v2378 = vpack.c.b16 %v2374, %v2373
      %v2380 = vsel %vm1287, %v2375, 0
      %v2383 = vsel %vm1287, %v2376, 0
      %v2386 = vsel %vm1287, %v2377, 0
      %v2389 = vsel %vm1287, %v2378, 0
      %v2392 = vsel %vm1482, %v2351, 0
      %2394 = vmatprep.subr.bf16.mxu0 0
      %2395 = vmatpush1.bf16.msra.mxu0 %v2392
      %2396 = vmatprep.subr.bf16.mxu0 0
      %2397 = vmatpush1.bf16.msra.mxu0 0
      %2398 = vmatprep.subr.bf16.mxu0 0
      %2399 = vmatpush1.bf16.msra.mxu0 0
      %2400 = vmatprep.subr.bf16.mxu0 0
      %2401 = vmatpush1.bf16.msra.mxu0 0
      %2402 = vmatprep.subr.bf16.mxu0 0
      %2403 = vmatpush1.bf16.msra.mxu0 0
      %2404 = vmatprep.subr.bf16.mxu0 0
      %2405 = vmatpush1.bf16.msra.mxu0 0
      %2406 = vmatprep.subr.bf16.mxu0 0
      %2407 = vmatpush1.bf16.msra.mxu0 0
      %2408 = vmatprep.subr.bf16.mxu0 0
      %2409 = vmatpush1.bf16.msra.mxu0 0
      %2410 = vmatprep.subr.bf16.mxu0 0
      %2411 = vmatpush1.bf16.msra.mxu0 0
      %2412 = vmatprep.subr.bf16.mxu0 0
      %2413 = vmatpush1.bf16.msra.mxu0 0
      %2414 = vmatprep.subr.bf16.mxu0 0
      %2415 = vmatpush1.bf16.msra.mxu0 0
      %2416 = vmatprep.subr.bf16.mxu0 0
      %2417 = vmatpush1.bf16.msra.mxu0 0
      %2418 = vmatprep.subr.bf16.mxu0 0
      %2419 = vmatpush1.bf16.msra.mxu0 0
      %2420 = vmatprep.subr.bf16.mxu0 0
      %2421 = vmatpush1.bf16.msra.mxu0 0
      %2422 = vmatprep.subr.bf16.mxu0 0
      %2423 = vmatpush1.bf16.msra.mxu0 0
      %2424 = vmatprep.subr.bf16.mxu0 0
      %2425 = vmatpush1.bf16.msra.mxu0 0
      %2426 = vmatprep.mubr.bf16.mxu0 0
      %2427 = vmatmul.mubr.bf16.gmra.mrb[0].mxu0 %v2380
      %v2428 = vpop.f32.mrb[0].mxu0
      %v2429 = vadd.f32 %v2357, %v2428
      %v2430 = vpop.f32.mrb[0].mxu0
      %v2431 = vpop.f32.mrb[0].mxu0
      %v2432 = vadd.f32 %v2357, %v2431
      %v2433 = vpop.f32.mrb[0].mxu0
      %2434 = vmatprep.mubr.bf16.mxu0 0
      %2435 = vmatmul.mubr.bf16.gmra.mrb[0].mxu0 %v2383
      %v2436 = vpop.f32.mrb[0].mxu0
      %v2437 = vadd.f32 %v2357, %v2436
      %v2438 = vpop.f32.mrb[0].mxu0
      %v2439 = vpop.f32.mrb[0].mxu0
      %v2440 = vadd.f32 %v2357, %v2439
      %v2441 = vpop.f32.mrb[0].mxu0
      %2442 = vmatprep.mubr.bf16.mxu0 0
      %2443 = vmatmul.mubr.bf16.gmra.mrb[0].mxu0 %v2386
      %v2444 = vpop.f32.mrb[0].mxu0
      %v2445 = vadd.f32 %v2357, %v2444
      %v2446 = vpop.f32.mrb[0].mxu0
      %v2447 = vpop.f32.mrb[0].mxu0
      %v2448 = vadd.f32 %v2357, %v2447
      %v2449 = vpop.f32.mrb[0].mxu0
      %2450 = vmatprep.mubr.bf16.mxu0 0
      %2451 = vmatmul.mubr.bf16.gmra.mrb[0].mxu0 %v2389
      %v2452 = vpop.f32.mrb[0].mxu0
      %v2453 = vadd.f32 %v2357, %v2452
      %v2454 = vpop.f32.mrb[0].mxu0
      %v2455 = vpop.f32.mrb[0].mxu0
      %v2456 = vadd.f32 %v2357, %v2455
      %v2457 = vpop.f32.mrb[0].mxu0
      %2458 = vdwg.mxu0
      %v2459 = vmax.f32 %v2429, 0.0
      %v2460 = vmax.f32 %v2432, 0.0
      %v2461 = vmax.f32 %v2437, 0.0
      %v2462 = vmax.f32 %v2440, 0.0
      %v2463 = vmax.f32 %v2445, 0.0
      %v2464 = vmax.f32 %v2448, 0.0
      %v2465 = vmax.f32 %v2453, 0.0
      %v2466 = vmax.f32 %v2456, 0.0
      %v2467 = vpack.c.bf16 %v2459, %v2459
      %v2468 = vpack.c.bf16 %v2460, %v2460
      %v2469 = vpack.c.bf16 %v2461, %v2461
      %v2470 = vpack.c.bf16 %v2462, %v2462
      %v2471 = vpack.c.bf16 %v2463, %v2463
      %v2472 = vpack.c.bf16 %v2464, %v2464
      %v2473 = vpack.c.bf16 %v2465, %v2465
      %v2474 = vpack.c.bf16 %v2466, %v2466
      %v2475 = vld [vmem:[%s11] sm:$0x3]
      %v2476 = vld [vmem:[%s12] sm:$0x1]
      %v2478 = vlaneseq
      %v2479 = vshrl.u32 %v2478, 7
      %v2480 = vsub.s32 0, %v2479
      %v2481 = vrot.slane %v2476, %v2480
      %v2491 = vunpack.c.l.b16 %v2467
      %v2492 = vunpack.c.l.b16 %v2468
      %v2493 = vunpack.c.l.b16 %v2469
      %v2494 = vunpack.c.l.b16 %v2470
      %v2495 = vunpack.c.l.b16 %v2471
      %v2496 = vunpack.c.l.b16 %v2472
      %v2497 = vunpack.c.l.b16 %v2473
      %v2498 = vunpack.c.l.b16 %v2474
      %v2499 = vpack.c.b16 %v2492, %v2491
      %v2500 = vpack.c.b16 %v2494, %v2493
      %v2501 = vpack.c.b16 %v2496, %v2495
      %v2502 = vpack.c.b16 %v2498, %v2497
      %v2504 = vsel %vm1287, %v2499, 0
      %v2507 = vsel %vm1287, %v2500, 0
      %v2510 = vsel %vm1287, %v2501, 0
      %v2513 = vsel %vm1287, %v2502, 0
      %v2516 = vsel %vm1482, %v2475, 0
      %2518 = vmatprep.subr.bf16.mxu0 0
      %2519 = vmatpush1.bf16.msra.mxu0 %v2516
      %2520 = vmatprep.subr.bf16.mxu0 0
      %2521 = vmatpush1.bf16.msra.mxu0 0
      %2522 = vmatprep.subr.bf16.mxu0 0
      %2523 = vmatpush1.bf16.msra.mxu0 0
      %2524 = vmatprep.subr.bf16.mxu0 0
      %2525 = vmatpush1.bf16.msra.mxu0 0
      %2526 = vmatprep.subr.bf16.mxu0 0
      %2527 = vmatpush1.bf16.msra.mxu0 0
      %2528 = vmatprep.subr.bf16.mxu0 0
      %2529 = vmatpush1.bf16.msra.mxu0 0
      %2530 = vmatprep.subr.bf16.mxu0 0
      %2531 = vmatpush1.bf16.msra.mxu0 0
      %2532 = vmatprep.subr.bf16.mxu0 0
      %2533 = vmatpush1.bf16.msra.mxu0 0
      %2534 = vmatprep.subr.bf16.mxu0 0
      %2535 = vmatpush1.bf16.msra.mxu0 0
      %2536 = vmatprep.subr.bf16.mxu0 0
      %2537 = vmatpush1.bf16.msra.mxu0 0
      %2538 = vmatprep.subr.bf16.mxu0 0
      %2539 = vmatpush1.bf16.msra.mxu0 0
      %2540 = vmatprep.subr.bf16.mxu0 0
      %2541 = vmatpush1.bf16.msra.mxu0 0
      %2542 = vmatprep.subr.bf16.mxu0 0
      %2543 = vmatpush1.bf16.msra.mxu0 0
      %2544 = vmatprep.subr.bf16.mxu0 0
      %2545 = vmatpush1.bf16.msra.mxu0 0
      %2546 = vmatprep.subr.bf16.mxu0 0
      %2547 = vmatpush1.bf16.msra.mxu0 0
      %2548 = vmatprep.subr.bf16.mxu0 0
      %2549 = vmatpush1.bf16.msra.mxu0 0
      %2550 = vmatprep.mubr.bf16.mxu0 0
      %2551 = vmatmul.mubr.bf16.gmra.mrb[0].mxu0 %v2504
      %v2552 = vpop.f32.mrb[0].mxu0
      %v2553 = vadd.f32 %v2481, %v2552
      %v2554 = vpop.f32.mrb[0].mxu0
      %v2555 = vpop.f32.mrb[0].mxu0
      %v2556 = vadd.f32 %v2481, %v2555
      %v2557 = vpop.f32.mrb[0].mxu0
      %2558 = vmatprep.mubr.bf16.mxu0 0
      %2559 = vmatmul.mubr.bf16.gmra.mrb[0].mxu0 %v2507
      %v2560 = vpop.f32.mrb[0].mxu0
      %v2561 = vadd.f32 %v2481, %v2560
      %v2562 = vpop.f32.mrb[0].mxu0
      %v2563 = vpop.f32.mrb[0].mxu0
      %v2564 = vadd.f32 %v2481, %v2563
      %v2565 = vpop.f32.mrb[0].mxu0
      %2566 = vmatprep.mubr.bf16.mxu0 0
      %2567 = vmatmul.mubr.bf16.gmra.mrb[0].mxu0 %v2510
      %v2568 = vpop.f32.mrb[0].mxu0
      %v2569 = vadd.f32 %v2481, %v2568
      %v2570 = vpop.f32.mrb[0].mxu0
      %v2571 = vpop.f32.mrb[0].mxu0
      %v2572 = vadd.f32 %v2481, %v2571
      %v2573 = vpop.f32.mrb[0].mxu0
      %2574 = vmatprep.mubr.bf16.mxu0 0
      %2575 = vmatmul.mubr.bf16.gmra.mrb[0].mxu0 %v2513
      %v2576 = vpop.f32.mrb[0].mxu0
      %v2577 = vadd.f32 %v2481, %v2576
      %v2578 = vpop.f32.mrb[0].mxu0
      %v2579 = vpop.f32.mrb[0].mxu0
      %v2580 = vadd.f32 %v2481, %v2579
      %v2581 = vpop.f32.mrb[0].mxu0
      %2582 = vdwg.mxu0
      %v2583 = vmul.f32 %v2553, 0.1
      %v2584 = vmul.f32 %v2556, 0.1
      %v2585 = vmul.f32 %v2561, 0.1
      %v2586 = vmul.f32 %v2564, 0.1
      %v2587 = vmul.f32 %v2569, 0.1
      %v2588 = vmul.f32 %v2572, 0.1
      %v2589 = vmul.f32 %v2577, 0.1
      %v2590 = vmul.f32 %v2580, 0.1
      %v2591 = vtanh.pop %v2583
      %v2592 = vtanh.pop %v2584
      %v2593 = vtanh.pop %v2585
      %v2594 = vtanh.pop %v2586
      %v2595 = vtanh.pop %v2587
      %v2596 = vtanh.pop %v2588
      %v2597 = vtanh.pop %v2589
      %v2598 = vtanh.pop %v2590
      %v2599 = vmul.f32 %v2591, 2.0
      %v2600 = vmul.f32 %v2592, 2.0
      %v2601 = vmul.f32 %v2593, 2.0
      %v2602 = vmul.f32 %v2594, 2.0
      %v2603 = vmul.f32 %v2595, 2.0
      %v2604 = vmul.f32 %v2596, 2.0
      %v2605 = vmul.f32 %v2597, 2.0
      %v2606 = vmul.f32 %v2598, 2.0
      %v2607 = vmul.f32 %v2599, 1.442695
      %v2608 = vpow.pop %v2607
      %v2609 = vmul.f32 %v2600, 1.442695
      %v2610 = vpow.pop %v2609
      %v2611 = vmul.f32 %v2601, 1.442695
      %v2612 = vpow.pop %v2611
      %v2613 = vmul.f32 %v2602, 1.442695
      %v2614 = vpow.pop %v2613
      %v2615 = vmul.f32 %v2603, 1.442695
      %v2616 = vpow.pop %v2615
      %v2617 = vmul.f32 %v2604, 1.442695
      %v2618 = vpow.pop %v2617
      %v2619 = vmul.f32 %v2605, 1.442695
      %v2620 = vpow.pop %v2619
      %v2621 = vmul.f32 %v2606, 1.442695
      %v2622 = vpow.pop %v2621
      %2631 = vrot.lane.b32.xlu0 %v2608, 4
      %v2632 = vpop.permute.xlu0 %2631
      %2633 = vrot.lane.b32.xlu0 %v2610, 4
      %v2634 = vpop.permute.xlu0 %2633
      %2635 = vrot.lane.b32.xlu0 %v2612, 4
      %v2636 = vpop.permute.xlu0 %2635
      %2637 = vrot.lane.b32.xlu0 %v2614, 4
      %v2638 = vpop.permute.xlu0 %2637
      %2639 = vrot.lane.b32.xlu0 %v2616, 4
      %v2640 = vpop.permute.xlu0 %2639
      %2641 = vrot.lane.b32.xlu0 %v2618, 4
      %v2642 = vpop.permute.xlu0 %2641
      %2643 = vrot.lane.b32.xlu0 %v2620, 4
      %v2644 = vpop.permute.xlu0 %2643
      %2645 = vrot.lane.b32.xlu0 %v2622, 4
      %v2646 = vpop.permute.xlu0 %2645
      %v2655 = vmul.f32 %v2305, %v2632
      %v2656 = vmul.f32 %v2310, %v2634
      %v2657 = vmul.f32 %v2315, %v2636
      %v2658 = vmul.f32 %v2320, %v2638
      %v2659 = vmul.f32 %v2325, %v2640
      %v2660 = vmul.f32 %v2330, %v2642
      %v2661 = vmul.f32 %v2335, %v2644
      %v2662 = vmul.f32 %v2340, %v2646
      %v2663 = vadd.f32 %v2655, %v2583
      %v2664 = vadd.f32 %v2656, %v2584
      %v2665 = vadd.f32 %v2657, %v2585
      %v2666 = vadd.f32 %v2658, %v2586
      %v2667 = vadd.f32 %v2659, %v2587
      %v2668 = vadd.f32 %v2660, %v2588
      %v2669 = vadd.f32 %v2661, %v2589
      %v2670 = vadd.f32 %v2662, %v2590
      %v2671 = vsel %vm1287, %v2599, 0.0
      %v2672 = vsel %vm1287, %v2600, 0.0
      %v2673 = vadd.f32 %v2671, %v2672
      %v2674 = vsel %vm1287, %v2601, 0.0
      %v2675 = vadd.f32 %v2673, %v2674
      %v2676 = vsel %vm1287, %v2602, 0.0
      %v2677 = vadd.f32 %v2675, %v2676
      %v2678 = vsel %vm1287, %v2603, 0.0
      %v2679 = vadd.f32 %v2677, %v2678
      %v2680 = vsel %vm1287, %v2604, 0.0
      %v2681 = vadd.f32 %v2679, %v2680
      %v2682 = vsel %vm1287, %v2605, 0.0
      %v2683 = vadd.f32 %v2681, %v2682
      %v2684 = vsel %vm1287, %v2606, 0.0
      %v2685 = vadd.f32 %v2683, %v2684
      %2686 = vadd.xlane.f32.xlu0 %v2685
      %v2687 = vpop.xlane.xlu0 %2686
      %v2688 = vrot.slane %v2687, 4
      %v2689 = vadd.f32 %v2687, %v2688
      %v2690 = vrot.slane %v2689, 2
      %v2691 = vadd.f32 %v2689, %v2690
      %v2692 = vrot.slane %v2691, 1
      %v2693 = vadd.f32 %v2691, %v2692
      %s2694 = vtos %v2693
      %s2695 = sadd.f32 %s2197, %s2694
      %v2696 = vsel %vm1287, %v2305, %v2663
      %v2697 = vsel %vm1287, %v2310, %v2664
      %v2698 = vsel %vm1287, %v2315, %v2665
      %v2699 = vsel %vm1287, %v2320, %v2666
      %v2700 = vsel %vm1287, %v2325, %v2667
      %v2701 = vsel %vm1287, %v2330, %v2668
      %v2702 = vsel %vm1287, %v2335, %v2669
      %v2703 = vsel %vm1287, %v2340, %v2670
      %v2704 = vld [vmem:[%s13] sm:$0xff]
      %v2705 = vld [vmem:[%s14] sm:$0x1]
      %v2707 = vlaneseq
      %v2708 = vshrl.u32 %v2707, 7
      %v2709 = vsub.s32 0, %v2708
      %v2710 = vrot.slane %v2705, %v2709
      %v2713 = vsel %vm862, %v2696, 0
      %v2716 = vsel %vm862, %v2697, 0
      %v2719 = vsel %vm862, %v2698, 0
      %v2722 = vsel %vm862, %v2699, 0
      %v2725 = vsel %vm862, %v2700, 0
      %v2728 = vsel %vm862, %v2701, 0
      %v2731 = vsel %vm862, %v2702, 0
      %v2734 = vsel %vm862, %v2703, 0
      %2736 = vmatprep.subr.mxu0 0.0
      %2737 = vmatpush1.msra.mxu0 %v2704
      %2738 = vmatprep.subr.mxu0 0.0
      %2739 = vmatpush1.msra.mxu0 0.0
      %2740 = vmatprep.subr.mxu0 0.0
      %2741 = vmatpush1.msra.mxu0 0.0
      %2742 = vmatprep.subr.mxu0 0.0
      %2743 = vmatpush1.msra.mxu0 0.0
      %2744 = vmatprep.subr.mxu0 0.0
      %2745 = vmatpush1.msra.mxu0 0.0
      %2746 = vmatprep.subr.mxu0 0.0
      %2747 = vmatpush1.msra.mxu0 0.0
      %2748 = vmatprep.subr.mxu0 0.0
      %2749 = vmatpush1.msra.mxu0 0.0
      %2750 = vmatprep.subr.mxu0 0.0
      %2751 = vmatpush1.msra.mxu0 0.0
      %2752 = vmatprep.subr.mxu0 0.0
      %2753 = vmatpush1.msra.mxu0 0.0
      %2754 = vmatprep.subr.mxu0 0.0
      %2755 = vmatpush1.msra.mxu0 0.0
      %2756 = vmatprep.subr.mxu0 0.0
      %2757 = vmatpush1.msra.mxu0 0.0
      %2758 = vmatprep.subr.mxu0 0.0
      %2759 = vmatpush1.msra.mxu0 0.0
      %2760 = vmatprep.subr.mxu0 0.0
      %2761 = vmatpush1.msra.mxu0 0.0
      %2762 = vmatprep.subr.mxu0 0.0
      %2763 = vmatpush1.msra.mxu0 0.0
      %2764 = vmatprep.subr.mxu0 0.0
      %2765 = vmatpush1.msra.mxu0 0.0
      %2766 = vmatprep.subr.mxu0 0.0
      %2767 = vmatpush1.msra.mxu0 0.0
      %2768 = vmatprep.subr.mxu0 0.0
      %2769 = vmatpush1.msra.mxu0 0.0
      %2770 = vmatprep.subr.mxu0 0.0
      %2771 = vmatpush1.msra.mxu0 0.0
      %2772 = vmatprep.subr.mxu0 0.0
      %2773 = vmatpush1.msra.mxu0 0.0
      %2774 = vmatprep.subr.mxu0 0.0
      %2775 = vmatpush1.msra.mxu0 0.0
      %2776 = vmatprep.subr.mxu0 0.0
      %2777 = vmatpush1.msra.mxu0 0.0
      %2778 = vmatprep.subr.mxu0 0.0
      %2779 = vmatpush1.msra.mxu0 0.0
      %2780 = vmatprep.subr.mxu0 0.0
      %2781 = vmatpush1.msra.mxu0 0.0
      %2782 = vmatprep.subr.mxu0 0.0
      %2783 = vmatpush1.msra.mxu0 0.0
      %2784 = vmatprep.subr.mxu0 0.0
      %2785 = vmatpush1.msra.mxu0 0.0
      %2786 = vmatprep.subr.mxu0 0.0
      %2787 = vmatpush1.msra.mxu0 0.0
      %2788 = vmatprep.subr.mxu0 0.0
      %2789 = vmatpush1.msra.mxu0 0.0
      %2790 = vmatprep.subr.mxu0 0.0
      %2791 = vmatpush1.msra.mxu0 0.0
      %2792 = vmatprep.subr.mxu0 0.0
      %2793 = vmatpush1.msra.mxu0 0.0
      %2794 = vmatprep.subr.mxu0 0.0
      %2795 = vmatpush1.msra.mxu0 0.0
      %2796 = vmatprep.subr.mxu0 0.0
      %2797 = vmatpush1.msra.mxu0 0.0
      %2798 = vmatprep.subr.mxu0 0.0
      %2799 = vmatpush1.msra.mxu0 0.0
      %2800 = vmatprep.mubr.f32.mxu0 0.0
      %2801 = vmatmul.mubr.f32.gmra.mrb[0].mxu0 %v2713
      %v2802 = vpop.f32.mrb[0].mxu0
      %v2803 = vadd.f32 %v2710, %v2802
      %v2804 = vpop.f32.mrb[0].mxu0
      %2805 = vmatprep.mubr.f32.mxu0 0.0
      %2806 = vmatmul.mubr.f32.gmra.mrb[0].mxu0 %v2716
      %v2807 = vpop.f32.mrb[0].mxu0
      %v2808 = vadd.f32 %v2710, %v2807
      %v2809 = vpop.f32.mrb[0].mxu0
      %2810 = vmatprep.mubr.f32.mxu0 0.0
      %2811 = vmatmul.mubr.f32.gmra.mrb[0].mxu0 %v2719
      %v2812 = vpop.f32.mrb[0].mxu0
      %v2813 = vadd.f32 %v2710, %v2812
      %v2814 = vpop.f32.mrb[0].mxu0
      %2815 = vmatprep.mubr.f32.mxu0 0.0
      %2816 = vmatmul.mubr.f32.gmra.mrb[0].mxu0 %v2722
      %v2817 = vpop.f32.mrb[0].mxu0
      %v2818 = vadd.f32 %v2710, %v2817
      %v2819 = vpop.f32.mrb[0].mxu0
      %2820 = vmatprep.mubr.f32.mxu0 0.0
      %2821 = vmatmul.mubr.f32.gmra.mrb[0].mxu0 %v2725
      %v2822 = vpop.f32.mrb[0].mxu0
      %v2823 = vadd.f32 %v2710, %v2822
      %v2824 = vpop.f32.mrb[0].mxu0
      %2825 = vmatprep.mubr.f32.mxu0 0.0
      %2826 = vmatmul.mubr.f32.gmra.mrb[0].mxu0 %v2728
      %v2827 = vpop.f32.mrb[0].mxu0
      %v2828 = vadd.f32 %v2710, %v2827
      %v2829 = vpop.f32.mrb[0].mxu0
      %2830 = vmatprep.mubr.f32.mxu0 0.0
      %2831 = vmatmul.mubr.f32.gmra.mrb[0].mxu0 %v2731
      %v2832 = vpop.f32.mrb[0].mxu0
      %v2833 = vadd.f32 %v2710, %v2832
      %v2834 = vpop.f32.mrb[0].mxu0
      %2835 = vmatprep.mubr.f32.mxu0 0.0
      %2836 = vmatmul.mubr.f32.gmra.mrb[0].mxu0 %v2734
      %v2837 = vpop.f32.mrb[0].mxu0
      %v2838 = vadd.f32 %v2710, %v2837
      %v2839 = vpop.f32.mrb[0].mxu0
      %2840 = vdwg.mxu0
      %v2841 = vpack.c.bf16 %v2803, %v2803
      %v2842 = vpack.c.bf16 %v2808, %v2808
      %v2843 = vpack.c.bf16 %v2813, %v2813
      %v2844 = vpack.c.bf16 %v2818, %v2818
      %v2845 = vpack.c.bf16 %v2823, %v2823
      %v2846 = vpack.c.bf16 %v2828, %v2828
      %v2847 = vpack.c.bf16 %v2833, %v2833
      %v2848 = vpack.c.bf16 %v2838, %v2838
      %v2850 = vshrl.u32 %v2841, 16
      %v2852 = vrot.slane %v2850, 7
      %v2853 = vshll.u32 %v2841, 16
      %v2855 = vor.u32 %v2852, %v2853
      %v2857 = vshrl.u32 %v2842, 16
      %v2859 = vrot.slane %v2857, 7
      %v2860 = vshll.u32 %v2842, 16
      %v2862 = vor.u32 %v2859, %v2860
      %v2864 = vshrl.u32 %v2843, 16
      %v2866 = vrot.slane %v2864, 7
      %v2867 = vshll.u32 %v2843, 16
      %v2869 = vor.u32 %v2866, %v2867
      %v2871 = vshrl.u32 %v2844, 16
      %v2873 = vrot.slane %v2871, 7
      %v2874 = vshll.u32 %v2844, 16
      %v2876 = vor.u32 %v2873, %v2874
      %v2878 = vshrl.u32 %v2845, 16
      %v2880 = vrot.slane %v2878, 7
      %v2881 = vshll.u32 %v2845, 16
      %v2883 = vor.u32 %v2880, %v2881
      %v2885 = vshrl.u32 %v2846, 16
      %v2887 = vrot.slane %v2885, 7
      %v2888 = vshll.u32 %v2846, 16
      %v2890 = vor.u32 %v2887, %v2888
      %v2892 = vshrl.u32 %v2847, 16
      %v2894 = vrot.slane %v2892, 7
      %v2895 = vshll.u32 %v2847, 16
      %v2897 = vor.u32 %v2894, %v2895
      %v2899 = vshrl.u32 %v2848, 16
      %v2901 = vrot.slane %v2899, 7
      %v2902 = vshll.u32 %v2848, 16
      %v2904 = vor.u32 %v2901, %v2902
      %v2913 = vsel %vm1056, 0, %v2855
      %v2914 = vsel %vm1056, 0, %v2862
      %v2915 = vsel %vm1056, 0, %v2869
      %v2916 = vsel %vm1056, 0, %v2876
      %v2917 = vsel %vm1056, 0, %v2883
      %v2918 = vsel %vm1056, 0, %v2890
      %v2919 = vsel %vm1056, 0, %v2897
      %v2920 = vsel %vm1056, 0, %v2904
      %v2921 = vsel %vm1068, %v2913, 0
      %v2922 = vsel %vm1068, %v2914, 0
      %v2923 = vsel %vm1068, %v2915, 0
      %v2924 = vsel %vm1068, %v2916, 0
      %v2925 = vsel %vm1068, %v2917, 0
      %v2926 = vsel %vm1068, %v2918, 0
      %v2927 = vsel %vm1068, %v2919, 0
      %v2928 = vsel %vm1068, %v2920, 0
      %v2930 = vshrl.u32 %v2921, 16
      %v2932 = vshll.u32 %v2921, 16
      %v2934 = vrot.slane %v2932, 1
      %v2935 = vor.u32 %v2930, %v2934
      %v2937 = vshrl.u32 %v2922, 16
      %v2939 = vshll.u32 %v2922, 16
      %v2941 = vrot.slane %v2939, 1
      %v2942 = vor.u32 %v2937, %v2941
      %v2944 = vshrl.u32 %v2923, 16
      %v2946 = vshll.u32 %v2923, 16
      %v2948 = vrot.slane %v2946, 1
      %v2949 = vor.u32 %v2944, %v2948
      %v2951 = vshrl.u32 %v2924, 16
      %v2953 = vshll.u32 %v2924, 16
      %v2955 = vrot.slane %v2953, 1
      %v2956 = vor.u32 %v2951, %v2955
      %v2958 = vshrl.u32 %v2925, 16
      %v2960 = vshll.u32 %v2925, 16
      %v2962 = vrot.slane %v2960, 1
      %v2963 = vor.u32 %v2958, %v2962
      %v2965 = vshrl.u32 %v2926, 16
      %v2967 = vshll.u32 %v2926, 16
      %v2969 = vrot.slane %v2967, 1
      %v2970 = vor.u32 %v2965, %v2969
      %v2972 = vshrl.u32 %v2927, 16
      %v2974 = vshll.u32 %v2927, 16
      %v2976 = vrot.slane %v2974, 1
      %v2977 = vor.u32 %v2972, %v2976
      %2978 = vrot.lane.b32.xlu0 %v2935, 4
      %v2979 = vpop.permute.xlu0 %2978
      %2980 = vrot.lane.b32.xlu0 %v2942, 4
      %v2981 = vpop.permute.xlu0 %2980
      %2982 = vrot.lane.b32.xlu0 %v2949, 4
      %v2983 = vpop.permute.xlu0 %2982
      %2984 = vrot.lane.b32.xlu0 %v2956, 4
      %v2985 = vpop.permute.xlu0 %2984
      %2986 = vrot.lane.b32.xlu0 %v2963, 4
      %v2987 = vpop.permute.xlu0 %2986
      %2988 = vrot.lane.b32.xlu0 %v2970, 4
      %v2989 = vpop.permute.xlu0 %2988
      %2990 = vrot.lane.b32.xlu0 %v2977, 4
      %v2991 = vpop.permute.xlu0 %2990
      %v2999 = vrot.slane %v2921, 1
      %v3000 = vrot.slane %v2922, 1
      %v3001 = vrot.slane %v2923, 1
      %v3002 = vrot.slane %v2924, 1
      %v3003 = vrot.slane %v2925, 1
      %v3004 = vrot.slane %v2926, 1
      %v3005 = vrot.slane %v2927, 1
      %3006 = vrot.lane.b32.xlu0 %v2999, 8
      %v3007 = vpop.permute.xlu0 %3006
      %3008 = vrot.lane.b32.xlu0 %v3000, 8
      %v3009 = vpop.permute.xlu0 %3008
      %3010 = vrot.lane.b32.xlu0 %v3001, 8
      %v3011 = vpop.permute.xlu0 %3010
      %3012 = vrot.lane.b32.xlu0 %v3002, 8
      %v3013 = vpop.permute.xlu0 %3012
      %3014 = vrot.lane.b32.xlu0 %v3003, 8
      %v3015 = vpop.permute.xlu0 %3014
      %3016 = vrot.lane.b32.xlu0 %v3004, 8
      %v3017 = vpop.permute.xlu0 %3016
      %3018 = vrot.lane.b32.xlu0 %v3005, 8
      %v3019 = vpop.permute.xlu0 %3018
      %3021 = vrot.lane.b32.xlu0 %v2921, 12
      %v3022 = vpop.permute.xlu0 %3021
      %3023 = vrot.lane.b32.xlu0 %v2922, 12
      %v3024 = vpop.permute.xlu0 %3023
      %3025 = vrot.lane.b32.xlu0 %v2923, 12
      %v3026 = vpop.permute.xlu0 %3025
      %3027 = vrot.lane.b32.xlu0 %v2924, 12
      %v3028 = vpop.permute.xlu0 %3027
      %3029 = vrot.lane.b32.xlu0 %v2925, 12
      %v3030 = vpop.permute.xlu0 %3029
      %3031 = vrot.lane.b32.xlu0 %v2926, 12
      %v3032 = vpop.permute.xlu0 %3031
      %3033 = vrot.lane.b32.xlu0 %v2927, 12
      %v3034 = vpop.permute.xlu0 %3033
      %3035 = vrot.lane.b32.xlu0 %v2928, 12
      %v3036 = vpop.permute.xlu0 %3035
      %v3038 = vshrl.u32 %v2928, 16
      %v3040 = vshll.u32 %v2928, 16
      %v3042 = vrot.slane %v3040, 1
      %v3043 = vor.u32 %v3038, %v3042
      %3044 = vrot.lane.b32.xlu0 %v2935, 16
      %v3045 = vpop.permute.xlu0 %3044
      %3046 = vrot.lane.b32.xlu0 %v2942, 16
      %v3047 = vpop.permute.xlu0 %3046
      %3048 = vrot.lane.b32.xlu0 %v2949, 16
      %v3049 = vpop.permute.xlu0 %3048
      %3050 = vrot.lane.b32.xlu0 %v2956, 16
      %v3051 = vpop.permute.xlu0 %3050
      %3052 = vrot.lane.b32.xlu0 %v2963, 16
      %v3053 = vpop.permute.xlu0 %3052
      %3054 = vrot.lane.b32.xlu0 %v2970, 16
      %v3055 = vpop.permute.xlu0 %3054
      %3056 = vrot.lane.b32.xlu0 %v2977, 16
      %v3057 = vpop.permute.xlu0 %3056
      %3058 = vrot.lane.b32.xlu0 %v3043, 16
      %v3059 = vpop.permute.xlu0 %3058
      %v3060 = vrot.slane %v2928, 1
      %3061 = vrot.lane.b32.xlu0 %v2999, 20
      %v3062 = vpop.permute.xlu0 %3061
      %3063 = vrot.lane.b32.xlu0 %v3000, 20
      %v3064 = vpop.permute.xlu0 %3063
      %3065 = vrot.lane.b32.xlu0 %v3001, 20
      %v3066 = vpop.permute.xlu0 %3065
      %3067 = vrot.lane.b32.xlu0 %v3002, 20
      %v3068 = vpop.permute.xlu0 %3067
      %3069 = vrot.lane.b32.xlu0 %v3003, 20
      %v3070 = vpop.permute.xlu0 %3069
      %3071 = vrot.lane.b32.xlu0 %v3004, 20
      %v3072 = vpop.permute.xlu0 %3071
      %3073 = vrot.lane.b32.xlu0 %v3005, 20
      %v3074 = vpop.permute.xlu0 %3073
      %3075 = vrot.lane.b32.xlu0 %v3060, 20
      %v3076 = vpop.permute.xlu0 %3075
      %3077 = vrot.lane.b32.xlu0 %v2922, 24
      %v3078 = vpop.permute.xlu0 %3077
      %3079 = vrot.lane.b32.xlu0 %v2923, 24
      %v3080 = vpop.permute.xlu0 %3079
      %3081 = vrot.lane.b32.xlu0 %v2924, 24
      %v3082 = vpop.permute.xlu0 %3081
      %3083 = vrot.lane.b32.xlu0 %v2925, 24
      %v3084 = vpop.permute.xlu0 %3083
      %3085 = vrot.lane.b32.xlu0 %v2926, 24
      %v3086 = vpop.permute.xlu0 %3085
      %3087 = vrot.lane.b32.xlu0 %v2927, 24
      %v3088 = vpop.permute.xlu0 %3087
      %3089 = vrot.lane.b32.xlu0 %v2928, 24
      %v3090 = vpop.permute.xlu0 %3089
      %3091 = vrot.lane.b32.xlu0 %v2942, 28
      %v3092 = vpop.permute.xlu0 %3091
      %3093 = vrot.lane.b32.xlu0 %v2949, 28
      %v3094 = vpop.permute.xlu0 %3093
      %3095 = vrot.lane.b32.xlu0 %v2956, 28
      %v3096 = vpop.permute.xlu0 %3095
      %3097 = vrot.lane.b32.xlu0 %v2963, 28
      %v3098 = vpop.permute.xlu0 %3097
      %3099 = vrot.lane.b32.xlu0 %v2970, 28
      %v3100 = vpop.permute.xlu0 %3099
      %3101 = vrot.lane.b32.xlu0 %v2977, 28
      %v3102 = vpop.permute.xlu0 %3101
      %3103 = vrot.lane.b32.xlu0 %v3043, 28
      %v3104 = vpop.permute.xlu0 %3103
      %3105 = vrot.lane.b32.xlu0 %v3000, 32
      %v3106 = vpop.permute.xlu0 %3105
      %3107 = vrot.lane.b32.xlu0 %v3001, 32
      %v3108 = vpop.permute.xlu0 %3107
      %3109 = vrot.lane.b32.xlu0 %v3002, 32
      %v3110 = vpop.permute.xlu0 %3109
      %3111 = vrot.lane.b32.xlu0 %v3003, 32
      %v3112 = vpop.permute.xlu0 %3111
      %3113 = vrot.lane.b32.xlu0 %v3004, 32
      %v3114 = vpop.permute.xlu0 %3113
      %3115 = vrot.lane.b32.xlu0 %v3005, 32
      %v3116 = vpop.permute.xlu0 %3115
      %3117 = vrot.lane.b32.xlu0 %v3060, 32
      %v3118 = vpop.permute.xlu0 %3117
      %v3120 = vsel %vm1287, %v2921, %v2979
      %v3122 = vsel %vm1287, %v2922, %v2981
      %v3124 = vsel %vm1287, %v2923, %v2983
      %v3126 = vsel %vm1287, %v2924, %v2985
      %v3128 = vsel %vm1287, %v2925, %v2987
      %v3130 = vsel %vm1287, %v2926, %v2989
      %v3132 = vsel %vm1287, %v2927, %v2991
      %v3134 = vsel %vm862, %v3120, %v3007
      %v3136 = vsel %vm862, %v3122, %v3009
      %v3138 = vsel %vm862, %v3124, %v3011
      %v3140 = vsel %vm862, %v3126, %v3013
      %v3142 = vsel %vm862, %v3128, %v3015
      %v3144 = vsel %vm862, %v3130, %v3017
      %v3146 = vsel %vm862, %v3132, %v3019
      %v3148 = vsel %vm1320, %v1305, %v3022
      %v3150 = vsel %vm1320, %v3134, %v3024
      %v3152 = vsel %vm1320, %v3136, %v3026
      %v3154 = vsel %vm1320, %v3138, %v3028
      %v3156 = vsel %vm1320, %v3140, %v3030
      %v3158 = vsel %vm1320, %v3142, %v3032
      %v3160 = vsel %vm1320, %v3144, %v3034
      %v3162 = vsel %vm1320, %v3146, %v3036
      %v3164 = vsel %vm1337, %v3148, %v3045
      %v3166 = vsel %vm1337, %v3150, %v3047
      %v3168 = vsel %vm1337, %v3152, %v3049
      %v3170 = vsel %vm1337, %v3154, %v3051
      %v3172 = vsel %vm1337, %v3156, %v3053
      %v3174 = vsel %vm1337, %v3158, %v3055
      %v3176 = vsel %vm1337, %v3160, %v3057
      %v3178 = vsel %vm1337, %v3162, %v3059
      %v3180 = vsel %vm1354, %v3164, %v3062
      %v3182 = vsel %vm1354, %v3166, %v3064
      %v3184 = vsel %vm1354, %v3168, %v3066
      %v3186 = vsel %vm1354, %v3170, %v3068
      %v3188 = vsel %vm1354, %v3172, %v3070
      %v3190 = vsel %vm1354, %v3174, %v3072
      %v3192 = vsel %vm1354, %v3176, %v3074
      %v3194 = vsel %vm1354, %v3178, %v3076
      %v3196 = vsel %vm1371, %v3180, %v3078
      %v3198 = vsel %vm1371, %v3182, %v3080
      %v3200 = vsel %vm1371, %v3184, %v3082
      %v3202 = vsel %vm1371, %v3186, %v3084
      %v3204 = vsel %vm1371, %v3188, %v3086
      %v3206 = vsel %vm1371, %v3190, %v3088
      %v3208 = vsel %vm1371, %v3192, %v3090
      %v3209 = vsel %vm1371, %v3194, %v1254
      %v3211 = vsel %vm1388, %v3196, %v3092
      %v3213 = vsel %vm1388, %v3198, %v3094
      %v3215 = vsel %vm1388, %v3200, %v3096
      %v3217 = vsel %vm1388, %v3202, %v3098
      %v3219 = vsel %vm1388, %v3204, %v3100
      %v3221 = vsel %vm1388, %v3206, %v3102
      %v3223 = vsel %vm1388, %v3208, %v3104
      %v3224 = vsel %vm1388, %v3209, %v1270
      %v3226 = vsel %vm1405, %v3211, %v3106
      %v3228 = vsel %vm1405, %v3213, %v3108
      %v3230 = vsel %vm1405, %v3215, %v3110
      %v3232 = vsel %vm1405, %v3217, %v3112
      %v3234 = vsel %vm1405, %v3219, %v3114
      %v3236 = vsel %vm1405, %v3221, %v3116
      %v3238 = vsel %vm1405, %v3223, %v3118
      %v3239 = vsel %vm1405, %v3224, %v1286
      %v3240 = vld [vmem:[%s15] sm:$0xf]
      %v3241 = vld [vmem:[%s15 + $0x4] sm:$0xf]
      %v3242 = vld [vmem:[%s15 + $0x8] sm:$0xf]
      %v3243 = vld [vmem:[%s15 + $0xc] sm:$0xf]
      %v3244 = vld [vmem:[%s15 + $0x10] sm:$0x3]
      %v3245 = vld [vmem:[%s16] sm:$0x1]
      %v3247 = vlaneseq
      %v3248 = vshrl.u32 %v3247, 7
      %v3249 = vsub.s32 0, %v3248
      %v3250 = vrot.slane %v3245, %v3249
      %v3260 = vunpack.c.l.b16 %v3226
      %v3261 = vunpack.c.l.b16 %v3228
      %v3262 = vunpack.c.l.b16 %v3230
      %v3263 = vunpack.c.l.b16 %v3232
      %v3264 = vunpack.c.l.b16 %v3234
      %v3265 = vunpack.c.l.b16 %v3236
      %v3266 = vunpack.c.l.b16 %v3238
      %v3267 = vunpack.c.l.b16 %v3239
      %v3268 = vpack.c.b16 %v3261, %v3260
      %v3269 = vpack.c.b16 %v3263, %v3262
      %v3270 = vpack.c.b16 %v3265, %v3264
      %v3271 = vpack.c.b16 %v3267, %v3266
      %v3277 = vunpack.c.l.b16 %v3240
      %v3278 = vunpack.c.l.b16 %v3241
      %v3279 = vunpack.c.l.b16 %v3242
      %v3280 = vunpack.c.l.b16 %v3243
      %v3281 = vunpack.c.l.b16 %v3244
      %v3282 = vpack.c.b16 %v3278, %v3277
      %v3283 = vpack.c.b16 %v3280, %v3279
      %v3284 = vpack.c.b16 %v3281, %v3281
      %v3288 = vsel %vm1469, %v3268, 0
      %v3291 = vsel %vm1469, %v3269, 0
      %v3294 = vsel %vm1469, %v3270, 0
      %v3297 = vsel %vm1469, %v3271, 0
      %v3300 = vsel %vm1482, %v3284, 0
      %3302 = vmatprep.subr.bf16.mxu0 0
      %3303 = vmatpush1.bf16.msra.mxu0 %v3282
      %3304 = vmatprep.subr.bf16.mxu0 0
      %3305 = vmatpush1.bf16.msra.mxu0 %v3283
      %3306 = vmatprep.subr.bf16.mxu0 0
      %3307 = vmatpush1.bf16.msra.mxu0 %v3300
      %3308 = vmatprep.subr.bf16.mxu0 0
      %3309 = vmatpush1.bf16.msra.mxu0 0
      %3310 = vmatprep.subr.bf16.mxu0 0
      %3311 = vmatpush1.bf16.msra.mxu0 0
      %3312 = vmatprep.subr.bf16.mxu0 0
      %3313 = vmatpush1.bf16.msra.mxu0 0
      %3314 = vmatprep.subr.bf16.mxu0 0
      %3315 = vmatpush1.bf16.msra.mxu0 0
      %3316 = vmatprep.subr.bf16.mxu0 0
      %3317 = vmatpush1.bf16.msra.mxu0 0
      %3318 = vmatprep.subr.bf16.mxu0 0
      %3319 = vmatpush1.bf16.msra.mxu0 0
      %3320 = vmatprep.subr.bf16.mxu0 0
      %3321 = vmatpush1.bf16.msra.mxu0 0
      %3322 = vmatprep.subr.bf16.mxu0 0
      %3323 = vmatpush1.bf16.msra.mxu0 0
      %3324 = vmatprep.subr.bf16.mxu0 0
      %3325 = vmatpush1.bf16.msra.mxu0 0
      %3326 = vmatprep.subr.bf16.mxu0 0
      %3327 = vmatpush1.bf16.msra.mxu0 0
      %3328 = vmatprep.subr.bf16.mxu0 0
      %3329 = vmatpush1.bf16.msra.mxu0 0
      %3330 = vmatprep.subr.bf16.mxu0 0
      %3331 = vmatpush1.bf16.msra.mxu0 0
      %3332 = vmatprep.subr.bf16.mxu0 0
      %3333 = vmatpush1.bf16.msra.mxu0 0
      %3334 = vmatprep.mubr.bf16.mxu0 0
      %3335 = vmatmul.mubr.bf16.gmra.mrb[0].mxu0 %v3288
      %v3336 = vpop.f32.mrb[0].mxu0
      %v3337 = vadd.f32 %v3250, %v3336
      %v3338 = vpop.f32.mrb[0].mxu0
      %v3339 = vpop.f32.mrb[0].mxu0
      %v3340 = vadd.f32 %v3250, %v3339
      %v3341 = vpop.f32.mrb[0].mxu0
      %3342 = vmatprep.mubr.bf16.mxu0 0
      %3343 = vmatmul.mubr.bf16.gmra.mrb[0].mxu0 %v3291
      %v3344 = vpop.f32.mrb[0].mxu0
      %v3345 = vadd.f32 %v3250, %v3344
      %v3346 = vpop.f32.mrb[0].mxu0
      %v3347 = vpop.f32.mrb[0].mxu0
      %v3348 = vadd.f32 %v3250, %v3347
      %v3349 = vpop.f32.mrb[0].mxu0
      %3350 = vmatprep.mubr.bf16.mxu0 0
      %3351 = vmatmul.mubr.bf16.gmra.mrb[0].mxu0 %v3294
      %v3352 = vpop.f32.mrb[0].mxu0
      %v3353 = vadd.f32 %v3250, %v3352
      %v3354 = vpop.f32.mrb[0].mxu0
      %v3355 = vpop.f32.mrb[0].mxu0
      %v3356 = vadd.f32 %v3250, %v3355
      %v3357 = vpop.f32.mrb[0].mxu0
      %3358 = vmatprep.mubr.bf16.mxu0 0
      %3359 = vmatmul.mubr.bf16.gmra.mrb[0].mxu0 %v3297
      %v3360 = vpop.f32.mrb[0].mxu0
      %v3361 = vadd.f32 %v3250, %v3360
      %v3362 = vpop.f32.mrb[0].mxu0
      %v3363 = vpop.f32.mrb[0].mxu0
      %v3364 = vadd.f32 %v3250, %v3363
      %v3365 = vpop.f32.mrb[0].mxu0
      %3366 = vdwg.mxu0
      %v3367 = vmax.f32 %v3337, 0.0
      %v3368 = vmax.f32 %v3340, 0.0
      %v3369 = vmax.f32 %v3345, 0.0
      %v3370 = vmax.f32 %v3348, 0.0
      %v3371 = vmax.f32 %v3353, 0.0
      %v3372 = vmax.f32 %v3356, 0.0
      %v3373 = vmax.f32 %v3361, 0.0
      %v3374 = vmax.f32 %v3364, 0.0
      %v3375 = vpack.c.bf16 %v3367, %v3367
      %v3376 = vpack.c.bf16 %v3368, %v3368
      %v3377 = vpack.c.bf16 %v3369, %v3369
      %v3378 = vpack.c.bf16 %v3370, %v3370
      %v3379 = vpack.c.bf16 %v3371, %v3371
      %v3380 = vpack.c.bf16 %v3372, %v3372
      %v3381 = vpack.c.bf16 %v3373, %v3373
      %v3382 = vpack.c.bf16 %v3374, %v3374
      %v3384 = vshrl.u32 %v3375, 16
      %v3386 = vrot.slane %v3384, 7
      %v3387 = vshll.u32 %v3375, 16
      %v3389 = vor.u32 %v3386, %v3387
      %v3391 = vshrl.u32 %v3376, 16
      %v3393 = vrot.slane %v3391, 7
      %v3394 = vshll.u32 %v3376, 16
      %v3396 = vor.u32 %v3393, %v3394
      %v3398 = vshrl.u32 %v3377, 16
      %v3400 = vrot.slane %v3398, 7
      %v3401 = vshll.u32 %v3377, 16
      %v3403 = vor.u32 %v3400, %v3401
      %v3405 = vshrl.u32 %v3378, 16
      %v3407 = vrot.slane %v3405, 7
      %v3408 = vshll.u32 %v3378, 16
      %v3410 = vor.u32 %v3407, %v3408
      %v3412 = vshrl.u32 %v3379, 16
      %v3414 = vrot.slane %v3412, 7
      %v3415 = vshll.u32 %v3379, 16
      %v3417 = vor.u32 %v3414, %v3415
      %v3419 = vshrl.u32 %v3380, 16
      %v3421 = vrot.slane %v3419, 7
      %v3422 = vshll.u32 %v3380, 16
      %v3424 = vor.u32 %v3421, %v3422
      %v3426 = vshrl.u32 %v3381, 16
      %v3428 = vrot.slane %v3426, 7
      %v3429 = vshll.u32 %v3381, 16
      %v3431 = vor.u32 %v3428, %v3429
      %v3433 = vshrl.u32 %v3382, 16
      %v3435 = vrot.slane %v3433, 7
      %v3436 = vshll.u32 %v3382, 16
      %v3438 = vor.u32 %v3435, %v3436
      %v3447 = vsel %vm1056, 0, %v3389
      %v3448 = vsel %vm1056, 0, %v3396
      %v3449 = vsel %vm1056, 0, %v3403
      %v3450 = vsel %vm1056, 0, %v3410
      %v3451 = vsel %vm1056, 0, %v3417
      %v3452 = vsel %vm1056, 0, %v3424
      %v3453 = vsel %vm1056, 0, %v3431
      %v3454 = vsel %vm1056, 0, %v3438
      %v3455 = vsel %vm1068, %v3447, 0
      %v3456 = vsel %vm1068, %v3448, 0
      %v3457 = vsel %vm1068, %v3449, 0
      %v3458 = vsel %vm1068, %v3450, 0
      %v3459 = vsel %vm1068, %v3451, 0
      %v3460 = vsel %vm1068, %v3452, 0
      %v3461 = vsel %vm1068, %v3453, 0
      %v3462 = vsel %vm1068, %v3454, 0
      %v3464 = vshrl.u32 %v3455, 16
      %v3466 = vshll.u32 %v3455, 16
      %v3468 = vrot.slane %v3466, 1
      %v3469 = vor.u32 %v3464, %v3468
      %v3471 = vshrl.u32 %v3456, 16
      %v3473 = vshll.u32 %v3456, 16
      %v3475 = vrot.slane %v3473, 1
      %v3476 = vor.u32 %v3471, %v3475
      %v3478 = vshrl.u32 %v3457, 16
      %v3480 = vshll.u32 %v3457, 16
      %v3482 = vrot.slane %v3480, 1
      %v3483 = vor.u32 %v3478, %v3482
      %v3485 = vshrl.u32 %v3458, 16
      %v3487 = vshll.u32 %v3458, 16
      %v3489 = vrot.slane %v3487, 1
      %v3490 = vor.u32 %v3485, %v3489
      %v3492 = vshrl.u32 %v3459, 16
      %v3494 = vshll.u32 %v3459, 16
      %v3496 = vrot.slane %v3494, 1
      %v3497 = vor.u32 %v3492, %v3496
      %v3499 = vshrl.u32 %v3460, 16
      %v3501 = vshll.u32 %v3460, 16
      %v3503 = vrot.slane %v3501, 1
      %v3504 = vor.u32 %v3499, %v3503
      %v3506 = vshrl.u32 %v3461, 16
      %v3508 = vshll.u32 %v3461, 16
      %v3510 = vrot.slane %v3508, 1
      %v3511 = vor.u32 %v3506, %v3510
      %3512 = vrot.lane.b32.xlu0 %v3469, 4
      %v3513 = vpop.permute.xlu0 %3512
      %3514 = vrot.lane.b32.xlu0 %v3476, 4
      %v3515 = vpop.permute.xlu0 %3514
      %3516 = vrot.lane.b32.xlu0 %v3483, 4
      %v3517 = vpop.permute.xlu0 %3516
      %3518 = vrot.lane.b32.xlu0 %v3490, 4
      %v3519 = vpop.permute.xlu0 %3518
      %3520 = vrot.lane.b32.xlu0 %v3497, 4
      %v3521 = vpop.permute.xlu0 %3520
      %3522 = vrot.lane.b32.xlu0 %v3504, 4
      %v3523 = vpop.permute.xlu0 %3522
      %3524 = vrot.lane.b32.xlu0 %v3511, 4
      %v3525 = vpop.permute.xlu0 %3524
      %v3533 = vrot.slane %v3455, 1
      %v3534 = vrot.slane %v3456, 1
      %v3535 = vrot.slane %v3457, 1
      %v3536 = vrot.slane %v3458, 1
      %v3537 = vrot.slane %v3459, 1
      %v3538 = vrot.slane %v3460, 1
      %v3539 = vrot.slane %v3461, 1
      %3540 = vrot.lane.b32.xlu0 %v3533, 8
      %v3541 = vpop.permute.xlu0 %3540
      %3542 = vrot.lane.b32.xlu0 %v3534, 8
      %v3543 = vpop.permute.xlu0 %3542
      %3544 = vrot.lane.b32.xlu0 %v3535, 8
      %v3545 = vpop.permute.xlu0 %3544
      %3546 = vrot.lane.b32.xlu0 %v3536, 8
      %v3547 = vpop.permute.xlu0 %3546
      %3548 = vrot.lane.b32.xlu0 %v3537, 8
      %v3549 = vpop.permute.xlu0 %3548
      %3550 = vrot.lane.b32.xlu0 %v3538, 8
      %v3551 = vpop.permute.xlu0 %3550
      %3552 = vrot.lane.b32.xlu0 %v3539, 8
      %v3553 = vpop.permute.xlu0 %3552
      %3555 = vrot.lane.b32.xlu0 %v3455, 12
      %v3556 = vpop.permute.xlu0 %3555
      %3557 = vrot.lane.b32.xlu0 %v3456, 12
      %v3558 = vpop.permute.xlu0 %3557
      %3559 = vrot.lane.b32.xlu0 %v3457, 12
      %v3560 = vpop.permute.xlu0 %3559
      %3561 = vrot.lane.b32.xlu0 %v3458, 12
      %v3562 = vpop.permute.xlu0 %3561
      %3563 = vrot.lane.b32.xlu0 %v3459, 12
      %v3564 = vpop.permute.xlu0 %3563
      %3565 = vrot.lane.b32.xlu0 %v3460, 12
      %v3566 = vpop.permute.xlu0 %3565
      %3567 = vrot.lane.b32.xlu0 %v3461, 12
      %v3568 = vpop.permute.xlu0 %3567
      %3569 = vrot.lane.b32.xlu0 %v3462, 12
      %v3570 = vpop.permute.xlu0 %3569
      %v3572 = vshrl.u32 %v3462, 16
      %v3574 = vshll.u32 %v3462, 16
      %v3576 = vrot.slane %v3574, 1
      %v3577 = vor.u32 %v3572, %v3576
      %3578 = vrot.lane.b32.xlu0 %v3469, 16
      %v3579 = vpop.permute.xlu0 %3578
      %3580 = vrot.lane.b32.xlu0 %v3476, 16
      %v3581 = vpop.permute.xlu0 %3580
      %3582 = vrot.lane.b32.xlu0 %v3483, 16
      %v3583 = vpop.permute.xlu0 %3582
      %3584 = vrot.lane.b32.xlu0 %v3490, 16
      %v3585 = vpop.permute.xlu0 %3584
      %3586 = vrot.lane.b32.xlu0 %v3497, 16
      %v3587 = vpop.permute.xlu0 %3586
      %3588 = vrot.lane.b32.xlu0 %v3504, 16
      %v3589 = vpop.permute.xlu0 %3588
      %3590 = vrot.lane.b32.xlu0 %v3511, 16
      %v3591 = vpop.permute.xlu0 %3590
      %3592 = vrot.lane.b32.xlu0 %v3577, 16
      %v3593 = vpop.permute.xlu0 %3592
      %v3594 = vrot.slane %v3462, 1
      %3595 = vrot.lane.b32.xlu0 %v3533, 20
      %v3596 = vpop.permute.xlu0 %3595
      %3597 = vrot.lane.b32.xlu0 %v3534, 20
      %v3598 = vpop.permute.xlu0 %3597
      %3599 = vrot.lane.b32.xlu0 %v3535, 20
      %v3600 = vpop.permute.xlu0 %3599
      %3601 = vrot.lane.b32.xlu0 %v3536, 20
      %v3602 = vpop.permute.xlu0 %3601
      %3603 = vrot.lane.b32.xlu0 %v3537, 20
      %v3604 = vpop.permute.xlu0 %3603
      %3605 = vrot.lane.b32.xlu0 %v3538, 20
      %v3606 = vpop.permute.xlu0 %3605
      %3607 = vrot.lane.b32.xlu0 %v3539, 20
      %v3608 = vpop.permute.xlu0 %3607
      %3609 = vrot.lane.b32.xlu0 %v3594, 20
      %v3610 = vpop.permute.xlu0 %3609
      %3611 = vrot.lane.b32.xlu0 %v3456, 24
      %v3612 = vpop.permute.xlu0 %3611
      %3613 = vrot.lane.b32.xlu0 %v3457, 24
      %v3614 = vpop.permute.xlu0 %3613
      %3615 = vrot.lane.b32.xlu0 %v3458, 24
      %v3616 = vpop.permute.xlu0 %3615
      %3617 = vrot.lane.b32.xlu0 %v3459, 24
      %v3618 = vpop.permute.xlu0 %3617
      %3619 = vrot.lane.b32.xlu0 %v3460, 24
      %v3620 = vpop.permute.xlu0 %3619
      %3621 = vrot.lane.b32.xlu0 %v3461, 24
      %v3622 = vpop.permute.xlu0 %3621
      %3623 = vrot.lane.b32.xlu0 %v3462, 24
      %v3624 = vpop.permute.xlu0 %3623
      %3625 = vrot.lane.b32.xlu0 %v3476, 28
      %v3626 = vpop.permute.xlu0 %3625
      %3627 = vrot.lane.b32.xlu0 %v3483, 28
      %v3628 = vpop.permute.xlu0 %3627
      %3629 = vrot.lane.b32.xlu0 %v3490, 28
      %v3630 = vpop.permute.xlu0 %3629
      %3631 = vrot.lane.b32.xlu0 %v3497, 28
      %v3632 = vpop.permute.xlu0 %3631
      %3633 = vrot.lane.b32.xlu0 %v3504, 28
      %v3634 = vpop.permute.xlu0 %3633
      %3635 = vrot.lane.b32.xlu0 %v3511, 28
      %v3636 = vpop.permute.xlu0 %3635
      %3637 = vrot.lane.b32.xlu0 %v3577, 28
      %v3638 = vpop.permute.xlu0 %3637
      %3639 = vrot.lane.b32.xlu0 %v3534, 32
      %v3640 = vpop.permute.xlu0 %3639
      %3641 = vrot.lane.b32.xlu0 %v3535, 32
      %v3642 = vpop.permute.xlu0 %3641
      %3643 = vrot.lane.b32.xlu0 %v3536, 32
      %v3644 = vpop.permute.xlu0 %3643
      %3645 = vrot.lane.b32.xlu0 %v3537, 32
      %v3646 = vpop.permute.xlu0 %3645
      %3647 = vrot.lane.b32.xlu0 %v3538, 32
      %v3648 = vpop.permute.xlu0 %3647
      %3649 = vrot.lane.b32.xlu0 %v3539, 32
      %v3650 = vpop.permute.xlu0 %3649
      %3651 = vrot.lane.b32.xlu0 %v3594, 32
      %v3652 = vpop.permute.xlu0 %3651
      %v3654 = vsel %vm1287, %v3455, %v3513
      %v3656 = vsel %vm1287, %v3456, %v3515
      %v3658 = vsel %vm1287, %v3457, %v3517
      %v3660 = vsel %vm1287, %v3458, %v3519
      %v3662 = vsel %vm1287, %v3459, %v3521
      %v3664 = vsel %vm1287, %v3460, %v3523
      %v3666 = vsel %vm1287, %v3461, %v3525
      %v3668 = vsel %vm862, %v3654, %v3541
      %v3670 = vsel %vm862, %v3656, %v3543
      %v3672 = vsel %vm862, %v3658, %v3545
      %v3674 = vsel %vm862, %v3660, %v3547
      %v3676 = vsel %vm862, %v3662, %v3549
      %v3678 = vsel %vm862, %v3664, %v3551
      %v3680 = vsel %vm862, %v3666, %v3553
      %v3682 = vsel %vm1320, %v1305, %v3556
      %v3684 = vsel %vm1320, %v3668, %v3558
      %v3686 = vsel %vm1320, %v3670, %v3560
      %v3688 = vsel %vm1320, %v3672, %v3562
      %v3690 = vsel %vm1320, %v3674, %v3564
      %v3692 = vsel %vm1320, %v3676, %v3566
      %v3694 = vsel %vm1320, %v3678, %v3568
      %v3696 = vsel %vm1320, %v3680, %v3570
      %v3698 = vsel %vm1337, %v3682, %v3579
      %v3700 = vsel %vm1337, %v3684, %v3581
      %v3702 = vsel %vm1337, %v3686, %v3583
      %v3704 = vsel %vm1337, %v3688, %v3585
      %v3706 = vsel %vm1337, %v3690, %v3587
      %v3708 = vsel %vm1337, %v3692, %v3589
      %v3710 = vsel %vm1337, %v3694, %v3591
      %v3712 = vsel %vm1337, %v3696, %v3593
      %v3714 = vsel %vm1354, %v3698, %v3596
      %v3716 = vsel %vm1354, %v3700, %v3598
      %v3718 = vsel %vm1354, %v3702, %v3600
      %v3720 = vsel %vm1354, %v3704, %v3602
      %v3722 = vsel %vm1354, %v3706, %v3604
      %v3724 = vsel %vm1354, %v3708, %v3606
      %v3726 = vsel %vm1354, %v3710, %v3608
      %v3728 = vsel %vm1354, %v3712, %v3610
      %v3730 = vsel %vm1371, %v3714, %v3612
      %v3732 = vsel %vm1371, %v3716, %v3614
      %v3734 = vsel %vm1371, %v3718, %v3616
      %v3736 = vsel %vm1371, %v3720, %v3618
      %v3738 = vsel %vm1371, %v3722, %v3620
      %v3740 = vsel %vm1371, %v3724, %v3622
      %v3742 = vsel %vm1371, %v3726, %v3624
      %v3743 = vsel %vm1371, %v3728, %v1254
      %v3745 = vsel %vm1388, %v3730, %v3626
      %v3747 = vsel %vm1388, %v3732, %v3628
      %v3749 = vsel %vm1388, %v3734, %v3630
      %v3751 = vsel %vm1388, %v3736, %v3632
      %v3753 = vsel %vm1388, %v3738, %v3634
      %v3755 = vsel %vm1388, %v3740, %v3636
      %v3757 = vsel %vm1388, %v3742, %v3638
      %v3758 = vsel %vm1388, %v3743, %v1270
      %v3760 = vsel %vm1405, %v3745, %v3640
      %v3762 = vsel %vm1405, %v3747, %v3642
      %v3764 = vsel %vm1405, %v3749, %v3644
      %v3766 = vsel %vm1405, %v3751, %v3646
      %v3768 = vsel %vm1405, %v3753, %v3648
      %v3770 = vsel %vm1405, %v3755, %v3650
      %v3772 = vsel %vm1405, %v3757, %v3652
      %v3773 = vsel %vm1405, %v3758, %v1286
      %v3774 = vld [vmem:[%s17] sm:$0xf]
      %v3775 = vld [vmem:[%s17 + $0x4] sm:$0xf]
      %v3776 = vld [vmem:[%s17 + $0x8] sm:$0xf]
      %v3777 = vld [vmem:[%s17 + $0xc] sm:$0xf]
      %v3778 = vld [vmem:[%s17 + $0x10] sm:$0x3]
      %v3779 = vld [vmem:[%s18] sm:$0x1]
      %v3781 = vlaneseq
      %v3782 = vshrl.u32 %v3781, 7
      %v3783 = vsub.s32 0, %v3782
      %v3784 = vrot.slane %v3779, %v3783
      %v3794 = vunpack.c.l.b16 %v3760
      %v3795 = vunpack.c.l.b16 %v3762
      %v3796 = vunpack.c.l.b16 %v3764
      %v3797 = vunpack.c.l.b16 %v3766
      %v3798 = vunpack.c.l.b16 %v3768
      %v3799 = vunpack.c.l.b16 %v3770
      %v3800 = vunpack.c.l.b16 %v3772
      %v3801 = vunpack.c.l.b16 %v3773
      %v3802 = vpack.c.b16 %v3795, %v3794
      %v3803 = vpack.c.b16 %v3797, %v3796
      %v3804 = vpack.c.b16 %v3799, %v3798
      %v3805 = vpack.c.b16 %v3801, %v3800
      %v3811 = vunpack.c.l.b16 %v3774
      %v3812 = vunpack.c.l.b16 %v3775
      %v3813 = vunpack.c.l.b16 %v3776
      %v3814 = vunpack.c.l.b16 %v3777
      %v3815 = vunpack.c.l.b16 %v3778
      %v3816 = vpack.c.b16 %v3812, %v3811
      %v3817 = vpack.c.b16 %v3814, %v3813
      %v3818 = vpack.c.b16 %v3815, %v3815
      %v3822 = vsel %vm1469, %v3802, 0
      %v3825 = vsel %vm1469, %v3803, 0
      %v3828 = vsel %vm1469, %v3804, 0
      %v3831 = vsel %vm1469, %v3805, 0
      %v3834 = vsel %vm1482, %v3818, 0
      %3836 = vmatprep.subr.bf16.mxu0 0
      %3837 = vmatpush1.bf16.msra.mxu0 %v3816
      %3838 = vmatprep.subr.bf16.mxu0 0
      %3839 = vmatpush1.bf16.msra.mxu0 %v3817
      %3840 = vmatprep.subr.bf16.mxu0 0
      %3841 = vmatpush1.bf16.msra.mxu0 %v3834
      %3842 = vmatprep.subr.bf16.mxu0 0
      %3843 = vmatpush1.bf16.msra.mxu0 0
      %3844 = vmatprep.subr.bf16.mxu0 0
      %3845 = vmatpush1.bf16.msra.mxu0 0
      %3846 = vmatprep.subr.bf16.mxu0 0
      %3847 = vmatpush1.bf16.msra.mxu0 0
      %3848 = vmatprep.subr.bf16.mxu0 0
      %3849 = vmatpush1.bf16.msra.mxu0 0
      %3850 = vmatprep.subr.bf16.mxu0 0
      %3851 = vmatpush1.bf16.msra.mxu0 0
      %3852 = vmatprep.subr.bf16.mxu0 0
      %3853 = vmatpush1.bf16.msra.mxu0 0
      %3854 = vmatprep.subr.bf16.mxu0 0
      %3855 = vmatpush1.bf16.msra.mxu0 0
      %3856 = vmatprep.subr.bf16.mxu0 0
      %3857 = vmatpush1.bf16.msra.mxu0 0
      %3858 = vmatprep.subr.bf16.mxu0 0
      %3859 = vmatpush1.bf16.msra.mxu0 0
      %3860 = vmatprep.subr.bf16.mxu0 0
      %3861 = vmatpush1.bf16.msra.mxu0 0
      %3862 = vmatprep.subr.bf16.mxu0 0
      %3863 = vmatpush1.bf16.msra.mxu0 0
      %3864 = vmatprep.subr.bf16.mxu0 0
      %3865 = vmatpush1.bf16.msra.mxu0 0
      %3866 = vmatprep.subr.bf16.mxu0 0
      %3867 = vmatpush1.bf16.msra.mxu0 0
      %3868 = vmatprep.mubr.bf16.mxu0 0
      %3869 = vmatmul.mubr.bf16.gmra.mrb[0].mxu0 %v3822
      %v3870 = vpop.f32.mrb[0].mxu0
      %v3871 = vadd.f32 %v3784, %v3870
      %v3872 = vpop.f32.mrb[0].mxu0
      %v3873 = vpop.f32.mrb[0].mxu0
      %v3874 = vadd.f32 %v3784, %v3873
      %v3875 = vpop.f32.mrb[0].mxu0
      %3876 = vmatprep.mubr.bf16.mxu0 0
      %3877 = vmatmul.mubr.bf16.gmra.mrb[0].mxu0 %v3825
      %v3878 = vpop.f32.mrb[0].mxu0
      %v3879 = vadd.f32 %v3784, %v3878
      %v3880 = vpop.f32.mrb[0].mxu0
      %v3881 = vpop.f32.mrb[0].mxu0
      %v3882 = vadd.f32 %v3784, %v3881
      %v3883 = vpop.f32.mrb[0].mxu0
      %3884 = vmatprep.mubr.bf16.mxu0 0
      %3885 = vmatmul.mubr.bf16.gmra.mrb[0].mxu0 %v3828
      %v3886 = vpop.f32.mrb[0].mxu0
      %v3887 = vadd.f32 %v3784, %v3886
      %v3888 = vpop.f32.mrb[0].mxu0
      %v3889 = vpop.f32.mrb[0].mxu0
      %v3890 = vadd.f32 %v3784, %v3889
      %v3891 = vpop.f32.mrb[0].mxu0
      %3892 = vmatprep.mubr.bf16.mxu0 0
      %3893 = vmatmul.mubr.bf16.gmra.mrb[0].mxu0 %v3831
      %v3894 = vpop.f32.mrb[0].mxu0
      %v3895 = vadd.f32 %v3784, %v3894
      %v3896 = vpop.f32.mrb[0].mxu0
      %v3897 = vpop.f32.mrb[0].mxu0
      %v3898 = vadd.f32 %v3784, %v3897
      %v3899 = vpop.f32.mrb[0].mxu0
      %3900 = vdwg.mxu0
      %v3901 = vmul.f32 %v3871, 0.1
      %v3902 = vmul.f32 %v3874, 0.1
      %v3903 = vmul.f32 %v3879, 0.1
      %v3904 = vmul.f32 %v3882, 0.1
      %v3905 = vmul.f32 %v3887, 0.1
      %v3906 = vmul.f32 %v3890, 0.1
      %v3907 = vmul.f32 %v3895, 0.1
      %v3908 = vmul.f32 %v3898, 0.1
      %v3909 = vtanh.pop %v3901
      %v3910 = vtanh.pop %v3902
      %v3911 = vtanh.pop %v3903
      %v3912 = vtanh.pop %v3904
      %v3913 = vtanh.pop %v3905
      %v3914 = vtanh.pop %v3906
      %v3915 = vtanh.pop %v3907
      %v3916 = vtanh.pop %v3908
      %v3917 = vmul.f32 %v3909, 2.0
      %v3918 = vmul.f32 %v3910, 2.0
      %v3919 = vmul.f32 %v3911, 2.0
      %v3920 = vmul.f32 %v3912, 2.0
      %v3921 = vmul.f32 %v3913, 2.0
      %v3922 = vmul.f32 %v3914, 2.0
      %v3923 = vmul.f32 %v3915, 2.0
      %v3924 = vmul.f32 %v3916, 2.0
      %v3925 = vmul.f32 %v3917, 1.442695
      %v3926 = vpow.pop %v3925
      %v3927 = vmul.f32 %v3918, 1.442695
      %v3928 = vpow.pop %v3927
      %v3929 = vmul.f32 %v3919, 1.442695
      %v3930 = vpow.pop %v3929
      %v3931 = vmul.f32 %v3920, 1.442695
      %v3932 = vpow.pop %v3931
      %v3933 = vmul.f32 %v3921, 1.442695
      %v3934 = vpow.pop %v3933
      %v3935 = vmul.f32 %v3922, 1.442695
      %v3936 = vpow.pop %v3935
      %v3937 = vmul.f32 %v3923, 1.442695
      %v3938 = vpow.pop %v3937
      %v3939 = vmul.f32 %v3924, 1.442695
      %v3940 = vpow.pop %v3939
      %3949 = vrot.lane.b32.xlu0 %v3926, 4
      %v3950 = vpop.permute.xlu0 %3949
      %3951 = vrot.lane.b32.xlu0 %v3928, 4
      %v3952 = vpop.permute.xlu0 %3951
      %3953 = vrot.lane.b32.xlu0 %v3930, 4
      %v3954 = vpop.permute.xlu0 %3953
      %3955 = vrot.lane.b32.xlu0 %v3932, 4
      %v3956 = vpop.permute.xlu0 %3955
      %3957 = vrot.lane.b32.xlu0 %v3934, 4
      %v3958 = vpop.permute.xlu0 %3957
      %3959 = vrot.lane.b32.xlu0 %v3936, 4
      %v3960 = vpop.permute.xlu0 %3959
      %3961 = vrot.lane.b32.xlu0 %v3938, 4
      %v3962 = vpop.permute.xlu0 %3961
      %3963 = vrot.lane.b32.xlu0 %v3940, 4
      %v3964 = vpop.permute.xlu0 %3963
      %v3973 = vmul.f32 %v2803, %v3950
      %v3974 = vmul.f32 %v2808, %v3952
      %v3975 = vmul.f32 %v2813, %v3954
      %v3976 = vmul.f32 %v2818, %v3956
      %v3977 = vmul.f32 %v2823, %v3958
      %v3978 = vmul.f32 %v2828, %v3960
      %v3979 = vmul.f32 %v2833, %v3962
      %v3980 = vmul.f32 %v2838, %v3964
      %v3981 = vadd.f32 %v3973, %v3901
      %v3982 = vadd.f32 %v3974, %v3902
      %v3983 = vadd.f32 %v3975, %v3903
      %v3984 = vadd.f32 %v3976, %v3904
      %v3985 = vadd.f32 %v3977, %v3905
      %v3986 = vadd.f32 %v3978, %v3906
      %v3987 = vadd.f32 %v3979, %v3907
      %v3988 = vadd.f32 %v3980, %v3908
      %v3989 = vsel %vm1287, %v3917, 0.0
      %v3990 = vsel %vm1287, %v3918, 0.0
      %v3991 = vadd.f32 %v3989, %v3990
      %v3992 = vsel %vm1287, %v3919, 0.0
      %v3993 = vadd.f32 %v3991, %v3992
      %v3994 = vsel %vm1287, %v3920, 0.0
      %v3995 = vadd.f32 %v3993, %v3994
      %v3996 = vsel %vm1287, %v3921, 0.0
      %v3997 = vadd.f32 %v3995, %v3996
      %v3998 = vsel %vm1287, %v3922, 0.0
      %v3999 = vadd.f32 %v3997, %v3998
      %v4000 = vsel %vm1287, %v3923, 0.0
      %v4001 = vadd.f32 %v3999, %v4000
      %v4002 = vsel %vm1287, %v3924, 0.0
      %v4003 = vadd.f32 %v4001, %v4002
      %4004 = vadd.xlane.f32.xlu0 %v4003
      %v4005 = vpop.xlane.xlu0 %4004
      %v4006 = vrot.slane %v4005, 4
      %v4007 = vadd.f32 %v4005, %v4006
      %v4008 = vrot.slane %v4007, 2
      %v4009 = vadd.f32 %v4007, %v4008
      %v4010 = vrot.slane %v4009, 1
      %v4011 = vadd.f32 %v4009, %v4010
      %s4012 = vtos %v4011
      %s4013 = sadd.f32 %s2695, %s4012
      %v4014 = vsel %vm1287, %v2803, %v3981
      %v4015 = vsel %vm1287, %v2808, %v3982
      %v4016 = vsel %vm1287, %v2813, %v3983
      %v4017 = vsel %vm1287, %v2818, %v3984
      %v4018 = vsel %vm1287, %v2823, %v3985
      %v4019 = vsel %vm1287, %v2828, %v3986
      %v4020 = vsel %vm1287, %v2833, %v3987
      %v4021 = vsel %vm1287, %v2838, %v3988
      %v4022 = vld [vmem:[%s19] sm:$0xff]
      %v4023 = vld [vmem:[%s20] sm:$0x1]
      %v4025 = vlaneseq
      %v4026 = vshrl.u32 %v4025, 7
      %v4027 = vsub.s32 0, %v4026
      %v4028 = vrot.slane %v4023, %v4027
      %v4031 = vsel %vm862, %v4014, 0
      %v4034 = vsel %vm862, %v4015, 0
      %v4037 = vsel %vm862, %v4016, 0
      %v4040 = vsel %vm862, %v4017, 0
      %v4043 = vsel %vm862, %v4018, 0
      %v4046 = vsel %vm862, %v4019, 0
      %v4049 = vsel %vm862, %v4020, 0
      %v4052 = vsel %vm862, %v4021, 0
      %4054 = vmatprep.subr.mxu0 0.0
      %4055 = vmatpush1.msra.mxu0 %v4022
      %4056 = vmatprep.subr.mxu0 0.0
      %4057 = vmatpush1.msra.mxu0 0.0
      %4058 = vmatprep.subr.mxu0 0.0
      %4059 = vmatpush1.msra.mxu0 0.0
      %4060 = vmatprep.subr.mxu0 0.0
      %4061 = vmatpush1.msra.mxu0 0.0
      %4062 = vmatprep.subr.mxu0 0.0
      %4063 = vmatpush1.msra.mxu0 0.0
      %4064 = vmatprep.subr.mxu0 0.0
      %4065 = vmatpush1.msra.mxu0 0.0
      %4066 = vmatprep.subr.mxu0 0.0
      %4067 = vmatpush1.msra.mxu0 0.0
      %4068 = vmatprep.subr.mxu0 0.0
      %4069 = vmatpush1.msra.mxu0 0.0
      %4070 = vmatprep.subr.mxu0 0.0
      %4071 = vmatpush1.msra.mxu0 0.0
      %4072 = vmatprep.subr.mxu0 0.0
      %4073 = vmatpush1.msra.mxu0 0.0
      %4074 = vmatprep.subr.mxu0 0.0
      %4075 = vmatpush1.msra.mxu0 0.0
      %4076 = vmatprep.subr.mxu0 0.0
      %4077 = vmatpush1.msra.mxu0 0.0
      %4078 = vmatprep.subr.mxu0 0.0
      %4079 = vmatpush1.msra.mxu0 0.0
      %4080 = vmatprep.subr.mxu0 0.0
      %4081 = vmatpush1.msra.mxu0 0.0
      %4082 = vmatprep.subr.mxu0 0.0
      %4083 = vmatpush1.msra.mxu0 0.0
      %4084 = vmatprep.subr.mxu0 0.0
      %4085 = vmatpush1.msra.mxu0 0.0
      %4086 = vmatprep.subr.mxu0 0.0
      %4087 = vmatpush1.msra.mxu0 0.0
      %4088 = vmatprep.subr.mxu0 0.0
      %4089 = vmatpush1.msra.mxu0 0.0
      %4090 = vmatprep.subr.mxu0 0.0
      %4091 = vmatpush1.msra.mxu0 0.0
      %4092 = vmatprep.subr.mxu0 0.0
      %4093 = vmatpush1.msra.mxu0 0.0
      %4094 = vmatprep.subr.mxu0 0.0
      %4095 = vmatpush1.msra.mxu0 0.0
      %4096 = vmatprep.subr.mxu0 0.0
      %4097 = vmatpush1.msra.mxu0 0.0
      %4098 = vmatprep.subr.mxu0 0.0
      %4099 = vmatpush1.msra.mxu0 0.0
      %4100 = vmatprep.subr.mxu0 0.0
      %4101 = vmatpush1.msra.mxu0 0.0
      %4102 = vmatprep.subr.mxu0 0.0
      %4103 = vmatpush1.msra.mxu0 0.0
      %4104 = vmatprep.subr.mxu0 0.0
      %4105 = vmatpush1.msra.mxu0 0.0
      %4106 = vmatprep.subr.mxu0 0.0
      %4107 = vmatpush1.msra.mxu0 0.0
      %4108 = vmatprep.subr.mxu0 0.0
      %4109 = vmatpush1.msra.mxu0 0.0
      %4110 = vmatprep.subr.mxu0 0.0
      %4111 = vmatpush1.msra.mxu0 0.0
      %4112 = vmatprep.subr.mxu0 0.0
      %4113 = vmatpush1.msra.mxu0 0.0
      %4114 = vmatprep.subr.mxu0 0.0
      %4115 = vmatpush1.msra.mxu0 0.0
      %4116 = vmatprep.subr.mxu0 0.0
      %4117 = vmatpush1.msra.mxu0 0.0
      %4118 = vmatprep.mubr.f32.mxu0 0.0
      %4119 = vmatmul.mubr.f32.gmra.mrb[0].mxu0 %v4031
      %v4120 = vpop.f32.mrb[0].mxu0
      %v4121 = vadd.f32 %v4028, %v4120
      %v4122 = vpop.f32.mrb[0].mxu0
      %4123 = vmatprep.mubr.f32.mxu0 0.0
      %4124 = vmatmul.mubr.f32.gmra.mrb[0].mxu0 %v4034
      %v4125 = vpop.f32.mrb[0].mxu0
      %v4126 = vadd.f32 %v4028, %v4125
      %v4127 = vpop.f32.mrb[0].mxu0
      %4128 = vmatprep.mubr.f32.mxu0 0.0
      %4129 = vmatmul.mubr.f32.gmra.mrb[0].mxu0 %v4037
      %v4130 = vpop.f32.mrb[0].mxu0
      %v4131 = vadd.f32 %v4028, %v4130
      %v4132 = vpop.f32.mrb[0].mxu0
      %4133 = vmatprep.mubr.f32.mxu0 0.0
      %4134 = vmatmul.mubr.f32.gmra.mrb[0].mxu0 %v4040
      %v4135 = vpop.f32.mrb[0].mxu0
      %v4136 = vadd.f32 %v4028, %v4135
      %v4137 = vpop.f32.mrb[0].mxu0
      %4138 = vmatprep.mubr.f32.mxu0 0.0
      %4139 = vmatmul.mubr.f32.gmra.mrb[0].mxu0 %v4043
      %v4140 = vpop.f32.mrb[0].mxu0
      %v4141 = vadd.f32 %v4028, %v4140
      %v4142 = vpop.f32.mrb[0].mxu0
      %4143 = vmatprep.mubr.f32.mxu0 0.0
      %4144 = vmatmul.mubr.f32.gmra.mrb[0].mxu0 %v4046
      %v4145 = vpop.f32.mrb[0].mxu0
      %v4146 = vadd.f32 %v4028, %v4145
      %v4147 = vpop.f32.mrb[0].mxu0
      %4148 = vmatprep.mubr.f32.mxu0 0.0
      %4149 = vmatmul.mubr.f32.gmra.mrb[0].mxu0 %v4049
      %v4150 = vpop.f32.mrb[0].mxu0
      %v4151 = vadd.f32 %v4028, %v4150
      %v4152 = vpop.f32.mrb[0].mxu0
      %4153 = vmatprep.mubr.f32.mxu0 0.0
      %4154 = vmatmul.mubr.f32.gmra.mrb[0].mxu0 %v4052
      %v4155 = vpop.f32.mrb[0].mxu0
      %v4156 = vadd.f32 %v4028, %v4155
      %v4157 = vpop.f32.mrb[0].mxu0
      %4158 = vdwg.mxu0
      %v4159 = vpack.c.bf16 %v4121, %v4121
      %v4160 = vpack.c.bf16 %v4126, %v4126
      %v4161 = vpack.c.bf16 %v4131, %v4131
      %v4162 = vpack.c.bf16 %v4136, %v4136
      %v4163 = vpack.c.bf16 %v4141, %v4141
      %v4164 = vpack.c.bf16 %v4146, %v4146
      %v4165 = vpack.c.bf16 %v4151, %v4151
      %v4166 = vpack.c.bf16 %v4156, %v4156
      %v4167 = vld [vmem:[%s21] sm:$0x3]
      %v4168 = vld [vmem:[%s22] sm:$0x1]
      %v4170 = vlaneseq
      %v4171 = vshrl.u32 %v4170, 7
      %v4172 = vsub.s32 0, %v4171
      %v4173 = vrot.slane %v4168, %v4172
      %v4183 = vunpack.c.l.b16 %v4159
      %v4184 = vunpack.c.l.b16 %v4160
      %v4185 = vunpack.c.l.b16 %v4161
      %v4186 = vunpack.c.l.b16 %v4162
      %v4187 = vunpack.c.l.b16 %v4163
      %v4188 = vunpack.c.l.b16 %v4164
      %v4189 = vunpack.c.l.b16 %v4165
      %v4190 = vunpack.c.l.b16 %v4166
      %v4191 = vpack.c.b16 %v4184, %v4183
      %v4192 = vpack.c.b16 %v4186, %v4185
      %v4193 = vpack.c.b16 %v4188, %v4187
      %v4194 = vpack.c.b16 %v4190, %v4189
      %v4196 = vsel %vm1287, %v4191, 0
      %v4199 = vsel %vm1287, %v4192, 0
      %v4202 = vsel %vm1287, %v4193, 0
      %v4205 = vsel %vm1287, %v4194, 0
      %v4208 = vsel %vm1482, %v4167, 0
      %4210 = vmatprep.subr.bf16.mxu0 0
      %4211 = vmatpush1.bf16.msra.mxu0 %v4208
      %4212 = vmatprep.subr.bf16.mxu0 0
      %4213 = vmatpush1.bf16.msra.mxu0 0
      %4214 = vmatprep.subr.bf16.mxu0 0
      %4215 = vmatpush1.bf16.msra.mxu0 0
      %4216 = vmatprep.subr.bf16.mxu0 0
      %4217 = vmatpush1.bf16.msra.mxu0 0
      %4218 = vmatprep.subr.bf16.mxu0 0
      %4219 = vmatpush1.bf16.msra.mxu0 0
      %4220 = vmatprep.subr.bf16.mxu0 0
      %4221 = vmatpush1.bf16.msra.mxu0 0
      %4222 = vmatprep.subr.bf16.mxu0 0
      %4223 = vmatpush1.bf16.msra.mxu0 0
      %4224 = vmatprep.subr.bf16.mxu0 0
      %4225 = vmatpush1.bf16.msra.mxu0 0
      %4226 = vmatprep.subr.bf16.mxu0 0
      %4227 = vmatpush1.bf16.msra.mxu0 0
      %4228 = vmatprep.subr.bf16.mxu0 0
      %4229 = vmatpush1.bf16.msra.mxu0 0
      %4230 = vmatprep.subr.bf16.mxu0 0
      %4231 = vmatpush1.bf16.msra.mxu0 0
      %4232 = vmatprep.subr.bf16.mxu0 0
      %4233 = vmatpush1.bf16.msra.mxu0 0
      %4234 = vmatprep.subr.bf16.mxu0 0
      %4235 = vmatpush1.bf16.msra.mxu0 0
      %4236 = vmatprep.subr.bf16.mxu0 0
      %4237 = vmatpush1.bf16.msra.mxu0 0
      %4238 = vmatprep.subr.bf16.mxu0 0
      %4239 = vmatpush1.bf16.msra.mxu0 0
      %4240 = vmatprep.subr.bf16.mxu0 0
      %4241 = vmatpush1.bf16.msra.mxu0 0
      %4242 = vmatprep.mubr.bf16.mxu0 0
      %4243 = vmatmul.mubr.bf16.gmra.mrb[0].mxu0 %v4196
      %v4244 = vpop.f32.mrb[0].mxu0
      %v4245 = vadd.f32 %v4173, %v4244
      %v4246 = vpop.f32.mrb[0].mxu0
      %v4247 = vpop.f32.mrb[0].mxu0
      %v4248 = vadd.f32 %v4173, %v4247
      %v4249 = vpop.f32.mrb[0].mxu0
      %4250 = vmatprep.mubr.bf16.mxu0 0
      %4251 = vmatmul.mubr.bf16.gmra.mrb[0].mxu0 %v4199
      %v4252 = vpop.f32.mrb[0].mxu0
      %v4253 = vadd.f32 %v4173, %v4252
      %v4254 = vpop.f32.mrb[0].mxu0
      %v4255 = vpop.f32.mrb[0].mxu0
      %v4256 = vadd.f32 %v4173, %v4255
      %v4257 = vpop.f32.mrb[0].mxu0
      %4258 = vmatprep.mubr.bf16.mxu0 0
      %4259 = vmatmul.mubr.bf16.gmra.mrb[0].mxu0 %v4202
      %v4260 = vpop.f32.mrb[0].mxu0
      %v4261 = vadd.f32 %v4173, %v4260
      %v4262 = vpop.f32.mrb[0].mxu0
      %v4263 = vpop.f32.mrb[0].mxu0
      %v4264 = vadd.f32 %v4173, %v4263
      %v4265 = vpop.f32.mrb[0].mxu0
      %4266 = vmatprep.mubr.bf16.mxu0 0
      %4267 = vmatmul.mubr.bf16.gmra.mrb[0].mxu0 %v4205
      %v4268 = vpop.f32.mrb[0].mxu0
      %v4269 = vadd.f32 %v4173, %v4268
      %v4270 = vpop.f32.mrb[0].mxu0
      %v4271 = vpop.f32.mrb[0].mxu0
      %v4272 = vadd.f32 %v4173, %v4271
      %v4273 = vpop.f32.mrb[0].mxu0
      %4274 = vdwg.mxu0
      %v4275 = vmax.f32 %v4245, 0.0
      %v4276 = vmax.f32 %v4248, 0.0
      %v4277 = vmax.f32 %v4253, 0.0
      %v4278 = vmax.f32 %v4256, 0.0
      %v4279 = vmax.f32 %v4261, 0.0
      %v4280 = vmax.f32 %v4264, 0.0
      %v4281 = vmax.f32 %v4269, 0.0
      %v4282 = vmax.f32 %v4272, 0.0
      %v4283 = vpack.c.bf16 %v4275, %v4275
      %v4284 = vpack.c.bf16 %v4276, %v4276
      %v4285 = vpack.c.bf16 %v4277, %v4277
      %v4286 = vpack.c.bf16 %v4278, %v4278
      %v4287 = vpack.c.bf16 %v4279, %v4279
      %v4288 = vpack.c.bf16 %v4280, %v4280
      %v4289 = vpack.c.bf16 %v4281, %v4281
      %v4290 = vpack.c.bf16 %v4282, %v4282
      %v4291 = vld [vmem:[%s23] sm:$0x3]
      %v4292 = vld [vmem:[%s24] sm:$0x1]
      %v4294 = vlaneseq
      %v4295 = vshrl.u32 %v4294, 7
      %v4296 = vsub.s32 0, %v4295
      %v4297 = vrot.slane %v4292, %v4296
      %v4307 = vunpack.c.l.b16 %v4283
      %v4308 = vunpack.c.l.b16 %v4284
      %v4309 = vunpack.c.l.b16 %v4285
      %v4310 = vunpack.c.l.b16 %v4286
      %v4311 = vunpack.c.l.b16 %v4287
      %v4312 = vunpack.c.l.b16 %v4288
      %v4313 = vunpack.c.l.b16 %v4289
      %v4314 = vunpack.c.l.b16 %v4290
      %v4315 = vpack.c.b16 %v4308, %v4307
      %v4316 = vpack.c.b16 %v4310, %v4309
      %v4317 = vpack.c.b16 %v4312, %v4311
      %v4318 = vpack.c.b16 %v4314, %v4313
      %v4320 = vsel %vm1287, %v4315, 0
      %v4323 = vsel %vm1287, %v4316, 0
      %v4326 = vsel %vm1287, %v4317, 0
      %v4329 = vsel %vm1287, %v4318, 0
      %v4332 = vsel %vm1482, %v4291, 0
      %4334 = vmatprep.subr.bf16.mxu0 0
      %4335 = vmatpush1.bf16.msra.mxu0 %v4332
      %4336 = vmatprep.subr.bf16.mxu0 0
      %4337 = vmatpush1.bf16.msra.mxu0 0
      %4338 = vmatprep.subr.bf16.mxu0 0
      %4339 = vmatpush1.bf16.msra.mxu0 0
      %4340 = vmatprep.subr.bf16.mxu0 0
      %4341 = vmatpush1.bf16.msra.mxu0 0
      %4342 = vmatprep.subr.bf16.mxu0 0
      %4343 = vmatpush1.bf16.msra.mxu0 0
      %4344 = vmatprep.subr.bf16.mxu0 0
      %4345 = vmatpush1.bf16.msra.mxu0 0
      %4346 = vmatprep.subr.bf16.mxu0 0
      %4347 = vmatpush1.bf16.msra.mxu0 0
      %4348 = vmatprep.subr.bf16.mxu0 0
      %4349 = vmatpush1.bf16.msra.mxu0 0
      %4350 = vmatprep.subr.bf16.mxu0 0
      %4351 = vmatpush1.bf16.msra.mxu0 0
      %4352 = vmatprep.subr.bf16.mxu0 0
      %4353 = vmatpush1.bf16.msra.mxu0 0
      %4354 = vmatprep.subr.bf16.mxu0 0
      %4355 = vmatpush1.bf16.msra.mxu0 0
      %4356 = vmatprep.subr.bf16.mxu0 0
      %4357 = vmatpush1.bf16.msra.mxu0 0
      %4358 = vmatprep.subr.bf16.mxu0 0
      %4359 = vmatpush1.bf16.msra.mxu0 0
      %4360 = vmatprep.subr.bf16.mxu0 0
      %4361 = vmatpush1.bf16.msra.mxu0 0
      %4362 = vmatprep.subr.bf16.mxu0 0
      %4363 = vmatpush1.bf16.msra.mxu0 0
      %4364 = vmatprep.subr.bf16.mxu0 0
      %4365 = vmatpush1.bf16.msra.mxu0 0
      %4366 = vmatprep.mubr.bf16.mxu0 0
      %4367 = vmatmul.mubr.bf16.gmra.mrb[0].mxu0 %v4320
      %v4368 = vpop.f32.mrb[0].mxu0
      %v4369 = vadd.f32 %v4297, %v4368
      %v4370 = vpop.f32.mrb[0].mxu0
      %v4371 = vpop.f32.mrb[0].mxu0
      %v4372 = vadd.f32 %v4297, %v4371
      %v4373 = vpop.f32.mrb[0].mxu0
      %4374 = vmatprep.mubr.bf16.mxu0 0
      %4375 = vmatmul.mubr.bf16.gmra.mrb[0].mxu0 %v4323
      %v4376 = vpop.f32.mrb[0].mxu0
      %v4377 = vadd.f32 %v4297, %v4376
      %v4378 = vpop.f32.mrb[0].mxu0
      %v4379 = vpop.f32.mrb[0].mxu0
      %v4380 = vadd.f32 %v4297, %v4379
      %v4381 = vpop.f32.mrb[0].mxu0
      %4382 = vmatprep.mubr.bf16.mxu0 0
      %4383 = vmatmul.mubr.bf16.gmra.mrb[0].mxu0 %v4326
      %v4384 = vpop.f32.mrb[0].mxu0
      %v4385 = vadd.f32 %v4297, %v4384
      %v4386 = vpop.f32.mrb[0].mxu0
      %v4387 = vpop.f32.mrb[0].mxu0
      %v4388 = vadd.f32 %v4297, %v4387
      %v4389 = vpop.f32.mrb[0].mxu0
      %4390 = vmatprep.mubr.bf16.mxu0 0
      %4391 = vmatmul.mubr.bf16.gmra.mrb[0].mxu0 %v4329
      %v4392 = vpop.f32.mrb[0].mxu0
      %v4393 = vadd.f32 %v4297, %v4392
      %v4394 = vpop.f32.mrb[0].mxu0
      %v4395 = vpop.f32.mrb[0].mxu0
      %v4396 = vadd.f32 %v4297, %v4395
      %v4397 = vpop.f32.mrb[0].mxu0
      %4398 = vdwg.mxu0
      %v4399 = vmul.f32 %v4369, 0.1
      %v4400 = vmul.f32 %v4372, 0.1
      %v4401 = vmul.f32 %v4377, 0.1
      %v4402 = vmul.f32 %v4380, 0.1
      %v4403 = vmul.f32 %v4385, 0.1
      %v4404 = vmul.f32 %v4388, 0.1
      %v4405 = vmul.f32 %v4393, 0.1
      %v4406 = vmul.f32 %v4396, 0.1
      %v4407 = vtanh.pop %v4399
      %v4408 = vtanh.pop %v4400
      %v4409 = vtanh.pop %v4401
      %v4410 = vtanh.pop %v4402
      %v4411 = vtanh.pop %v4403
      %v4412 = vtanh.pop %v4404
      %v4413 = vtanh.pop %v4405
      %v4414 = vtanh.pop %v4406
      %v4415 = vmul.f32 %v4407, 2.0
      %v4416 = vmul.f32 %v4408, 2.0
      %v4417 = vmul.f32 %v4409, 2.0
      %v4418 = vmul.f32 %v4410, 2.0
      %v4419 = vmul.f32 %v4411, 2.0
      %v4420 = vmul.f32 %v4412, 2.0
      %v4421 = vmul.f32 %v4413, 2.0
      %v4422 = vmul.f32 %v4414, 2.0
      %v4423 = vmul.f32 %v4415, 1.442695
      %v4424 = vpow.pop %v4423
      %v4425 = vmul.f32 %v4416, 1.442695
      %v4426 = vpow.pop %v4425
      %v4427 = vmul.f32 %v4417, 1.442695
      %v4428 = vpow.pop %v4427
      %v4429 = vmul.f32 %v4418, 1.442695
      %v4430 = vpow.pop %v4429
      %v4431 = vmul.f32 %v4419, 1.442695
      %v4432 = vpow.pop %v4431
      %v4433 = vmul.f32 %v4420, 1.442695
      %v4434 = vpow.pop %v4433
      %v4435 = vmul.f32 %v4421, 1.442695
      %v4436 = vpow.pop %v4435
      %v4437 = vmul.f32 %v4422, 1.442695
      %v4438 = vpow.pop %v4437
      %4447 = vrot.lane.b32.xlu0 %v4424, 4
      %v4448 = vpop.permute.xlu0 %4447
      %4449 = vrot.lane.b32.xlu0 %v4426, 4
      %v4450 = vpop.permute.xlu0 %4449
      %4451 = vrot.lane.b32.xlu0 %v4428, 4
      %v4452 = vpop.permute.xlu0 %4451
      %4453 = vrot.lane.b32.xlu0 %v4430, 4
      %v4454 = vpop.permute.xlu0 %4453
      %4455 = vrot.lane.b32.xlu0 %v4432, 4
      %v4456 = vpop.permute.xlu0 %4455
      %4457 = vrot.lane.b32.xlu0 %v4434, 4
      %v4458 = vpop.permute.xlu0 %4457
      %4459 = vrot.lane.b32.xlu0 %v4436, 4
      %v4460 = vpop.permute.xlu0 %4459
      %4461 = vrot.lane.b32.xlu0 %v4438, 4
      %v4462 = vpop.permute.xlu0 %4461
      %v4471 = vmul.f32 %v4121, %v4448
      %v4472 = vmul.f32 %v4126, %v4450
      %v4473 = vmul.f32 %v4131, %v4452
      %v4474 = vmul.f32 %v4136, %v4454
      %v4475 = vmul.f32 %v4141, %v4456
      %v4476 = vmul.f32 %v4146, %v4458
      %v4477 = vmul.f32 %v4151, %v4460
      %v4478 = vmul.f32 %v4156, %v4462
      %v4479 = vadd.f32 %v4471, %v4399
      %v4480 = vadd.f32 %v4472, %v4400
      %v4481 = vadd.f32 %v4473, %v4401
      %v4482 = vadd.f32 %v4474, %v4402
      %v4483 = vadd.f32 %v4475, %v4403
      %v4484 = vadd.f32 %v4476, %v4404
      %v4485 = vadd.f32 %v4477, %v4405
      %v4486 = vadd.f32 %v4478, %v4406
      %v4487 = vsel %vm1287, %v4415, 0.0
      %v4488 = vsel %vm1287, %v4416, 0.0
      %v4489 = vadd.f32 %v4487, %v4488
      %v4490 = vsel %vm1287, %v4417, 0.0
      %v4491 = vadd.f32 %v4489, %v4490
      %v4492 = vsel %vm1287, %v4418, 0.0
      %v4493 = vadd.f32 %v4491, %v4492
      %v4494 = vsel %vm1287, %v4419, 0.0
      %v4495 = vadd.f32 %v4493, %v4494
      %v4496 = vsel %vm1287, %v4420, 0.0
      %v4497 = vadd.f32 %v4495, %v4496
      %v4498 = vsel %vm1287, %v4421, 0.0
      %v4499 = vadd.f32 %v4497, %v4498
      %v4500 = vsel %vm1287, %v4422, 0.0
      %v4501 = vadd.f32 %v4499, %v4500
      %4502 = vadd.xlane.f32.xlu0 %v4501
      %v4503 = vpop.xlane.xlu0 %4502
      %v4504 = vrot.slane %v4503, 4
      %v4505 = vadd.f32 %v4503, %v4504
      %v4506 = vrot.slane %v4505, 2
      %v4507 = vadd.f32 %v4505, %v4506
      %v4508 = vrot.slane %v4507, 1
      %v4509 = vadd.f32 %v4507, %v4508
      %s4510 = vtos %v4509
      %s4511 = sadd.f32 %s4013, %s4510
      %v4512 = vsel %vm1287, %v4121, %v4479
      %v4513 = vsel %vm1287, %v4126, %v4480
      %v4514 = vsel %vm1287, %v4131, %v4481
      %v4515 = vsel %vm1287, %v4136, %v4482
      %v4516 = vsel %vm1287, %v4141, %v4483
      %v4517 = vsel %vm1287, %v4146, %v4484
      %v4518 = vsel %vm1287, %v4151, %v4485
      %v4519 = vsel %vm1287, %v4156, %v4486
      %v4520 = vld [vmem:[%s25] sm:$0xff]
      %v4521 = vld [vmem:[%s26] sm:$0x1]
      %v4523 = vlaneseq
      %v4524 = vshrl.u32 %v4523, 7
      %v4525 = vsub.s32 0, %v4524
      %v4526 = vrot.slane %v4521, %v4525
      %v4529 = vsel %vm862, %v4512, 0
      %v4532 = vsel %vm862, %v4513, 0
      %v4535 = vsel %vm862, %v4514, 0
      %v4538 = vsel %vm862, %v4515, 0
      %v4541 = vsel %vm862, %v4516, 0
      %v4544 = vsel %vm862, %v4517, 0
      %v4547 = vsel %vm862, %v4518, 0
      %v4550 = vsel %vm862, %v4519, 0
      %4552 = vmatprep.subr.mxu0 0.0
      %4553 = vmatpush1.msra.mxu0 %v4520
      %4554 = vmatprep.subr.mxu0 0.0
      %4555 = vmatpush1.msra.mxu0 0.0
      %4556 = vmatprep.subr.mxu0 0.0
      %4557 = vmatpush1.msra.mxu0 0.0
      %4558 = vmatprep.subr.mxu0 0.0
      %4559 = vmatpush1.msra.mxu0 0.0
      %4560 = vmatprep.subr.mxu0 0.0
      %4561 = vmatpush1.msra.mxu0 0.0
      %4562 = vmatprep.subr.mxu0 0.0
      %4563 = vmatpush1.msra.mxu0 0.0
      %4564 = vmatprep.subr.mxu0 0.0
      %4565 = vmatpush1.msra.mxu0 0.0
      %4566 = vmatprep.subr.mxu0 0.0
      %4567 = vmatpush1.msra.mxu0 0.0
      %4568 = vmatprep.subr.mxu0 0.0
      %4569 = vmatpush1.msra.mxu0 0.0
      %4570 = vmatprep.subr.mxu0 0.0
      %4571 = vmatpush1.msra.mxu0 0.0
      %4572 = vmatprep.subr.mxu0 0.0
      %4573 = vmatpush1.msra.mxu0 0.0
      %4574 = vmatprep.subr.mxu0 0.0
      %4575 = vmatpush1.msra.mxu0 0.0
      %4576 = vmatprep.subr.mxu0 0.0
      %4577 = vmatpush1.msra.mxu0 0.0
      %4578 = vmatprep.subr.mxu0 0.0
      %4579 = vmatpush1.msra.mxu0 0.0
      %4580 = vmatprep.subr.mxu0 0.0
      %4581 = vmatpush1.msra.mxu0 0.0
      %4582 = vmatprep.subr.mxu0 0.0
      %4583 = vmatpush1.msra.mxu0 0.0
      %4584 = vmatprep.subr.mxu0 0.0
      %4585 = vmatpush1.msra.mxu0 0.0
      %4586 = vmatprep.subr.mxu0 0.0
      %4587 = vmatpush1.msra.mxu0 0.0
      %4588 = vmatprep.subr.mxu0 0.0
      %4589 = vmatpush1.msra.mxu0 0.0
      %4590 = vmatprep.subr.mxu0 0.0
      %4591 = vmatpush1.msra.mxu0 0.0
      %4592 = vmatprep.subr.mxu0 0.0
      %4593 = vmatpush1.msra.mxu0 0.0
      %4594 = vmatprep.subr.mxu0 0.0
      %4595 = vmatpush1.msra.mxu0 0.0
      %4596 = vmatprep.subr.mxu0 0.0
      %4597 = vmatpush1.msra.mxu0 0.0
      %4598 = vmatprep.subr.mxu0 0.0
      %4599 = vmatpush1.msra.mxu0 0.0
      %4600 = vmatprep.subr.mxu0 0.0
      %4601 = vmatpush1.msra.mxu0 0.0
      %4602 = vmatprep.subr.mxu0 0.0
      %4603 = vmatpush1.msra.mxu0 0.0
      %4604 = vmatprep.subr.mxu0 0.0
      %4605 = vmatpush1.msra.mxu0 0.0
      %4606 = vmatprep.subr.mxu0 0.0
      %4607 = vmatpush1.msra.mxu0 0.0
      %4608 = vmatprep.subr.mxu0 0.0
      %4609 = vmatpush1.msra.mxu0 0.0
      %4610 = vmatprep.subr.mxu0 0.0
      %4611 = vmatpush1.msra.mxu0 0.0
      %4612 = vmatprep.subr.mxu0 0.0
      %4613 = vmatpush1.msra.mxu0 0.0
      %4614 = vmatprep.subr.mxu0 0.0
      %4615 = vmatpush1.msra.mxu0 0.0
      %4616 = vmatprep.mubr.f32.mxu0 0.0
      %4617 = vmatmul.mubr.f32.gmra.mrb[0].mxu0 %v4529
      %v4618 = vpop.f32.mrb[0].mxu0
      %v4619 = vadd.f32 %v4526, %v4618
      %v4620 = vpop.f32.mrb[0].mxu0
      %4621 = vmatprep.mubr.f32.mxu0 0.0
      %4622 = vmatmul.mubr.f32.gmra.mrb[0].mxu0 %v4532
      %v4623 = vpop.f32.mrb[0].mxu0
      %v4624 = vadd.f32 %v4526, %v4623
      %v4625 = vpop.f32.mrb[0].mxu0
      %4626 = vmatprep.mubr.f32.mxu0 0.0
      %4627 = vmatmul.mubr.f32.gmra.mrb[0].mxu0 %v4535
      %v4628 = vpop.f32.mrb[0].mxu0
      %v4629 = vadd.f32 %v4526, %v4628
      %v4630 = vpop.f32.mrb[0].mxu0
      %4631 = vmatprep.mubr.f32.mxu0 0.0
      %4632 = vmatmul.mubr.f32.gmra.mrb[0].mxu0 %v4538
      %v4633 = vpop.f32.mrb[0].mxu0
      %v4634 = vadd.f32 %v4526, %v4633
      %v4635 = vpop.f32.mrb[0].mxu0
      %4636 = vmatprep.mubr.f32.mxu0 0.0
      %4637 = vmatmul.mubr.f32.gmra.mrb[0].mxu0 %v4541
      %v4638 = vpop.f32.mrb[0].mxu0
      %v4639 = vadd.f32 %v4526, %v4638
      %v4640 = vpop.f32.mrb[0].mxu0
      %4641 = vmatprep.mubr.f32.mxu0 0.0
      %4642 = vmatmul.mubr.f32.gmra.mrb[0].mxu0 %v4544
      %v4643 = vpop.f32.mrb[0].mxu0
      %v4644 = vadd.f32 %v4526, %v4643
      %v4645 = vpop.f32.mrb[0].mxu0
      %4646 = vmatprep.mubr.f32.mxu0 0.0
      %4647 = vmatmul.mubr.f32.gmra.mrb[0].mxu0 %v4547
      %v4648 = vpop.f32.mrb[0].mxu0
      %v4649 = vadd.f32 %v4526, %v4648
      %v4650 = vpop.f32.mrb[0].mxu0
      %4651 = vmatprep.mubr.f32.mxu0 0.0
      %4652 = vmatmul.mubr.f32.gmra.mrb[0].mxu0 %v4550
      %v4653 = vpop.f32.mrb[0].mxu0
      %v4654 = vadd.f32 %v4526, %v4653
      %v4655 = vpop.f32.mrb[0].mxu0
      %4656 = vdwg.mxu0
      %v4657 = vmul.f32 %v4619, %v4619
      %v4658 = vmul.f32 %v4624, %v4624
      %v4659 = vmul.f32 %v4629, %v4629
      %v4660 = vmul.f32 %v4634, %v4634
      %v4661 = vmul.f32 %v4639, %v4639
      %v4662 = vmul.f32 %v4644, %v4644
      %v4663 = vmul.f32 %v4649, %v4649
      %v4664 = vmul.f32 %v4654, %v4654
      %v4665 = vsel %vm862, %v4657, 0.0
      %v4666 = vsel %vm862, %v4658, 0.0
      %v4667 = vadd.f32 %v4665, %v4666
      %v4668 = vsel %vm862, %v4659, 0.0
      %v4669 = vadd.f32 %v4667, %v4668
      %v4670 = vsel %vm862, %v4660, 0.0
      %v4671 = vadd.f32 %v4669, %v4670
      %v4672 = vsel %vm862, %v4661, 0.0
      %v4673 = vadd.f32 %v4671, %v4672
      %v4674 = vsel %vm862, %v4662, 0.0
      %v4675 = vadd.f32 %v4673, %v4674
      %v4676 = vsel %vm862, %v4663, 0.0
      %v4677 = vadd.f32 %v4675, %v4676
      %v4678 = vsel %vm862, %v4664, 0.0
      %v4679 = vadd.f32 %v4677, %v4678
      %4680 = vadd.xlane.f32.xlu0 %v4679
      %v4681 = vpop.xlane.xlu0 %4680
      %v4682 = vrot.slane %v4681, 4
      %v4683 = vadd.f32 %v4681, %v4682
      %v4684 = vrot.slane %v4683, 2
      %v4685 = vadd.f32 %v4683, %v4684
      %v4686 = vrot.slane %v4685, 1
      %v4687 = vadd.f32 %v4685, %v4686
      %s4688 = vtos %v4687
      %s4689 = smul.f32 %s4688, 0.5
      %s4690 = ssub.f32 %s4689, %s4511
      %v4691 = vstv %s4690
      %4692 = vst [vmem:[%s848] sm:$0x1] %v4691
      %4693 = vadd.xlane.f32.xlu0 %v4665
      %v4694 = vpop.xlane.xlu0 %4693
      %4695 = vadd.xlane.f32.xlu0 %v4666
      %v4696 = vpop.xlane.xlu0 %4695
      %4697 = vadd.xlane.f32.xlu0 %v4668
      %v4698 = vpop.xlane.xlu0 %4697
      %4699 = vadd.xlane.f32.xlu0 %v4670
      %v4700 = vpop.xlane.xlu0 %4699
      %4701 = vadd.xlane.f32.xlu0 %v4672
      %v4702 = vpop.xlane.xlu0 %4701
      %4703 = vadd.xlane.f32.xlu0 %v4674
      %v4704 = vpop.xlane.xlu0 %4703
      %4705 = vadd.xlane.f32.xlu0 %v4676
      %v4706 = vpop.xlane.xlu0 %4705
      %4707 = vadd.xlane.f32.xlu0 %v4678
      %v4708 = vpop.xlane.xlu0 %4707
      %v4709 = vrcp.pop 8.0
      %v4710 = vmul.f32 %v4694, %v4709
      %v4711 = vmul.f32 %v4696, %v4709
      %v4712 = vmul.f32 %v4698, %v4709
      %v4713 = vmul.f32 %v4700, %v4709
      %v4714 = vmul.f32 %v4702, %v4709
      %v4715 = vmul.f32 %v4704, %v4709
      %v4716 = vmul.f32 %v4706, %v4709
      %v4717 = vmul.f32 %v4708, %v4709
      %v4718 = vmul.f32 %v4710, -0.5
      %v4719 = vmul.f32 %v4711, -0.5
      %v4720 = vmul.f32 %v4712, -0.5
      %v4721 = vmul.f32 %v4713, -0.5
      %v4722 = vmul.f32 %v4714, -0.5
      %v4723 = vmul.f32 %v4715, -0.5
      %v4724 = vmul.f32 %v4716, -0.5
      %v4725 = vmul.f32 %v4717, -0.5
      %v4726 = vmul.f32 %v4718, 1.442695
      %v4727 = vpow.pop %v4726
      %v4728 = vmul.f32 %v4719, 1.442695
      %v4729 = vpow.pop %v4728
      %v4730 = vmul.f32 %v4720, 1.442695
      %v4731 = vpow.pop %v4730
      %v4732 = vmul.f32 %v4721, 1.442695
      %v4733 = vpow.pop %v4732
      %v4734 = vmul.f32 %v4722, 1.442695
      %v4735 = vpow.pop %v4734
      %v4736 = vmul.f32 %v4723, 1.442695
      %v4737 = vpow.pop %v4736
      %v4738 = vmul.f32 %v4724, 1.442695
      %v4739 = vpow.pop %v4738
      %v4740 = vmul.f32 %v4725, 1.442695
      %v4741 = vpow.pop %v4740
      %v4742 = vsub.f32 0.0, %v4727
      %v4743 = vsub.f32 0.0, %v4729
      %v4744 = vsub.f32 0.0, %v4731
      %v4745 = vsub.f32 0.0, %v4733
      %v4746 = vsub.f32 0.0, %v4735
      %v4747 = vsub.f32 0.0, %v4737
      %v4748 = vsub.f32 0.0, %v4739
      %v4749 = vsub.f32 0.0, %v4741
      %v4758 = vlaneseq
      %v4759 = vand.u32 %v4758, 127
      %v4760 = vlaneseq
      %v4761 = vshrl.u32 %v4760, 7
      %v4762 = vsub.s32 %v4759, %v4761
      %v4763 = vrot.slane %v4742, %v4762
      %v4764 = vlaneseq
      %v4765 = vshrl.u32 %v4764, 7
      %v4766 = vsub.s32 %v4759, %v4765
      %v4767 = vrot.slane %v4743, %v4766
      %v4768 = vlaneseq
      %v4769 = vshrl.u32 %v4768, 7
      %v4770 = vsub.s32 %v4759, %v4769
      %v4771 = vrot.slane %v4744, %v4770
      %v4772 = vlaneseq
      %v4773 = vshrl.u32 %v4772, 7
      %v4774 = vsub.s32 %v4759, %v4773
      %v4775 = vrot.slane %v4745, %v4774
      %v4776 = vlaneseq
      %v4777 = vshrl.u32 %v4776, 7
      %v4778 = vsub.s32 %v4759, %v4777
      %v4779 = vrot.slane %v4746, %v4778
      %v4780 = vlaneseq
      %v4781 = vshrl.u32 %v4780, 7
      %v4782 = vsub.s32 %v4759, %v4781
      %v4783 = vrot.slane %v4747, %v4782
      %v4784 = vlaneseq
      %v4785 = vshrl.u32 %v4784, 7
      %v4786 = vsub.s32 %v4759, %v4785
      %v4787 = vrot.slane %v4748, %v4786
      %v4788 = vlaneseq
      %v4789 = vshrl.u32 %v4788, 7
      %v4790 = vsub.s32 %v4759, %v4789
      %v4791 = vrot.slane %v4749, %v4790
      %vm4792 = vcmask 1041409
      %v4793 = vsel %vm4792, %v4767, %v4763
      %vm4794 = vcmask 1042434
      %v4795 = vsel %vm4794, %v4771, %v4793
      %vm4796 = vcmask 1043459
      %v4797 = vsel %vm4796, %v4775, %v4795
      %vm4798 = vcmask 1044484
      %v4799 = vsel %vm4798, %v4779, %v4797
      %vm4800 = vcmask 1045509
      %v4801 = vsel %vm4800, %v4783, %v4799
      %vm4802 = vcmask 1046534
      %v4803 = vsel %vm4802, %v4787, %v4801
      %vm4804 = vcmask 1047559
      %v4805 = vsel %vm4804, %v4791, %v4803
      %4807 = vst.msk [vmem:[%s852] sm:$0xff] %vm862, %v4805
      %p4808 = scmp.lt.s32.totalorder %s40, 1
      %s4809 = scalar_select %p4808, %s40, 1
      %s4810 = scalar_lea.vmem %s27, %s4809
      %p4811 = scmp.lt.s32.totalorder %s40, 1
      %s4812 = scalar_select %p4811, %s40, 1
      %s4813 = smul.addr %s4812, 8
      %s4814 = scalar_lea.vmem %s28, %s4813
      // Predicated region
      $region129: #{_lambda_.2} parent=127 // pred_check
        %p4815 = pneg %p630
      $region130: #{_lambda_.2} parent=127 // pred_check_branch
        %4817 = sbr.rel (%p4815) target = $region132
      $region131: #{_lambda_.2} parent=127 // pred_region
        _
      $region132: #{_lambda_.2} parent=127 // pred_fallthru
        _
      // Predicated region
      $region133: #{_lambda_.2} parent=127 // pred_check
        %p4818 = pneg %p656
      $region134: #{_lambda_.2} parent=127 // pred_check_branch
        %4820 = sbr.rel (%p4818) target = $region136
      $region135: #{_lambda_.2} parent=127 // pred_region
        _
      $region136: #{_lambda_.2} parent=127 // pred_fallthru
        _
    $region128: #{_lambda_.2} parent=5 // pred_fallthru
      _
    %p4821 = scmp.le.s32.totalorder 2, %s35
    // Predicated region
    $region137: #{_lambda_.2} parent=5 // pred_check
      %p4822 = pneg %p4821
    $region138: #{_lambda_.2} parent=5 // pred_check_branch
      %4824 = sbr.rel (%p4822) target = $region140
    $region139: #{_lambda_.2} parent=5 // pred_region
      %s4825 = ssub.s32 %s35, 2
      // Predicated region
      $region141: #{_lambda_.2} parent=139 // pred_check
        %p4826 = pneg %p636
      $region142: #{_lambda_.2} parent=139 // pred_check_branch
        %4828 = sbr.rel (%p4826) target = $region144
      $region143: #{_lambda_.2} parent=139 // pred_region
        %p4829 = scmp.lt.s32.totalorder %s41, 1
        %s4830 = scalar_select %p4829, %s41, 1
        %s4831 = scalar_lea.vmem %s27, %s4830
      $region144: #{_lambda_.2} parent=139 // pred_fallthru
        _
      // Predicated region
      $region145: #{_lambda_.2} parent=139 // pred_check
        %p4832 = pneg %p662
      $region146: #{_lambda_.2} parent=139 // pred_check_branch
        %4834 = sbr.rel (%p4832) target = $region148
      $region147: #{_lambda_.2} parent=139 // pred_region
        %p4835 = scmp.lt.s32.totalorder %s41, 1
        %s4836 = scalar_select %p4835, %s41, 1
        %s4837 = smul.addr %s4836, 8
        %s4838 = scalar_lea.vmem %s28, %s4837
      $region148: #{_lambda_.2} parent=139 // pred_fallthru
        _
    $region140: #{_lambda_.2} parent=5 // pred_fallthru
      _
  $region6: #{_lambda_.2} parent=0 // loop_footer
    %s39 = sadd.s32 1, %s35
  $region7: #{_lambda_.2} parent=0 // loop_footer_branch
    %34 = sbr.rel target = $region3
  $region8: #{_lambda_.2} parent=0 // loop_exit
    _

// kernel: _lambda_.3
$region0: #{_lambda_.3}
  #allocation0 [shape = 'u32[]', space=smem, size = 0x4, offset = 0x4, fixed_abs, tag = 'smem constant byte address 0x4 - core index']
  #allocation1 [shape = 'u32[144,128]{1,0:T(1,128)}', space=vmem, size = 0x12000, scoped, tag = 'internal scratch']
  %s0 = inlined_call_operand.vmem [shape: f32[2,4,4,16], index: 0, kind: input, shape index: {}]
  %s1 = inlined_call_operand.vmem [shape: f32[4,4,16], index: 1, kind: input, shape index: {}]
  %s2 = inlined_call_operand.vmem [shape: f32[4,4,16], index: 2, kind: input, shape index: {}]
  %s3 = inlined_call_operand.vmem [shape: bf16[72,8], index: 3, kind: input, shape index: {}]
  %s4 = inlined_call_operand.vmem [shape: f32[1,8], index: 4, kind: input, shape index: {}]
  %s5 = inlined_call_operand.vmem [shape: bf16[72,16], index: 5, kind: input, shape index: {}]
  %s6 = inlined_call_operand.vmem [shape: f32[1,16], index: 6, kind: input, shape index: {}]
  %s7 = inlined_call_operand.vmem [shape: f32[16,16], index: 7, kind: input, shape index: {}]
  %s8 = inlined_call_operand.vmem [shape: f32[1,16], index: 8, kind: input, shape index: {}, may-alias: {8,14,20,26}]
  %s9 = inlined_call_operand.vmem [shape: bf16[8,8], index: 9, kind: input, shape index: {}]
  %s10 = inlined_call_operand.vmem [shape: f32[1,8], index: 10, kind: input, shape index: {}]
  %s11 = inlined_call_operand.vmem [shape: bf16[8,16], index: 11, kind: input, shape index: {}]
  %s12 = inlined_call_operand.vmem [shape: f32[1,16], index: 12, kind: input, shape index: {}]
  %s13 = inlined_call_operand.vmem [shape: f32[16,16], index: 13, kind: input, shape index: {}]
  %s14 = inlined_call_operand.vmem [shape: f32[1,16], index: 14, kind: input, shape index: {}, may-alias: {8,14,20,26}]
  %s15 = inlined_call_operand.vmem [shape: bf16[72,8], index: 15, kind: input, shape index: {}]
  %s16 = inlined_call_operand.vmem [shape: f32[1,8], index: 16, kind: input, shape index: {}]
  %s17 = inlined_call_operand.vmem [shape: bf16[72,16], index: 17, kind: input, shape index: {}]
  %s18 = inlined_call_operand.vmem [shape: f32[1,16], index: 18, kind: input, shape index: {}]
  %s19 = inlined_call_operand.vmem [shape: f32[16,16], index: 19, kind: input, shape index: {}]
  %s20 = inlined_call_operand.vmem [shape: f32[1,16], index: 20, kind: input, shape index: {}, may-alias: {8,14,20,26}]
  %s21 = inlined_call_operand.vmem [shape: bf16[8,8], index: 21, kind: input, shape index: {}]
  %s22 = inlined_call_operand.vmem [shape: f32[1,8], index: 22, kind: input, shape index: {}]
  %s23 = inlined_call_operand.vmem [shape: bf16[8,16], index: 23, kind: input, shape index: {}]
  %s24 = inlined_call_operand.vmem [shape: f32[1,16], index: 24, kind: input, shape index: {}]
  %s25 = inlined_call_operand.vmem [shape: f32[16,16], index: 25, kind: input, shape index: {}]
  %s26 = inlined_call_operand.vmem [shape: f32[1,16], index: 26, kind: input, shape index: {}, may-alias: {8,14,20,26}]
  %s27 = inlined_call_operand.vmem [shape: f32[2,1,128], index: 27, kind: output, shape index: {0}]
  %s28 = inlined_call_operand.vmem [shape: f32[2,4,4], index: 28, kind: output, shape index: {1}]
  %29 = xla_tuple %s27, %s28
  %s30 = sld [smem:[#allocation0]]
  $region149: #{_lambda_.3} parent=0
    _
  %s32 = ssub.s32 1, %s30
  %s33 = scalar_select 0, %s32, %s30
  loop: start=0, step=1, limit=4
  $region2: #{_lambda_.3} parent=0 // loop_pre_header
    _
  $region3: #{_lambda_.3} parent=0 // loop_header
    %s35 = sphi 0, %s39
    %p36 = scmp.ge.s32.totalorder %s35, 4
    %s45 = sphi 0, %s47
    %s48 = sphi 0, %s45
    %s49 = sphi 0, %s48
    %s65 = sphi 0, %s49
    %s69 = sphi 0, %s69
    %s71 = sphi 0, %s69
    %s72 = sphi 0, %s71
    %s86 = sphi 0, %s72
    %s90 = sphi 0, %s90
    %s92 = sphi 0, %s90
    %s93 = sphi 0, %s92
    %s107 = sphi 0, %s93
    %s111 = sphi 0, %s111
    %s113 = sphi 0, %s111
    %s114 = sphi 0, %s113
    %s128 = sphi 0, %s114
    %s132 = sphi 0, %s132
    %s134 = sphi 0, %s132
    %s135 = sphi 0, %s134
    %s149 = sphi 0, %s135
    %s153 = sphi 0, %s153
    %s155 = sphi 0, %s153
    %s156 = sphi 0, %s155
    %s170 = sphi 0, %s156
    %s174 = sphi 0, %s174
    %s176 = sphi 0, %s174
    %s177 = sphi 0, %s176
    %s191 = sphi 0, %s177
    %s195 = sphi 0, %s195
    %s197 = sphi 0, %s195
    %s198 = sphi 0, %s197
    %s212 = sphi 0, %s198
    %s216 = sphi 0, %s216
    %s218 = sphi 0, %s216
    %s219 = sphi 0, %s218
    %s233 = sphi 0, %s219
    %s237 = sphi 0, %s237
    %s239 = sphi 0, %s237
    %s240 = sphi 0, %s239
    %s254 = sphi 0, %s240
    %s258 = sphi 0, %s258
    %s260 = sphi 0, %s258
    %s261 = sphi 0, %s260
    %s275 = sphi 0, %s261
    %s279 = sphi 0, %s279
    %s281 = sphi 0, %s279
    %s282 = sphi 0, %s281
    %s296 = sphi 0, %s282
    %s300 = sphi 0, %s300
    %s302 = sphi 0, %s300
    %s303 = sphi 0, %s302
    %s317 = sphi 0, %s303
    %s321 = sphi 0, %s321
    %s323 = sphi 0, %s321
    %s324 = sphi 0, %s323
    %s338 = sphi 0, %s324
    %s342 = sphi 0, %s342
    %s344 = sphi 0, %s342
    %s345 = sphi 0, %s344
    %s359 = sphi 0, %s345
    %s363 = sphi 0, %s363
    %s365 = sphi 0, %s363
    %s366 = sphi 0, %s365
    %s380 = sphi 0, %s366
    %s384 = sphi 0, %s384
    %s386 = sphi 0, %s384
    %s387 = sphi 0, %s386
    %s401 = sphi 0, %s387
    %s405 = sphi 0, %s405
    %s407 = sphi 0, %s405
    %s408 = sphi 0, %s407
    %s422 = sphi 0, %s408
    %s426 = sphi 0, %s426
    %s428 = sphi 0, %s426
    %s429 = sphi 0, %s428
    %s443 = sphi 0, %s429
    %s447 = sphi 0, %s447
    %s449 = sphi 0, %s447
    %s450 = sphi 0, %s449
    %s464 = sphi 0, %s450
    %s468 = sphi 0, %s468
    %s470 = sphi 0, %s468
    %s471 = sphi 0, %s470
    %s485 = sphi 0, %s471
    %s489 = sphi 0, %s489
    %s491 = sphi 0, %s489
    %s492 = sphi 0, %s491
    %s506 = sphi 0, %s492
    %s510 = sphi 0, %s510
    %s512 = sphi 0, %s510
    %s513 = sphi 0, %s512
    %s527 = sphi 0, %s513
    %s531 = sphi 0, %s531
    %s533 = sphi 0, %s531
    %s534 = sphi 0, %s533
    %s548 = sphi 0, %s534
    %s552 = sphi 0, %s552
    %s554 = sphi 0, %s552
    %s555 = sphi 0, %s554
    %s569 = sphi 0, %s555
    %s573 = sphi 0, %s573
    %s575 = sphi 0, %s573
    %s576 = sphi 0, %s575
    %s590 = sphi 0, %s576
    %s594 = sphi 0, %s594
    %s596 = sphi 0, %s594
    %s597 = sphi 0, %s596
    %s611 = sphi 0, %s597
    %s617 = sphi 0, %s619
    %s620 = sphi 0, %s617
    %s621 = sphi 0, %s620
    %s637 = sphi 0, %s621
    %s643 = sphi 0, %s645
    %s646 = sphi 0, %s643
    %s647 = sphi 0, %s646
    %s663 = sphi 0, %s647
  $region4: #{_lambda_.3} parent=0 // loop_header_branch
    %38 = sbr.rel (%p36) target = $region8
  $region5: #{_lambda_.3} parent=0 // loop_body
    %s40 = ssub.s32 %s35, 1
    %s41 = ssub.s32 %s35, 2
    %s42 = sadd.s32 %s35, 1
    %s43 = ssub.s32 %s35, %s42
    %p44 = scmp.eq.s32.totalorder %s43, 0
    %s46 = sadd.s32 %s45, 1
    %s47 = scalar_select %p44, %s45, %s46
    %p50 = pneg %p44
    %p51 = scmp.eq.s32.totalorder %s35, 1
    %p52 = por %p50, %p51
    %p53 = scmp.ne.s32.totalorder %s45, %s48
    %p54 = scmp.eq.s32.totalorder %s35, 0
    %p55 = por %p53, %p54
    %p56 = scmp.ne.s32.totalorder %s45, %s48
    %p57 = scmp.eq.s32.totalorder %s40, 1
    %p58 = por %p56, %p57
    %p59 = scmp.ne.s32.totalorder %s48, %s49
    %p60 = scmp.eq.s32.totalorder %s40, 0
    %p61 = por %p59, %p60
    %p62 = scmp.ne.s32.totalorder %s48, %s49
    %p63 = scmp.eq.s32.totalorder %s41, 1
    %p64 = por %p62, %p63
    %p66 = scmp.ne.s32.totalorder %s49, %s65
    %p67 = scmp.eq.s32.totalorder %s41, 0
    %p68 = por %p66, %p67
    %s70 = sadd.s32 %s69, 1
    %p73 = scmp.eq.s32.totalorder %s35, 1
    %p74 = scmp.ne.s32.totalorder %s69, %s71
    %p75 = scmp.eq.s32.totalorder %s35, 0
    %p76 = por %p74, %p75
    %p77 = scmp.ne.s32.totalorder %s69, %s71
    %p78 = scmp.eq.s32.totalorder %s40, 1
    %p79 = por %p77, %p78
    %p80 = scmp.ne.s32.totalorder %s71, %s72
    %p81 = scmp.eq.s32.totalorder %s40, 0
    %p82 = por %p80, %p81
    %p83 = scmp.ne.s32.totalorder %s71, %s72
    %p84 = scmp.eq.s32.totalorder %s41, 1
    %p85 = por %p83, %p84
    %p87 = scmp.ne.s32.totalorder %s72, %s86
    %p88 = scmp.eq.s32.totalorder %s41, 0
    %p89 = por %p87, %p88
    %s91 = sadd.s32 %s90, 1
    %p94 = scmp.eq.s32.totalorder %s35, 1
    %p95 = scmp.ne.s32.totalorder %s90, %s92
    %p96 = scmp.eq.s32.totalorder %s35, 0
    %p97 = por %p95, %p96
    %p98 = scmp.ne.s32.totalorder %s90, %s92
    %p99 = scmp.eq.s32.totalorder %s40, 1
    %p100 = por %p98, %p99
    %p101 = scmp.ne.s32.totalorder %s92, %s93
    %p102 = scmp.eq.s32.totalorder %s40, 0
    %p103 = por %p101, %p102
    %p104 = scmp.ne.s32.totalorder %s92, %s93
    %p105 = scmp.eq.s32.totalorder %s41, 1
    %p106 = por %p104, %p105
    %p108 = scmp.ne.s32.totalorder %s93, %s107
    %p109 = scmp.eq.s32.totalorder %s41, 0
    %p110 = por %p108, %p109
    %s112 = sadd.s32 %s111, 1
    %p115 = scmp.eq.s32.totalorder %s35, 1
    %p116 = scmp.ne.s32.totalorder %s111, %s113
    %p117 = scmp.eq.s32.totalorder %s35, 0
    %p118 = por %p116, %p117
    %p119 = scmp.ne.s32.totalorder %s111, %s113
    %p120 = scmp.eq.s32.totalorder %s40, 1
    %p121 = por %p119, %p120
    %p122 = scmp.ne.s32.totalorder %s113, %s114
    %p123 = scmp.eq.s32.totalorder %s40, 0
    %p124 = por %p122, %p123
    %p125 = scmp.ne.s32.totalorder %s113, %s114
    %p126 = scmp.eq.s32.totalorder %s41, 1
    %p127 = por %p125, %p126
    %p129 = scmp.ne.s32.totalorder %s114, %s128
    %p130 = scmp.eq.s32.totalorder %s41, 0
    %p131 = por %p129, %p130
    %s133 = sadd.s32 %s132, 1
    %p136 = scmp.eq.s32.totalorder %s35, 1
    %p137 = scmp.ne.s32.totalorder %s132, %s134
    %p138 = scmp.eq.s32.totalorder %s35, 0
    %p139 = por %p137, %p138
    %p140 = scmp.ne.s32.totalorder %s132, %s134
    %p141 = scmp.eq.s32.totalorder %s40, 1
    %p142 = por %p140, %p141
    %p143 = scmp.ne.s32.totalorder %s134, %s135
    %p144 = scmp.eq.s32.totalorder %s40, 0
    %p145 = por %p143, %p144
    %p146 = scmp.ne.s32.totalorder %s134, %s135
    %p147 = scmp.eq.s32.totalorder %s41, 1
    %p148 = por %p146, %p147
    %p150 = scmp.ne.s32.totalorder %s135, %s149
    %p151 = scmp.eq.s32.totalorder %s41, 0
    %p152 = por %p150, %p151
    %s154 = sadd.s32 %s153, 1
    %p157 = scmp.eq.s32.totalorder %s35, 1
    %p158 = scmp.ne.s32.totalorder %s153, %s155
    %p159 = scmp.eq.s32.totalorder %s35, 0
    %p160 = por %p158, %p159
    %p161 = scmp.ne.s32.totalorder %s153, %s155
    %p162 = scmp.eq.s32.totalorder %s40, 1
    %p163 = por %p161, %p162
    %p164 = scmp.ne.s32.totalorder %s155, %s156
    %p165 = scmp.eq.s32.totalorder %s40, 0
    %p166 = por %p164, %p165
    %p167 = scmp.ne.s32.totalorder %s155, %s156
    %p168 = scmp.eq.s32.totalorder %s41, 1
    %p169 = por %p167, %p168
    %p171 = scmp.ne.s32.totalorder %s156, %s170
    %p172 = scmp.eq.s32.totalorder %s41, 0
    %p173 = por %p171, %p172
    %s175 = sadd.s32 %s174, 1
    %p178 = scmp.eq.s32.totalorder %s35, 1
    %p179 = scmp.ne.s32.totalorder %s174, %s176
    %p180 = scmp.eq.s32.totalorder %s35, 0
    %p181 = por %p179, %p180
    %p182 = scmp.ne.s32.totalorder %s174, %s176
    %p183 = scmp.eq.s32.totalorder %s40, 1
    %p184 = por %p182, %p183
    %p185 = scmp.ne.s32.totalorder %s176, %s177
    %p186 = scmp.eq.s32.totalorder %s40, 0
    %p187 = por %p185, %p186
    %p188 = scmp.ne.s32.totalorder %s176, %s177
    %p189 = scmp.eq.s32.totalorder %s41, 1
    %p190 = por %p188, %p189
    %p192 = scmp.ne.s32.totalorder %s177, %s191
    %p193 = scmp.eq.s32.totalorder %s41, 0
    %p194 = por %p192, %p193
    %s196 = sadd.s32 %s195, 1
    %p199 = scmp.eq.s32.totalorder %s35, 1
    %p200 = scmp.ne.s32.totalorder %s195, %s197
    %p201 = scmp.eq.s32.totalorder %s35, 0
    %p202 = por %p200, %p201
    %p203 = scmp.ne.s32.totalorder %s195, %s197
    %p204 = scmp.eq.s32.totalorder %s40, 1
    %p205 = por %p203, %p204
    %p206 = scmp.ne.s32.totalorder %s197, %s198
    %p207 = scmp.eq.s32.totalorder %s40, 0
    %p208 = por %p206, %p207
    %p209 = scmp.ne.s32.totalorder %s197, %s198
    %p210 = scmp.eq.s32.totalorder %s41, 1
    %p211 = por %p209, %p210
    %p213 = scmp.ne.s32.totalorder %s198, %s212
    %p214 = scmp.eq.s32.totalorder %s41, 0
    %p215 = por %p213, %p214
    %s217 = sadd.s32 %s216, 1
    %p220 = scmp.eq.s32.totalorder %s35, 1
    %p221 = scmp.ne.s32.totalorder %s216, %s218
    %p222 = scmp.eq.s32.totalorder %s35, 0
    %p223 = por %p221, %p222
    %p224 = scmp.ne.s32.totalorder %s216, %s218
    %p225 = scmp.eq.s32.totalorder %s40, 1
    %p226 = por %p224, %p225
    %p227 = scmp.ne.s32.totalorder %s218, %s219
    %p228 = scmp.eq.s32.totalorder %s40, 0
    %p229 = por %p227, %p228
    %p230 = scmp.ne.s32.totalorder %s218, %s219
    %p231 = scmp.eq.s32.totalorder %s41, 1
    %p232 = por %p230, %p231
    %p234 = scmp.ne.s32.totalorder %s219, %s233
    %p235 = scmp.eq.s32.totalorder %s41, 0
    %p236 = por %p234, %p235
    %s238 = sadd.s32 %s237, 1
    %p241 = scmp.eq.s32.totalorder %s35, 1
    %p242 = scmp.ne.s32.totalorder %s237, %s239
    %p243 = scmp.eq.s32.totalorder %s35, 0
    %p244 = por %p242, %p243
    %p245 = scmp.ne.s32.totalorder %s237, %s239
    %p246 = scmp.eq.s32.totalorder %s40, 1
    %p247 = por %p245, %p246
    %p248 = scmp.ne.s32.totalorder %s239, %s240
    %p249 = scmp.eq.s32.totalorder %s40, 0
    %p250 = por %p248, %p249
    %p251 = scmp.ne.s32.totalorder %s239, %s240
    %p252 = scmp.eq.s32.totalorder %s41, 1
    %p253 = por %p251, %p252
    %p255 = scmp.ne.s32.totalorder %s240, %s254
    %p256 = scmp.eq.s32.totalorder %s41, 0
    %p257 = por %p255, %p256
    %s259 = sadd.s32 %s258, 1
    %p262 = scmp.eq.s32.totalorder %s35, 1
    %p263 = scmp.ne.s32.totalorder %s258, %s260
    %p264 = scmp.eq.s32.totalorder %s35, 0
    %p265 = por %p263, %p264
    %p266 = scmp.ne.s32.totalorder %s258, %s260
    %p267 = scmp.eq.s32.totalorder %s40, 1
    %p268 = por %p266, %p267
    %p269 = scmp.ne.s32.totalorder %s260, %s261
    %p270 = scmp.eq.s32.totalorder %s40, 0
    %p271 = por %p269, %p270
    %p272 = scmp.ne.s32.totalorder %s260, %s261
    %p273 = scmp.eq.s32.totalorder %s41, 1
    %p274 = por %p272, %p273
    %p276 = scmp.ne.s32.totalorder %s261, %s275
    %p277 = scmp.eq.s32.totalorder %s41, 0
    %p278 = por %p276, %p277
    %s280 = sadd.s32 %s279, 1
    %p283 = scmp.eq.s32.totalorder %s35, 1
    %p284 = scmp.ne.s32.totalorder %s279, %s281
    %p285 = scmp.eq.s32.totalorder %s35, 0
    %p286 = por %p284, %p285
    %p287 = scmp.ne.s32.totalorder %s279, %s281
    %p288 = scmp.eq.s32.totalorder %s40, 1
    %p289 = por %p287, %p288
    %p290 = scmp.ne.s32.totalorder %s281, %s282
    %p291 = scmp.eq.s32.totalorder %s40, 0
    %p292 = por %p290, %p291
    %p293 = scmp.ne.s32.totalorder %s281, %s282
    %p294 = scmp.eq.s32.totalorder %s41, 1
    %p295 = por %p293, %p294
    %p297 = scmp.ne.s32.totalorder %s282, %s296
    %p298 = scmp.eq.s32.totalorder %s41, 0
    %p299 = por %p297, %p298
    %s301 = sadd.s32 %s300, 1
    %p304 = scmp.eq.s32.totalorder %s35, 1
    %p305 = scmp.ne.s32.totalorder %s300, %s302
    %p306 = scmp.eq.s32.totalorder %s35, 0
    %p307 = por %p305, %p306
    %p308 = scmp.ne.s32.totalorder %s300, %s302
    %p309 = scmp.eq.s32.totalorder %s40, 1
    %p310 = por %p308, %p309
    %p311 = scmp.ne.s32.totalorder %s302, %s303
    %p312 = scmp.eq.s32.totalorder %s40, 0
    %p313 = por %p311, %p312
    %p314 = scmp.ne.s32.totalorder %s302, %s303
    %p315 = scmp.eq.s32.totalorder %s41, 1
    %p316 = por %p314, %p315
    %p318 = scmp.ne.s32.totalorder %s303, %s317
    %p319 = scmp.eq.s32.totalorder %s41, 0
    %p320 = por %p318, %p319
    %s322 = sadd.s32 %s321, 1
    %p325 = scmp.eq.s32.totalorder %s35, 1
    %p326 = scmp.ne.s32.totalorder %s321, %s323
    %p327 = scmp.eq.s32.totalorder %s35, 0
    %p328 = por %p326, %p327
    %p329 = scmp.ne.s32.totalorder %s321, %s323
    %p330 = scmp.eq.s32.totalorder %s40, 1
    %p331 = por %p329, %p330
    %p332 = scmp.ne.s32.totalorder %s323, %s324
    %p333 = scmp.eq.s32.totalorder %s40, 0
    %p334 = por %p332, %p333
    %p335 = scmp.ne.s32.totalorder %s323, %s324
    %p336 = scmp.eq.s32.totalorder %s41, 1
    %p337 = por %p335, %p336
    %p339 = scmp.ne.s32.totalorder %s324, %s338
    %p340 = scmp.eq.s32.totalorder %s41, 0
    %p341 = por %p339, %p340
    %s343 = sadd.s32 %s342, 1
    %p346 = scmp.eq.s32.totalorder %s35, 1
    %p347 = scmp.ne.s32.totalorder %s342, %s344
    %p348 = scmp.eq.s32.totalorder %s35, 0
    %p349 = por %p347, %p348
    %p350 = scmp.ne.s32.totalorder %s342, %s344
    %p351 = scmp.eq.s32.totalorder %s40, 1
    %p352 = por %p350, %p351
    %p353 = scmp.ne.s32.totalorder %s344, %s345
    %p354 = scmp.eq.s32.totalorder %s40, 0
    %p355 = por %p353, %p354
    %p356 = scmp.ne.s32.totalorder %s344, %s345
    %p357 = scmp.eq.s32.totalorder %s41, 1
    %p358 = por %p356, %p357
    %p360 = scmp.ne.s32.totalorder %s345, %s359
    %p361 = scmp.eq.s32.totalorder %s41, 0
    %p362 = por %p360, %p361
    %s364 = sadd.s32 %s363, 1
    %p367 = scmp.eq.s32.totalorder %s35, 1
    %p368 = scmp.ne.s32.totalorder %s363, %s365
    %p369 = scmp.eq.s32.totalorder %s35, 0
    %p370 = por %p368, %p369
    %p371 = scmp.ne.s32.totalorder %s363, %s365
    %p372 = scmp.eq.s32.totalorder %s40, 1
    %p373 = por %p371, %p372
    %p374 = scmp.ne.s32.totalorder %s365, %s366
    %p375 = scmp.eq.s32.totalorder %s40, 0
    %p376 = por %p374, %p375
    %p377 = scmp.ne.s32.totalorder %s365, %s366
    %p378 = scmp.eq.s32.totalorder %s41, 1
    %p379 = por %p377, %p378
    %p381 = scmp.ne.s32.totalorder %s366, %s380
    %p382 = scmp.eq.s32.totalorder %s41, 0
    %p383 = por %p381, %p382
    %s385 = sadd.s32 %s384, 1
    %p388 = scmp.eq.s32.totalorder %s35, 1
    %p389 = scmp.ne.s32.totalorder %s384, %s386
    %p390 = scmp.eq.s32.totalorder %s35, 0
    %p391 = por %p389, %p390
    %p392 = scmp.ne.s32.totalorder %s384, %s386
    %p393 = scmp.eq.s32.totalorder %s40, 1
    %p394 = por %p392, %p393
    %p395 = scmp.ne.s32.totalorder %s386, %s387
    %p396 = scmp.eq.s32.totalorder %s40, 0
    %p397 = por %p395, %p396
    %p398 = scmp.ne.s32.totalorder %s386, %s387
    %p399 = scmp.eq.s32.totalorder %s41, 1
    %p400 = por %p398, %p399
    %p402 = scmp.ne.s32.totalorder %s387, %s401
    %p403 = scmp.eq.s32.totalorder %s41, 0
    %p404 = por %p402, %p403
    %s406 = sadd.s32 %s405, 1
    %p409 = scmp.eq.s32.totalorder %s35, 1
    %p410 = scmp.ne.s32.totalorder %s405, %s407
    %p411 = scmp.eq.s32.totalorder %s35, 0
    %p412 = por %p410, %p411
    %p413 = scmp.ne.s32.totalorder %s405, %s407
    %p414 = scmp.eq.s32.totalorder %s40, 1
    %p415 = por %p413, %p414
    %p416 = scmp.ne.s32.totalorder %s407, %s408
    %p417 = scmp.eq.s32.totalorder %s40, 0
    %p418 = por %p416, %p417
    %p419 = scmp.ne.s32.totalorder %s407, %s408
    %p420 = scmp.eq.s32.totalorder %s41, 1
    %p421 = por %p419, %p420
    %p423 = scmp.ne.s32.totalorder %s408, %s422
    %p424 = scmp.eq.s32.totalorder %s41, 0
    %p425 = por %p423, %p424
    %s427 = sadd.s32 %s426, 1
    %p430 = scmp.eq.s32.totalorder %s35, 1
    %p431 = scmp.ne.s32.totalorder %s426, %s428
    %p432 = scmp.eq.s32.totalorder %s35, 0
    %p433 = por %p431, %p432
    %p434 = scmp.ne.s32.totalorder %s426, %s428
    %p435 = scmp.eq.s32.totalorder %s40, 1
    %p436 = por %p434, %p435
    %p437 = scmp.ne.s32.totalorder %s428, %s429
    %p438 = scmp.eq.s32.totalorder %s40, 0
    %p439 = por %p437, %p438
    %p440 = scmp.ne.s32.totalorder %s428, %s429
    %p441 = scmp.eq.s32.totalorder %s41, 1
    %p442 = por %p440, %p441
    %p444 = scmp.ne.s32.totalorder %s429, %s443
    %p445 = scmp.eq.s32.totalorder %s41, 0
    %p446 = por %p444, %p445
    %s448 = sadd.s32 %s447, 1
    %p451 = scmp.eq.s32.totalorder %s35, 1
    %p452 = scmp.ne.s32.totalorder %s447, %s449
    %p453 = scmp.eq.s32.totalorder %s35, 0
    %p454 = por %p452, %p453
    %p455 = scmp.ne.s32.totalorder %s447, %s449
    %p456 = scmp.eq.s32.totalorder %s40, 1
    %p457 = por %p455, %p456
    %p458 = scmp.ne.s32.totalorder %s449, %s450
    %p459 = scmp.eq.s32.totalorder %s40, 0
    %p460 = por %p458, %p459
    %p461 = scmp.ne.s32.totalorder %s449, %s450
    %p462 = scmp.eq.s32.totalorder %s41, 1
    %p463 = por %p461, %p462
    %p465 = scmp.ne.s32.totalorder %s450, %s464
    %p466 = scmp.eq.s32.totalorder %s41, 0
    %p467 = por %p465, %p466
    %s469 = sadd.s32 %s468, 1
    %p472 = scmp.eq.s32.totalorder %s35, 1
    %p473 = scmp.ne.s32.totalorder %s468, %s470
    %p474 = scmp.eq.s32.totalorder %s35, 0
    %p475 = por %p473, %p474
    %p476 = scmp.ne.s32.totalorder %s468, %s470
    %p477 = scmp.eq.s32.totalorder %s40, 1
    %p478 = por %p476, %p477
    %p479 = scmp.ne.s32.totalorder %s470, %s471
    %p480 = scmp.eq.s32.totalorder %s40, 0
    %p481 = por %p479, %p480
    %p482 = scmp.ne.s32.totalorder %s470, %s471
    %p483 = scmp.eq.s32.totalorder %s41, 1
    %p484 = por %p482, %p483
    %p486 = scmp.ne.s32.totalorder %s471, %s485
    %p487 = scmp.eq.s32.totalorder %s41, 0
    %p488 = por %p486, %p487
    %s490 = sadd.s32 %s489, 1
    %p493 = scmp.eq.s32.totalorder %s35, 1
    %p494 = scmp.ne.s32.totalorder %s489, %s491
    %p495 = scmp.eq.s32.totalorder %s35, 0
    %p496 = por %p494, %p495
    %p497 = scmp.ne.s32.totalorder %s489, %s491
    %p498 = scmp.eq.s32.totalorder %s40, 1
    %p499 = por %p497, %p498
    %p500 = scmp.ne.s32.totalorder %s491, %s492
    %p501 = scmp.eq.s32.totalorder %s40, 0
    %p502 = por %p500, %p501
    %p503 = scmp.ne.s32.totalorder %s491, %s492
    %p504 = scmp.eq.s32.totalorder %s41, 1
    %p505 = por %p503, %p504
    %p507 = scmp.ne.s32.totalorder %s492, %s506
    %p508 = scmp.eq.s32.totalorder %s41, 0
    %p509 = por %p507, %p508
    %s511 = sadd.s32 %s510, 1
    %p514 = scmp.eq.s32.totalorder %s35, 1
    %p515 = scmp.ne.s32.totalorder %s510, %s512
    %p516 = scmp.eq.s32.totalorder %s35, 0
    %p517 = por %p515, %p516
    %p518 = scmp.ne.s32.totalorder %s510, %s512
    %p519 = scmp.eq.s32.totalorder %s40, 1
    %p520 = por %p518, %p519
    %p521 = scmp.ne.s32.totalorder %s512, %s513
    %p522 = scmp.eq.s32.totalorder %s40, 0
    %p523 = por %p521, %p522
    %p524 = scmp.ne.s32.totalorder %s512, %s513
    %p525 = scmp.eq.s32.totalorder %s41, 1
    %p526 = por %p524, %p525
    %p528 = scmp.ne.s32.totalorder %s513, %s527
    %p529 = scmp.eq.s32.totalorder %s41, 0
    %p530 = por %p528, %p529
    %s532 = sadd.s32 %s531, 1
    %p535 = scmp.eq.s32.totalorder %s35, 1
    %p536 = scmp.ne.s32.totalorder %s531, %s533
    %p537 = scmp.eq.s32.totalorder %s35, 0
    %p538 = por %p536, %p537
    %p539 = scmp.ne.s32.totalorder %s531, %s533
    %p540 = scmp.eq.s32.totalorder %s40, 1
    %p541 = por %p539, %p540
    %p542 = scmp.ne.s32.totalorder %s533, %s534
    %p543 = scmp.eq.s32.totalorder %s40, 0
    %p544 = por %p542, %p543
    %p545 = scmp.ne.s32.totalorder %s533, %s534
    %p546 = scmp.eq.s32.totalorder %s41, 1
    %p547 = por %p545, %p546
    %p549 = scmp.ne.s32.totalorder %s534, %s548
    %p550 = scmp.eq.s32.totalorder %s41, 0
    %p551 = por %p549, %p550
    %s553 = sadd.s32 %s552, 1
    %p556 = scmp.eq.s32.totalorder %s35, 1
    %p557 = scmp.ne.s32.totalorder %s552, %s554
    %p558 = scmp.eq.s32.totalorder %s35, 0
    %p559 = por %p557, %p558
    %p560 = scmp.ne.s32.totalorder %s552, %s554
    %p561 = scmp.eq.s32.totalorder %s40, 1
    %p562 = por %p560, %p561
    %p563 = scmp.ne.s32.totalorder %s554, %s555
    %p564 = scmp.eq.s32.totalorder %s40, 0
    %p565 = por %p563, %p564
    %p566 = scmp.ne.s32.totalorder %s554, %s555
    %p567 = scmp.eq.s32.totalorder %s41, 1
    %p568 = por %p566, %p567
    %p570 = scmp.ne.s32.totalorder %s555, %s569
    %p571 = scmp.eq.s32.totalorder %s41, 0
    %p572 = por %p570, %p571
    %s574 = sadd.s32 %s573, 1
    %p577 = scmp.eq.s32.totalorder %s35, 1
    %p578 = scmp.ne.s32.totalorder %s573, %s575
    %p579 = scmp.eq.s32.totalorder %s35, 0
    %p580 = por %p578, %p579
    %p581 = scmp.ne.s32.totalorder %s573, %s575
    %p582 = scmp.eq.s32.totalorder %s40, 1
    %p583 = por %p581, %p582
    %p584 = scmp.ne.s32.totalorder %s575, %s576
    %p585 = scmp.eq.s32.totalorder %s40, 0
    %p586 = por %p584, %p585
    %p587 = scmp.ne.s32.totalorder %s575, %s576
    %p588 = scmp.eq.s32.totalorder %s41, 1
    %p589 = por %p587, %p588
    %p591 = scmp.ne.s32.totalorder %s576, %s590
    %p592 = scmp.eq.s32.totalorder %s41, 0
    %p593 = por %p591, %p592
    %s595 = sadd.s32 %s594, 1
    %p598 = scmp.eq.s32.totalorder %s35, 1
    %p599 = scmp.ne.s32.totalorder %s594, %s596
    %p600 = scmp.eq.s32.totalorder %s35, 0
    %p601 = por %p599, %p600
    %p602 = scmp.ne.s32.totalorder %s594, %s596
    %p603 = scmp.eq.s32.totalorder %s40, 1
    %p604 = por %p602, %p603
    %p605 = scmp.ne.s32.totalorder %s596, %s597
    %p606 = scmp.eq.s32.totalorder %s40, 0
    %p607 = por %p605, %p606
    %p608 = scmp.ne.s32.totalorder %s596, %s597
    %p609 = scmp.eq.s32.totalorder %s41, 1
    %p610 = por %p608, %p609
    %p612 = scmp.ne.s32.totalorder %s597, %s611
    %p613 = scmp.eq.s32.totalorder %s41, 0
    %p614 = por %p612, %p613
    %s615 = ssub.s32 %s35, %s42
    %p616 = scmp.eq.s32.totalorder %s615, 0
    %s618 = sadd.s32 %s617, 1
    %s619 = scalar_select %p616, %s617, %s618
    %p622 = pneg %p616
    %p623 = scmp.eq.s32.totalorder %s35, 1
    %p624 = por %p622, %p623
    %p625 = scmp.ne.s32.totalorder %s617, %s620
    %p626 = scmp.eq.s32.totalorder %s35, 0
    %p627 = por %p625, %p626
    %p628 = scmp.ne.s32.totalorder %s617, %s620
    %p629 = scmp.eq.s32.totalorder %s40, 1
    %p630 = por %p628, %p629
    %p631 = scmp.ne.s32.totalorder %s620, %s621
    %p632 = scmp.eq.s32.totalorder %s40, 0
    %p633 = por %p631, %p632
    %p634 = scmp.ne.s32.totalorder %s620, %s621
    %p635 = scmp.eq.s32.totalorder %s41, 1
    %p636 = por %p634, %p635
    %p638 = scmp.ne.s32.totalorder %s621, %s637
    %p639 = scmp.eq.s32.totalorder %s41, 0
    %p640 = por %p638, %p639
    %s641 = ssub.s32 %s35, %s42
    %p642 = scmp.eq.s32.totalorder %s641, 0
    %s644 = sadd.s32 %s643, 1
    %s645 = scalar_select %p642, %s643, %s644
    %p648 = pneg %p642
    %p649 = scmp.eq.s32.totalorder %s35, 1
    %p650 = por %p648, %p649
    %p651 = scmp.ne.s32.totalorder %s643, %s646
    %p652 = scmp.eq.s32.totalorder %s35, 0
    %p653 = por %p651, %p652
    %p654 = scmp.ne.s32.totalorder %s643, %s646
    %p655 = scmp.eq.s32.totalorder %s40, 1
    %p656 = por %p654, %p655
    %p657 = scmp.ne.s32.totalorder %s646, %s647
    %p658 = scmp.eq.s32.totalorder %s40, 0
    %p659 = por %p657, %p658
    %p660 = scmp.ne.s32.totalorder %s646, %s647
    %p661 = scmp.eq.s32.totalorder %s41, 1
    %p662 = por %p660, %p661
    %p664 = scmp.ne.s32.totalorder %s647, %s663
    %p665 = scmp.eq.s32.totalorder %s41, 0
    %p666 = por %p664, %p665
    %p667 = scmp.le.s32.totalorder 1, %s35
    %p668 = scmp.lt.s32.totalorder %s35, 3
    %p669 = pnand %p667, %p668
    %p670 = pneg %p669
    // Predicated region
    $region9: #{_lambda_.3} parent=5 // pred_check
      _
    $region10: #{_lambda_.3} parent=5 // pred_check_branch
      %672 = sbr.rel (%p669) target = $region12
    $region11: #{_lambda_.3} parent=5 // pred_region
      %s673 = ssub.s32 %s35, 1
      // Predicated region
      $region13: #{_lambda_.3} parent=11 // pred_check
        %p674 = pneg %p82
      $region14: #{_lambda_.3} parent=11 // pred_check_branch
        %676 = sbr.rel (%p674) target = $region16
      $region15: #{_lambda_.3} parent=11 // pred_region
        _
      $region16: #{_lambda_.3} parent=11 // pred_fallthru
        _
      // Predicated region
      $region17: #{_lambda_.3} parent=11 // pred_check
        %p677 = pneg %p103
      $region18: #{_lambda_.3} parent=11 // pred_check_branch
        %679 = sbr.rel (%p677) target = $region20
      $region19: #{_lambda_.3} parent=11 // pred_region
        _
      $region20: #{_lambda_.3} parent=11 // pred_fallthru
        _
      // Predicated region
      $region21: #{_lambda_.3} parent=11 // pred_check
        %p680 = pneg %p124
      $region22: #{_lambda_.3} parent=11 // pred_check_branch
        %682 = sbr.rel (%p680) target = $region24
      $region23: #{_lambda_.3} parent=11 // pred_region
        _
      $region24: #{_lambda_.3} parent=11 // pred_fallthru
        _
      // Predicated region
      $region25: #{_lambda_.3} parent=11 // pred_check
        %p683 = pneg %p145
      $region26: #{_lambda_.3} parent=11 // pred_check_branch
        %685 = sbr.rel (%p683) target = $region28
      $region27: #{_lambda_.3} parent=11 // pred_region
        _
      $region28: #{_lambda_.3} parent=11 // pred_fallthru
        _
      // Predicated region
      $region29: #{_lambda_.3} parent=11 // pred_check
        %p686 = pneg %p166
      $region30: #{_lambda_.3} parent=11 // pred_check_branch
        %688 = sbr.rel (%p686) target = $region32
      $region31: #{_lambda_.3} parent=11 // pred_region
        _
      $region32: #{_lambda_.3} parent=11 // pred_fallthru
        _
      // Predicated region
      $region33: #{_lambda_.3} parent=11 // pred_check
        %p689 = pneg %p187
      $region34: #{_lambda_.3} parent=11 // pred_check_branch
        %691 = sbr.rel (%p689) target = $region36
      $region35: #{_lambda_.3} parent=11 // pred_region
        _
      $region36: #{_lambda_.3} parent=11 // pred_fallthru
        _
      // Predicated region
      $region37: #{_lambda_.3} parent=11 // pred_check
        %p692 = pneg %p208
      $region38: #{_lambda_.3} parent=11 // pred_check_branch
        %694 = sbr.rel (%p692) target = $region40
      $region39: #{_lambda_.3} parent=11 // pred_region
        _
      $region40: #{_lambda_.3} parent=11 // pred_fallthru
        _
      // Predicated region
      $region41: #{_lambda_.3} parent=11 // pred_check
        %p695 = pneg %p229
      $region42: #{_lambda_.3} parent=11 // pred_check_branch
        %697 = sbr.rel (%p695) target = $region44
      $region43: #{_lambda_.3} parent=11 // pred_region
        _
      $region44: #{_lambda_.3} parent=11 // pred_fallthru
        _
      // Predicated region
      $region45: #{_lambda_.3} parent=11 // pred_check
        %p698 = pneg %p250
      $region46: #{_lambda_.3} parent=11 // pred_check_branch
        %700 = sbr.rel (%p698) target = $region48
      $region47: #{_lambda_.3} parent=11 // pred_region
        _
      $region48: #{_lambda_.3} parent=11 // pred_fallthru
        _
      // Predicated region
      $region49: #{_lambda_.3} parent=11 // pred_check
        %p701 = pneg %p271
      $region50: #{_lambda_.3} parent=11 // pred_check_branch
        %703 = sbr.rel (%p701) target = $region52
      $region51: #{_lambda_.3} parent=11 // pred_region
        _
      $region52: #{_lambda_.3} parent=11 // pred_fallthru
        _
      // Predicated region
      $region53: #{_lambda_.3} parent=11 // pred_check
        %p704 = pneg %p292
      $region54: #{_lambda_.3} parent=11 // pred_check_branch
        %706 = sbr.rel (%p704) target = $region56
      $region55: #{_lambda_.3} parent=11 // pred_region
        _
      $region56: #{_lambda_.3} parent=11 // pred_fallthru
        _
      // Predicated region
      $region57: #{_lambda_.3} parent=11 // pred_check
        %p707 = pneg %p313
      $region58: #{_lambda_.3} parent=11 // pred_check_branch
        %709 = sbr.rel (%p707) target = $region60
      $region59: #{_lambda_.3} parent=11 // pred_region
        _
      $region60: #{_lambda_.3} parent=11 // pred_fallthru
        _
      // Predicated region
      $region61: #{_lambda_.3} parent=11 // pred_check
        %p710 = pneg %p334
      $region62: #{_lambda_.3} parent=11 // pred_check_branch
        %712 = sbr.rel (%p710) target = $region64
      $region63: #{_lambda_.3} parent=11 // pred_region
        _
      $region64: #{_lambda_.3} parent=11 // pred_fallthru
        _
      // Predicated region
      $region65: #{_lambda_.3} parent=11 // pred_check
        %p713 = pneg %p355
      $region66: #{_lambda_.3} parent=11 // pred_check_branch
        %715 = sbr.rel (%p713) target = $region68
      $region67: #{_lambda_.3} parent=11 // pred_region
        _
      $region68: #{_lambda_.3} parent=11 // pred_fallthru
        _
      // Predicated region
      $region69: #{_lambda_.3} parent=11 // pred_check
        %p716 = pneg %p376
      $region70: #{_lambda_.3} parent=11 // pred_check_branch
        %718 = sbr.rel (%p716) target = $region72
      $region71: #{_lambda_.3} parent=11 // pred_region
        _
      $region72: #{_lambda_.3} parent=11 // pred_fallthru
        _
      // Predicated region
      $region73: #{_lambda_.3} parent=11 // pred_check
        %p719 = pneg %p397
      $region74: #{_lambda_.3} parent=11 // pred_check_branch
        %721 = sbr.rel (%p719) target = $region76
      $region75: #{_lambda_.3} parent=11 // pred_region
        _
      $region76: #{_lambda_.3} parent=11 // pred_fallthru
        _
      // Predicated region
      $region77: #{_lambda_.3} parent=11 // pred_check
        %p722 = pneg %p418
      $region78: #{_lambda_.3} parent=11 // pred_check_branch
        %724 = sbr.rel (%p722) target = $region80
      $region79: #{_lambda_.3} parent=11 // pred_region
        _
      $region80: #{_lambda_.3} parent=11 // pred_fallthru
        _
      // Predicated region
      $region81: #{_lambda_.3} parent=11 // pred_check
        %p725 = pneg %p439
      $region82: #{_lambda_.3} parent=11 // pred_check_branch
        %727 = sbr.rel (%p725) target = $region84
      $region83: #{_lambda_.3} parent=11 // pred_region
        _
      $region84: #{_lambda_.3} parent=11 // pred_fallthru
        _
      // Predicated region
      $region85: #{_lambda_.3} parent=11 // pred_check
        %p728 = pneg %p460
      $region86: #{_lambda_.3} parent=11 // pred_check_branch
        %730 = sbr.rel (%p728) target = $region88
      $region87: #{_lambda_.3} parent=11 // pred_region
        _
      $region88: #{_lambda_.3} parent=11 // pred_fallthru
        _
      // Predicated region
      $region89: #{_lambda_.3} parent=11 // pred_check
        %p731 = pneg %p481
      $region90: #{_lambda_.3} parent=11 // pred_check_branch
        %733 = sbr.rel (%p731) target = $region92
      $region91: #{_lambda_.3} parent=11 // pred_region
        _
      $region92: #{_lambda_.3} parent=11 // pred_fallthru
        _
      // Predicated region
      $region93: #{_lambda_.3} parent=11 // pred_check
        %p734 = pneg %p502
      $region94: #{_lambda_.3} parent=11 // pred_check_branch
        %736 = sbr.rel (%p734) target = $region96
      $region95: #{_lambda_.3} parent=11 // pred_region
        _
      $region96: #{_lambda_.3} parent=11 // pred_fallthru
        _
      // Predicated region
      $region97: #{_lambda_.3} parent=11 // pred_check
        %p737 = pneg %p523
      $region98: #{_lambda_.3} parent=11 // pred_check_branch
        %739 = sbr.rel (%p737) target = $region100
      $region99: #{_lambda_.3} parent=11 // pred_region
        _
      $region100: #{_lambda_.3} parent=11 // pred_fallthru
        _
      // Predicated region
      $region101: #{_lambda_.3} parent=11 // pred_check
        %p740 = pneg %p544
      $region102: #{_lambda_.3} parent=11 // pred_check_branch
        %742 = sbr.rel (%p740) target = $region104
      $region103: #{_lambda_.3} parent=11 // pred_region
        _
      $region104: #{_lambda_.3} parent=11 // pred_fallthru
        _
      // Predicated region
      $region105: #{_lambda_.3} parent=11 // pred_check
        %p743 = pneg %p565
      $region106: #{_lambda_.3} parent=11 // pred_check_branch
        %745 = sbr.rel (%p743) target = $region108
      $region107: #{_lambda_.3} parent=11 // pred_region
        _
      $region108: #{_lambda_.3} parent=11 // pred_fallthru
        _
      // Predicated region
      $region109: #{_lambda_.3} parent=11 // pred_check
        %p746 = pneg %p586
      $region110: #{_lambda_.3} parent=11 // pred_check_branch
        %748 = sbr.rel (%p746) target = $region112
      $region111: #{_lambda_.3} parent=11 // pred_region
        _
      $region112: #{_lambda_.3} parent=11 // pred_fallthru
        _
      // Predicated region
      $region113: #{_lambda_.3} parent=11 // pred_check
        %p749 = pneg %p607
      $region114: #{_lambda_.3} parent=11 // pred_check_branch
        %751 = sbr.rel (%p749) target = $region116
      $region115: #{_lambda_.3} parent=11 // pred_region
        _
      $region116: #{_lambda_.3} parent=11 // pred_fallthru
        _
    $region12: #{_lambda_.3} parent=5 // pred_fallthru
      _
    %p752 = scmp.lt.s32.totalorder %s35, 2
    // Predicated region
    $region117: #{_lambda_.3} parent=5 // pred_check
      %p753 = pneg %p752
    $region118: #{_lambda_.3} parent=5 // pred_check_branch
      %755 = sbr.rel (%p753) target = $region120
    $region119: #{_lambda_.3} parent=5 // pred_region
      // Predicated region
      $region121: #{_lambda_.3} parent=119 // pred_check
        %p756 = pneg %p55
      $region122: #{_lambda_.3} parent=119 // pred_check_branch
        %758 = sbr.rel (%p756) target = $region124
      $region123: #{_lambda_.3} parent=119 // pred_region
        %p759 = scmp.lt.s32.totalorder %s35, 1
        %s760 = scalar_select %p759, %s35, 1
        %s761 = smul.addr %s760, 4
        %s762 = smul.addr %s761, 4
        %s763 = scalar_lea.vmem %s0, %s762
      $region124: #{_lambda_.3} parent=119 // pred_fallthru
        _
    $region120: #{_lambda_.3} parent=5 // pred_fallthru
      _
    %p764 = scmp.le.s32.totalorder 1, %s35
    %p765 = scmp.lt.s32.totalorder %s35, 3
    %p766 = pnand %p764, %p765
    %p767 = pneg %p766
    // Predicated region
    $region125: #{_lambda_.3} parent=5 // pred_check
      _
    $region126: #{_lambda_.3} parent=5 // pred_check_branch
      %769 = sbr.rel (%p766) target = $region128
    $region127: #{_lambda_.3} parent=5 // pred_region
      %s770 = ssub.s32 %s35, 1
      %p771 = scmp.lt.s32.totalorder %s40, 1
      %s772 = scalar_select %p771, %s40, 1
      %s773 = smul.addr %s772, 4
      %s774 = smul.addr %s773, 4
      %s775 = scalar_lea.vmem %s0, %s774
      %p776 = pneg %p61
      %p777 = pneg %p58
      %p778 = pneg %p82
      %p779 = pneg %p79
      %p780 = pneg %p103
      %p781 = pneg %p100
      %p782 = pneg %p124
      %p783 = pneg %p121
      %p784 = pneg %p145
      %p785 = pneg %p142
      %p786 = pneg %p166
      %p787 = pneg %p163
      %p788 = pneg %p187
      %p789 = pneg %p184
      %p790 = pneg %p208
      %p791 = pneg %p205
      %p792 = pneg %p229
      %p793 = pneg %p226
      %p794 = pneg %p250
      %p795 = pneg %p247
      %p796 = pneg %p271
      %p797 = pneg %p268
      %p798 = pneg %p292
      %p799 = pneg %p289
      %p800 = pneg %p313
      %p801 = pneg %p310
      %p802 = pneg %p334
      %p803 = pneg %p331
      %p804 = pneg %p355
      %p805 = pneg %p352
      %p806 = pneg %p376
      %p807 = pneg %p373
      %p808 = pneg %p397
      %p809 = pneg %p394
      %p810 = pneg %p418
      %p811 = pneg %p415
      %p812 = pneg %p439
      %p813 = pneg %p436
      %p814 = pneg %p460
      %p815 = pneg %p457
      %p816 = pneg %p481
      %p817 = pneg %p478
      %p818 = pneg %p502
      %p819 = pneg %p499
      %p820 = pneg %p523
      %p821 = pneg %p520
      %p822 = pneg %p544
      %p823 = pneg %p541
      %p824 = pneg %p565
      %p825 = pneg %p562
      %p826 = pneg %p586
      %p827 = pneg %p583
      %p828 = pneg %p607
      %p829 = pneg %p604
      %p830 = pneg %p633
      %p831 = pneg %p630
      %p832 = scmp.lt.s32.totalorder %s40, 1
      %s833 = scalar_select %p832, %s40, 1
      %s834 = scalar_lea.vmem %s27, %s833
      %p835 = pneg %p659
      %p836 = pneg %p656
      %p837 = scmp.lt.s32.totalorder %s40, 1
      %s838 = scalar_select %p837, %s40, 1
      %s839 = smul.addr %s838, 4
      %s840 = scalar_lea.vmem %s28, %s839
      %p841 = scmp.lt.s32.totalorder %s40, 1
      %s842 = scalar_select %p841, %s40, 1
      %s843 = smul.addr %s842, 4
      %s844 = smul.addr %s843, 4
      %s845 = scalar_lea.vmem %s0, %s844
      %p846 = scmp.lt.s32.totalorder %s40, 1
      %s847 = scalar_select %p846, %s40, 1
      %s848 = scalar_lea.vmem %s27, %s847
      %p849 = scmp.lt.s32.totalorder %s40, 1
      %s850 = scalar_select %p849, %s40, 1
      %s851 = smul.addr %s850, 4
      %s852 = scalar_lea.vmem %s28, %s851
      %v854 = vld [vmem:[%s845] sm:$0xf]
      %v855 = vld [vmem:[%s845 + $0x4] sm:$0xf]
      %v856 = vld [vmem:[%s845 + $0x8] sm:$0xf]
      %v857 = vld [vmem:[%s845 + $0xc] sm:$0xf]
      %vm858 = vcmask 125952
      %v859 = vsel %vm858, %v854, 0.0
      %v860 = vsel %vm858, %v855, 0.0
      %v861 = vadd.f32 %v859, %v860
      %v862 = vsel %vm858, %v856, 0.0
      %v863 = vadd.f32 %v861, %v862
      %v864 = vsel %vm858, %v857, 0.0
      %v865 = vadd.f32 %v863, %v864
      %866 = vadd.xlane.f32.xlu0 %v865
      %v867 = vpop.xlane.xlu0 %866
      %v868 = vrot.slane %v867, 4
      %v869 = vadd.f32 %v867, %v868
      %v870 = vrot.slane %v869, 2
      %v871 = vadd.f32 %v869, %v870
      %v872 = vrot.slane %v871, 1
      %v873 = vadd.f32 %v871, %v872
      %s874 = vtos %v873
      %v875 = vstv %s874
      %v876 = vrcp.pop 256.0
      %v877 = vmul.f32 %v875, %v876
      %v878 = vsub.f32 %v854, %v877
      %v879 = vsub.f32 %v855, %v877
      %v880 = vsub.f32 %v856, %v877
      %v881 = vsub.f32 %v857, %v877
      %v882 = vmul.f32 %v878, %v878
      %v883 = vmul.f32 %v879, %v879
      %v884 = vmul.f32 %v880, %v880
      %v885 = vmul.f32 %v881, %v881
      %v886 = vsel %vm858, %v882, 0.0
      %v887 = vsel %vm858, %v883, 0.0
      %v888 = vadd.f32 %v886, %v887
      %v889 = vsel %vm858, %v884, 0.0
      %v890 = vadd.f32 %v888, %v889
      %v891 = vsel %vm858, %v885, 0.0
      %v892 = vadd.f32 %v890, %v891
      %893 = vadd.xlane.f32.xlu0 %v892
      %v894 = vpop.xlane.xlu0 %893
      %v895 = vrot.slane %v894, 4
      %v896 = vadd.f32 %v894, %v895
      %v897 = vrot.slane %v896, 2
      %v898 = vadd.f32 %v896, %v897
      %v899 = vrot.slane %v898, 1
      %v900 = vadd.f32 %v898, %v899
      %s901 = vtos %v900
      %v902 = vstv %s901
      %v903 = vmul.f32 %v902, %v876
      %v904 = vadd.f32 %v903, 1e-05
      %v905 = vrsqrt.pop %v904
      %v906 = vmul.f32 %v878, %v905
      %v907 = vmul.f32 %v879, %v905
      %v908 = vmul.f32 %v880, %v905
      %v909 = vmul.f32 %v881, %v905
      %v910 = vld [vmem:[%s1] sm:$0xf]
      %v911 = vld [vmem:[%s1 + $0x4] sm:$0xf]
      %v912 = vld [vmem:[%s1 + $0x8] sm:$0xf]
      %v913 = vld [vmem:[%s1 + $0xc] sm:$0xf]
      %v914 = vmul.f32 %v906, %v910
      %v915 = vmul.f32 %v907, %v911
      %v916 = vmul.f32 %v908, %v912
      %v917 = vmul.f32 %v909, %v913
      %v918 = vld [vmem:[%s2] sm:$0xf]
      %v919 = vld [vmem:[%s2 + $0x4] sm:$0xf]
      %v920 = vld [vmem:[%s2 + $0x8] sm:$0xf]
      %v921 = vld [vmem:[%s2 + $0xc] sm:$0xf]
      %v922 = vadd.f32 %v914, %v918
      %v923 = vadd.f32 %v915, %v919
      %v924 = vadd.f32 %v916, %v920
      %v925 = vadd.f32 %v917, %v921
      %v926 = vpack.c.bf16 %v922, %v922
      %v927 = vpack.c.bf16 %v923, %v923
      %v928 = vpack.c.bf16 %v924, %v924
      %v929 = vpack.c.bf16 %v925, %v925
      %v931 = vshrl.u32 0, 16
      %v933 = vrot.slane %v931, 7
      %v934 = vshll.u32 0, 16
      %v936 = vor.u32 %v933, %v934
      %v938 = vshrl.u32 %v926, 16
      %v940 = vrot.slane %v938, 7
      %v941 = vshll.u32 %v926, 16
      %v943 = vor.u32 %v940, %v941
      %v945 = vshrl.u32 %v927, 16
      %v947 = vrot.slane %v945, 7
      %v948 = vshll.u32 %v927, 16
      %v950 = vor.u32 %v947, %v948
      %v952 = vshrl.u32 %v928, 16
      %v954 = vrot.slane %v952, 7
      %v955 = vshll.u32 %v928, 16
      %v957 = vor.u32 %v954, %v955
      %v959 = vshrl.u32 %v929, 16
      %v961 = vrot.slane %v959, 7
      %v962 = vshll.u32 %v929, 16
      %v964 = vor.u32 %v961, %v962
      %vm970 = vcmask 1040384
      %vm971 = vsmask.f32 256
      %vm972 = vmand %vm970, %vm971
      %v973 = vsel %vm972, 0, %v936
      %v974 = vsel %vm972, 0, %v943
      %v975 = vsel %vm972, 0, %v950
      %v976 = vsel %vm972, 0, %v957
      %v977 = vsel %vm972, 0, %v964
      %vm978 = vcmask 1042432
      %vm979 = vsmask.f32 2304
      %vm980 = vmand %vm978, %vm979
      %v981 = vsel %vm980, %v973, 0
      %v982 = vsel %vm980, %v974, 0
      %v983 = vsel %vm980, %v975, 0
      %v984 = vsel %vm980, %v976, 0
      %v985 = vsel %vm980, %v977, 0
      %v987 = vshrl.u32 %v981, 16
      %v989 = vshll.u32 %v981, 16
      %v991 = vrot.slane %v989, 1
      %v992 = vor.u32 %v987, %v991
      %v994 = vshrl.u32 %v982, 16
      %v996 = vshll.u32 %v982, 16
      %v998 = vrot.slane %v996, 1
      %v999 = vor.u32 %v994, %v998
      %v1001 = vshrl.u32 %v983, 16
      %v1003 = vshll.u32 %v983, 16
      %v1005 = vrot.slane %v1003, 1
      %v1006 = vor.u32 %v1001, %v1005
      %v1008 = vshrl.u32 %v984, 16
      %v1010 = vshll.u32 %v984, 16
      %v1012 = vrot.slane %v1010, 1
      %v1013 = vor.u32 %v1008, %v1012
      %1014 = vrot.lane.b32.xlu0 %v992, 8
      %v1015 = vpop.permute.xlu0 %1014
      %1016 = vrot.lane.b32.xlu0 %v999, 8
      %v1017 = vpop.permute.xlu0 %1016
      %1018 = vrot.lane.b32.xlu0 %v1006, 8
      %v1019 = vpop.permute.xlu0 %1018
      %1020 = vrot.lane.b32.xlu0 %v1013, 8
      %v1021 = vpop.permute.xlu0 %1020
      %v1026 = vrot.slane %v981, 1
      %v1027 = vrot.slane %v982, 1
      %v1028 = vrot.slane %v983, 1
      %v1029 = vrot.slane %v984, 1
      %1030 = vrot.lane.b32.xlu0 %v1026, 16
      %v1031 = vpop.permute.xlu0 %1030
      %1032 = vrot.lane.b32.xlu0 %v1027, 16
      %v1033 = vpop.permute.xlu0 %1032
      %1034 = vrot.lane.b32.xlu0 %v1028, 16
      %v1035 = vpop.permute.xlu0 %1034
      %1036 = vrot.lane.b32.xlu0 %v1029, 16
      %v1037 = vpop.permute.xlu0 %1036
      %1039 = vrot.lane.b32.xlu0 %v982, 24
      %v1040 = vpop.permute.xlu0 %1039
      %1041 = vrot.lane.b32.xlu0 %v983, 24
      %v1042 = vpop.permute.xlu0 %1041
      %1043 = vrot.lane.b32.xlu0 %v984, 24
      %v1044 = vpop.permute.xlu0 %1043
      %1045 = vrot.lane.b32.xlu0 %v985, 24
      %v1046 = vpop.permute.xlu0 %1045
      %v1048 = vshrl.u32 %v985, 16
      %v1050 = vshll.u32 %v985, 16
      %v1052 = vrot.slane %v1050, 1
      %v1053 = vor.u32 %v1048, %v1052
      %1054 = vrot.lane.b32.xlu0 %v999, 32
      %v1055 = vpop.permute.xlu0 %1054
      %1056 = vrot.lane.b32.xlu0 %v1006, 32
      %v1057 = vpop.permute.xlu0 %1056
      %1058 = vrot.lane.b32.xlu0 %v1013, 32
      %v1059 = vpop.permute.xlu0 %1058
      %1060 = vrot.lane.b32.xlu0 %v1053, 32
      %v1061 = vpop.permute.xlu0 %1060
      %v1062 = vrot.slane %v985, 1
      %1063 = vrot.lane.b32.xlu0 %v1027, 40
      %v1064 = vpop.permute.xlu0 %1063
      %1065 = vrot.lane.b32.xlu0 %v1028, 40
      %v1066 = vpop.permute.xlu0 %1065
      %1067 = vrot.lane.b32.xlu0 %v1029, 40
      %v1068 = vpop.permute.xlu0 %1067
      %1069 = vrot.lane.b32.xlu0 %v1062, 40
      %v1070 = vpop.permute.xlu0 %1069
      %1071 = vrot.lane.b32.xlu0 %v983, 48
      %v1072 = vpop.permute.xlu0 %1071
      %1073 = vrot.lane.b32.xlu0 %v984, 48
      %v1074 = vpop.permute.xlu0 %1073
      %1075 = vrot.lane.b32.xlu0 %v985, 48
      %v1076 = vpop.permute.xlu0 %1075
      %1077 = vrot.lane.b32.xlu0 %v981, 48
      %v1078 = vpop.permute.xlu0 %1077
      %1079 = vrot.lane.b32.xlu0 %v1006, 56
      %v1080 = vpop.permute.xlu0 %1079
      %1081 = vrot.lane.b32.xlu0 %v1013, 56
      %v1082 = vpop.permute.xlu0 %1081
      %1083 = vrot.lane.b32.xlu0 %v1053, 56
      %v1084 = vpop.permute.xlu0 %1083
      %1085 = vrot.lane.b32.xlu0 %v992, 56
      %v1086 = vpop.permute.xlu0 %1085
      %1087 = vrot.lane.b32.xlu0 %v1028, 64
      %v1088 = vpop.permute.xlu0 %1087
      %1089 = vrot.lane.b32.xlu0 %v1029, 64
      %v1090 = vpop.permute.xlu0 %1089
      %1091 = vrot.lane.b32.xlu0 %v1062, 64
      %v1092 = vpop.permute.xlu0 %1091
      %1093 = vrot.lane.b32.xlu0 %v1026, 64
      %v1094 = vpop.permute.xlu0 %1093
      %vm1095 = vcmask 64512
      %v1097 = vsel %vm1095, %v981, %v1015
      %v1099 = vsel %vm1095, %v982, %v1017
      %v1101 = vsel %vm1095, %v983, %v1019
      %v1103 = vsel %vm1095, %v984, %v1021
      %vm1104 = vcmask 130048
      %v1106 = vsel %vm1104, %v1097, %v1031
      %v1108 = vsel %vm1104, %v1099, %v1033
      %v1110 = vsel %vm1104, %v1101, %v1035
      %v1112 = vsel %vm1104, %v1103, %v1037
      %vm1113 = vcmask 195584
      %v1115 = vsel %vm1113, %v1106, %v1040
      %v1117 = vsel %vm1113, %v1108, %v1042
      %v1119 = vsel %vm1113, %v1110, %v1044
      %v1121 = vsel %vm1113, %v1112, %v1046
      %vm1122 = vcmask 261120
      %v1124 = vsel %vm1122, %v1115, %v1055
      %v1126 = vsel %vm1122, %v1117, %v1057
      %v1128 = vsel %vm1122, %v1119, %v1059
      %v1130 = vsel %vm1122, %v1121, %v1061
      %vm1131 = vcmask 326656
      %v1133 = vsel %vm1131, %v1124, %v1064
      %v1135 = vsel %vm1131, %v1126, %v1066
      %v1137 = vsel %vm1131, %v1128, %v1068
      %v1139 = vsel %vm1131, %v1130, %v1070
      %vm1140 = vcmask 392192
      %v1142 = vsel %vm1140, %v1133, %v1072
      %v1144 = vsel %vm1140, %v1135, %v1074
      %v1146 = vsel %vm1140, %v1137, %v1076
      %v1148 = vsel %vm1140, %v1139, %v1078
      %vm1149 = vcmask 457728
      %v1151 = vsel %vm1149, %v1142, %v1080
      %v1153 = vsel %vm1149, %v1144, %v1082
      %v1155 = vsel %vm1149, %v1146, %v1084
      %v1157 = vsel %vm1149, %v1148, %v1086
      %vm1158 = vcmask 523264
      %v1160 = vsel %vm1158, %v1151, %v1088
      %v1162 = vsel %vm1158, %v1153, %v1090
      %v1164 = vsel %vm1158, %v1155, %v1092
      %v1166 = vsel %vm1158, %v1157, %v1094
      %v1167 = vld [vmem:[%s3] sm:$0xf]
      %v1168 = vld [vmem:[%s3 + $0x4] sm:$0xf]
      %v1169 = vld [vmem:[%s3 + $0x8] sm:$0xf]
      %v1170 = vld [vmem:[%s3 + $0xc] sm:$0xf]
      %v1171 = vld [vmem:[%s3 + $0x10] sm:$0xf]
      %v1172 = vld [vmem:[%s3 + $0x14] sm:$0xf]
      %v1173 = vld [vmem:[%s3 + $0x18] sm:$0xf]
      %v1174 = vld [vmem:[%s3 + $0x1c] sm:$0xf]
      %v1175 = vld [vmem:[%s3 + $0x20] sm:$0xf]
      %v1176 = vld [vmem:[%s4] sm:$0x1]
      %v1178 = vlaneseq
      %v1179 = vshrl.u32 %v1178, 7
      %v1180 = vsub.s32 0, %v1179
      %v1181 = vrot.slane %v1176, %v1180
      %v1187 = vcombine.low %v1160, %v1162
      %v1188 = vcombine.low %v1164, %v1166
      %v1190 = vunpack.c.l.s4 1983009808
      %v1191 = vunpack.c.0.s8 %v1190
      %v1192 = vlaneseq
      %v1193 = vshrl.u32 %v1192, 7
      %v1194 = vsub.s32 %v1191, %v1193
      %v1195 = vrot.slane %v1187, %v1194
      %v1197 = vunpack.c.l.s4 1983009808
      %v1198 = vunpack.c.0.s8 %v1197
      %v1199 = vlaneseq
      %v1200 = vshrl.u32 %v1199, 7
      %v1201 = vsub.s32 %v1198, %v1200
      %v1202 = vrot.slane %v1188, %v1201
      %v1203 = vcombine.low %v1195, %v1202
      %v1213 = vunpack.c.l.b16 %v1167
      %v1214 = vunpack.c.l.b16 %v1168
      %v1215 = vunpack.c.l.b16 %v1169
      %v1216 = vunpack.c.l.b16 %v1170
      %v1217 = vunpack.c.l.b16 %v1171
      %v1218 = vunpack.c.l.b16 %v1172
      %v1219 = vunpack.c.l.b16 %v1173
      %v1220 = vunpack.c.l.b16 %v1174
      %v1221 = vunpack.c.l.b16 %v1175
      %v1222 = vpack.c.b16 %v1214, %v1213
      %v1223 = vpack.c.b16 %v1216, %v1215
      %v1224 = vpack.c.b16 %v1218, %v1217
      %v1225 = vpack.c.b16 %v1220, %v1219
      %v1226 = vpack.c.b16 %v1221, %v1221
      %vm1231 = vcmask 588800
      %v1233 = vsel %vm1231, %v1203, 0
      %vm1235 = vcmask 1043456
      %v1237 = vsel %vm1235, %v1226, 0
      %1239 = vmatprep.subr.bf16.mxu0 0
      %1240 = vmatpush1.bf16.msra.mxu0 %v1222
      %1241 = vmatprep.subr.bf16.mxu0 0
      %1242 = vmatpush1.bf16.msra.mxu0 %v1223
      %1243 = vmatprep.subr.bf16.mxu0 0
      %1244 = vmatpush1.bf16.msra.mxu0 %v1224
      %1245 = vmatprep.subr.bf16.mxu0 0
      %1246 = vmatpush1.bf16.msra.mxu0 %v1225
      %1247 = vmatprep.subr.bf16.mxu0 0
      %1248 = vmatpush1.bf16.msra.mxu0 %v1237
      %1249 = vmatprep.subr.bf16.mxu0 0
      %1250 = vmatpush1.bf16.msra.mxu0 0
      %1251 = vmatprep.subr.bf16.mxu0 0
      %1252 = vmatpush1.bf16.msra.mxu0 0
      %1253 = vmatprep.subr.bf16.mxu0 0
      %1254 = vmatpush1.bf16.msra.mxu0 0
      %1255 = vmatprep.subr.bf16.mxu0 0
      %1256 = vmatpush1.bf16.msra.mxu0 0
      %1257 = vmatprep.subr.bf16.mxu0 0
      %1258 = vmatpush1.bf16.msra.mxu0 0
      %1259 = vmatprep.subr.bf16.mxu0 0
      %1260 = vmatpush1.bf16.msra.mxu0 0
      %1261 = vmatprep.subr.bf16.mxu0 0
      %1262 = vmatpush1.bf16.msra.mxu0 0
      %1263 = vmatprep.subr.bf16.mxu0 0
      %1264 = vmatpush1.bf16.msra.mxu0 0
      %1265 = vmatprep.subr.bf16.mxu0 0
      %1266 = vmatpush1.bf16.msra.mxu0 0
      %1267 = vmatprep.subr.bf16.mxu0 0
      %1268 = vmatpush1.bf16.msra.mxu0 0
      %1269 = vmatprep.subr.bf16.mxu0 0
      %1270 = vmatpush1.bf16.msra.mxu0 0
      %1271 = vmatprep.mubr.bf16.mxu0 0
      %1272 = vmatmul.mubr.bf16.gmra.mrb[0].mxu0 %v1233
      %v1273 = vpop.f32.mrb[0].mxu0
      %v1274 = vadd.f32 %v1181, %v1273
      %v1275 = vpop.f32.mrb[0].mxu0
      %v1276 = vpop.f32.mrb[0].mxu0
      %v1277 = vadd.f32 %v1181, %v1276
      %v1278 = vpop.f32.mrb[0].mxu0
      %1279 = vdwg.mxu0
      %v1282 = vcombine.high %v1274, %v1274
      %v1283 = vcombine.high %v1277, %v1277
      %v1286 = vmax.f32 %v1274, 0.0
      %v1287 = vmax.f32 %v1282, 0.0
      %v1288 = vmax.f32 %v1277, 0.0
      %v1289 = vmax.f32 %v1283, 0.0
      %v1290 = vpack.c.bf16 %v1286, %v1286
      %v1291 = vpack.c.bf16 %v1287, %v1287
      %v1292 = vpack.c.bf16 %v1288, %v1288
      %v1293 = vpack.c.bf16 %v1289, %v1289
      %v1295 = vshrl.u32 %v1290, 16
      %v1297 = vrot.slane %v1295, 7
      %v1298 = vshll.u32 %v1290, 16
      %v1300 = vor.u32 %v1297, %v1298
      %v1302 = vshrl.u32 %v1291, 16
      %v1304 = vrot.slane %v1302, 7
      %v1305 = vshll.u32 %v1291, 16
      %v1307 = vor.u32 %v1304, %v1305
      %v1309 = vshrl.u32 %v1292, 16
      %v1311 = vrot.slane %v1309, 7
      %v1312 = vshll.u32 %v1292, 16
      %v1314 = vor.u32 %v1311, %v1312
      %v1316 = vshrl.u32 %v1293, 16
      %v1318 = vrot.slane %v1316, 7
      %v1319 = vshll.u32 %v1293, 16
      %v1321 = vor.u32 %v1318, %v1319
      %v1326 = vsel %vm972, 0, %v1300
      %v1327 = vsel %vm972, 0, %v1307
      %v1328 = vsel %vm972, 0, %v1314
      %v1329 = vsel %vm972, 0, %v1321
      %v1330 = vsel %vm980, %v1326, 0
      %v1331 = vsel %vm980, %v1327, 0
      %v1332 = vsel %vm980, %v1328, 0
      %v1333 = vsel %vm980, %v1329, 0
      %v1335 = vshrl.u32 %v1330, 16
      %v1337 = vshll.u32 %v1330, 16
      %v1339 = vrot.slane %v1337, 1
      %v1340 = vor.u32 %v1335, %v1339
      %v1342 = vshrl.u32 %v1331, 16
      %v1344 = vshll.u32 %v1331, 16
      %v1346 = vrot.slane %v1344, 1
      %v1347 = vor.u32 %v1342, %v1346
      %v1349 = vshrl.u32 %v1332, 16
      %v1351 = vshll.u32 %v1332, 16
      %v1353 = vrot.slane %v1351, 1
      %v1354 = vor.u32 %v1349, %v1353
      %1355 = vrot.lane.b32.xlu0 %v1340, 8
      %v1356 = vpop.permute.xlu0 %1355
      %1357 = vrot.lane.b32.xlu0 %v1347, 8
      %v1358 = vpop.permute.xlu0 %1357
      %1359 = vrot.lane.b32.xlu0 %v1354, 8
      %v1360 = vpop.permute.xlu0 %1359
      %v1364 = vrot.slane %v1330, 1
      %v1365 = vrot.slane %v1331, 1
      %v1366 = vrot.slane %v1332, 1
      %1367 = vrot.lane.b32.xlu0 %v1364, 16
      %v1368 = vpop.permute.xlu0 %1367
      %1369 = vrot.lane.b32.xlu0 %v1365, 16
      %v1370 = vpop.permute.xlu0 %1369
      %1371 = vrot.lane.b32.xlu0 %v1366, 16
      %v1372 = vpop.permute.xlu0 %1371
      %1374 = vrot.lane.b32.xlu0 %v1330, 24
      %v1375 = vpop.permute.xlu0 %1374
      %1376 = vrot.lane.b32.xlu0 %v1331, 24
      %v1377 = vpop.permute.xlu0 %1376
      %1378 = vrot.lane.b32.xlu0 %v1332, 24
      %v1379 = vpop.permute.xlu0 %1378
      %1380 = vrot.lane.b32.xlu0 %v1333, 24
      %v1381 = vpop.permute.xlu0 %1380
      %v1383 = vshrl.u32 %v1333, 16
      %v1385 = vshll.u32 %v1333, 16
      %v1387 = vrot.slane %v1385, 1
      %v1388 = vor.u32 %v1383, %v1387
      %1389 = vrot.lane.b32.xlu0 %v1340, 32
      %v1390 = vpop.permute.xlu0 %1389
      %1391 = vrot.lane.b32.xlu0 %v1347, 32
      %v1392 = vpop.permute.xlu0 %1391
      %1393 = vrot.lane.b32.xlu0 %v1354, 32
      %v1394 = vpop.permute.xlu0 %1393
      %1395 = vrot.lane.b32.xlu0 %v1388, 32
      %v1396 = vpop.permute.xlu0 %1395
      %v1397 = vrot.slane %v1333, 1
      %1398 = vrot.lane.b32.xlu0 %v1364, 40
      %v1399 = vpop.permute.xlu0 %1398
      %1400 = vrot.lane.b32.xlu0 %v1365, 40
      %v1401 = vpop.permute.xlu0 %1400
      %1402 = vrot.lane.b32.xlu0 %v1366, 40
      %v1403 = vpop.permute.xlu0 %1402
      %1404 = vrot.lane.b32.xlu0 %v1397, 40
      %v1405 = vpop.permute.xlu0 %1404
      %1406 = vrot.lane.b32.xlu0 %v1331, 48
      %v1407 = vpop.permute.xlu0 %1406
      %1408 = vrot.lane.b32.xlu0 %v1332, 48
      %v1409 = vpop.permute.xlu0 %1408
      %1410 = vrot.lane.b32.xlu0 %v1333, 48
      %v1411 = vpop.permute.xlu0 %1410
      %1412 = vrot.lane.b32.xlu0 %v1347, 56
      %v1413 = vpop.permute.xlu0 %1412
      %1414 = vrot.lane.b32.xlu0 %v1354, 56
      %v1415 = vpop.permute.xlu0 %1414
      %1416 = vrot.lane.b32.xlu0 %v1388, 56
      %v1417 = vpop.permute.xlu0 %1416
      %1418 = vrot.lane.b32.xlu0 %v1365, 64
      %v1419 = vpop.permute.xlu0 %1418
      %1420 = vrot.lane.b32.xlu0 %v1366, 64
      %v1421 = vpop.permute.xlu0 %1420
      %1422 = vrot.lane.b32.xlu0 %v1397, 64
      %v1423 = vpop.permute.xlu0 %1422
      %v1425 = vsel %vm1095, %v1330, %v1356
      %v1427 = vsel %vm1095, %v1331, %v1358
      %v1429 = vsel %vm1095, %v1332, %v1360
      %v1431 = vsel %vm1104, %v1425, %v1368
      %v1433 = vsel %vm1104, %v1427, %v1370
      %v1435 = vsel %vm1104, %v1429, %v1372
      %v1437 = vsel %vm1113, %v1106, %v1375
      %v1439 = vsel %vm1113, %v1431, %v1377
      %v1441 = vsel %vm1113, %v1433, %v1379
      %v1443 = vsel %vm1113, %v1435, %v1381
      %v1445 = vsel %vm1122, %v1437, %v1390
      %v1447 = vsel %vm1122, %v1439, %v1392
      %v1449 = vsel %vm1122, %v1441, %v1394
      %v1451 = vsel %vm1122, %v1443, %v1396
      %v1453 = vsel %vm1131, %v1445, %v1399
      %v1455 = vsel %vm1131, %v1447, %v1401
      %v1457 = vsel %vm1131, %v1449, %v1403
      %v1459 = vsel %vm1131, %v1451, %v1405
      %v1461 = vsel %vm1140, %v1453, %v1407
      %v1463 = vsel %vm1140, %v1455, %v1409
      %v1465 = vsel %vm1140, %v1457, %v1411
      %v1466 = vsel %vm1140, %v1459, %v1078
      %v1468 = vsel %vm1149, %v1461, %v1413
      %v1470 = vsel %vm1149, %v1463, %v1415
      %v1472 = vsel %vm1149, %v1465, %v1417
      %v1473 = vsel %vm1149, %v1466, %v1086
      %v1475 = vsel %vm1158, %v1468, %v1419
      %v1477 = vsel %vm1158, %v1470, %v1421
      %v1479 = vsel %vm1158, %v1472, %v1423
      %v1480 = vsel %vm1158, %v1473, %v1094
      %v1481 = vld [vmem:[%s5] sm:$0xf]
      %v1482 = vld [vmem:[%s5 + $0x4] sm:$0xf]
      %v1483 = vld [vmem:[%s5 + $0x8] sm:$0xf]
      %v1484 = vld [vmem:[%s5 + $0xc] sm:$0xf]
      %v1485 = vld [vmem:[%s5 + $0x10] sm:$0xf]
      %v1486 = vld [vmem:[%s5 + $0x14] sm:$0xf]
      %v1487 = vld [vmem:[%s5 + $0x18] sm:$0xf]
      %v1488 = vld [vmem:[%s5 + $0x1c] sm:$0xf]
      %v1489 = vld [vmem:[%s5 + $0x20] sm:$0xf]
      %v1490 = vld [vmem:[%s6] sm:$0x1]
      %v1492 = vlaneseq
      %v1493 = vshrl.u32 %v1492, 7
      %v1494 = vsub.s32 0, %v1493
      %v1495 = vrot.slane %v1490, %v1494
      %v1501 = vcombine.low %v1475, %v1477
      %v1502 = vcombine.low %v1479, %v1480
      %v1504 = vunpack.c.l.s4 1983009808
      %v1505 = vunpack.c.0.s8 %v1504
      %v1506 = vlaneseq
      %v1507 = vshrl.u32 %v1506, 7
      %v1508 = vsub.s32 %v1505, %v1507
      %v1509 = vrot.slane %v1501, %v1508
      %v1511 = vunpack.c.l.s4 1983009808
      %v1512 = vunpack.c.0.s8 %v1511
      %v1513 = vlaneseq
      %v1514 = vshrl.u32 %v1513, 7
      %v1515 = vsub.s32 %v1512, %v1514
      %v1516 = vrot.slane %v1502, %v1515
      %v1517 = vcombine.low %v1509, %v1516
      %v1527 = vunpack.c.l.b16 %v1481
      %v1528 = vunpack.c.l.b16 %v1482
      %v1529 = vunpack.c.l.b16 %v1483
      %v1530 = vunpack.c.l.b16 %v1484
      %v1531 = vunpack.c.l.b16 %v1485
      %v1532 = vunpack.c.l.b16 %v1486
      %v1533 = vunpack.c.l.b16 %v1487
      %v1534 = vunpack.c.l.b16 %v1488
      %v1535 = vunpack.c.l.b16 %v1489
      %v1536 = vpack.c.b16 %v1528, %v1527
      %v1537 = vpack.c.b16 %v1530, %v1529
      %v1538 = vpack.c.b16 %v1532, %v1531
      %v1539 = vpack.c.b16 %v1534, %v1533
      %v1540 = vpack.c.b16 %v1535, %v1535
      %v1546 = vsel %vm1231, %v1517, 0
      %v1549 = vsel %vm1235, %v1540, 0
      %1551 = vmatprep.subr.bf16.mxu0 0
      %1552 = vmatpush1.bf16.msra.mxu0 %v1536
      %1553 = vmatprep.subr.bf16.mxu0 0
      %1554 = vmatpush1.bf16.msra.mxu0 %v1537
      %1555 = vmatprep.subr.bf16.mxu0 0
      %1556 = vmatpush1.bf16.msra.mxu0 %v1538
      %1557 = vmatprep.subr.bf16.mxu0 0
      %1558 = vmatpush1.bf16.msra.mxu0 %v1539
      %1559 = vmatprep.subr.bf16.mxu0 0
      %1560 = vmatpush1.bf16.msra.mxu0 %v1549
      %1561 = vmatprep.subr.bf16.mxu0 0
      %1562 = vmatpush1.bf16.msra.mxu0 0
      %1563 = vmatprep.subr.bf16.mxu0 0
      %1564 = vmatpush1.bf16.msra.mxu0 0
      %1565 = vmatprep.subr.bf16.mxu0 0
      %1566 = vmatpush1.bf16.msra.mxu0 0
      %1567 = vmatprep.subr.bf16.mxu0 0
      %1568 = vmatpush1.bf16.msra.mxu0 0
      %1569 = vmatprep.subr.bf16.mxu0 0
      %1570 = vmatpush1.bf16.msra.mxu0 0
      %1571 = vmatprep.subr.bf16.mxu0 0
      %1572 = vmatpush1.bf16.msra.mxu0 0
      %1573 = vmatprep.subr.bf16.mxu0 0
      %1574 = vmatpush1.bf16.msra.mxu0 0
      %1575 = vmatprep.subr.bf16.mxu0 0
      %1576 = vmatpush1.bf16.msra.mxu0 0
      %1577 = vmatprep.subr.bf16.mxu0 0
      %1578 = vmatpush1.bf16.msra.mxu0 0
      %1579 = vmatprep.subr.bf16.mxu0 0
      %1580 = vmatpush1.bf16.msra.mxu0 0
      %1581 = vmatprep.subr.bf16.mxu0 0
      %1582 = vmatpush1.bf16.msra.mxu0 0
      %1583 = vmatprep.mubr.bf16.mxu0 0
      %1584 = vmatmul.mubr.bf16.gmra.mrb[0].mxu0 %v1546
      %v1585 = vpop.f32.mrb[0].mxu0
      %v1586 = vadd.f32 %v1495, %v1585
      %v1587 = vpop.f32.mrb[0].mxu0
      %v1588 = vpop.f32.mrb[0].mxu0
      %v1589 = vadd.f32 %v1495, %v1588
      %v1590 = vpop.f32.mrb[0].mxu0
      %1591 = vdwg.mxu0
      %v1594 = vcombine.high %v1586, %v1586
      %v1595 = vcombine.high %v1589, %v1589
      %v1598 = vmul.f32 %v1586, 0.1
      %v1599 = vmul.f32 %v1594, 0.1
      %v1600 = vmul.f32 %v1589, 0.1
      %v1601 = vmul.f32 %v1595, 0.1
      %v1602 = vtanh.pop %v1598
      %v1603 = vtanh.pop %v1599
      %v1604 = vtanh.pop %v1600
      %v1605 = vtanh.pop %v1601
      %v1606 = vmul.f32 %v1602, 2.0
      %v1607 = vmul.f32 %v1603, 2.0
      %v1608 = vmul.f32 %v1604, 2.0
      %v1609 = vmul.f32 %v1605, 2.0
      %v1610 = vmul.f32 %v1606, 1.442695
      %v1611 = vpow.pop %v1610
      %v1612 = vmul.f32 %v1607, 1.442695
      %v1613 = vpow.pop %v1612
      %v1614 = vmul.f32 %v1608, 1.442695
      %v1615 = vpow.pop %v1614
      %v1616 = vmul.f32 %v1609, 1.442695
      %v1617 = vpow.pop %v1616
      %1622 = vrot.lane.b32.xlu0 %v1611, 8
      %v1623 = vpop.permute.xlu0 %1622
      %1624 = vrot.lane.b32.xlu0 %v1613, 8
      %v1625 = vpop.permute.xlu0 %1624
      %1626 = vrot.lane.b32.xlu0 %v1615, 8
      %v1627 = vpop.permute.xlu0 %1626
      %1628 = vrot.lane.b32.xlu0 %v1617, 8
      %v1629 = vpop.permute.xlu0 %1628
      %v1634 = vmul.f32 %v922, %v1623
      %v1635 = vmul.f32 %v923, %v1625
      %v1636 = vmul.f32 %v924, %v1627
      %v1637 = vmul.f32 %v925, %v1629
      %v1638 = vadd.f32 %v1634, %v1598
      %v1639 = vadd.f32 %v1635, %v1599
      %v1640 = vadd.f32 %v1636, %v1600
      %v1641 = vadd.f32 %v1637, %v1601
      %vm1642 = vcmask 60416
      %v1643 = vsel %vm1642, %v1606, 0.0
      %v1644 = vsel %vm1642, %v1607, 0.0
      %v1645 = vadd.f32 %v1643, %v1644
      %v1646 = vsel %vm1642, %v1608, 0.0
      %v1647 = vadd.f32 %v1645, %v1646
      %v1648 = vsel %vm1642, %v1609, 0.0
      %v1649 = vadd.f32 %v1647, %v1648
      %1650 = vadd.xlane.f32.xlu0 %v1649
      %v1651 = vpop.xlane.xlu0 %1650
      %v1652 = vrot.slane %v1651, 4
      %v1653 = vadd.f32 %v1651, %v1652
      %v1654 = vrot.slane %v1653, 2
      %v1655 = vadd.f32 %v1653, %v1654
      %v1656 = vrot.slane %v1655, 1
      %v1657 = vadd.f32 %v1655, %v1656
      %s1658 = vtos %v1657
      %s1659 = sadd.f32 %s1658, 0.0
      %v1660 = vsel %vm1095, %v922, %v1638
      %v1661 = vsel %vm1095, %v923, %v1639
      %v1662 = vsel %vm1095, %v924, %v1640
      %v1663 = vsel %vm1095, %v925, %v1641
      %v1664 = vld [vmem:[%s7] sm:$0xff]
      %v1665 = vld [vmem:[%s7 + $0x8] sm:$0xff]
      %v1666 = vld [vmem:[%s8] sm:$0x1]
      %v1668 = vlaneseq
      %v1669 = vshrl.u32 %v1668, 7
      %v1670 = vsub.s32 0, %v1669
      %v1671 = vrot.slane %v1666, %v1670
      %v1677 = vcombine.low %v1660, %v1661
      %v1678 = vcombine.low %v1662, %v1663
      %v1679 = vsel %vm1104, %v1677, 0
      %v1681 = vsel %vm1104, %v1678, 0
      %1683 = vmatprep.subr.mxu0 0.0
      %1684 = vmatpush1.msra.mxu0 %v1664
      %1685 = vmatprep.subr.mxu0 0.0
      %1686 = vmatpush1.msra.mxu0 %v1665
      %1687 = vmatprep.subr.mxu0 0.0
      %1688 = vmatpush1.msra.mxu0 0.0
      %1689 = vmatprep.subr.mxu0 0.0
      %1690 = vmatpush1.msra.mxu0 0.0
      %1691 = vmatprep.subr.mxu0 0.0
      %1692 = vmatpush1.msra.mxu0 0.0
      %1693 = vmatprep.subr.mxu0 0.0
      %1694 = vmatpush1.msra.mxu0 0.0
      %1695 = vmatprep.subr.mxu0 0.0
      %1696 = vmatpush1.msra.mxu0 0.0
      %1697 = vmatprep.subr.mxu0 0.0
      %1698 = vmatpush1.msra.mxu0 0.0
      %1699 = vmatprep.subr.mxu0 0.0
      %1700 = vmatpush1.msra.mxu0 0.0
      %1701 = vmatprep.subr.mxu0 0.0
      %1702 = vmatpush1.msra.mxu0 0.0
      %1703 = vmatprep.subr.mxu0 0.0
      %1704 = vmatpush1.msra.mxu0 0.0
      %1705 = vmatprep.subr.mxu0 0.0
      %1706 = vmatpush1.msra.mxu0 0.0
      %1707 = vmatprep.subr.mxu0 0.0
      %1708 = vmatpush1.msra.mxu0 0.0
      %1709 = vmatprep.subr.mxu0 0.0
      %1710 = vmatpush1.msra.mxu0 0.0
      %1711 = vmatprep.subr.mxu0 0.0
      %1712 = vmatpush1.msra.mxu0 0.0
      %1713 = vmatprep.subr.mxu0 0.0
      %1714 = vmatpush1.msra.mxu0 0.0
      %1715 = vmatprep.subr.mxu0 0.0
      %1716 = vmatpush1.msra.mxu0 0.0
      %1717 = vmatprep.subr.mxu0 0.0
      %1718 = vmatpush1.msra.mxu0 0.0
      %1719 = vmatprep.subr.mxu0 0.0
      %1720 = vmatpush1.msra.mxu0 0.0
      %1721 = vmatprep.subr.mxu0 0.0
      %1722 = vmatpush1.msra.mxu0 0.0
      %1723 = vmatprep.subr.mxu0 0.0
      %1724 = vmatpush1.msra.mxu0 0.0
      %1725 = vmatprep.subr.mxu0 0.0
      %1726 = vmatpush1.msra.mxu0 0.0
      %1727 = vmatprep.subr.mxu0 0.0
      %1728 = vmatpush1.msra.mxu0 0.0
      %1729 = vmatprep.subr.mxu0 0.0
      %1730 = vmatpush1.msra.mxu0 0.0
      %1731 = vmatprep.subr.mxu0 0.0
      %1732 = vmatpush1.msra.mxu0 0.0
      %1733 = vmatprep.subr.mxu0 0.0
      %1734 = vmatpush1.msra.mxu0 0.0
      %1735 = vmatprep.subr.mxu0 0.0
      %1736 = vmatpush1.msra.mxu0 0.0
      %1737 = vmatprep.subr.mxu0 0.0
      %1738 = vmatpush1.msra.mxu0 0.0
      %1739 = vmatprep.subr.mxu0 0.0
      %1740 = vmatpush1.msra.mxu0 0.0
      %1741 = vmatprep.subr.mxu0 0.0
      %1742 = vmatpush1.msra.mxu0 0.0
      %1743 = vmatprep.subr.mxu0 0.0
      %1744 = vmatpush1.msra.mxu0 0.0
      %1745 = vmatprep.subr.mxu0 0.0
      %1746 = vmatpush1.msra.mxu0 0.0
      %1747 = vmatprep.mubr.f32.mxu0 0.0
      %1748 = vmatmul.mubr.f32.gmra.mrb[0].mxu0 %v1679
      %v1749 = vpop.f32.mrb[0].mxu0
      %v1750 = vadd.f32 %v1671, %v1749
      %v1751 = vpop.f32.mrb[0].mxu0
      %1752 = vmatprep.mubr.f32.mxu0 0.0
      %1753 = vmatmul.mubr.f32.gmra.mrb[0].mxu0 %v1681
      %v1754 = vpop.f32.mrb[0].mxu0
      %v1755 = vadd.f32 %v1671, %v1754
      %v1756 = vpop.f32.mrb[0].mxu0
      %1757 = vdwg.mxu0
      %v1760 = vcombine.high %v1750, %v1750
      %v1761 = vcombine.high %v1755, %v1755
      %v1764 = vpack.c.bf16 %v1750, %v1750
      %v1765 = vpack.c.bf16 %v1760, %v1760
      %v1766 = vpack.c.bf16 %v1755, %v1755
      %v1767 = vpack.c.bf16 %v1761, %v1761
      %v1768 = vld [vmem:[%s9] sm:$0xf]
      %v1769 = vld [vmem:[%s10] sm:$0x1]
      %v1771 = vlaneseq
      %v1772 = vshrl.u32 %v1771, 7
      %v1773 = vsub.s32 0, %v1772
      %v1774 = vrot.slane %v1769, %v1773
      %v1780 = vcombine.low %v1764, %v1765
      %v1781 = vcombine.low %v1766, %v1767
      %v1783 = vunpack.c.l.s4 1983009808
      %v1784 = vunpack.c.0.s8 %v1783
      %v1785 = vlaneseq
      %v1786 = vshrl.u32 %v1785, 7
      %v1787 = vsub.s32 %v1784, %v1786
      %v1788 = vrot.slane %v1780, %v1787
      %v1790 = vunpack.c.l.s4 1983009808
      %v1791 = vunpack.c.0.s8 %v1790
      %v1792 = vlaneseq
      %v1793 = vshrl.u32 %v1792, 7
      %v1794 = vsub.s32 %v1791, %v1793
      %v1795 = vrot.slane %v1781, %v1794
      %v1796 = vcombine.low %v1788, %v1795
      %v1798 = vsel %vm1095, %v1796, 0
      %v1801 = vsel %vm1235, %v1768, 0
      %1803 = vmatprep.subr.bf16.mxu0 0
      %1804 = vmatpush1.bf16.msra.mxu0 %v1801
      %1805 = vmatprep.subr.bf16.mxu0 0
      %1806 = vmatpush1.bf16.msra.mxu0 0
      %1807 = vmatprep.subr.bf16.mxu0 0
      %1808 = vmatpush1.bf16.msra.mxu0 0
      %1809 = vmatprep.subr.bf16.mxu0 0
      %1810 = vmatpush1.bf16.msra.mxu0 0
      %1811 = vmatprep.subr.bf16.mxu0 0
      %1812 = vmatpush1.bf16.msra.mxu0 0
      %1813 = vmatprep.subr.bf16.mxu0 0
      %1814 = vmatpush1.bf16.msra.mxu0 0
      %1815 = vmatprep.subr.bf16.mxu0 0
      %1816 = vmatpush1.bf16.msra.mxu0 0
      %1817 = vmatprep.subr.bf16.mxu0 0
      %1818 = vmatpush1.bf16.msra.mxu0 0
      %1819 = vmatprep.subr.bf16.mxu0 0
      %1820 = vmatpush1.bf16.msra.mxu0 0
      %1821 = vmatprep.subr.bf16.mxu0 0
      %1822 = vmatpush1.bf16.msra.mxu0 0
      %1823 = vmatprep.subr.bf16.mxu0 0
      %1824 = vmatpush1.bf16.msra.mxu0 0
      %1825 = vmatprep.subr.bf16.mxu0 0
      %1826 = vmatpush1.bf16.msra.mxu0 0
      %1827 = vmatprep.subr.bf16.mxu0 0
      %1828 = vmatpush1.bf16.msra.mxu0 0
      %1829 = vmatprep.subr.bf16.mxu0 0
      %1830 = vmatpush1.bf16.msra.mxu0 0
      %1831 = vmatprep.subr.bf16.mxu0 0
      %1832 = vmatpush1.bf16.msra.mxu0 0
      %1833 = vmatprep.subr.bf16.mxu0 0
      %1834 = vmatpush1.bf16.msra.mxu0 0
      %1835 = vmatprep.mubr.bf16.mxu0 0
      %1836 = vmatmul.mubr.bf16.gmra.mrb[0].mxu0 %v1798
      %v1837 = vpop.f32.mrb[0].mxu0
      %v1838 = vadd.f32 %v1774, %v1837
      %v1839 = vpop.f32.mrb[0].mxu0
      %v1840 = vpop.f32.mrb[0].mxu0
      %v1841 = vadd.f32 %v1774, %v1840
      %v1842 = vpop.f32.mrb[0].mxu0
      %1843 = vdwg.mxu0
      %v1846 = vcombine.high %v1838, %v1838
      %v1847 = vcombine.high %v1841, %v1841
      %v1850 = vmax.f32 %v1838, 0.0
      %v1851 = vmax.f32 %v1846, 0.0
      %v1852 = vmax.f32 %v1841, 0.0
      %v1853 = vmax.f32 %v1847, 0.0
      %v1854 = vpack.c.bf16 %v1850, %v1850
      %v1855 = vpack.c.bf16 %v1851, %v1851
      %v1856 = vpack.c.bf16 %v1852, %v1852
      %v1857 = vpack.c.bf16 %v1853, %v1853
      %v1858 = vld [vmem:[%s11] sm:$0xf]
      %v1859 = vld [vmem:[%s12] sm:$0x1]
      %v1861 = vlaneseq
      %v1862 = vshrl.u32 %v1861, 7
      %v1863 = vsub.s32 0, %v1862
      %v1864 = vrot.slane %v1859, %v1863
      %v1870 = vcombine.low %v1854, %v1855
      %v1871 = vcombine.low %v1856, %v1857
      %v1873 = vunpack.c.l.s4 1983009808
      %v1874 = vunpack.c.0.s8 %v1873
      %v1875 = vlaneseq
      %v1876 = vshrl.u32 %v1875, 7
      %v1877 = vsub.s32 %v1874, %v1876
      %v1878 = vrot.slane %v1870, %v1877
      %v1880 = vunpack.c.l.s4 1983009808
      %v1881 = vunpack.c.0.s8 %v1880
      %v1882 = vlaneseq
      %v1883 = vshrl.u32 %v1882, 7
      %v1884 = vsub.s32 %v1881, %v1883
      %v1885 = vrot.slane %v1871, %v1884
      %v1886 = vcombine.low %v1878, %v1885
      %v1888 = vsel %vm1095, %v1886, 0
      %v1891 = vsel %vm1235, %v1858, 0
      %1893 = vmatprep.subr.bf16.mxu0 0
      %1894 = vmatpush1.bf16.msra.mxu0 %v1891
      %1895 = vmatprep.subr.bf16.mxu0 0
      %1896 = vmatpush1.bf16.msra.mxu0 0
      %1897 = vmatprep.subr.bf16.mxu0 0
      %1898 = vmatpush1.bf16.msra.mxu0 0
      %1899 = vmatprep.subr.bf16.mxu0 0
      %1900 = vmatpush1.bf16.msra.mxu0 0
      %1901 = vmatprep.subr.bf16.mxu0 0
      %1902 = vmatpush1.bf16.msra.mxu0 0
      %1903 = vmatprep.subr.bf16.mxu0 0
      %1904 = vmatpush1.bf16.msra.mxu0 0
      %1905 = vmatprep.subr.bf16.mxu0 0
      %1906 = vmatpush1.bf16.msra.mxu0 0
      %1907 = vmatprep.subr.bf16.mxu0 0
      %1908 = vmatpush1.bf16.msra.mxu0 0
      %1909 = vmatprep.subr.bf16.mxu0 0
      %1910 = vmatpush1.bf16.msra.mxu0 0
      %1911 = vmatprep.subr.bf16.mxu0 0
      %1912 = vmatpush1.bf16.msra.mxu0 0
      %1913 = vmatprep.subr.bf16.mxu0 0
      %1914 = vmatpush1.bf16.msra.mxu0 0
      %1915 = vmatprep.subr.bf16.mxu0 0
      %1916 = vmatpush1.bf16.msra.mxu0 0
      %1917 = vmatprep.subr.bf16.mxu0 0
      %1918 = vmatpush1.bf16.msra.mxu0 0
      %1919 = vmatprep.subr.bf16.mxu0 0
      %1920 = vmatpush1.bf16.msra.mxu0 0
      %1921 = vmatprep.subr.bf16.mxu0 0
      %1922 = vmatpush1.bf16.msra.mxu0 0
      %1923 = vmatprep.subr.bf16.mxu0 0
      %1924 = vmatpush1.bf16.msra.mxu0 0
      %1925 = vmatprep.mubr.bf16.mxu0 0
      %1926 = vmatmul.mubr.bf16.gmra.mrb[0].mxu0 %v1888
      %v1927 = vpop.f32.mrb[0].mxu0
      %v1928 = vadd.f32 %v1864, %v1927
      %v1929 = vpop.f32.mrb[0].mxu0
      %v1930 = vpop.f32.mrb[0].mxu0
      %v1931 = vadd.f32 %v1864, %v1930
      %v1932 = vpop.f32.mrb[0].mxu0
      %1933 = vdwg.mxu0
      %v1936 = vcombine.high %v1928, %v1928
      %v1937 = vcombine.high %v1931, %v1931
      %v1940 = vmul.f32 %v1928, 0.1
      %v1941 = vmul.f32 %v1936, 0.1
      %v1942 = vmul.f32 %v1931, 0.1
      %v1943 = vmul.f32 %v1937, 0.1
      %v1944 = vtanh.pop %v1940
      %v1945 = vtanh.pop %v1941
      %v1946 = vtanh.pop %v1942
      %v1947 = vtanh.pop %v1943
      %v1948 = vmul.f32 %v1944, 2.0
      %v1949 = vmul.f32 %v1945, 2.0
      %v1950 = vmul.f32 %v1946, 2.0
      %v1951 = vmul.f32 %v1947, 2.0
      %v1952 = vmul.f32 %v1948, 1.442695
      %v1953 = vpow.pop %v1952
      %v1954 = vmul.f32 %v1949, 1.442695
      %v1955 = vpow.pop %v1954
      %v1956 = vmul.f32 %v1950, 1.442695
      %v1957 = vpow.pop %v1956
      %v1958 = vmul.f32 %v1951, 1.442695
      %v1959 = vpow.pop %v1958
      %1964 = vrot.lane.b32.xlu0 %v1953, 8
      %v1965 = vpop.permute.xlu0 %1964
      %1966 = vrot.lane.b32.xlu0 %v1955, 8
      %v1967 = vpop.permute.xlu0 %1966
      %1968 = vrot.lane.b32.xlu0 %v1957, 8
      %v1969 = vpop.permute.xlu0 %1968
      %1970 = vrot.lane.b32.xlu0 %v1959, 8
      %v1971 = vpop.permute.xlu0 %1970
      %v1976 = vmul.f32 %v1750, %v1965
      %v1977 = vmul.f32 %v1760, %v1967
      %v1978 = vmul.f32 %v1755, %v1969
      %v1979 = vmul.f32 %v1761, %v1971
      %v1980 = vadd.f32 %v1976, %v1940
      %v1981 = vadd.f32 %v1977, %v1941
      %v1982 = vadd.f32 %v1978, %v1942
      %v1983 = vadd.f32 %v1979, %v1943
      %v1984 = vsel %vm1642, %v1948, 0.0
      %v1985 = vsel %vm1642, %v1949, 0.0
      %v1986 = vadd.f32 %v1984, %v1985
      %v1987 = vsel %vm1642, %v1950, 0.0
      %v1988 = vadd.f32 %v1986, %v1987
      %v1989 = vsel %vm1642, %v1951, 0.0
      %v1990 = vadd.f32 %v1988, %v1989
      %1991 = vadd.xlane.f32.xlu0 %v1990
      %v1992 = vpop.xlane.xlu0 %1991
      %v1993 = vrot.slane %v1992, 4
      %v1994 = vadd.f32 %v1992, %v1993
      %v1995 = vrot.slane %v1994, 2
      %v1996 = vadd.f32 %v1994, %v1995
      %v1997 = vrot.slane %v1996, 1
      %v1998 = vadd.f32 %v1996, %v1997
      %s1999 = vtos %v1998
      %s2000 = sadd.f32 %s1659, %s1999
      %v2001 = vsel %vm1095, %v1750, %v1980
      %v2002 = vsel %vm1095, %v1760, %v1981
      %v2003 = vsel %vm1095, %v1755, %v1982
      %v2004 = vsel %vm1095, %v1761, %v1983
      %v2005 = vld [vmem:[%s13] sm:$0xff]
      %v2006 = vld [vmem:[%s13 + $0x8] sm:$0xff]
      %v2007 = vld [vmem:[%s14] sm:$0x1]
      %v2009 = vlaneseq
      %v2010 = vshrl.u32 %v2009, 7
      %v2011 = vsub.s32 0, %v2010
      %v2012 = vrot.slane %v2007, %v2011
      %v2018 = vcombine.low %v2001, %v2002
      %v2019 = vcombine.low %v2003, %v2004
      %v2020 = vsel %vm1104, %v2018, 0
      %v2022 = vsel %vm1104, %v2019, 0
      %2024 = vmatprep.subr.mxu0 0.0
      %2025 = vmatpush1.msra.mxu0 %v2005
      %2026 = vmatprep.subr.mxu0 0.0
      %2027 = vmatpush1.msra.mxu0 %v2006
      %2028 = vmatprep.subr.mxu0 0.0
      %2029 = vmatpush1.msra.mxu0 0.0
      %2030 = vmatprep.subr.mxu0 0.0
      %2031 = vmatpush1.msra.mxu0 0.0
      %2032 = vmatprep.subr.mxu0 0.0
      %2033 = vmatpush1.msra.mxu0 0.0
      %2034 = vmatprep.subr.mxu0 0.0
      %2035 = vmatpush1.msra.mxu0 0.0
      %2036 = vmatprep.subr.mxu0 0.0
      %2037 = vmatpush1.msra.mxu0 0.0
      %2038 = vmatprep.subr.mxu0 0.0
      %2039 = vmatpush1.msra.mxu0 0.0
      %2040 = vmatprep.subr.mxu0 0.0
      %2041 = vmatpush1.msra.mxu0 0.0
      %2042 = vmatprep.subr.mxu0 0.0
      %2043 = vmatpush1.msra.mxu0 0.0
      %2044 = vmatprep.subr.mxu0 0.0
      %2045 = vmatpush1.msra.mxu0 0.0
      %2046 = vmatprep.subr.mxu0 0.0
      %2047 = vmatpush1.msra.mxu0 0.0
      %2048 = vmatprep.subr.mxu0 0.0
      %2049 = vmatpush1.msra.mxu0 0.0
      %2050 = vmatprep.subr.mxu0 0.0
      %2051 = vmatpush1.msra.mxu0 0.0
      %2052 = vmatprep.subr.mxu0 0.0
      %2053 = vmatpush1.msra.mxu0 0.0
      %2054 = vmatprep.subr.mxu0 0.0
      %2055 = vmatpush1.msra.mxu0 0.0
      %2056 = vmatprep.subr.mxu0 0.0
      %2057 = vmatpush1.msra.mxu0 0.0
      %2058 = vmatprep.subr.mxu0 0.0
      %2059 = vmatpush1.msra.mxu0 0.0
      %2060 = vmatprep.subr.mxu0 0.0
      %2061 = vmatpush1.msra.mxu0 0.0
      %2062 = vmatprep.subr.mxu0 0.0
      %2063 = vmatpush1.msra.mxu0 0.0
      %2064 = vmatprep.subr.mxu0 0.0
      %2065 = vmatpush1.msra.mxu0 0.0
      %2066 = vmatprep.subr.mxu0 0.0
      %2067 = vmatpush1.msra.mxu0 0.0
      %2068 = vmatprep.subr.mxu0 0.0
      %2069 = vmatpush1.msra.mxu0 0.0
      %2070 = vmatprep.subr.mxu0 0.0
      %2071 = vmatpush1.msra.mxu0 0.0
      %2072 = vmatprep.subr.mxu0 0.0
      %2073 = vmatpush1.msra.mxu0 0.0
      %2074 = vmatprep.subr.mxu0 0.0
      %2075 = vmatpush1.msra.mxu0 0.0
      %2076 = vmatprep.subr.mxu0 0.0
      %2077 = vmatpush1.msra.mxu0 0.0
      %2078 = vmatprep.subr.mxu0 0.0
      %2079 = vmatpush1.msra.mxu0 0.0
      %2080 = vmatprep.subr.mxu0 0.0
      %2081 = vmatpush1.msra.mxu0 0.0
      %2082 = vmatprep.subr.mxu0 0.0
      %2083 = vmatpush1.msra.mxu0 0.0
      %2084 = vmatprep.subr.mxu0 0.0
      %2085 = vmatpush1.msra.mxu0 0.0
      %2086 = vmatprep.subr.mxu0 0.0
      %2087 = vmatpush1.msra.mxu0 0.0
      %2088 = vmatprep.mubr.f32.mxu0 0.0
      %2089 = vmatmul.mubr.f32.gmra.mrb[0].mxu0 %v2020
      %v2090 = vpop.f32.mrb[0].mxu0
      %v2091 = vadd.f32 %v2012, %v2090
      %v2092 = vpop.f32.mrb[0].mxu0
      %2093 = vmatprep.mubr.f32.mxu0 0.0
      %2094 = vmatmul.mubr.f32.gmra.mrb[0].mxu0 %v2022
      %v2095 = vpop.f32.mrb[0].mxu0
      %v2096 = vadd.f32 %v2012, %v2095
      %v2097 = vpop.f32.mrb[0].mxu0
      %2098 = vdwg.mxu0
      %v2101 = vcombine.high %v2091, %v2091
      %v2102 = vcombine.high %v2096, %v2096
      %v2105 = vpack.c.bf16 %v2091, %v2091
      %v2106 = vpack.c.bf16 %v2101, %v2101
      %v2107 = vpack.c.bf16 %v2096, %v2096
      %v2108 = vpack.c.bf16 %v2102, %v2102
      %v2110 = vshrl.u32 %v2105, 16
      %v2112 = vrot.slane %v2110, 7
      %v2113 = vshll.u32 %v2105, 16
      %v2115 = vor.u32 %v2112, %v2113
      %v2117 = vshrl.u32 %v2106, 16
      %v2119 = vrot.slane %v2117, 7
      %v2120 = vshll.u32 %v2106, 16
      %v2122 = vor.u32 %v2119, %v2120
      %v2124 = vshrl.u32 %v2107, 16
      %v2126 = vrot.slane %v2124, 7
      %v2127 = vshll.u32 %v2107, 16
      %v2129 = vor.u32 %v2126, %v2127
      %v2131 = vshrl.u32 %v2108, 16
      %v2133 = vrot.slane %v2131, 7
      %v2134 = vshll.u32 %v2108, 16
      %v2136 = vor.u32 %v2133, %v2134
      %v2141 = vsel %vm972, 0, %v2115
      %v2142 = vsel %vm972, 0, %v2122
      %v2143 = vsel %vm972, 0, %v2129
      %v2144 = vsel %vm972, 0, %v2136
      %v2145 = vsel %vm980, %v2141, 0
      %v2146 = vsel %vm980, %v2142, 0
      %v2147 = vsel %vm980, %v2143, 0
      %v2148 = vsel %vm980, %v2144, 0
      %v2150 = vshrl.u32 %v2145, 16
      %v2152 = vshll.u32 %v2145, 16
      %v2154 = vrot.slane %v2152, 1
      %v2155 = vor.u32 %v2150, %v2154
      %v2157 = vshrl.u32 %v2146, 16
      %v2159 = vshll.u32 %v2146, 16
      %v2161 = vrot.slane %v2159, 1
      %v2162 = vor.u32 %v2157, %v2161
      %v2164 = vshrl.u32 %v2147, 16
      %v2166 = vshll.u32 %v2147, 16
      %v2168 = vrot.slane %v2166, 1
      %v2169 = vor.u32 %v2164, %v2168
      %2170 = vrot.lane.b32.xlu0 %v2155, 8
      %v2171 = vpop.permute.xlu0 %2170
      %2172 = vrot.lane.b32.xlu0 %v2162, 8
      %v2173 = vpop.permute.xlu0 %2172
      %2174 = vrot.lane.b32.xlu0 %v2169, 8
      %v2175 = vpop.permute.xlu0 %2174
      %v2179 = vrot.slane %v2145, 1
      %v2180 = vrot.slane %v2146, 1
      %v2181 = vrot.slane %v2147, 1
      %2182 = vrot.lane.b32.xlu0 %v2179, 16
      %v2183 = vpop.permute.xlu0 %2182
      %2184 = vrot.lane.b32.xlu0 %v2180, 16
      %v2185 = vpop.permute.xlu0 %2184
      %2186 = vrot.lane.b32.xlu0 %v2181, 16
      %v2187 = vpop.permute.xlu0 %2186
      %2189 = vrot.lane.b32.xlu0 %v2145, 24
      %v2190 = vpop.permute.xlu0 %2189
      %2191 = vrot.lane.b32.xlu0 %v2146, 24
      %v2192 = vpop.permute.xlu0 %2191
      %2193 = vrot.lane.b32.xlu0 %v2147, 24
      %v2194 = vpop.permute.xlu0 %2193
      %2195 = vrot.lane.b32.xlu0 %v2148, 24
      %v2196 = vpop.permute.xlu0 %2195
      %v2198 = vshrl.u32 %v2148, 16
      %v2200 = vshll.u32 %v2148, 16
      %v2202 = vrot.slane %v2200, 1
      %v2203 = vor.u32 %v2198, %v2202
      %2204 = vrot.lane.b32.xlu0 %v2155, 32
      %v2205 = vpop.permute.xlu0 %2204
      %2206 = vrot.lane.b32.xlu0 %v2162, 32
      %v2207 = vpop.permute.xlu0 %2206
      %2208 = vrot.lane.b32.xlu0 %v2169, 32
      %v2209 = vpop.permute.xlu0 %2208
      %2210 = vrot.lane.b32.xlu0 %v2203, 32
      %v2211 = vpop.permute.xlu0 %2210
      %v2212 = vrot.slane %v2148, 1
      %2213 = vrot.lane.b32.xlu0 %v2179, 40
      %v2214 = vpop.permute.xlu0 %2213
      %2215 = vrot.lane.b32.xlu0 %v2180, 40
      %v2216 = vpop.permute.xlu0 %2215
      %2217 = vrot.lane.b32.xlu0 %v2181, 40
      %v2218 = vpop.permute.xlu0 %2217
      %2219 = vrot.lane.b32.xlu0 %v2212, 40
      %v2220 = vpop.permute.xlu0 %2219
      %2221 = vrot.lane.b32.xlu0 %v2146, 48
      %v2222 = vpop.permute.xlu0 %2221
      %2223 = vrot.lane.b32.xlu0 %v2147, 48
      %v2224 = vpop.permute.xlu0 %2223
      %2225 = vrot.lane.b32.xlu0 %v2148, 48
      %v2226 = vpop.permute.xlu0 %2225
      %2227 = vrot.lane.b32.xlu0 %v2162, 56
      %v2228 = vpop.permute.xlu0 %2227
      %2229 = vrot.lane.b32.xlu0 %v2169, 56
      %v2230 = vpop.permute.xlu0 %2229
      %2231 = vrot.lane.b32.xlu0 %v2203, 56
      %v2232 = vpop.permute.xlu0 %2231
      %2233 = vrot.lane.b32.xlu0 %v2180, 64
      %v2234 = vpop.permute.xlu0 %2233
      %2235 = vrot.lane.b32.xlu0 %v2181, 64
      %v2236 = vpop.permute.xlu0 %2235
      %2237 = vrot.lane.b32.xlu0 %v2212, 64
      %v2238 = vpop.permute.xlu0 %2237
      %v2240 = vsel %vm1095, %v2145, %v2171
      %v2242 = vsel %vm1095, %v2146, %v2173
      %v2244 = vsel %vm1095, %v2147, %v2175
      %v2246 = vsel %vm1104, %v2240, %v2183
      %v2248 = vsel %vm1104, %v2242, %v2185
      %v2250 = vsel %vm1104, %v2244, %v2187
      %v2252 = vsel %vm1113, %v1106, %v2190
      %v2254 = vsel %vm1113, %v2246, %v2192
      %v2256 = vsel %vm1113, %v2248, %v2194
      %v2258 = vsel %vm1113, %v2250, %v2196
      %v2260 = vsel %vm1122, %v2252, %v2205
      %v2262 = vsel %vm1122, %v2254, %v2207
      %v2264 = vsel %vm1122, %v2256, %v2209
      %v2266 = vsel %vm1122, %v2258, %v2211
      %v2268 = vsel %vm1131, %v2260, %v2214
      %v2270 = vsel %vm1131, %v2262, %v2216
      %v2272 = vsel %vm1131, %v2264, %v2218
      %v2274 = vsel %vm1131, %v2266, %v2220
      %v2276 = vsel %vm1140, %v2268, %v2222
      %v2278 = vsel %vm1140, %v2270, %v2224
      %v2280 = vsel %vm1140, %v2272, %v2226
      %v2281 = vsel %vm1140, %v2274, %v1078
      %v2283 = vsel %vm1149, %v2276, %v2228
      %v2285 = vsel %vm1149, %v2278, %v2230
      %v2287 = vsel %vm1149, %v2280, %v2232
      %v2288 = vsel %vm1149, %v2281, %v1086
      %v2290 = vsel %vm1158, %v2283, %v2234
      %v2292 = vsel %vm1158, %v2285, %v2236
      %v2294 = vsel %vm1158, %v2287, %v2238
      %v2295 = vsel %vm1158, %v2288, %v1094
      %v2296 = vld [vmem:[%s15] sm:$0xf]
      %v2297 = vld [vmem:[%s15 + $0x4] sm:$0xf]
      %v2298 = vld [vmem:[%s15 + $0x8] sm:$0xf]
      %v2299 = vld [vmem:[%s15 + $0xc] sm:$0xf]
      %v2300 = vld [vmem:[%s15 + $0x10] sm:$0xf]
      %v2301 = vld [vmem:[%s15 + $0x14] sm:$0xf]
      %v2302 = vld [vmem:[%s15 + $0x18] sm:$0xf]
      %v2303 = vld [vmem:[%s15 + $0x1c] sm:$0xf]
      %v2304 = vld [vmem:[%s15 + $0x20] sm:$0xf]
      %v2305 = vld [vmem:[%s16] sm:$0x1]
      %v2307 = vlaneseq
      %v2308 = vshrl.u32 %v2307, 7
      %v2309 = vsub.s32 0, %v2308
      %v2310 = vrot.slane %v2305, %v2309
      %v2316 = vcombine.low %v2290, %v2292
      %v2317 = vcombine.low %v2294, %v2295
      %v2319 = vunpack.c.l.s4 1983009808
      %v2320 = vunpack.c.0.s8 %v2319
      %v2321 = vlaneseq
      %v2322 = vshrl.u32 %v2321, 7
      %v2323 = vsub.s32 %v2320, %v2322
      %v2324 = vrot.slane %v2316, %v2323
      %v2326 = vunpack.c.l.s4 1983009808
      %v2327 = vunpack.c.0.s8 %v2326
      %v2328 = vlaneseq
      %v2329 = vshrl.u32 %v2328, 7
      %v2330 = vsub.s32 %v2327, %v2329
      %v2331 = vrot.slane %v2317, %v2330
      %v2332 = vcombine.low %v2324, %v2331
      %v2342 = vunpack.c.l.b16 %v2296
      %v2343 = vunpack.c.l.b16 %v2297
      %v2344 = vunpack.c.l.b16 %v2298
      %v2345 = vunpack.c.l.b16 %v2299
      %v2346 = vunpack.c.l.b16 %v2300
      %v2347 = vunpack.c.l.b16 %v2301
      %v2348 = vunpack.c.l.b16 %v2302
      %v2349 = vunpack.c.l.b16 %v2303
      %v2350 = vunpack.c.l.b16 %v2304
      %v2351 = vpack.c.b16 %v2343, %v2342
      %v2352 = vpack.c.b16 %v2345, %v2344
      %v2353 = vpack.c.b16 %v2347, %v2346
      %v2354 = vpack.c.b16 %v2349, %v2348
      %v2355 = vpack.c.b16 %v2350, %v2350
      %v2361 = vsel %vm1231, %v2332, 0
      %v2364 = vsel %vm1235, %v2355, 0
      %2366 = vmatprep.subr.bf16.mxu0 0
      %2367 = vmatpush1.bf16.msra.mxu0 %v2351
      %2368 = vmatprep.subr.bf16.mxu0 0
      %2369 = vmatpush1.bf16.msra.mxu0 %v2352
      %2370 = vmatprep.subr.bf16.mxu0 0
      %2371 = vmatpush1.bf16.msra.mxu0 %v2353
      %2372 = vmatprep.subr.bf16.mxu0 0
      %2373 = vmatpush1.bf16.msra.mxu0 %v2354
      %2374 = vmatprep.subr.bf16.mxu0 0
      %2375 = vmatpush1.bf16.msra.mxu0 %v2364
      %2376 = vmatprep.subr.bf16.mxu0 0
      %2377 = vmatpush1.bf16.msra.mxu0 0
      %2378 = vmatprep.subr.bf16.mxu0 0
      %2379 = vmatpush1.bf16.msra.mxu0 0
      %2380 = vmatprep.subr.bf16.mxu0 0
      %2381 = vmatpush1.bf16.msra.mxu0 0
      %2382 = vmatprep.subr.bf16.mxu0 0
      %2383 = vmatpush1.bf16.msra.mxu0 0
      %2384 = vmatprep.subr.bf16.mxu0 0
      %2385 = vmatpush1.bf16.msra.mxu0 0
      %2386 = vmatprep.subr.bf16.mxu0 0
      %2387 = vmatpush1.bf16.msra.mxu0 0
      %2388 = vmatprep.subr.bf16.mxu0 0
      %2389 = vmatpush1.bf16.msra.mxu0 0
      %2390 = vmatprep.subr.bf16.mxu0 0
      %2391 = vmatpush1.bf16.msra.mxu0 0
      %2392 = vmatprep.subr.bf16.mxu0 0
      %2393 = vmatpush1.bf16.msra.mxu0 0
      %2394 = vmatprep.subr.bf16.mxu0 0
      %2395 = vmatpush1.bf16.msra.mxu0 0
      %2396 = vmatprep.subr.bf16.mxu0 0
      %2397 = vmatpush1.bf16.msra.mxu0 0
      %2398 = vmatprep.mubr.bf16.mxu0 0
      %2399 = vmatmul.mubr.bf16.gmra.mrb[0].mxu0 %v2361
      %v2400 = vpop.f32.mrb[0].mxu0
      %v2401 = vadd.f32 %v2310, %v2400
      %v2402 = vpop.f32.mrb[0].mxu0
      %v2403 = vpop.f32.mrb[0].mxu0
      %v2404 = vadd.f32 %v2310, %v2403
      %v2405 = vpop.f32.mrb[0].mxu0
      %2406 = vdwg.mxu0
      %v2409 = vcombine.high %v2401, %v2401
      %v2410 = vcombine.high %v2404, %v2404
      %v2413 = vmax.f32 %v2401, 0.0
      %v2414 = vmax.f32 %v2409, 0.0
      %v2415 = vmax.f32 %v2404, 0.0
      %v2416 = vmax.f32 %v2410, 0.0
      %v2417 = vpack.c.bf16 %v2413, %v2413
      %v2418 = vpack.c.bf16 %v2414, %v2414
      %v2419 = vpack.c.bf16 %v2415, %v2415
      %v2420 = vpack.c.bf16 %v2416, %v2416
      %v2422 = vshrl.u32 %v2417, 16
      %v2424 = vrot.slane %v2422, 7
      %v2425 = vshll.u32 %v2417, 16
      %v2427 = vor.u32 %v2424, %v2425
      %v2429 = vshrl.u32 %v2418, 16
      %v2431 = vrot.slane %v2429, 7
      %v2432 = vshll.u32 %v2418, 16
      %v2434 = vor.u32 %v2431, %v2432
      %v2436 = vshrl.u32 %v2419, 16
      %v2438 = vrot.slane %v2436, 7
      %v2439 = vshll.u32 %v2419, 16
      %v2441 = vor.u32 %v2438, %v2439
      %v2443 = vshrl.u32 %v2420, 16
      %v2445 = vrot.slane %v2443, 7
      %v2446 = vshll.u32 %v2420, 16
      %v2448 = vor.u32 %v2445, %v2446
      %v2453 = vsel %vm972, 0, %v2427
      %v2454 = vsel %vm972, 0, %v2434
      %v2455 = vsel %vm972, 0, %v2441
      %v2456 = vsel %vm972, 0, %v2448
      %v2457 = vsel %vm980, %v2453, 0
      %v2458 = vsel %vm980, %v2454, 0
      %v2459 = vsel %vm980, %v2455, 0
      %v2460 = vsel %vm980, %v2456, 0
      %v2462 = vshrl.u32 %v2457, 16
      %v2464 = vshll.u32 %v2457, 16
      %v2466 = vrot.slane %v2464, 1
      %v2467 = vor.u32 %v2462, %v2466
      %v2469 = vshrl.u32 %v2458, 16
      %v2471 = vshll.u32 %v2458, 16
      %v2473 = vrot.slane %v2471, 1
      %v2474 = vor.u32 %v2469, %v2473
      %v2476 = vshrl.u32 %v2459, 16
      %v2478 = vshll.u32 %v2459, 16
      %v2480 = vrot.slane %v2478, 1
      %v2481 = vor.u32 %v2476, %v2480
      %2482 = vrot.lane.b32.xlu0 %v2467, 8
      %v2483 = vpop.permute.xlu0 %2482
      %2484 = vrot.lane.b32.xlu0 %v2474, 8
      %v2485 = vpop.permute.xlu0 %2484
      %2486 = vrot.lane.b32.xlu0 %v2481, 8
      %v2487 = vpop.permute.xlu0 %2486
      %v2491 = vrot.slane %v2457, 1
      %v2492 = vrot.slane %v2458, 1
      %v2493 = vrot.slane %v2459, 1
      %2494 = vrot.lane.b32.xlu0 %v2491, 16
      %v2495 = vpop.permute.xlu0 %2494
      %2496 = vrot.lane.b32.xlu0 %v2492, 16
      %v2497 = vpop.permute.xlu0 %2496
      %2498 = vrot.lane.b32.xlu0 %v2493, 16
      %v2499 = vpop.permute.xlu0 %2498
      %2501 = vrot.lane.b32.xlu0 %v2457, 24
      %v2502 = vpop.permute.xlu0 %2501
      %2503 = vrot.lane.b32.xlu0 %v2458, 24
      %v2504 = vpop.permute.xlu0 %2503
      %2505 = vrot.lane.b32.xlu0 %v2459, 24
      %v2506 = vpop.permute.xlu0 %2505
      %2507 = vrot.lane.b32.xlu0 %v2460, 24
      %v2508 = vpop.permute.xlu0 %2507
      %v2510 = vshrl.u32 %v2460, 16
      %v2512 = vshll.u32 %v2460, 16
      %v2514 = vrot.slane %v2512, 1
      %v2515 = vor.u32 %v2510, %v2514
      %2516 = vrot.lane.b32.xlu0 %v2467, 32
      %v2517 = vpop.permute.xlu0 %2516
      %2518 = vrot.lane.b32.xlu0 %v2474, 32
      %v2519 = vpop.permute.xlu0 %2518
      %2520 = vrot.lane.b32.xlu0 %v2481, 32
      %v2521 = vpop.permute.xlu0 %2520
      %2522 = vrot.lane.b32.xlu0 %v2515, 32
      %v2523 = vpop.permute.xlu0 %2522
      %v2524 = vrot.slane %v2460, 1
      %2525 = vrot.lane.b32.xlu0 %v2491, 40
      %v2526 = vpop.permute.xlu0 %2525
      %2527 = vrot.lane.b32.xlu0 %v2492, 40
      %v2528 = vpop.permute.xlu0 %2527
      %2529 = vrot.lane.b32.xlu0 %v2493, 40
      %v2530 = vpop.permute.xlu0 %2529
      %2531 = vrot.lane.b32.xlu0 %v2524, 40
      %v2532 = vpop.permute.xlu0 %2531
      %2533 = vrot.lane.b32.xlu0 %v2458, 48
      %v2534 = vpop.permute.xlu0 %2533
      %2535 = vrot.lane.b32.xlu0 %v2459, 48
      %v2536 = vpop.permute.xlu0 %2535
      %2537 = vrot.lane.b32.xlu0 %v2460, 48
      %v2538 = vpop.permute.xlu0 %2537
      %2539 = vrot.lane.b32.xlu0 %v2474, 56
      %v2540 = vpop.permute.xlu0 %2539
      %2541 = vrot.lane.b32.xlu0 %v2481, 56
      %v2542 = vpop.permute.xlu0 %2541
      %2543 = vrot.lane.b32.xlu0 %v2515, 56
      %v2544 = vpop.permute.xlu0 %2543
      %2545 = vrot.lane.b32.xlu0 %v2492, 64
      %v2546 = vpop.permute.xlu0 %2545
      %2547 = vrot.lane.b32.xlu0 %v2493, 64
      %v2548 = vpop.permute.xlu0 %2547
      %2549 = vrot.lane.b32.xlu0 %v2524, 64
      %v2550 = vpop.permute.xlu0 %2549
      %v2552 = vsel %vm1095, %v2457, %v2483
      %v2554 = vsel %vm1095, %v2458, %v2485
      %v2556 = vsel %vm1095, %v2459, %v2487
      %v2558 = vsel %vm1104, %v2552, %v2495
      %v2560 = vsel %vm1104, %v2554, %v2497
      %v2562 = vsel %vm1104, %v2556, %v2499
      %v2564 = vsel %vm1113, %v1106, %v2502
      %v2566 = vsel %vm1113, %v2558, %v2504
      %v2568 = vsel %vm1113, %v2560, %v2506
      %v2570 = vsel %vm1113, %v2562, %v2508
      %v2572 = vsel %vm1122, %v2564, %v2517
      %v2574 = vsel %vm1122, %v2566, %v2519
      %v2576 = vsel %vm1122, %v2568, %v2521
      %v2578 = vsel %vm1122, %v2570, %v2523
      %v2580 = vsel %vm1131, %v2572, %v2526
      %v2582 = vsel %vm1131, %v2574, %v2528
      %v2584 = vsel %vm1131, %v2576, %v2530
      %v2586 = vsel %vm1131, %v2578, %v2532
      %v2588 = vsel %vm1140, %v2580, %v2534
      %v2590 = vsel %vm1140, %v2582, %v2536
      %v2592 = vsel %vm1140, %v2584, %v2538
      %v2593 = vsel %vm1140, %v2586, %v1078
      %v2595 = vsel %vm1149, %v2588, %v2540
      %v2597 = vsel %vm1149, %v2590, %v2542
      %v2599 = vsel %vm1149, %v2592, %v2544
      %v2600 = vsel %vm1149, %v2593, %v1086
      %v2602 = vsel %vm1158, %v2595, %v2546
      %v2604 = vsel %vm1158, %v2597, %v2548
      %v2606 = vsel %vm1158, %v2599, %v2550
      %v2607 = vsel %vm1158, %v2600, %v1094
      %v2608 = vld [vmem:[%s17] sm:$0xf]
      %v2609 = vld [vmem:[%s17 + $0x4] sm:$0xf]
      %v2610 = vld [vmem:[%s17 + $0x8] sm:$0xf]
      %v2611 = vld [vmem:[%s17 + $0xc] sm:$0xf]
      %v2612 = vld [vmem:[%s17 + $0x10] sm:$0xf]
      %v2613 = vld [vmem:[%s17 + $0x14] sm:$0xf]
      %v2614 = vld [vmem:[%s17 + $0x18] sm:$0xf]
      %v2615 = vld [vmem:[%s17 + $0x1c] sm:$0xf]
      %v2616 = vld [vmem:[%s17 + $0x20] sm:$0xf]
      %v2617 = vld [vmem:[%s18] sm:$0x1]
      %v2619 = vlaneseq
      %v2620 = vshrl.u32 %v2619, 7
      %v2621 = vsub.s32 0, %v2620
      %v2622 = vrot.slane %v2617, %v2621
      %v2628 = vcombine.low %v2602, %v2604
      %v2629 = vcombine.low %v2606, %v2607
      %v2631 = vunpack.c.l.s4 1983009808
      %v2632 = vunpack.c.0.s8 %v2631
      %v2633 = vlaneseq
      %v2634 = vshrl.u32 %v2633, 7
      %v2635 = vsub.s32 %v2632, %v2634
      %v2636 = vrot.slane %v2628, %v2635
      %v2638 = vunpack.c.l.s4 1983009808
      %v2639 = vunpack.c.0.s8 %v2638
      %v2640 = vlaneseq
      %v2641 = vshrl.u32 %v2640, 7
      %v2642 = vsub.s32 %v2639, %v2641
      %v2643 = vrot.slane %v2629, %v2642
      %v2644 = vcombine.low %v2636, %v2643
      %v2654 = vunpack.c.l.b16 %v2608
      %v2655 = vunpack.c.l.b16 %v2609
      %v2656 = vunpack.c.l.b16 %v2610
      %v2657 = vunpack.c.l.b16 %v2611
      %v2658 = vunpack.c.l.b16 %v2612
      %v2659 = vunpack.c.l.b16 %v2613
      %v2660 = vunpack.c.l.b16 %v2614
      %v2661 = vunpack.c.l.b16 %v2615
      %v2662 = vunpack.c.l.b16 %v2616
      %v2663 = vpack.c.b16 %v2655, %v2654
      %v2664 = vpack.c.b16 %v2657, %v2656
      %v2665 = vpack.c.b16 %v2659, %v2658
      %v2666 = vpack.c.b16 %v2661, %v2660
      %v2667 = vpack.c.b16 %v2662, %v2662
      %v2673 = vsel %vm1231, %v2644, 0
      %v2676 = vsel %vm1235, %v2667, 0
      %2678 = vmatprep.subr.bf16.mxu0 0
      %2679 = vmatpush1.bf16.msra.mxu0 %v2663
      %2680 = vmatprep.subr.bf16.mxu0 0
      %2681 = vmatpush1.bf16.msra.mxu0 %v2664
      %2682 = vmatprep.subr.bf16.mxu0 0
      %2683 = vmatpush1.bf16.msra.mxu0 %v2665
      %2684 = vmatprep.subr.bf16.mxu0 0
      %2685 = vmatpush1.bf16.msra.mxu0 %v2666
      %2686 = vmatprep.subr.bf16.mxu0 0
      %2687 = vmatpush1.bf16.msra.mxu0 %v2676
      %2688 = vmatprep.subr.bf16.mxu0 0
      %2689 = vmatpush1.bf16.msra.mxu0 0
      %2690 = vmatprep.subr.bf16.mxu0 0
      %2691 = vmatpush1.bf16.msra.mxu0 0
      %2692 = vmatprep.subr.bf16.mxu0 0
      %2693 = vmatpush1.bf16.msra.mxu0 0
      %2694 = vmatprep.subr.bf16.mxu0 0
      %2695 = vmatpush1.bf16.msra.mxu0 0
      %2696 = vmatprep.subr.bf16.mxu0 0
      %2697 = vmatpush1.bf16.msra.mxu0 0
      %2698 = vmatprep.subr.bf16.mxu0 0
      %2699 = vmatpush1.bf16.msra.mxu0 0
      %2700 = vmatprep.subr.bf16.mxu0 0
      %2701 = vmatpush1.bf16.msra.mxu0 0
      %2702 = vmatprep.subr.bf16.mxu0 0
      %2703 = vmatpush1.bf16.msra.mxu0 0
      %2704 = vmatprep.subr.bf16.mxu0 0
      %2705 = vmatpush1.bf16.msra.mxu0 0
      %2706 = vmatprep.subr.bf16.mxu0 0
      %2707 = vmatpush1.bf16.msra.mxu0 0
      %2708 = vmatprep.subr.bf16.mxu0 0
      %2709 = vmatpush1.bf16.msra.mxu0 0
      %2710 = vmatprep.mubr.bf16.mxu0 0
      %2711 = vmatmul.mubr.bf16.gmra.mrb[0].mxu0 %v2673
      %v2712 = vpop.f32.mrb[0].mxu0
      %v2713 = vadd.f32 %v2622, %v2712
      %v2714 = vpop.f32.mrb[0].mxu0
      %v2715 = vpop.f32.mrb[0].mxu0
      %v2716 = vadd.f32 %v2622, %v2715
      %v2717 = vpop.f32.mrb[0].mxu0
      %2718 = vdwg.mxu0
      %v2721 = vcombine.high %v2713, %v2713
      %v2722 = vcombine.high %v2716, %v2716
      %v2725 = vmul.f32 %v2713, 0.1
      %v2726 = vmul.f32 %v2721, 0.1
      %v2727 = vmul.f32 %v2716, 0.1
      %v2728 = vmul.f32 %v2722, 0.1
      %v2729 = vtanh.pop %v2725
      %v2730 = vtanh.pop %v2726
      %v2731 = vtanh.pop %v2727
      %v2732 = vtanh.pop %v2728
      %v2733 = vmul.f32 %v2729, 2.0
      %v2734 = vmul.f32 %v2730, 2.0
      %v2735 = vmul.f32 %v2731, 2.0
      %v2736 = vmul.f32 %v2732, 2.0
      %v2737 = vmul.f32 %v2733, 1.442695
      %v2738 = vpow.pop %v2737
      %v2739 = vmul.f32 %v2734, 1.442695
      %v2740 = vpow.pop %v2739
      %v2741 = vmul.f32 %v2735, 1.442695
      %v2742 = vpow.pop %v2741
      %v2743 = vmul.f32 %v2736, 1.442695
      %v2744 = vpow.pop %v2743
      %2749 = vrot.lane.b32.xlu0 %v2738, 8
      %v2750 = vpop.permute.xlu0 %2749
      %2751 = vrot.lane.b32.xlu0 %v2740, 8
      %v2752 = vpop.permute.xlu0 %2751
      %2753 = vrot.lane.b32.xlu0 %v2742, 8
      %v2754 = vpop.permute.xlu0 %2753
      %2755 = vrot.lane.b32.xlu0 %v2744, 8
      %v2756 = vpop.permute.xlu0 %2755
      %v2761 = vmul.f32 %v2091, %v2750
      %v2762 = vmul.f32 %v2101, %v2752
      %v2763 = vmul.f32 %v2096, %v2754
      %v2764 = vmul.f32 %v2102, %v2756
      %v2765 = vadd.f32 %v2761, %v2725
      %v2766 = vadd.f32 %v2762, %v2726
      %v2767 = vadd.f32 %v2763, %v2727
      %v2768 = vadd.f32 %v2764, %v2728
      %v2769 = vsel %vm1642, %v2733, 0.0
      %v2770 = vsel %vm1642, %v2734, 0.0
      %v2771 = vadd.f32 %v2769, %v2770
      %v2772 = vsel %vm1642, %v2735, 0.0
      %v2773 = vadd.f32 %v2771, %v2772
      %v2774 = vsel %vm1642, %v2736, 0.0
      %v2775 = vadd.f32 %v2773, %v2774
      %2776 = vadd.xlane.f32.xlu0 %v2775
      %v2777 = vpop.xlane.xlu0 %2776
      %v2778 = vrot.slane %v2777, 4
      %v2779 = vadd.f32 %v2777, %v2778
      %v2780 = vrot.slane %v2779, 2
      %v2781 = vadd.f32 %v2779, %v2780
      %v2782 = vrot.slane %v2781, 1
      %v2783 = vadd.f32 %v2781, %v2782
      %s2784 = vtos %v2783
      %s2785 = sadd.f32 %s2000, %s2784
      %v2786 = vsel %vm1095, %v2091, %v2765
      %v2787 = vsel %vm1095, %v2101, %v2766
      %v2788 = vsel %vm1095, %v2096, %v2767
      %v2789 = vsel %vm1095, %v2102, %v2768
      %v2790 = vld [vmem:[%s19] sm:$0xff]
      %v2791 = vld [vmem:[%s19 + $0x8] sm:$0xff]
      %v2792 = vld [vmem:[%s20] sm:$0x1]
      %v2794 = vlaneseq
      %v2795 = vshrl.u32 %v2794, 7
      %v2796 = vsub.s32 0, %v2795
      %v2797 = vrot.slane %v2792, %v2796
      %v2803 = vcombine.low %v2786, %v2787
      %v2804 = vcombine.low %v2788, %v2789
      %v2805 = vsel %vm1104, %v2803, 0
      %v2807 = vsel %vm1104, %v2804, 0
      %2809 = vmatprep.subr.mxu0 0.0
      %2810 = vmatpush1.msra.mxu0 %v2790
      %2811 = vmatprep.subr.mxu0 0.0
      %2812 = vmatpush1.msra.mxu0 %v2791
      %2813 = vmatprep.subr.mxu0 0.0
      %2814 = vmatpush1.msra.mxu0 0.0
      %2815 = vmatprep.subr.mxu0 0.0
      %2816 = vmatpush1.msra.mxu0 0.0
      %2817 = vmatprep.subr.mxu0 0.0
      %2818 = vmatpush1.msra.mxu0 0.0
      %2819 = vmatprep.subr.mxu0 0.0
      %2820 = vmatpush1.msra.mxu0 0.0
      %2821 = vmatprep.subr.mxu0 0.0
      %2822 = vmatpush1.msra.mxu0 0.0
      %2823 = vmatprep.subr.mxu0 0.0
      %2824 = vmatpush1.msra.mxu0 0.0
      %2825 = vmatprep.subr.mxu0 0.0
      %2826 = vmatpush1.msra.mxu0 0.0
      %2827 = vmatprep.subr.mxu0 0.0
      %2828 = vmatpush1.msra.mxu0 0.0
      %2829 = vmatprep.subr.mxu0 0.0
      %2830 = vmatpush1.msra.mxu0 0.0
      %2831 = vmatprep.subr.mxu0 0.0
      %2832 = vmatpush1.msra.mxu0 0.0
      %2833 = vmatprep.subr.mxu0 0.0
      %2834 = vmatpush1.msra.mxu0 0.0
      %2835 = vmatprep.subr.mxu0 0.0
      %2836 = vmatpush1.msra.mxu0 0.0
      %2837 = vmatprep.subr.mxu0 0.0
      %2838 = vmatpush1.msra.mxu0 0.0
      %2839 = vmatprep.subr.mxu0 0.0
      %2840 = vmatpush1.msra.mxu0 0.0
      %2841 = vmatprep.subr.mxu0 0.0
      %2842 = vmatpush1.msra.mxu0 0.0
      %2843 = vmatprep.subr.mxu0 0.0
      %2844 = vmatpush1.msra.mxu0 0.0
      %2845 = vmatprep.subr.mxu0 0.0
      %2846 = vmatpush1.msra.mxu0 0.0
      %2847 = vmatprep.subr.mxu0 0.0
      %2848 = vmatpush1.msra.mxu0 0.0
      %2849 = vmatprep.subr.mxu0 0.0
      %2850 = vmatpush1.msra.mxu0 0.0
      %2851 = vmatprep.subr.mxu0 0.0
      %2852 = vmatpush1.msra.mxu0 0.0
      %2853 = vmatprep.subr.mxu0 0.0
      %2854 = vmatpush1.msra.mxu0 0.0
      %2855 = vmatprep.subr.mxu0 0.0
      %2856 = vmatpush1.msra.mxu0 0.0
      %2857 = vmatprep.subr.mxu0 0.0
      %2858 = vmatpush1.msra.mxu0 0.0
      %2859 = vmatprep.subr.mxu0 0.0
      %2860 = vmatpush1.msra.mxu0 0.0
      %2861 = vmatprep.subr.mxu0 0.0
      %2862 = vmatpush1.msra.mxu0 0.0
      %2863 = vmatprep.subr.mxu0 0.0
      %2864 = vmatpush1.msra.mxu0 0.0
      %2865 = vmatprep.subr.mxu0 0.0
      %2866 = vmatpush1.msra.mxu0 0.0
      %2867 = vmatprep.subr.mxu0 0.0
      %2868 = vmatpush1.msra.mxu0 0.0
      %2869 = vmatprep.subr.mxu0 0.0
      %2870 = vmatpush1.msra.mxu0 0.0
      %2871 = vmatprep.subr.mxu0 0.0
      %2872 = vmatpush1.msra.mxu0 0.0
      %2873 = vmatprep.mubr.f32.mxu0 0.0
      %2874 = vmatmul.mubr.f32.gmra.mrb[0].mxu0 %v2805
      %v2875 = vpop.f32.mrb[0].mxu0
      %v2876 = vadd.f32 %v2797, %v2875
      %v2877 = vpop.f32.mrb[0].mxu0
      %2878 = vmatprep.mubr.f32.mxu0 0.0
      %2879 = vmatmul.mubr.f32.gmra.mrb[0].mxu0 %v2807
      %v2880 = vpop.f32.mrb[0].mxu0
      %v2881 = vadd.f32 %v2797, %v2880
      %v2882 = vpop.f32.mrb[0].mxu0
      %2883 = vdwg.mxu0
      %v2886 = vcombine.high %v2876, %v2876
      %v2887 = vcombine.high %v2881, %v2881
      %v2890 = vpack.c.bf16 %v2876, %v2876
      %v2891 = vpack.c.bf16 %v2886, %v2886
      %v2892 = vpack.c.bf16 %v2881, %v2881
      %v2893 = vpack.c.bf16 %v2887, %v2887
      %v2894 = vld [vmem:[%s21] sm:$0xf]
      %v2895 = vld [vmem:[%s22] sm:$0x1]
      %v2897 = vlaneseq
      %v2898 = vshrl.u32 %v2897, 7
      %v2899 = vsub.s32 0, %v2898
      %v2900 = vrot.slane %v2895, %v2899
      %v2906 = vcombine.low %v2890, %v2891
      %v2907 = vcombine.low %v2892, %v2893
      %v2909 = vunpack.c.l.s4 1983009808
      %v2910 = vunpack.c.0.s8 %v2909
      %v2911 = vlaneseq
      %v2912 = vshrl.u32 %v2911, 7
      %v2913 = vsub.s32 %v2910, %v2912
      %v2914 = vrot.slane %v2906, %v2913
      %v2916 = vunpack.c.l.s4 1983009808
      %v2917 = vunpack.c.0.s8 %v2916
      %v2918 = vlaneseq
      %v2919 = vshrl.u32 %v2918, 7
      %v2920 = vsub.s32 %v2917, %v2919
      %v2921 = vrot.slane %v2907, %v2920
      %v2922 = vcombine.low %v2914, %v2921
      %v2924 = vsel %vm1095, %v2922, 0
      %v2927 = vsel %vm1235, %v2894, 0
      %2929 = vmatprep.subr.bf16.mxu0 0
      %2930 = vmatpush1.bf16.msra.mxu0 %v2927
      %2931 = vmatprep.subr.bf16.mxu0 0
      %2932 = vmatpush1.bf16.msra.mxu0 0
      %2933 = vmatprep.subr.bf16.mxu0 0
      %2934 = vmatpush1.bf16.msra.mxu0 0
      %2935 = vmatprep.subr.bf16.mxu0 0
      %2936 = vmatpush1.bf16.msra.mxu0 0
      %2937 = vmatprep.subr.bf16.mxu0 0
      %2938 = vmatpush1.bf16.msra.mxu0 0
      %2939 = vmatprep.subr.bf16.mxu0 0
      %2940 = vmatpush1.bf16.msra.mxu0 0
      %2941 = vmatprep.subr.bf16.mxu0 0
      %2942 = vmatpush1.bf16.msra.mxu0 0
      %2943 = vmatprep.subr.bf16.mxu0 0
      %2944 = vmatpush1.bf16.msra.mxu0 0
      %2945 = vmatprep.subr.bf16.mxu0 0
      %2946 = vmatpush1.bf16.msra.mxu0 0
      %2947 = vmatprep.subr.bf16.mxu0 0
      %2948 = vmatpush1.bf16.msra.mxu0 0
      %2949 = vmatprep.subr.bf16.mxu0 0
      %2950 = vmatpush1.bf16.msra.mxu0 0
      %2951 = vmatprep.subr.bf16.mxu0 0
      %2952 = vmatpush1.bf16.msra.mxu0 0
      %2953 = vmatprep.subr.bf16.mxu0 0
      %2954 = vmatpush1.bf16.msra.mxu0 0
      %2955 = vmatprep.subr.bf16.mxu0 0
      %2956 = vmatpush1.bf16.msra.mxu0 0
      %2957 = vmatprep.subr.bf16.mxu0 0
      %2958 = vmatpush1.bf16.msra.mxu0 0
      %2959 = vmatprep.subr.bf16.mxu0 0
      %2960 = vmatpush1.bf16.msra.mxu0 0
      %2961 = vmatprep.mubr.bf16.mxu0 0
      %2962 = vmatmul.mubr.bf16.gmra.mrb[0].mxu0 %v2924
      %v2963 = vpop.f32.mrb[0].mxu0
      %v2964 = vadd.f32 %v2900, %v2963
      %v2965 = vpop.f32.mrb[0].mxu0
      %v2966 = vpop.f32.mrb[0].mxu0
      %v2967 = vadd.f32 %v2900, %v2966
      %v2968 = vpop.f32.mrb[0].mxu0
      %2969 = vdwg.mxu0
      %v2972 = vcombine.high %v2964, %v2964
      %v2973 = vcombine.high %v2967, %v2967
      %v2976 = vmax.f32 %v2964, 0.0
      %v2977 = vmax.f32 %v2972, 0.0
      %v2978 = vmax.f32 %v2967, 0.0
      %v2979 = vmax.f32 %v2973, 0.0
      %v2980 = vpack.c.bf16 %v2976, %v2976
      %v2981 = vpack.c.bf16 %v2977, %v2977
      %v2982 = vpack.c.bf16 %v2978, %v2978
      %v2983 = vpack.c.bf16 %v2979, %v2979
      %v2984 = vld [vmem:[%s23] sm:$0xf]
      %v2985 = vld [vmem:[%s24] sm:$0x1]
      %v2987 = vlaneseq
      %v2988 = vshrl.u32 %v2987, 7
      %v2989 = vsub.s32 0, %v2988
      %v2990 = vrot.slane %v2985, %v2989
      %v2996 = vcombine.low %v2980, %v2981
      %v2997 = vcombine.low %v2982, %v2983
      %v2999 = vunpack.c.l.s4 1983009808
      %v3000 = vunpack.c.0.s8 %v2999
      %v3001 = vlaneseq
      %v3002 = vshrl.u32 %v3001, 7
      %v3003 = vsub.s32 %v3000, %v3002
      %v3004 = vrot.slane %v2996, %v3003
      %v3006 = vunpack.c.l.s4 1983009808
      %v3007 = vunpack.c.0.s8 %v3006
      %v3008 = vlaneseq
      %v3009 = vshrl.u32 %v3008, 7
      %v3010 = vsub.s32 %v3007, %v3009
      %v3011 = vrot.slane %v2997, %v3010
      %v3012 = vcombine.low %v3004, %v3011
      %v3014 = vsel %vm1095, %v3012, 0
      %v3017 = vsel %vm1235, %v2984, 0
      %3019 = vmatprep.subr.bf16.mxu0 0
      %3020 = vmatpush1.bf16.msra.mxu0 %v3017
      %3021 = vmatprep.subr.bf16.mxu0 0
      %3022 = vmatpush1.bf16.msra.mxu0 0
      %3023 = vmatprep.subr.bf16.mxu0 0
      %3024 = vmatpush1.bf16.msra.mxu0 0
      %3025 = vmatprep.subr.bf16.mxu0 0
      %3026 = vmatpush1.bf16.msra.mxu0 0
      %3027 = vmatprep.subr.bf16.mxu0 0
      %3028 = vmatpush1.bf16.msra.mxu0 0
      %3029 = vmatprep.subr.bf16.mxu0 0
      %3030 = vmatpush1.bf16.msra.mxu0 0
      %3031 = vmatprep.subr.bf16.mxu0 0
      %3032 = vmatpush1.bf16.msra.mxu0 0
      %3033 = vmatprep.subr.bf16.mxu0 0
      %3034 = vmatpush1.bf16.msra.mxu0 0
      %3035 = vmatprep.subr.bf16.mxu0 0
      %3036 = vmatpush1.bf16.msra.mxu0 0
      %3037 = vmatprep.subr.bf16.mxu0 0
      %3038 = vmatpush1.bf16.msra.mxu0 0
      %3039 = vmatprep.subr.bf16.mxu0 0
      %3040 = vmatpush1.bf16.msra.mxu0 0
      %3041 = vmatprep.subr.bf16.mxu0 0
      %3042 = vmatpush1.bf16.msra.mxu0 0
      %3043 = vmatprep.subr.bf16.mxu0 0
      %3044 = vmatpush1.bf16.msra.mxu0 0
      %3045 = vmatprep.subr.bf16.mxu0 0
      %3046 = vmatpush1.bf16.msra.mxu0 0
      %3047 = vmatprep.subr.bf16.mxu0 0
      %3048 = vmatpush1.bf16.msra.mxu0 0
      %3049 = vmatprep.subr.bf16.mxu0 0
      %3050 = vmatpush1.bf16.msra.mxu0 0
      %3051 = vmatprep.mubr.bf16.mxu0 0
      %3052 = vmatmul.mubr.bf16.gmra.mrb[0].mxu0 %v3014
      %v3053 = vpop.f32.mrb[0].mxu0
      %v3054 = vadd.f32 %v2990, %v3053
      %v3055 = vpop.f32.mrb[0].mxu0
      %v3056 = vpop.f32.mrb[0].mxu0
      %v3057 = vadd.f32 %v2990, %v3056
      %v3058 = vpop.f32.mrb[0].mxu0
      %3059 = vdwg.mxu0
      %v3062 = vcombine.high %v3054, %v3054
      %v3063 = vcombine.high %v3057, %v3057
      %v3066 = vmul.f32 %v3054, 0.1
      %v3067 = vmul.f32 %v3062, 0.1
      %v3068 = vmul.f32 %v3057, 0.1
      %v3069 = vmul.f32 %v3063, 0.1
      %v3070 = vtanh.pop %v3066
      %v3071 = vtanh.pop %v3067
      %v3072 = vtanh.pop %v3068
      %v3073 = vtanh.pop %v3069
      %v3074 = vmul.f32 %v3070, 2.0
      %v3075 = vmul.f32 %v3071, 2.0
      %v3076 = vmul.f32 %v3072, 2.0
      %v3077 = vmul.f32 %v3073, 2.0
      %v3078 = vmul.f32 %v3074, 1.442695
      %v3079 = vpow.pop %v3078
      %v3080 = vmul.f32 %v3075, 1.442695
      %v3081 = vpow.pop %v3080
      %v3082 = vmul.f32 %v3076, 1.442695
      %v3083 = vpow.pop %v3082
      %v3084 = vmul.f32 %v3077, 1.442695
      %v3085 = vpow.pop %v3084
      %3090 = vrot.lane.b32.xlu0 %v3079, 8
      %v3091 = vpop.permute.xlu0 %3090
      %3092 = vrot.lane.b32.xlu0 %v3081, 8
      %v3093 = vpop.permute.xlu0 %3092
      %3094 = vrot.lane.b32.xlu0 %v3083, 8
      %v3095 = vpop.permute.xlu0 %3094
      %3096 = vrot.lane.b32.xlu0 %v3085, 8
      %v3097 = vpop.permute.xlu0 %3096
      %v3102 = vmul.f32 %v2876, %v3091
      %v3103 = vmul.f32 %v2886, %v3093
      %v3104 = vmul.f32 %v2881, %v3095
      %v3105 = vmul.f32 %v2887, %v3097
      %v3106 = vadd.f32 %v3102, %v3066
      %v3107 = vadd.f32 %v3103, %v3067
      %v3108 = vadd.f32 %v3104, %v3068
      %v3109 = vadd.f32 %v3105, %v3069
      %v3110 = vsel %vm1642, %v3074, 0.0
      %v3111 = vsel %vm1642, %v3075, 0.0
      %v3112 = vadd.f32 %v3110, %v3111
      %v3113 = vsel %vm1642, %v3076, 0.0
      %v3114 = vadd.f32 %v3112, %v3113
      %v3115 = vsel %vm1642, %v3077, 0.0
      %v3116 = vadd.f32 %v3114, %v3115
      %3117 = vadd.xlane.f32.xlu0 %v3116
      %v3118 = vpop.xlane.xlu0 %3117
      %v3119 = vrot.slane %v3118, 4
      %v3120 = vadd.f32 %v3118, %v3119
      %v3121 = vrot.slane %v3120, 2
      %v3122 = vadd.f32 %v3120, %v3121
      %v3123 = vrot.slane %v3122, 1
      %v3124 = vadd.f32 %v3122, %v3123
      %s3125 = vtos %v3124
      %s3126 = sadd.f32 %s2785, %s3125
      %v3127 = vsel %vm1095, %v2876, %v3106
      %v3128 = vsel %vm1095, %v2886, %v3107
      %v3129 = vsel %vm1095, %v2881, %v3108
      %v3130 = vsel %vm1095, %v2887, %v3109
      %v3131 = vld [vmem:[%s25] sm:$0xff]
      %v3132 = vld [vmem:[%s25 + $0x8] sm:$0xff]
      %v3133 = vld [vmem:[%s26] sm:$0x1]
      %v3135 = vlaneseq
      %v3136 = vshrl.u32 %v3135, 7
      %v3137 = vsub.s32 0, %v3136
      %v3138 = vrot.slane %v3133, %v3137
      %v3144 = vcombine.low %v3127, %v3128
      %v3145 = vcombine.low %v3129, %v3130
      %v3146 = vsel %vm1104, %v3144, 0
      %v3148 = vsel %vm1104, %v3145, 0
      %3150 = vmatprep.subr.mxu0 0.0
      %3151 = vmatpush1.msra.mxu0 %v3131
      %3152 = vmatprep.subr.mxu0 0.0
      %3153 = vmatpush1.msra.mxu0 %v3132
      %3154 = vmatprep.subr.mxu0 0.0
      %3155 = vmatpush1.msra.mxu0 0.0
      %3156 = vmatprep.subr.mxu0 0.0
      %3157 = vmatpush1.msra.mxu0 0.0
      %3158 = vmatprep.subr.mxu0 0.0
      %3159 = vmatpush1.msra.mxu0 0.0
      %3160 = vmatprep.subr.mxu0 0.0
      %3161 = vmatpush1.msra.mxu0 0.0
      %3162 = vmatprep.subr.mxu0 0.0
      %3163 = vmatpush1.msra.mxu0 0.0
      %3164 = vmatprep.subr.mxu0 0.0
      %3165 = vmatpush1.msra.mxu0 0.0
      %3166 = vmatprep.subr.mxu0 0.0
      %3167 = vmatpush1.msra.mxu0 0.0
      %3168 = vmatprep.subr.mxu0 0.0
      %3169 = vmatpush1.msra.mxu0 0.0
      %3170 = vmatprep.subr.mxu0 0.0
      %3171 = vmatpush1.msra.mxu0 0.0
      %3172 = vmatprep.subr.mxu0 0.0
      %3173 = vmatpush1.msra.mxu0 0.0
      %3174 = vmatprep.subr.mxu0 0.0
      %3175 = vmatpush1.msra.mxu0 0.0
      %3176 = vmatprep.subr.mxu0 0.0
      %3177 = vmatpush1.msra.mxu0 0.0
      %3178 = vmatprep.subr.mxu0 0.0
      %3179 = vmatpush1.msra.mxu0 0.0
      %3180 = vmatprep.subr.mxu0 0.0
      %3181 = vmatpush1.msra.mxu0 0.0
      %3182 = vmatprep.subr.mxu0 0.0
      %3183 = vmatpush1.msra.mxu0 0.0
      %3184 = vmatprep.subr.mxu0 0.0
      %3185 = vmatpush1.msra.mxu0 0.0
      %3186 = vmatprep.subr.mxu0 0.0
      %3187 = vmatpush1.msra.mxu0 0.0
      %3188 = vmatprep.subr.mxu0 0.0
      %3189 = vmatpush1.msra.mxu0 0.0
      %3190 = vmatprep.subr.mxu0 0.0
      %3191 = vmatpush1.msra.mxu0 0.0
      %3192 = vmatprep.subr.mxu0 0.0
      %3193 = vmatpush1.msra.mxu0 0.0
      %3194 = vmatprep.subr.mxu0 0.0
      %3195 = vmatpush1.msra.mxu0 0.0
      %3196 = vmatprep.subr.mxu0 0.0
      %3197 = vmatpush1.msra.mxu0 0.0
      %3198 = vmatprep.subr.mxu0 0.0
      %3199 = vmatpush1.msra.mxu0 0.0
      %3200 = vmatprep.subr.mxu0 0.0
      %3201 = vmatpush1.msra.mxu0 0.0
      %3202 = vmatprep.subr.mxu0 0.0
      %3203 = vmatpush1.msra.mxu0 0.0
      %3204 = vmatprep.subr.mxu0 0.0
      %3205 = vmatpush1.msra.mxu0 0.0
      %3206 = vmatprep.subr.mxu0 0.0
      %3207 = vmatpush1.msra.mxu0 0.0
      %3208 = vmatprep.subr.mxu0 0.0
      %3209 = vmatpush1.msra.mxu0 0.0
      %3210 = vmatprep.subr.mxu0 0.0
      %3211 = vmatpush1.msra.mxu0 0.0
      %3212 = vmatprep.subr.mxu0 0.0
      %3213 = vmatpush1.msra.mxu0 0.0
      %3214 = vmatprep.mubr.f32.mxu0 0.0
      %3215 = vmatmul.mubr.f32.gmra.mrb[0].mxu0 %v3146
      %v3216 = vpop.f32.mrb[0].mxu0
      %v3217 = vadd.f32 %v3138, %v3216
      %v3218 = vpop.f32.mrb[0].mxu0
      %3219 = vmatprep.mubr.f32.mxu0 0.0
      %3220 = vmatmul.mubr.f32.gmra.mrb[0].mxu0 %v3148
      %v3221 = vpop.f32.mrb[0].mxu0
      %v3222 = vadd.f32 %v3138, %v3221
      %v3223 = vpop.f32.mrb[0].mxu0
      %3224 = vdwg.mxu0
      %v3227 = vcombine.high %v3217, %v3217
      %v3228 = vcombine.high %v3222, %v3222
      %v3231 = vmul.f32 %v3217, %v3217
      %v3232 = vmul.f32 %v3227, %v3227
      %v3233 = vmul.f32 %v3222, %v3222
      %v3234 = vmul.f32 %v3228, %v3228
      %v3235 = vsel %vm858, %v3231, 0.0
      %v3236 = vsel %vm858, %v3232, 0.0
      %v3237 = vadd.f32 %v3235, %v3236
      %v3238 = vsel %vm858, %v3233, 0.0
      %v3239 = vadd.f32 %v3237, %v3238
      %v3240 = vsel %vm858, %v3234, 0.0
      %v3241 = vadd.f32 %v3239, %v3240
      %3242 = vadd.xlane.f32.xlu0 %v3241
      %v3243 = vpop.xlane.xlu0 %3242
      %v3244 = vrot.slane %v3243, 4
      %v3245 = vadd.f32 %v3243, %v3244
      %v3246 = vrot.slane %v3245, 2
      %v3247 = vadd.f32 %v3245, %v3246
      %v3248 = vrot.slane %v3247, 1
      %v3249 = vadd.f32 %v3247, %v3248
      %s3250 = vtos %v3249
      %s3251 = smul.f32 %s3250, 0.5
      %s3252 = ssub.f32 %s3251, %s3126
      %v3253 = vstv %s3252
      %3254 = vst [vmem:[%s848] sm:$0x1] %v3253
      %3255 = vadd.xlane.f32.xlu0 %v3235
      %v3256 = vpop.xlane.xlu0 %3255
      %3257 = vadd.xlane.f32.xlu0 %v3236
      %v3258 = vpop.xlane.xlu0 %3257
      %3259 = vadd.xlane.f32.xlu0 %v3238
      %v3260 = vpop.xlane.xlu0 %3259
      %3261 = vadd.xlane.f32.xlu0 %v3240
      %v3262 = vpop.xlane.xlu0 %3261
      %v3263 = vrcp.pop 16.0
      %v3264 = vmul.f32 %v3256, %v3263
      %v3265 = vmul.f32 %v3258, %v3263
      %v3266 = vmul.f32 %v3260, %v3263
      %v3267 = vmul.f32 %v3262, %v3263
      %v3268 = vmul.f32 %v3264, -0.5
      %v3269 = vmul.f32 %v3265, -0.5
      %v3270 = vmul.f32 %v3266, -0.5
      %v3271 = vmul.f32 %v3267, -0.5
      %v3272 = vmul.f32 %v3268, 1.442695
      %v3273 = vpow.pop %v3272
      %v3274 = vmul.f32 %v3269, 1.442695
      %v3275 = vpow.pop %v3274
      %v3276 = vmul.f32 %v3270, 1.442695
      %v3277 = vpow.pop %v3276
      %v3278 = vmul.f32 %v3271, 1.442695
      %v3279 = vpow.pop %v3278
      %v3280 = vsub.f32 0.0, %v3273
      %v3281 = vsub.f32 0.0, %v3275
      %v3282 = vsub.f32 0.0, %v3277
      %v3283 = vsub.f32 0.0, %v3279
      %v3288 = vlaneseq
      %v3289 = vand.u32 %v3288, 127
      %v3290 = vlaneseq
      %v3291 = vshrl.u32 %v3290, 7
      %v3292 = vsub.s32 %v3289, %v3291
      %v3293 = vrot.slane %v3280, %v3292
      %v3294 = vlaneseq
      %v3295 = vshrl.u32 %v3294, 7
      %v3296 = vsub.s32 %v3289, %v3295
      %v3297 = vrot.slane %v3281, %v3296
      %v3298 = vlaneseq
      %v3299 = vshrl.u32 %v3298, 7
      %v3300 = vsub.s32 %v3289, %v3299
      %v3301 = vrot.slane %v3282, %v3300
      %v3302 = vlaneseq
      %v3303 = vshrl.u32 %v3302, 7
      %v3304 = vsub.s32 %v3289, %v3303
      %v3305 = vrot.slane %v3283, %v3304
      %vm3306 = vcmask 1041409
      %v3307 = vsel %vm3306, %v3297, %v3293
      %vm3308 = vcmask 1042434
      %v3309 = vsel %vm3308, %v3301, %v3307
      %vm3310 = vcmask 1043459
      %v3311 = vsel %vm3310, %v3305, %v3309
      %vm3313 = vcmask 27648
      %3314 = vst.msk [vmem:[%s852] sm:$0xf] %vm3313, %v3311
      %p3315 = scmp.lt.s32.totalorder %s40, 1
      %s3316 = scalar_select %p3315, %s40, 1
      %s3317 = scalar_lea.vmem %s27, %s3316
      %p3318 = scmp.lt.s32.totalorder %s40, 1
      %s3319 = scalar_select %p3318, %s40, 1
      %s3320 = smul.addr %s3319, 4
      %s3321 = scalar_lea.vmem %s28, %s3320
      // Predicated region
      $region129: #{_lambda_.3} parent=127 // pred_check
        %p3322 = pneg %p630
      $region130: #{_lambda_.3} parent=127 // pred_check_branch
        %3324 = sbr.rel (%p3322) target = $region132
      $region131: #{_lambda_.3} parent=127 // pred_region
        _
      $region132: #{_lambda_.3} parent=127 // pred_fallthru
        _
      // Predicated region
      $region133: #{_lambda_.3} parent=127 // pred_check
        %p3325 = pneg %p656
      $region134: #{_lambda_.3} parent=127 // pred_check_branch
        %3327 = sbr.rel (%p3325) target = $region136
      $region135: #{_lambda_.3} parent=127 // pred_region
        _
      $region136: #{_lambda_.3} parent=127 // pred_fallthru
        _
    $region128: #{_lambda_.3} parent=5 // pred_fallthru
      _
    %p3328 = scmp.le.s32.totalorder 2, %s35
    // Predicated region
    $region137: #{_lambda_.3} parent=5 // pred_check
      %p3329 = pneg %p3328
    $region138: #{_lambda_.3} parent=5 // pred_check_branch
      %3331 = sbr.rel (%p3329) target = $region140
    $region139: #{_lambda_.3} parent=5 // pred_region
      %s3332 = ssub.s32 %s35, 2
      // Predicated region
      $region141: #{_lambda_.3} parent=139 // pred_check
        %p3333 = pneg %p636
      $region142: #{_lambda_.3} parent=139 // pred_check_branch
        %3335 = sbr.rel (%p3333) target = $region144
      $region143: #{_lambda_.3} parent=139 // pred_region
        %p3336 = scmp.lt.s32.totalorder %s41, 1
        %s3337 = scalar_select %p3336, %s41, 1
        %s3338 = scalar_lea.vmem %s27, %s3337
      $region144: #{_lambda_.3} parent=139 // pred_fallthru
        _
      // Predicated region
      $region145: #{_lambda_.3} parent=139 // pred_check
        %p3339 = pneg %p662
      $region146: #{_lambda_.3} parent=139 // pred_check_branch
        %3341 = sbr.rel (%p3339) target = $region148
      $region147: #{_lambda_.3} parent=139 // pred_region
        %p3342 = scmp.lt.s32.totalorder %s41, 1
        %s3343 = scalar_select %p3342, %s41, 1
        %s3344 = smul.addr %s3343, 4
        %s3345 = scalar_lea.vmem %s28, %s3344
      $region148: #{_lambda_.3} parent=139 // pred_fallthru
        _
    $region140: #{_lambda_.3} parent=5 // pred_fallthru
      _
  $region6: #{_lambda_.3} parent=0 // loop_footer
    %s39 = sadd.s32 1, %s35
  $region7: #{_lambda_.3} parent=0 // loop_footer_branch
    %34 = sbr.rel target = $region3
  $region8: #{_lambda_.3} parent=0 // loop_exit
    _

</llo_original>
